<compile_context>
chip_gen: v5e
topology: v5e:2x2
jax: 0.10.0
libtpu: 0.0.40
codegen_flags: <defaults>
</compile_context>

<pallas_src>
import functools

import jax
import jax.numpy as jnp
from jax import lax
from jax.experimental import pallas as pl
from jax.experimental.pallas import tpu as pltpu


def _qfattn_kernel(x_ref, w1_ref, b1_ref, w2_ref, b2_ref, gamma_ref, beta_ref,
                   out_ref, zp_ref, *, TB, H, W, C, mxu_dtype):
    """One (TB, H, W, C) batch block per grid step.

    x_ref:          (TB, H, W, C)      NHWC activations (natural C, no lane pad)
    w1_ref/w2_ref:  (9*C, C)           tap-major im2col-packed 3x3 weights (mxu_dtype)
    b1_ref/b2_ref:  (1, C)             f32 conv biases
    gamma/beta_ref: (TB, 1, C)         f32 per-(batch, channel) affine
    out_ref:        (TB, H, W, C)
    zp_ref:         (TB, HW + 2*PAD, C) persistent zero-row-padded scratch (mxu_dtype)
    """
    HW = H * W
    M = TB * HW
    PAD = W + 8      # >= W+1 zero rows per image: absorbs the +-1 row halo of
                     # the dh taps and keeps the dh=0 offsets 8-aligned.

    # Left/right image-border masks for the horizontally shifted (dw != 0)
    # taps.  Computed once, reused by both convs.
    col = lax.broadcasted_iota(jnp.int32, (M, C), 0) % W
    w_mask = {-1: col >= 1, 1: col <= W - 2}

    # Re-zero only the halo rows (2*PAD rows per image - tiny).  Done every
    # step so correctness never depends on grid scheduling (megacore).
    halo = jnp.zeros((TB, PAD, C), mxu_dtype)
    zp_ref[:, :PAD, :] = halo
    zp_ref[:, PAD + HW:, :] = halo

    def conv3x3(w_ref):
        """3x3 / pad-1 conv of the map staged in zp_ref -> (M, C) f32.

        Nine accumulated per-tap MXU matmuls; no (M, 9*C) im2col buffer is
        ever materialized.
        # TODO(synk): on v6e/v7x pair two taps into one K=2*C matmul to fill
        # the 256-deep MXU contraction (K=C already matches v5e's 128).
        """
        zp = zp_ref[...]
        acc = jnp.zeros((M, C), jnp.float32)
        tap = 0
        for dh in (-1, 0, 1):            # tap order matches the weight packing
            for dw in (-1, 0, 1):
                start = PAD + dh * W + dw
                t = zp[:, start:start + HW, :].reshape(M, C)
                if dw != 0:              # zero the wrapped image-border rows
                    t = jnp.where(w_mask[dw], t, jnp.zeros_like(t))
                acc = acc + jnp.dot(t, w_ref[tap * C:(tap + 1) * C, :],
                                    preferred_element_type=jnp.float32)
                tap += 1
        return acc

    x = x_ref[...].reshape(TB, HW, C)

    # conv1 (+ bias + ReLU), f32 accumulation.
    zp_ref[:, PAD:PAD + HW, :] = x.astype(mxu_dtype)
    h1 = jnp.maximum(conv3x3(w1_ref) + b1_ref[...], 0.0)

    # conv2 (+ bias) reuses the same padded scratch.
    zp_ref[:, PAD:PAD + HW, :] = h1.reshape(TB, HW, C).astype(mxu_dtype)
    y = (conv3x3(w2_ref) + b2_ref[...]).reshape(TB, HW, C)

    # res = gamma * conv(x) + beta ;  out = x + res   (all f32 on the VPU)
    out = x.astype(jnp.float32) + gamma_ref[...] * y + beta_ref[...]
    out_ref[...] = out.reshape(TB, H, W, C).astype(out_ref.dtype)


def _pick_batch_block(B, max_tb=8):
    """Largest divisor of B (<= max_tb) that still leaves >= 2 grid steps."""
    tb = 1
    for d in range(1, min(B, max_tb) + 1):
        if B % d == 0 and B // d >= 2:
            tb = d
    return tb


def qf_attention(x, w1, b1, w2, b2, gamma, beta, *,
                 mxu_dtype=jnp.bfloat16, batch_block=None,
                 vmem_limit_bytes=None):
    """QFAttention forward.

    x: (B, H, W, C) NHWC; w1, w2: (3, 3, C, C) HWIO; b1, b2: (C,);
    gamma, beta: (B, C).
    Returns x + gamma * (conv2(relu(conv1(x) + b1)) + b2) + beta.
    """
    B, H, W, C = x.shape
    assert w1.shape == (3, 3, C, C) and w2.shape == (3, 3, C, C)

    tb = _pick_batch_block(B) if batch_block is None else batch_block
    assert B % tb == 0

    # Weights / biases / affine params are tiny; repack them once per call.
    def prep_w(w):                        # (3,3,C,C) HWIO -> (9*C, C), tap-major
        return w.reshape(9 * C, C).astype(mxu_dtype)

    def prep_b(v):                        # (C,) -> (1, C)
        return v.reshape(1, C).astype(jnp.float32)

    def prep_gb(v):                       # (B, C) -> (B, 1, C)
        return v.reshape(B, 1, C).astype(jnp.float32)

    kernel = functools.partial(_qfattn_kernel, TB=tb, H=H, W=W, C=C,
                               mxu_dtype=mxu_dtype)

    cp = dict(dimension_semantics=("parallel",))
    if vmem_limit_bytes is not None:      # raise for big H*W / C (<=48 MiB on v7x)
        cp["vmem_limit_bytes"] = vmem_limit_bytes

    zp_rows = H * W + 2 * (W + 8)

    return pl.pallas_call(
        kernel,
        out_shape=jax.ShapeDtypeStruct((B, H, W, C), x.dtype),
        grid_spec=pltpu.PrefetchScalarGridSpec(
            num_scalar_prefetch=0,
            grid=(B // tb,),
            in_specs=[
                pl.BlockSpec((tb, H, W, C), lambda b: (b, 0, 0, 0)),   # x
                pl.BlockSpec((9 * C, C), lambda b: (0, 0)),            # w1 (resident)
                pl.BlockSpec((1, C), lambda b: (0, 0)),                # b1
                pl.BlockSpec((9 * C, C), lambda b: (0, 0)),            # w2 (resident)
                pl.BlockSpec((1, C), lambda b: (0, 0)),                # b2
                pl.BlockSpec((tb, 1, C), lambda b: (b, 0, 0)),         # gamma
                pl.BlockSpec((tb, 1, C), lambda b: (b, 0, 0)),         # beta
            ],
            out_specs=pl.BlockSpec((tb, H, W, C), lambda b: (b, 0, 0, 0)),
            scratch_shapes=[pltpu.VMEM((tb, zp_rows, C), mxu_dtype)],
        ),
        compiler_params=pltpu.CompilerParams(**cp),
    )(x, prep_w(w1), prep_b(b1), prep_w(w2), prep_b(b2),
      prep_gb(gamma), prep_gb(beta))


def _reference(x, w1, b1, w2, b2, gamma, beta):
    """Pure-JAX reference (NHWC, HWIO) mirroring the PyTorch forward."""
    dn = lax.conv_dimension_numbers(x.shape, w1.shape, ("NHWC", "HWIO", "NHWC"))
    h = lax.conv_general_dilated(x, w1, (1, 1), ((1, 1), (1, 1)),
                                 dimension_numbers=dn,
                                 precision=lax.Precision.HIGHEST) + b1
    h = jnp.maximum(h, 0.0)
    h = lax.conv_general_dilated(h, w2, (1, 1), ((1, 1), (1, 1)),
                                 dimension_numbers=dn,
                                 precision=lax.Precision.HIGHEST) + b2
    return x + gamma[:, None, None, :] * h + beta[:, None, None, :]


if __name__ == "__main__":
    def make_inputs(B, H, W, C, key):
        ks = jax.random.split(key, 7)
        scale = 1.0 / (3 * 3 * C) ** 0.5          # fan-in-like init, HWIO layout
        x = jax.random.normal(ks[0], (B, H, W, C), jnp.float32)
        w1 = jax.random.normal(ks[1], (3, 3, C, C), jnp.float32) * scale
        b1 = jax.random.normal(ks[2], (C,), jnp.float32) * 0.1
        w2 = jax.random.normal(ks[3], (3, 3, C, C), jnp.float32) * scale
        b2 = jax.random.normal(ks[4], (C,), jnp.float32) * 0.1
        gamma = jax.random.normal(ks[5], (B, C), jnp.float32)
        beta = jax.random.normal(ks[6], (B, C), jnp.float32)
        return x, w1, b1, w2, b2, gamma, beta

    # Module defaults: 64 channels; small spatial / batch for the smoke test.
    args = make_inputs(2, 16, 16, 64, jax.random.PRNGKey(0))
    ref = _reference(*args)

    # 1) default bf16-MXU path (f32 accumulation) - looser tolerance.
    out = jax.block_until_ready(qf_attention(*args))
    assert out.shape == ref.shape and out.dtype == ref.dtype
    rel = float(jnp.linalg.norm(out - ref) / jnp.linalg.norm(ref))
    mae = float(jnp.max(jnp.abs(out - ref)))
    assert rel < 2e-2 and mae < 1.5e-1, (rel, mae)

    # 2) f32-MXU path - tight tolerance.
    out32 = jax.block_until_ready(qf_attention(*args, mxu_dtype=jnp.float32))
    assert jnp.allclose(out32, ref, atol=2e-3, rtol=2e-3), \
        float(jnp.max(jnp.abs(out32 - ref)))

    # 3) batch-blocked path (B=4 -> TB=2 images folded into one grid step).
    args4 = make_inputs(4, 16, 16, 64, jax.random.PRNGKey(0))
    ref4 = _reference(*args4)
    out4 = jax.block_until_ready(qf_attention(*args4))
    rel4 = float(jnp.linalg.norm(out4 - ref4) / jnp.linalg.norm(ref4))
    assert out4.shape == ref4.shape and rel4 < 2e-2, rel4

    print("KERNEL_OK")
</pallas_src>

<mosaic_0001>
module attributes {stable_mosaic.version = 11 : i64} {
  func.func @_qfattn_kernel(%arg0: i32, %arg1: memref<1x16x16x64xf32, #tpu.memory_space<vmem>>, %arg2: memref<576x64xbf16, #tpu.memory_space<vmem>>, %arg3: memref<1x64xf32, #tpu.memory_space<vmem>>, %arg4: memref<576x64xbf16, #tpu.memory_space<vmem>>, %arg5: memref<1x64xf32, #tpu.memory_space<vmem>>, %arg6: memref<1x1x64xf32, #tpu.memory_space<vmem>>, %arg7: memref<1x1x64xf32, #tpu.memory_space<vmem>>, %arg8: memref<1x16x16x64xf32, #tpu.memory_space<vmem>>, %arg9: memref<1x304x64xbf16, #tpu.memory_space<vmem>>) attributes {dimension_semantics = [#tpu.dimension_semantics<parallel>], iteration_bounds = array<i64: 2>, scalar_prefetch = 0 : i64, scratch_operands = 1 : i64, tpu.core_type = #tpu.core_type<tc>, window_params = [{transform_indices = @transform_0, window_bounds = array<i64: 1, 16, 16, 64>}, {pipeline_mode = #tpu.pipeline_mode<synchronous>, transform_indices = @transform_1, window_bounds = array<i64: 576, 64>}, {pipeline_mode = #tpu.pipeline_mode<synchronous>, transform_indices = @transform_2, window_bounds = array<i64: 1, 64>}, {pipeline_mode = #tpu.pipeline_mode<synchronous>, transform_indices = @transform_3, window_bounds = array<i64: 576, 64>}, {pipeline_mode = #tpu.pipeline_mode<synchronous>, transform_indices = @transform_4, window_bounds = array<i64: 1, 64>}, {transform_indices = @transform_5, window_bounds = array<i64: 1, 1, 64>}, {transform_indices = @transform_6, window_bounds = array<i64: 1, 1, 64>}, {transform_indices = @transform_7, window_bounds = array<i64: 1, 16, 16, 64>}]} {
    %0 = tpu.iota {dimensions = array<i32: 0>} : vector<256x64xi32>
    %c16_i32 = arith.constant 16 : i32
    %c0_i32 = arith.constant 0 : i32
    %1 = arith.cmpi eq, %c16_i32, %c0_i32 : i32
    %c1_i32 = arith.constant 1 : i32
    %2 = arith.select %1, %c1_i32, %c16_i32 : i32
    %3 = vector.broadcast %2 : i32 to vector<256x64xi32>
    %4 = arith.remsi %0, %3 : vector<256x64xi32>
    %c0_i32_0 = arith.constant 0 : i32
    %5 = vector.broadcast %c0_i32_0 : i32 to vector<256x64xi32>
    %6 = arith.cmpi ne, %4, %5 : vector<256x64xi32>
    %c0_i32_1 = arith.constant 0 : i32
    %7 = vector.broadcast %c0_i32_1 : i32 to vector<256x64xi32>
    %8 = arith.cmpi slt, %4, %7 : vector<256x64xi32>
    %c0_i32_2 = arith.constant 0 : i32
    %9 = arith.cmpi slt, %2, %c0_i32_2 : i32
    %10 = vector.broadcast %9 : i1 to vector<256x64xi1>
    %11 = vector.broadcast %10 : vector<256x64xi1> to vector<256x64xi1>
    %12 = arith.xori %8, %11 : vector<256x64xi1>
    %13 = arith.andi %12, %6 : vector<256x64xi1>
    %14 = vector.broadcast %2 : i32 to vector<256x64xi32>
    %15 = arith.addi %4, %14 : vector<256x64xi32>
    %16 = arith.select %13, %15, %4 : vector<256x64xi1>, vector<256x64xi32>
    %c1_i32_3 = arith.constant 1 : i32
    %17 = vector.broadcast %c1_i32_3 : i32 to vector<256x64xi32>
    %18 = arith.cmpi sge, %16, %17 : vector<256x64xi32>
    %c14_i32 = arith.constant 14 : i32
    %19 = vector.broadcast %c14_i32 : i32 to vector<256x64xi32>
    %20 = arith.cmpi sle, %16, %19 : vector<256x64xi32>
    %cst = arith.constant 0.000000e+00 : bf16
    %21 = vector.broadcast %cst : bf16 to vector<1x24x64xbf16>
    %c0 = arith.constant 0 : index
    %c0_4 = arith.constant 0 : index
    %c0_5 = arith.constant 0 : index
    %22 = vector.load %arg9[%c0, %c0_4, %c0_5] : memref<1x304x64xbf16, #tpu.memory_space<vmem>>, vector<1x24x64xbf16>
    tpu.vector_store %arg9[%c0, %c0_4, %c0_5], %21 {strides = array<i32>} : memref<1x304x64xbf16, #tpu.memory_space<vmem>>, vector<1x24x64xbf16>,
    %c0_6 = arith.constant 0 : index
    %c280 = arith.constant 280 : index
    %c0_7 = arith.constant 0 : index
    %23 = vector.load %arg9[%c0_6, %c280, %c0_7] : memref<1x304x64xbf16, #tpu.memory_space<vmem>>, vector<1x24x64xbf16>
    tpu.vector_store %arg9[%c0_6, %c280, %c0_7], %21 {strides = array<i32>} : memref<1x304x64xbf16, #tpu.memory_space<vmem>>, vector<1x24x64xbf16>,
    %c0_8 = arith.constant 0 : index
    %c0_9 = arith.constant 0 : index
    %c0_10 = arith.constant 0 : index
    %c0_11 = arith.constant 0 : index
    %24 = vector.load %arg1[%c0_8, %c0_9, %c0_10, %c0_11] : memref<1x16x16x64xf32, #tpu.memory_space<vmem>>, vector<1x16x16x64xf32>
    %25 = vector.shape_cast %24 : vector<1x16x16x64xf32> to vector<1x256x64xf32>
    %26 = arith.truncf %25 : vector<1x256x64xf32> to vector<1x256x64xbf16>
    %c0_12 = arith.constant 0 : index
    %c24 = arith.constant 24 : index
    %c0_13 = arith.constant 0 : index
    %27 = vector.load %arg9[%c0_12, %c24, %c0_13] : memref<1x304x64xbf16, #tpu.memory_space<vmem>>, vector<1x256x64xbf16>
    tpu.vector_store %arg9[%c0_12, %c24, %c0_13], %26 {strides = array<i32>} : memref<1x304x64xbf16, #tpu.memory_space<vmem>>, vector<1x256x64xbf16>,
    %c0_14 = arith.constant 0 : index
    %c0_15 = arith.constant 0 : index
    %c0_16 = arith.constant 0 : index
    %28 = vector.load %arg9[%c0_14, %c0_15, %c0_16] : memref<1x304x64xbf16, #tpu.memory_space<vmem>>, vector<1x304x64xbf16>
    %cst_17 = arith.constant 0.000000e+00 : f32
    %29 = vector.broadcast %cst_17 : f32 to vector<256x64xf32>
    %30 = vector.extract_strided_slice %28 {offsets = [0, 7, 0], sizes = [1, 256, 64], strides = [1, 1, 1]} : vector<1x304x64xbf16> to vector<1x256x64xbf16>
    %31 = vector.shape_cast %30 : vector<1x256x64xbf16> to vector<256x64xbf16>
    %cst_18 = arith.constant 0.000000e+00 : bf16
    %32 = vector.broadcast %cst_18 : bf16 to vector<256x64xbf16>
    %33 = arith.select %18, %31, %32 : vector<256x64xi1>, vector<256x64xbf16>
    %c0_19 = arith.constant 0 : index
    %c0_20 = arith.constant 0 : index
    %34 = vector.load %arg2[%c0_19, %c0_20] : memref<576x64xbf16, #tpu.memory_space<vmem>>, vector<64x64xbf16>
    %cst_21 = arith.constant dense<0.000000e+00> : vector<256x64xf32>
    %35 = tpu.matmul %33, %34, %cst_21 {dimension_numbers = #tpu.dot_dimension_numbers<[1], [0], [0], [1], [0, 0, 1, 1], [], []>} : vector<256x64xbf16>, vector<64x64xbf16>, vector<256x64xf32> -> vector<256x64xf32>
    %36 = arith.addf %29, %35 : vector<256x64xf32>
    %37 = vector.extract_strided_slice %28 {offsets = [0, 8, 0], sizes = [1, 256, 64], strides = [1, 1, 1]} : vector<1x304x64xbf16> to vector<1x256x64xbf16>
    %38 = vector.shape_cast %37 : vector<1x256x64xbf16> to vector<256x64xbf16>
    %c64 = arith.constant 64 : index
    %c0_22 = arith.constant 0 : index
    %39 = vector.load %arg2[%c64, %c0_22] : memref<576x64xbf16, #tpu.memory_space<vmem>>, vector<64x64xbf16>
    %cst_23 = arith.constant dense<0.000000e+00> : vector<256x64xf32>
    %40 = tpu.matmul %38, %39, %cst_23 {dimension_numbers = #tpu.dot_dimension_numbers<[1], [0], [0], [1], [0, 0, 1, 1], [], []>} : vector<256x64xbf16>, vector<64x64xbf16>, vector<256x64xf32> -> vector<256x64xf32>
    %41 = arith.addf %36, %40 : vector<256x64xf32>
    %42 = vector.extract_strided_slice %28 {offsets = [0, 9, 0], sizes = [1, 256, 64], strides = [1, 1, 1]} : vector<1x304x64xbf16> to vector<1x256x64xbf16>
    %43 = vector.shape_cast %42 : vector<1x256x64xbf16> to vector<256x64xbf16>
    %cst_24 = arith.constant 0.000000e+00 : bf16
    %44 = vector.broadcast %cst_24 : bf16 to vector<256x64xbf16>
    %45 = arith.select %20, %43, %44 : vector<256x64xi1>, vector<256x64xbf16>
    %c128 = arith.constant 128 : index
    %c0_25 = arith.constant 0 : index
    %46 = vector.load %arg2[%c128, %c0_25] : memref<576x64xbf16, #tpu.memory_space<vmem>>, vector<64x64xbf16>
    %cst_26 = arith.constant dense<0.000000e+00> : vector<256x64xf32>
    %47 = tpu.matmul %45, %46, %cst_26 {dimension_numbers = #tpu.dot_dimension_numbers<[1], [0], [0], [1], [0, 0, 1, 1], [], []>} : vector<256x64xbf16>, vector<64x64xbf16>, vector<256x64xf32> -> vector<256x64xf32>
    %48 = arith.addf %41, %47 : vector<256x64xf32>
    %49 = vector.extract_strided_slice %28 {offsets = [0, 23, 0], sizes = [1, 256, 64], strides = [1, 1, 1]} : vector<1x304x64xbf16> to vector<1x256x64xbf16>
    %50 = vector.shape_cast %49 : vector<1x256x64xbf16> to vector<256x64xbf16>
    %cst_27 = arith.constant 0.000000e+00 : bf16
    %51 = vector.broadcast %cst_27 : bf16 to vector<256x64xbf16>
    %52 = arith.select %18, %50, %51 : vector<256x64xi1>, vector<256x64xbf16>
    %c192 = arith.constant 192 : index
    %c0_28 = arith.constant 0 : index
    %53 = vector.load %arg2[%c192, %c0_28] : memref<576x64xbf16, #tpu.memory_space<vmem>>, vector<64x64xbf16>
    %cst_29 = arith.constant dense<0.000000e+00> : vector<256x64xf32>
    %54 = tpu.matmul %52, %53, %cst_29 {dimension_numbers = #tpu.dot_dimension_numbers<[1], [0], [0], [1], [0, 0, 1, 1], [], []>} : vector<256x64xbf16>, vector<64x64xbf16>, vector<256x64xf32> -> vector<256x64xf32>
    %55 = arith.addf %48, %54 : vector<256x64xf32>
    %56 = vector.extract_strided_slice %28 {offsets = [0, 24, 0], sizes = [1, 256, 64], strides = [1, 1, 1]} : vector<1x304x64xbf16> to vector<1x256x64xbf16>
    %57 = vector.shape_cast %56 : vector<1x256x64xbf16> to vector<256x64xbf16>
    %c256 = arith.constant 256 : index
    %c0_30 = arith.constant 0 : index
    %58 = vector.load %arg2[%c256, %c0_30] : memref<576x64xbf16, #tpu.memory_space<vmem>>, vector<64x64xbf16>
    %cst_31 = arith.constant dense<0.000000e+00> : vector<256x64xf32>
    %59 = tpu.matmul %57, %58, %cst_31 {dimension_numbers = #tpu.dot_dimension_numbers<[1], [0], [0], [1], [0, 0, 1, 1], [], []>} : vector<256x64xbf16>, vector<64x64xbf16>, vector<256x64xf32> -> vector<256x64xf32>
    %60 = arith.addf %55, %59 : vector<256x64xf32>
    %61 = vector.extract_strided_slice %28 {offsets = [0, 25, 0], sizes = [1, 256, 64], strides = [1, 1, 1]} : vector<1x304x64xbf16> to vector<1x256x64xbf16>
    %62 = vector.shape_cast %61 : vector<1x256x64xbf16> to vector<256x64xbf16>
    %cst_32 = arith.constant 0.000000e+00 : bf16
    %63 = vector.broadcast %cst_32 : bf16 to vector<256x64xbf16>
    %64 = arith.select %20, %62, %63 : vector<256x64xi1>, vector<256x64xbf16>
    %c320 = arith.constant 320 : index
    %c0_33 = arith.constant 0 : index
    %65 = vector.load %arg2[%c320, %c0_33] : memref<576x64xbf16, #tpu.memory_space<vmem>>, vector<64x64xbf16>
    %cst_34 = arith.constant dense<0.000000e+00> : vector<256x64xf32>
    %66 = tpu.matmul %64, %65, %cst_34 {dimension_numbers = #tpu.dot_dimension_numbers<[1], [0], [0], [1], [0, 0, 1, 1], [], []>} : vector<256x64xbf16>, vector<64x64xbf16>, vector<256x64xf32> -> vector<256x64xf32>
    %67 = arith.addf %60, %66 : vector<256x64xf32>
    %68 = vector.extract_strided_slice %28 {offsets = [0, 39, 0], sizes = [1, 256, 64], strides = [1, 1, 1]} : vector<1x304x64xbf16> to vector<1x256x64xbf16>
    %69 = vector.shape_cast %68 : vector<1x256x64xbf16> to vector<256x64xbf16>
    %cst_35 = arith.constant 0.000000e+00 : bf16
    %70 = vector.broadcast %cst_35 : bf16 to vector<256x64xbf16>
    %71 = arith.select %18, %69, %70 : vector<256x64xi1>, vector<256x64xbf16>
    %c384 = arith.constant 384 : index
    %c0_36 = arith.constant 0 : index
    %72 = vector.load %arg2[%c384, %c0_36] : memref<576x64xbf16, #tpu.memory_space<vmem>>, vector<64x64xbf16>
    %cst_37 = arith.constant dense<0.000000e+00> : vector<256x64xf32>
    %73 = tpu.matmul %71, %72, %cst_37 {dimension_numbers = #tpu.dot_dimension_numbers<[1], [0], [0], [1], [0, 0, 1, 1], [], []>} : vector<256x64xbf16>, vector<64x64xbf16>, vector<256x64xf32> -> vector<256x64xf32>
    %74 = arith.addf %67, %73 : vector<256x64xf32>
    %75 = vector.extract_strided_slice %28 {offsets = [0, 40, 0], sizes = [1, 256, 64], strides = [1, 1, 1]} : vector<1x304x64xbf16> to vector<1x256x64xbf16>
    %76 = vector.shape_cast %75 : vector<1x256x64xbf16> to vector<256x64xbf16>
    %c448 = arith.constant 448 : index
    %c0_38 = arith.constant 0 : index
    %77 = vector.load %arg2[%c448, %c0_38] : memref<576x64xbf16, #tpu.memory_space<vmem>>, vector<64x64xbf16>
    %cst_39 = arith.constant dense<0.000000e+00> : vector<256x64xf32>
    %78 = tpu.matmul %76, %77, %cst_39 {dimension_numbers = #tpu.dot_dimension_numbers<[1], [0], [0], [1], [0, 0, 1, 1], [], []>} : vector<256x64xbf16>, vector<64x64xbf16>, vector<256x64xf32> -> vector<256x64xf32>
    %79 = arith.addf %74, %78 : vector<256x64xf32>
    %80 = vector.extract_strided_slice %28 {offsets = [0, 41, 0], sizes = [1, 256, 64], strides = [1, 1, 1]} : vector<1x304x64xbf16> to vector<1x256x64xbf16>
    %81 = vector.shape_cast %80 : vector<1x256x64xbf16> to vector<256x64xbf16>
    %cst_40 = arith.constant 0.000000e+00 : bf16
    %82 = vector.broadcast %cst_40 : bf16 to vector<256x64xbf16>
    %83 = arith.select %20, %81, %82 : vector<256x64xi1>, vector<256x64xbf16>
    %c512 = arith.constant 512 : index
    %c0_41 = arith.constant 0 : index
    %84 = vector.load %arg2[%c512, %c0_41] : memref<576x64xbf16, #tpu.memory_space<vmem>>, vector<64x64xbf16>
    %cst_42 = arith.constant dense<0.000000e+00> : vector<256x64xf32>
    %85 = tpu.matmul %83, %84, %cst_42 {dimension_numbers = #tpu.dot_dimension_numbers<[1], [0], [0], [1], [0, 0, 1, 1], [], []>} : vector<256x64xbf16>, vector<64x64xbf16>, vector<256x64xf32> -> vector<256x64xf32>
    %86 = arith.addf %79, %85 : vector<256x64xf32>
    %c0_43 = arith.constant 0 : index
    %c0_44 = arith.constant 0 : index
    %87 = vector.load %arg3[%c0_43, %c0_44] : memref<1x64xf32, #tpu.memory_space<vmem>>, vector<1x64xf32>
    %88 = vector.broadcast %87 : vector<1x64xf32> to vector<256x64xf32>
    %89 = arith.addf %86, %88 : vector<256x64xf32>
    %cst_45 = arith.constant 0.000000e+00 : f32
    %90 = vector.broadcast %cst_45 : f32 to vector<256x64xf32>
    %91 = arith.maximumf %89, %90 : vector<256x64xf32>
    %92 = vector.shape_cast %91 : vector<256x64xf32> to vector<1x256x64xf32>
    %93 = arith.truncf %92 : vector<1x256x64xf32> to vector<1x256x64xbf16>
    %c0_46 = arith.constant 0 : index
    %c24_47 = arith.constant 24 : index
    %c0_48 = arith.constant 0 : index
    %94 = vector.load %arg9[%c0_46, %c24_47, %c0_48] : memref<1x304x64xbf16, #tpu.memory_space<vmem>>, vector<1x256x64xbf16>
    tpu.vector_store %arg9[%c0_46, %c24_47, %c0_48], %93 {strides = array<i32>} : memref<1x304x64xbf16, #tpu.memory_space<vmem>>, vector<1x256x64xbf16>,
    %c0_49 = arith.constant 0 : index
    %c0_50 = arith.constant 0 : index
    %c0_51 = arith.constant 0 : index
    %95 = vector.load %arg9[%c0_49, %c0_50, %c0_51] : memref<1x304x64xbf16, #tpu.memory_space<vmem>>, vector<1x304x64xbf16>
    %cst_52 = arith.constant 0.000000e+00 : f32
    %96 = vector.broadcast %cst_52 : f32 to vector<256x64xf32>
    %97 = vector.extract_strided_slice %95 {offsets = [0, 7, 0], sizes = [1, 256, 64], strides = [1, 1, 1]} : vector<1x304x64xbf16> to vector<1x256x64xbf16>
    %98 = vector.shape_cast %97 : vector<1x256x64xbf16> to vector<256x64xbf16>
    %cst_53 = arith.constant 0.000000e+00 : bf16
    %99 = vector.broadcast %cst_53 : bf16 to vector<256x64xbf16>
    %100 = arith.select %18, %98, %99 : vector<256x64xi1>, vector<256x64xbf16>
    %c0_54 = arith.constant 0 : index
    %c0_55 = arith.constant 0 : index
    %101 = vector.load %arg4[%c0_54, %c0_55] : memref<576x64xbf16, #tpu.memory_space<vmem>>, vector<64x64xbf16>
    %cst_56 = arith.constant dense<0.000000e+00> : vector<256x64xf32>
    %102 = tpu.matmul %100, %101, %cst_56 {dimension_numbers = #tpu.dot_dimension_numbers<[1], [0], [0], [1], [0, 0, 1, 1], [], []>} : vector<256x64xbf16>, vector<64x64xbf16>, vector<256x64xf32> -> vector<256x64xf32>
    %103 = arith.addf %96, %102 : vector<256x64xf32>
    %104 = vector.extract_strided_slice %95 {offsets = [0, 8, 0], sizes = [1, 256, 64], strides = [1, 1, 1]} : vector<1x304x64xbf16> to vector<1x256x64xbf16>
    %105 = vector.shape_cast %104 : vector<1x256x64xbf16> to vector<256x64xbf16>
    %c64_57 = arith.constant 64 : index
    %c0_58 = arith.constant 0 : index
    %106 = vector.load %arg4[%c64_57, %c0_58] : memref<576x64xbf16, #tpu.memory_space<vmem>>, vector<64x64xbf16>
    %cst_59 = arith.constant dense<0.000000e+00> : vector<256x64xf32>
    %107 = tpu.matmul %105, %106, %cst_59 {dimension_numbers = #tpu.dot_dimension_numbers<[1], [0], [0], [1], [0, 0, 1, 1], [], []>} : vector<256x64xbf16>, vector<64x64xbf16>, vector<256x64xf32> -> vector<256x64xf32>
    %108 = arith.addf %103, %107 : vector<256x64xf32>
    %109 = vector.extract_strided_slice %95 {offsets = [0, 9, 0], sizes = [1, 256, 64], strides = [1, 1, 1]} : vector<1x304x64xbf16> to vector<1x256x64xbf16>
    %110 = vector.shape_cast %109 : vector<1x256x64xbf16> to vector<256x64xbf16>
    %cst_60 = arith.constant 0.000000e+00 : bf16
    %111 = vector.broadcast %cst_60 : bf16 to vector<256x64xbf16>
    %112 = arith.select %20, %110, %111 : vector<256x64xi1>, vector<256x64xbf16>
    %c128_61 = arith.constant 128 : index
    %c0_62 = arith.constant 0 : index
    %113 = vector.load %arg4[%c128_61, %c0_62] : memref<576x64xbf16, #tpu.memory_space<vmem>>, vector<64x64xbf16>
    %cst_63 = arith.constant dense<0.000000e+00> : vector<256x64xf32>
    %114 = tpu.matmul %112, %113, %cst_63 {dimension_numbers = #tpu.dot_dimension_numbers<[1], [0], [0], [1], [0, 0, 1, 1], [], []>} : vector<256x64xbf16>, vector<64x64xbf16>, vector<256x64xf32> -> vector<256x64xf32>
    %115 = arith.addf %108, %114 : vector<256x64xf32>
    %116 = vector.extract_strided_slice %95 {offsets = [0, 23, 0], sizes = [1, 256, 64], strides = [1, 1, 1]} : vector<1x304x64xbf16> to vector<1x256x64xbf16>
    %117 = vector.shape_cast %116 : vector<1x256x64xbf16> to vector<256x64xbf16>
    %cst_64 = arith.constant 0.000000e+00 : bf16
    %118 = vector.broadcast %cst_64 : bf16 to vector<256x64xbf16>
    %119 = arith.select %18, %117, %118 : vector<256x64xi1>, vector<256x64xbf16>
    %c192_65 = arith.constant 192 : index
    %c0_66 = arith.constant 0 : index
    %120 = vector.load %arg4[%c192_65, %c0_66] : memref<576x64xbf16, #tpu.memory_space<vmem>>, vector<64x64xbf16>
    %cst_67 = arith.constant dense<0.000000e+00> : vector<256x64xf32>
    %121 = tpu.matmul %119, %120, %cst_67 {dimension_numbers = #tpu.dot_dimension_numbers<[1], [0], [0], [1], [0, 0, 1, 1], [], []>} : vector<256x64xbf16>, vector<64x64xbf16>, vector<256x64xf32> -> vector<256x64xf32>
    %122 = arith.addf %115, %121 : vector<256x64xf32>
    %123 = vector.extract_strided_slice %95 {offsets = [0, 24, 0], sizes = [1, 256, 64], strides = [1, 1, 1]} : vector<1x304x64xbf16> to vector<1x256x64xbf16>
    %124 = vector.shape_cast %123 : vector<1x256x64xbf16> to vector<256x64xbf16>
    %c256_68 = arith.constant 256 : index
    %c0_69 = arith.constant 0 : index
    %125 = vector.load %arg4[%c256_68, %c0_69] : memref<576x64xbf16, #tpu.memory_space<vmem>>, vector<64x64xbf16>
    %cst_70 = arith.constant dense<0.000000e+00> : vector<256x64xf32>
    %126 = tpu.matmul %124, %125, %cst_70 {dimension_numbers = #tpu.dot_dimension_numbers<[1], [0], [0], [1], [0, 0, 1, 1], [], []>} : vector<256x64xbf16>, vector<64x64xbf16>, vector<256x64xf32> -> vector<256x64xf32>
    %127 = arith.addf %122, %126 : vector<256x64xf32>
    %128 = vector.extract_strided_slice %95 {offsets = [0, 25, 0], sizes = [1, 256, 64], strides = [1, 1, 1]} : vector<1x304x64xbf16> to vector<1x256x64xbf16>
    %129 = vector.shape_cast %128 : vector<1x256x64xbf16> to vector<256x64xbf16>
    %cst_71 = arith.constant 0.000000e+00 : bf16
    %130 = vector.broadcast %cst_71 : bf16 to vector<256x64xbf16>
    %131 = arith.select %20, %129, %130 : vector<256x64xi1>, vector<256x64xbf16>
    %c320_72 = arith.constant 320 : index
    %c0_73 = arith.constant 0 : index
    %132 = vector.load %arg4[%c320_72, %c0_73] : memref<576x64xbf16, #tpu.memory_space<vmem>>, vector<64x64xbf16>
    %cst_74 = arith.constant dense<0.000000e+00> : vector<256x64xf32>
    %133 = tpu.matmul %131, %132, %cst_74 {dimension_numbers = #tpu.dot_dimension_numbers<[1], [0], [0], [1], [0, 0, 1, 1], [], []>} : vector<256x64xbf16>, vector<64x64xbf16>, vector<256x64xf32> -> vector<256x64xf32>
    %134 = arith.addf %127, %133 : vector<256x64xf32>
    %135 = vector.extract_strided_slice %95 {offsets = [0, 39, 0], sizes = [1, 256, 64], strides = [1, 1, 1]} : vector<1x304x64xbf16> to vector<1x256x64xbf16>
    %136 = vector.shape_cast %135 : vector<1x256x64xbf16> to vector<256x64xbf16>
    %cst_75 = arith.constant 0.000000e+00 : bf16
    %137 = vector.broadcast %cst_75 : bf16 to vector<256x64xbf16>
    %138 = arith.select %18, %136, %137 : vector<256x64xi1>, vector<256x64xbf16>
    %c384_76 = arith.constant 384 : index
    %c0_77 = arith.constant 0 : index
    %139 = vector.load %arg4[%c384_76, %c0_77] : memref<576x64xbf16, #tpu.memory_space<vmem>>, vector<64x64xbf16>
    %cst_78 = arith.constant dense<0.000000e+00> : vector<256x64xf32>
    %140 = tpu.matmul %138, %139, %cst_78 {dimension_numbers = #tpu.dot_dimension_numbers<[1], [0], [0], [1], [0, 0, 1, 1], [], []>} : vector<256x64xbf16>, vector<64x64xbf16>, vector<256x64xf32> -> vector<256x64xf32>
    %141 = arith.addf %134, %140 : vector<256x64xf32>
    %142 = vector.extract_strided_slice %95 {offsets = [0, 40, 0], sizes = [1, 256, 64], strides = [1, 1, 1]} : vector<1x304x64xbf16> to vector<1x256x64xbf16>
    %143 = vector.shape_cast %142 : vector<1x256x64xbf16> to vector<256x64xbf16>
    %c448_79 = arith.constant 448 : index
    %c0_80 = arith.constant 0 : index
    %144 = vector.load %arg4[%c448_79, %c0_80] : memref<576x64xbf16, #tpu.memory_space<vmem>>, vector<64x64xbf16>
    %cst_81 = arith.constant dense<0.000000e+00> : vector<256x64xf32>
    %145 = tpu.matmul %143, %144, %cst_81 {dimension_numbers = #tpu.dot_dimension_numbers<[1], [0], [0], [1], [0, 0, 1, 1], [], []>} : vector<256x64xbf16>, vector<64x64xbf16>, vector<256x64xf32> -> vector<256x64xf32>
    %146 = arith.addf %141, %145 : vector<256x64xf32>
    %147 = vector.extract_strided_slice %95 {offsets = [0, 41, 0], sizes = [1, 256, 64], strides = [1, 1, 1]} : vector<1x304x64xbf16> to vector<1x256x64xbf16>
    %148 = vector.shape_cast %147 : vector<1x256x64xbf16> to vector<256x64xbf16>
    %cst_82 = arith.constant 0.000000e+00 : bf16
    %149 = vector.broadcast %cst_82 : bf16 to vector<256x64xbf16>
    %150 = arith.select %20, %148, %149 : vector<256x64xi1>, vector<256x64xbf16>
    %c512_83 = arith.constant 512 : index
    %c0_84 = arith.constant 0 : index
    %151 = vector.load %arg4[%c512_83, %c0_84] : memref<576x64xbf16, #tpu.memory_space<vmem>>, vector<64x64xbf16>
    %cst_85 = arith.constant dense<0.000000e+00> : vector<256x64xf32>
    %152 = tpu.matmul %150, %151, %cst_85 {dimension_numbers = #tpu.dot_dimension_numbers<[1], [0], [0], [1], [0, 0, 1, 1], [], []>} : vector<256x64xbf16>, vector<64x64xbf16>, vector<256x64xf32> -> vector<256x64xf32>
    %153 = arith.addf %146, %152 : vector<256x64xf32>
    %c0_86 = arith.constant 0 : index
    %c0_87 = arith.constant 0 : index
    %154 = vector.load %arg5[%c0_86, %c0_87] : memref<1x64xf32, #tpu.memory_space<vmem>>, vector<1x64xf32>
    %155 = vector.broadcast %154 : vector<1x64xf32> to vector<256x64xf32>
    %156 = arith.addf %153, %155 : vector<256x64xf32>
    %157 = vector.shape_cast %156 : vector<256x64xf32> to vector<1x256x64xf32>
    %c0_88 = arith.constant 0 : index
    %c0_89 = arith.constant 0 : index
    %c0_90 = arith.constant 0 : index
    %158 = vector.load %arg6[%c0_88, %c0_89, %c0_90] : memref<1x1x64xf32, #tpu.memory_space<vmem>>, vector<1x1x64xf32>
    %159 = vector.broadcast %158 : vector<1x1x64xf32> to vector<1x256x64xf32>
    %160 = arith.mulf %159, %157 : vector<1x256x64xf32>
    %161 = arith.addf %25, %160 : vector<1x256x64xf32>
    %c0_91 = arith.constant 0 : index
    %c0_92 = arith.constant 0 : index
    %c0_93 = arith.constant 0 : index
    %162 = vector.load %arg7[%c0_91, %c0_92, %c0_93] : memref<1x1x64xf32, #tpu.memory_space<vmem>>, vector<1x1x64xf32>
    %163 = vector.broadcast %162 : vector<1x1x64xf32> to vector<1x256x64xf32>
    %164 = arith.addf %161, %163 : vector<1x256x64xf32>
    %165 = vector.shape_cast %164 : vector<1x256x64xf32> to vector<1x16x16x64xf32>
    %c0_94 = arith.constant 0 : index
    %c0_95 = arith.constant 0 : index
    %c0_96 = arith.constant 0 : index
    %c0_97 = arith.constant 0 : index
    %166 = vector.load %arg8[%c0_94, %c0_95, %c0_96, %c0_97] : memref<1x16x16x64xf32, #tpu.memory_space<vmem>>, vector<1x16x16x64xf32>
    tpu.vector_store %arg8[%c0_94, %c0_95, %c0_96, %c0_97], %165 {strides = array<i32>} : memref<1x16x16x64xf32, #tpu.memory_space<vmem>>, vector<1x16x16x64xf32>,
    return
  }
  func.func @transform_0(%arg0: i32) -> (i32, i32, i32, i32) {
    %c0_i32 = arith.constant 0 : i32
    %c0_i32_0 = arith.constant 0 : i32
    %c0_i32_1 = arith.constant 0 : i32
    %c0_i32_2 = arith.constant 0 : i32
    return %arg0, %c0_i32, %c0_i32_0, %c0_i32_1 : i32, i32, i32, i32
  }
  func.func @transform_1(%arg0: i32) -> (i32, i32) {
    %c0_i32 = arith.constant 0 : i32
    %c0_i32_0 = arith.constant 0 : i32
    %c0_i32_1 = arith.constant 0 : i32
    return %c0_i32, %c0_i32_0 : i32, i32
  }
  func.func @transform_2(%arg0: i32) -> (i32, i32) {
    %c0_i32 = arith.constant 0 : i32
    %c0_i32_0 = arith.constant 0 : i32
    %c0_i32_1 = arith.constant 0 : i32
    return %c0_i32, %c0_i32_0 : i32, i32
  }
  func.func @transform_3(%arg0: i32) -> (i32, i32) {
    %c0_i32 = arith.constant 0 : i32
    %c0_i32_0 = arith.constant 0 : i32
    %c0_i32_1 = arith.constant 0 : i32
    return %c0_i32, %c0_i32_0 : i32, i32
  }
  func.func @transform_4(%arg0: i32) -> (i32, i32) {
    %c0_i32 = arith.constant 0 : i32
    %c0_i32_0 = arith.constant 0 : i32
    %c0_i32_1 = arith.constant 0 : i32
    return %c0_i32, %c0_i32_0 : i32, i32
  }
  func.func @transform_5(%arg0: i32) -> (i32, i32, i32) {
    %c0_i32 = arith.constant 0 : i32
    %c0_i32_0 = arith.constant 0 : i32
    %c0_i32_1 = arith.constant 0 : i32
    return %arg0, %c0_i32, %c0_i32_0 : i32, i32, i32
  }
  func.func @transform_6(%arg0: i32) -> (i32, i32, i32) {
    %c0_i32 = arith.constant 0 : i32
    %c0_i32_0 = arith.constant 0 : i32
    %c0_i32_1 = arith.constant 0 : i32
    return %arg0, %c0_i32, %c0_i32_0 : i32, i32, i32
  }
  func.func @transform_7(%arg0: i32) -> (i32, i32, i32, i32) {
    %c0_i32 = arith.constant 0 : i32
    %c0_i32_0 = arith.constant 0 : i32
    %c0_i32_1 = arith.constant 0 : i32
    %c0_i32_2 = arith.constant 0 : i32
    return %arg0, %c0_i32, %c0_i32_0, %c0_i32_1 : i32, i32, i32, i32
  }
}

</mosaic_0001>

<llo_original>
// kernel: tpu_custom_call.1
$region0: #{tpu_custom_call.1}
  #allocation0 [shape = 'u32[]', space=smem, size = 0x4, offset = 0x4, fixed_abs, tag = 'smem constant byte address 0x4 - core index']
  #allocation1 [shape = 'u32[72,128]{1,0:T(1,128)}', space=vmem, size = 0x9000, scoped, tag = 'internal scratch']
  #allocation2 [shape = 'bf16[1,304,64]{2,1,0:T(8,128)(2,1)}', space=vmem, size = 0x13000, scoped, tag = 'scratch operand']
  %s0 = inlined_call_operand.vmem [shape: f32[2,16,16,64], index: 0, kind: input, shape index: {}]
  %s1 = inlined_call_operand.vmem [shape: bf16[576,64], index: 1, kind: input, shape index: {}]
  %s2 = inlined_call_operand.vmem [shape: f32[1,64], index: 2, kind: input, shape index: {}]
  %s3 = inlined_call_operand.vmem [shape: bf16[576,64], index: 3, kind: input, shape index: {}]
  %s4 = inlined_call_operand.vmem [shape: f32[1,64], index: 4, kind: input, shape index: {}]
  %s5 = inlined_call_operand.vmem [shape: f32[2,1,64], index: 5, kind: input, shape index: {}]
  %s6 = inlined_call_operand.vmem [shape: f32[2,1,64], index: 6, kind: input, shape index: {}]
  %s7 = inlined_call_operand.hbm [shape: f32[2,16,16,64], index: 7, kind: output, shape index: {}]
  %s8 = sld [smem:[#allocation0]]
  $region61: #{tpu_custom_call.1} parent=0
    _
  %s10 = ssub.s32 1, %s8
  %s11 = scalar_select 0, %s10, %s8
  $region1: #{tpu_custom_call.1} parent=0
    #allocation3 [shape = 'u8[262144]{0}', space=vmem, size = 0x40000, scoped, tag = 'output window, operand 0']
    #allocation4 [shape = 's32[2]{0}', space=sflag, size = 0x8, scoped, tag = 'scoped memory for tpu_custom_call.1']
    %12 = vsyncpa [#allocation4], 0
    %s13 = scalar_lea.sflag [#allocation4], 1
    %14 = vsyncpa %s13, 0
    loop: start=0, step=1, limit=4
    $region2: #{tpu_custom_call.1} parent=1 // loop_pre_header
      _
    $region3: #{tpu_custom_call.1} parent=1 // loop_header
      %s16 = sphi 0, %s20
      %p17 = scmp.ge.s32.totalorder %s16, 4
      %s26 = sphi 0, %s28
      %s29 = sphi 0, %s26
      %s30 = sphi 0, %s29
      %s46 = sphi 0, %s30
      %s50 = sphi 0, %s50
      %s52 = sphi 0, %s50
      %s53 = sphi 0, %s52
      %s67 = sphi 0, %s53
      %s71 = sphi 0, %s71
      %s73 = sphi 0, %s71
      %s74 = sphi 0, %s73
      %s88 = sphi 0, %s74
      %s92 = sphi 0, %s92
      %s94 = sphi 0, %s92
      %s95 = sphi 0, %s94
      %s109 = sphi 0, %s95
      %s113 = sphi 0, %s113
      %s115 = sphi 0, %s113
      %s116 = sphi 0, %s115
      %s130 = sphi 0, %s116
      %s136 = sphi 0, %s138
      %s139 = sphi 0, %s136
      %s140 = sphi 0, %s139
      %s156 = sphi 0, %s140
      %s162 = sphi 0, %s164
      %s165 = sphi 0, %s162
      %s166 = sphi 0, %s165
      %s182 = sphi 0, %s166
      %s188 = sphi 0, %s190
      %s191 = sphi 0, %s188
      %s192 = sphi 0, %s191
      %s208 = sphi 0, %s192
    $region4: #{tpu_custom_call.1} parent=1 // loop_header_branch
      %19 = sbr.rel (%p17) target = $region8
    $region5: #{tpu_custom_call.1} parent=1 // loop_body
      %s21 = ssub.s32 %s16, 1
      %s22 = ssub.s32 %s16, 2
      %s23 = sadd.s32 %s16, 1
      %s24 = ssub.s32 %s16, %s23
      %p25 = scmp.eq.s32.totalorder %s24, 0
      %s27 = sadd.s32 %s26, 1
      %s28 = scalar_select %p25, %s26, %s27
      %p31 = pneg %p25
      %p32 = scmp.eq.s32.totalorder %s16, 1
      %p33 = por %p31, %p32
      %p34 = scmp.ne.s32.totalorder %s26, %s29
      %p35 = scmp.eq.s32.totalorder %s16, 0
      %p36 = por %p34, %p35
      %p37 = scmp.ne.s32.totalorder %s26, %s29
      %p38 = scmp.eq.s32.totalorder %s21, 1
      %p39 = por %p37, %p38
      %p40 = scmp.ne.s32.totalorder %s29, %s30
      %p41 = scmp.eq.s32.totalorder %s21, 0
      %p42 = por %p40, %p41
      %p43 = scmp.ne.s32.totalorder %s29, %s30
      %p44 = scmp.eq.s32.totalorder %s22, 1
      %p45 = por %p43, %p44
      %p47 = scmp.ne.s32.totalorder %s30, %s46
      %p48 = scmp.eq.s32.totalorder %s22, 0
      %p49 = por %p47, %p48
      %s51 = sadd.s32 %s50, 1
      %p54 = scmp.eq.s32.totalorder %s16, 1
      %p55 = scmp.ne.s32.totalorder %s50, %s52
      %p56 = scmp.eq.s32.totalorder %s16, 0
      %p57 = por %p55, %p56
      %p58 = scmp.ne.s32.totalorder %s50, %s52
      %p59 = scmp.eq.s32.totalorder %s21, 1
      %p60 = por %p58, %p59
      %p61 = scmp.ne.s32.totalorder %s52, %s53
      %p62 = scmp.eq.s32.totalorder %s21, 0
      %p63 = por %p61, %p62
      %p64 = scmp.ne.s32.totalorder %s52, %s53
      %p65 = scmp.eq.s32.totalorder %s22, 1
      %p66 = por %p64, %p65
      %p68 = scmp.ne.s32.totalorder %s53, %s67
      %p69 = scmp.eq.s32.totalorder %s22, 0
      %p70 = por %p68, %p69
      %s72 = sadd.s32 %s71, 1
      %p75 = scmp.eq.s32.totalorder %s16, 1
      %p76 = scmp.ne.s32.totalorder %s71, %s73
      %p77 = scmp.eq.s32.totalorder %s16, 0
      %p78 = por %p76, %p77
      %p79 = scmp.ne.s32.totalorder %s71, %s73
      %p80 = scmp.eq.s32.totalorder %s21, 1
      %p81 = por %p79, %p80
      %p82 = scmp.ne.s32.totalorder %s73, %s74
      %p83 = scmp.eq.s32.totalorder %s21, 0
      %p84 = por %p82, %p83
      %p85 = scmp.ne.s32.totalorder %s73, %s74
      %p86 = scmp.eq.s32.totalorder %s22, 1
      %p87 = por %p85, %p86
      %p89 = scmp.ne.s32.totalorder %s74, %s88
      %p90 = scmp.eq.s32.totalorder %s22, 0
      %p91 = por %p89, %p90
      %s93 = sadd.s32 %s92, 1
      %p96 = scmp.eq.s32.totalorder %s16, 1
      %p97 = scmp.ne.s32.totalorder %s92, %s94
      %p98 = scmp.eq.s32.totalorder %s16, 0
      %p99 = por %p97, %p98
      %p100 = scmp.ne.s32.totalorder %s92, %s94
      %p101 = scmp.eq.s32.totalorder %s21, 1
      %p102 = por %p100, %p101
      %p103 = scmp.ne.s32.totalorder %s94, %s95
      %p104 = scmp.eq.s32.totalorder %s21, 0
      %p105 = por %p103, %p104
      %p106 = scmp.ne.s32.totalorder %s94, %s95
      %p107 = scmp.eq.s32.totalorder %s22, 1
      %p108 = por %p106, %p107
      %p110 = scmp.ne.s32.totalorder %s95, %s109
      %p111 = scmp.eq.s32.totalorder %s22, 0
      %p112 = por %p110, %p111
      %s114 = sadd.s32 %s113, 1
      %p117 = scmp.eq.s32.totalorder %s16, 1
      %p118 = scmp.ne.s32.totalorder %s113, %s115
      %p119 = scmp.eq.s32.totalorder %s16, 0
      %p120 = por %p118, %p119
      %p121 = scmp.ne.s32.totalorder %s113, %s115
      %p122 = scmp.eq.s32.totalorder %s21, 1
      %p123 = por %p121, %p122
      %p124 = scmp.ne.s32.totalorder %s115, %s116
      %p125 = scmp.eq.s32.totalorder %s21, 0
      %p126 = por %p124, %p125
      %p127 = scmp.ne.s32.totalorder %s115, %s116
      %p128 = scmp.eq.s32.totalorder %s22, 1
      %p129 = por %p127, %p128
      %p131 = scmp.ne.s32.totalorder %s116, %s130
      %p132 = scmp.eq.s32.totalorder %s22, 0
      %p133 = por %p131, %p132
      %s134 = ssub.s32 %s16, %s23
      %p135 = scmp.eq.s32.totalorder %s134, 0
      %s137 = sadd.s32 %s136, 1
      %s138 = scalar_select %p135, %s136, %s137
      %p141 = pneg %p135
      %p142 = scmp.eq.s32.totalorder %s16, 1
      %p143 = por %p141, %p142
      %p144 = scmp.ne.s32.totalorder %s136, %s139
      %p145 = scmp.eq.s32.totalorder %s16, 0
      %p146 = por %p144, %p145
      %p147 = scmp.ne.s32.totalorder %s136, %s139
      %p148 = scmp.eq.s32.totalorder %s21, 1
      %p149 = por %p147, %p148
      %p150 = scmp.ne.s32.totalorder %s139, %s140
      %p151 = scmp.eq.s32.totalorder %s21, 0
      %p152 = por %p150, %p151
      %p153 = scmp.ne.s32.totalorder %s139, %s140
      %p154 = scmp.eq.s32.totalorder %s22, 1
      %p155 = por %p153, %p154
      %p157 = scmp.ne.s32.totalorder %s140, %s156
      %p158 = scmp.eq.s32.totalorder %s22, 0
      %p159 = por %p157, %p158
      %s160 = ssub.s32 %s16, %s23
      %p161 = scmp.eq.s32.totalorder %s160, 0
      %s163 = sadd.s32 %s162, 1
      %s164 = scalar_select %p161, %s162, %s163
      %p167 = pneg %p161
      %p168 = scmp.eq.s32.totalorder %s16, 1
      %p169 = por %p167, %p168
      %p170 = scmp.ne.s32.totalorder %s162, %s165
      %p171 = scmp.eq.s32.totalorder %s16, 0
      %p172 = por %p170, %p171
      %p173 = scmp.ne.s32.totalorder %s162, %s165
      %p174 = scmp.eq.s32.totalorder %s21, 1
      %p175 = por %p173, %p174
      %p176 = scmp.ne.s32.totalorder %s165, %s166
      %p177 = scmp.eq.s32.totalorder %s21, 0
      %p178 = por %p176, %p177
      %p179 = scmp.ne.s32.totalorder %s165, %s166
      %p180 = scmp.eq.s32.totalorder %s22, 1
      %p181 = por %p179, %p180
      %p183 = scmp.ne.s32.totalorder %s166, %s182
      %p184 = scmp.eq.s32.totalorder %s22, 0
      %p185 = por %p183, %p184
      %s186 = ssub.s32 %s16, %s23
      %p187 = scmp.eq.s32.totalorder %s186, 0
      %s189 = sadd.s32 %s188, 1
      %s190 = scalar_select %p187, %s188, %s189
      %p193 = pneg %p187
      %p194 = scmp.eq.s32.totalorder %s16, 1
      %p195 = por %p193, %p194
      %p196 = scmp.ne.s32.totalorder %s188, %s191
      %p197 = scmp.eq.s32.totalorder %s16, 0
      %p198 = por %p196, %p197
      %p199 = scmp.ne.s32.totalorder %s188, %s191
      %p200 = scmp.eq.s32.totalorder %s21, 1
      %p201 = por %p199, %p200
      %p202 = scmp.ne.s32.totalorder %s191, %s192
      %p203 = scmp.eq.s32.totalorder %s21, 0
      %p204 = por %p202, %p203
      %p205 = scmp.ne.s32.totalorder %s191, %s192
      %p206 = scmp.eq.s32.totalorder %s22, 1
      %p207 = por %p205, %p206
      %p209 = scmp.ne.s32.totalorder %s192, %s208
      %p210 = scmp.eq.s32.totalorder %s22, 0
      %p211 = por %p209, %p210
      %p212 = scmp.le.s32.totalorder 1, %s16
      %p213 = scmp.lt.s32.totalorder %s16, 3
      %p214 = pnand %p212, %p213
      %p215 = pneg %p214
      // Predicated region
      $region9: #{tpu_custom_call.1} parent=5 // pred_check
        _
      $region10: #{tpu_custom_call.1} parent=5 // pred_check_branch
        %217 = sbr.rel (%p214) target = $region12
      $region11: #{tpu_custom_call.1} parent=5 // pred_region
        %s218 = ssub.s32 %s16, 1
        // Predicated region
        $region13: #{tpu_custom_call.1} parent=11 // pred_check
          %p219 = pneg %p63
        $region14: #{tpu_custom_call.1} parent=11 // pred_check_branch
          %221 = sbr.rel (%p219) target = $region16
        $region15: #{tpu_custom_call.1} parent=11 // pred_region
          _
        $region16: #{tpu_custom_call.1} parent=11 // pred_fallthru
          _
        // Predicated region
        $region17: #{tpu_custom_call.1} parent=11 // pred_check
          %p222 = pneg %p84
        $region18: #{tpu_custom_call.1} parent=11 // pred_check_branch
          %224 = sbr.rel (%p222) target = $region20
        $region19: #{tpu_custom_call.1} parent=11 // pred_region
          _
        $region20: #{tpu_custom_call.1} parent=11 // pred_fallthru
          _
        // Predicated region
        $region21: #{tpu_custom_call.1} parent=11 // pred_check
          %p225 = pneg %p105
        $region22: #{tpu_custom_call.1} parent=11 // pred_check_branch
          %227 = sbr.rel (%p225) target = $region24
        $region23: #{tpu_custom_call.1} parent=11 // pred_region
          _
        $region24: #{tpu_custom_call.1} parent=11 // pred_fallthru
          _
        // Predicated region
        $region25: #{tpu_custom_call.1} parent=11 // pred_check
          %p228 = pneg %p126
        $region26: #{tpu_custom_call.1} parent=11 // pred_check_branch
          %230 = sbr.rel (%p228) target = $region28
        $region27: #{tpu_custom_call.1} parent=11 // pred_region
          _
        $region28: #{tpu_custom_call.1} parent=11 // pred_fallthru
          _
      $region12: #{tpu_custom_call.1} parent=5 // pred_fallthru
        _
      %p231 = scmp.lt.s32.totalorder %s16, 2
      // Predicated region
      $region29: #{tpu_custom_call.1} parent=5 // pred_check
        %p232 = pneg %p231
      $region30: #{tpu_custom_call.1} parent=5 // pred_check_branch
        %234 = sbr.rel (%p232) target = $region32
      $region31: #{tpu_custom_call.1} parent=5 // pred_region
        // Predicated region
        $region33: #{tpu_custom_call.1} parent=31 // pred_check
          %p235 = pneg %p36
        $region34: #{tpu_custom_call.1} parent=31 // pred_check_branch
          %237 = sbr.rel (%p235) target = $region36
        $region35: #{tpu_custom_call.1} parent=31 // pred_region
          %p238 = scmp.lt.s32.totalorder %s16, 1
          %s239 = scalar_select %p238, %s16, 1
          %s240 = smul.addr %s239, 32
          %s241 = smul.addr %s240, 8
          %s242 = scalar_lea.vmem %s0, %s241
        $region36: #{tpu_custom_call.1} parent=31 // pred_fallthru
          _
        // Predicated region
        $region37: #{tpu_custom_call.1} parent=31 // pred_check
          %p243 = pneg %p146
        $region38: #{tpu_custom_call.1} parent=31 // pred_check_branch
          %245 = sbr.rel (%p243) target = $region40
        $region39: #{tpu_custom_call.1} parent=31 // pred_region
          %p246 = scmp.lt.s32.totalorder %s16, 1
          %s247 = scalar_select %p246, %s16, 1
          %s248 = scalar_lea.vmem %s5, %s247
        $region40: #{tpu_custom_call.1} parent=31 // pred_fallthru
          _
        // Predicated region
        $region41: #{tpu_custom_call.1} parent=31 // pred_check
          %p249 = pneg %p172
        $region42: #{tpu_custom_call.1} parent=31 // pred_check_branch
          %251 = sbr.rel (%p249) target = $region44
        $region43: #{tpu_custom_call.1} parent=31 // pred_region
          %p252 = scmp.lt.s32.totalorder %s16, 1
          %s253 = scalar_select %p252, %s16, 1
          %s254 = scalar_lea.vmem %s6, %s253
        $region44: #{tpu_custom_call.1} parent=31 // pred_fallthru
          _
      $region32: #{tpu_custom_call.1} parent=5 // pred_fallthru
        _
      %p255 = scmp.le.s32.totalorder 1, %s16
      %p256 = scmp.lt.s32.totalorder %s16, 3
      %p257 = pnand %p255, %p256
      %p258 = pneg %p257
      // Predicated region
      $region45: #{tpu_custom_call.1} parent=5 // pred_check
        _
      $region46: #{tpu_custom_call.1} parent=5 // pred_check_branch
        %260 = sbr.rel (%p257) target = $region48
      $region47: #{tpu_custom_call.1} parent=5 // pred_region
        %s261 = ssub.s32 %s16, 1
        %p262 = scmp.lt.s32.totalorder %s21, 1
        %s263 = scalar_select %p262, %s21, 1
        %s264 = smul.addr %s263, 32
        %s265 = smul.addr %s264, 8
        %s266 = scalar_lea.vmem %s0, %s265
        %p267 = pneg %p42
        %p268 = pneg %p39
        %p269 = pneg %p63
        %p270 = pneg %p60
        %p271 = pneg %p84
        %p272 = pneg %p81
        %p273 = pneg %p105
        %p274 = pneg %p102
        %p275 = pneg %p126
        %p276 = pneg %p123
        %p277 = scmp.lt.s32.totalorder %s21, 1
        %s278 = scalar_select %p277, %s21, 1
        %s279 = scalar_lea.vmem %s5, %s278
        %p280 = pneg %p152
        %p281 = pneg %p149
        %p282 = scmp.lt.s32.totalorder %s21, 1
        %s283 = scalar_select %p282, %s21, 1
        %s284 = scalar_lea.vmem %s6, %s283
        %p285 = pneg %p178
        %p286 = pneg %p175
        %p287 = pneg %p204
        %p288 = pneg %p201
        %s289 = sand.u32 %s191, 1
        %s290 = scalar_lea.sflag [#allocation4], %s289
        %s291 = sand.u32 %s191, 1
        %s292 = smul.addr %s291, 256
        %s293 = scalar_lea.vmem [#allocation3], %s292
        %p294 = scmp.lt.s32.totalorder %s21, 1
        %s295 = scalar_select %p294, %s21, 1
        %s296 = smul.addr %s295, 32
        %s297 = smul.addr %s296, 8
        %s298 = scalar_lea.vmem %s0, %s297
        %p299 = scmp.lt.s32.totalorder %s21, 1
        %s300 = scalar_select %p299, %s21, 1
        %s301 = scalar_lea.vmem %s5, %s300
        %p302 = scmp.lt.s32.totalorder %s21, 1
        %s303 = scalar_select %p302, %s21, 1
        %s304 = scalar_lea.vmem %s6, %s303
        %v308 = vlaneseq
        %v309 = vshrl.u32 %v308, 7
        %v310 = vadd.s32 %v309, 8
        %v311 = vadd.s32 %v309, 16
        %v312 = vadd.s32 %v309, 24
        %v313 = vadd.s32 %v309, 32
        %v314 = vadd.s32 %v309, 40
        %v315 = vadd.s32 %v309, 48
        %v316 = vadd.s32 %v309, 56
        %v317 = vadd.s32 %v309, 64
        %v318 = vadd.s32 %v309, 72
        %v319 = vadd.s32 %v309, 80
        %v320 = vadd.s32 %v309, 88
        %v321 = vadd.s32 %v309, 96
        %v322 = vadd.s32 %v309, 104
        %v323 = vadd.s32 %v309, 112
        %v324 = vadd.s32 %v309, 120
        %v325 = vadd.s32 %v309, 128
        %v326 = vadd.s32 %v309, 136
        %v327 = vadd.s32 %v309, 144
        %v328 = vadd.s32 %v309, 152
        %v329 = vadd.s32 %v309, 160
        %v330 = vadd.s32 %v309, 168
        %v331 = vadd.s32 %v309, 176
        %v332 = vadd.s32 %v309, 184
        %v333 = vadd.s32 %v309, 192
        %v334 = vadd.s32 %v309, 200
        %v335 = vadd.s32 %v309, 208
        %v336 = vadd.s32 %v309, 216
        %v337 = vadd.s32 %v309, 224
        %v338 = vadd.s32 %v309, 232
        %v339 = vadd.s32 %v309, 240
        %v340 = vadd.s32 %v309, 248
        %vm341 = vcmp.lt.s32.totalorder %v309, 0
        %v342 = vsub.s32 0, %v309
        %v343 = vsel %vm341, %v342, %v309
        %v344 = vshrl.u32 %v343, 4
        %v345 = vand.u32 %v343, 15
        %v346 = vsub.s32 0, %v345
        %v347 = vsel %vm341, %v346, %v345
        %vm348 = vcmp.lt.s32.totalorder %v310, 0
        %v349 = vsub.s32 0, %v310
        %v350 = vsel %vm348, %v349, %v310
        %v351 = vshrl.u32 %v350, 4
        %v352 = vand.u32 %v350, 15
        %v353 = vsub.s32 0, %v352
        %v354 = vsel %vm348, %v353, %v352
        %vm355 = vcmp.lt.s32.totalorder %v311, 0
        %v356 = vsub.s32 0, %v311
        %v357 = vsel %vm355, %v356, %v311
        %v358 = vshrl.u32 %v357, 4
        %v359 = vand.u32 %v357, 15
        %v360 = vsub.s32 0, %v359
        %v361 = vsel %vm355, %v360, %v359
        %vm362 = vcmp.lt.s32.totalorder %v312, 0
        %v363 = vsub.s32 0, %v312
        %v364 = vsel %vm362, %v363, %v312
        %v365 = vshrl.u32 %v364, 4
        %v366 = vand.u32 %v364, 15
        %v367 = vsub.s32 0, %v366
        %v368 = vsel %vm362, %v367, %v366
        %vm369 = vcmp.lt.s32.totalorder %v313, 0
        %v370 = vsub.s32 0, %v313
        %v371 = vsel %vm369, %v370, %v313
        %v372 = vshrl.u32 %v371, 4
        %v373 = vand.u32 %v371, 15
        %v374 = vsub.s32 0, %v373
        %v375 = vsel %vm369, %v374, %v373
        %vm376 = vcmp.lt.s32.totalorder %v314, 0
        %v377 = vsub.s32 0, %v314
        %v378 = vsel %vm376, %v377, %v314
        %v379 = vshrl.u32 %v378, 4
        %v380 = vand.u32 %v378, 15
        %v381 = vsub.s32 0, %v380
        %v382 = vsel %vm376, %v381, %v380
        %vm383 = vcmp.lt.s32.totalorder %v315, 0
        %v384 = vsub.s32 0, %v315
        %v385 = vsel %vm383, %v384, %v315
        %v386 = vshrl.u32 %v385, 4
        %v387 = vand.u32 %v385, 15
        %v388 = vsub.s32 0, %v387
        %v389 = vsel %vm383, %v388, %v387
        %vm390 = vcmp.lt.s32.totalorder %v316, 0
        %v391 = vsub.s32 0, %v316
        %v392 = vsel %vm390, %v391, %v316
        %v393 = vshrl.u32 %v392, 4
        %v394 = vand.u32 %v392, 15
        %v395 = vsub.s32 0, %v394
        %v396 = vsel %vm390, %v395, %v394
        %vm397 = vcmp.lt.s32.totalorder %v317, 0
        %v398 = vsub.s32 0, %v317
        %v399 = vsel %vm397, %v398, %v317
        %v400 = vshrl.u32 %v399, 4
        %v401 = vand.u32 %v399, 15
        %v402 = vsub.s32 0, %v401
        %v403 = vsel %vm397, %v402, %v401
        %vm404 = vcmp.lt.s32.totalorder %v318, 0
        %v405 = vsub.s32 0, %v318
        %v406 = vsel %vm404, %v405, %v318
        %v407 = vshrl.u32 %v406, 4
        %v408 = vand.u32 %v406, 15
        %v409 = vsub.s32 0, %v408
        %v410 = vsel %vm404, %v409, %v408
        %vm411 = vcmp.lt.s32.totalorder %v319, 0
        %v412 = vsub.s32 0, %v319
        %v413 = vsel %vm411, %v412, %v319
        %v414 = vshrl.u32 %v413, 4
        %v415 = vand.u32 %v413, 15
        %v416 = vsub.s32 0, %v415
        %v417 = vsel %vm411, %v416, %v415
        %vm418 = vcmp.lt.s32.totalorder %v320, 0
        %v419 = vsub.s32 0, %v320
        %v420 = vsel %vm418, %v419, %v320
        %v421 = vshrl.u32 %v420, 4
        %v422 = vand.u32 %v420, 15
        %v423 = vsub.s32 0, %v422
        %v424 = vsel %vm418, %v423, %v422
        %vm425 = vcmp.lt.s32.totalorder %v321, 0
        %v426 = vsub.s32 0, %v321
        %v427 = vsel %vm425, %v426, %v321
        %v428 = vshrl.u32 %v427, 4
        %v429 = vand.u32 %v427, 15
        %v430 = vsub.s32 0, %v429
        %v431 = vsel %vm425, %v430, %v429
        %vm432 = vcmp.lt.s32.totalorder %v322, 0
        %v433 = vsub.s32 0, %v322
        %v434 = vsel %vm432, %v433, %v322
        %v435 = vshrl.u32 %v434, 4
        %v436 = vand.u32 %v434, 15
        %v437 = vsub.s32 0, %v436
        %v438 = vsel %vm432, %v437, %v436
        %vm439 = vcmp.lt.s32.totalorder %v323, 0
        %v440 = vsub.s32 0, %v323
        %v441 = vsel %vm439, %v440, %v323
        %v442 = vshrl.u32 %v441, 4
        %v443 = vand.u32 %v441, 15
        %v444 = vsub.s32 0, %v443
        %v445 = vsel %vm439, %v444, %v443
        %vm446 = vcmp.lt.s32.totalorder %v324, 0
        %v447 = vsub.s32 0, %v324
        %v448 = vsel %vm446, %v447, %v324
        %v449 = vshrl.u32 %v448, 4
        %v450 = vand.u32 %v448, 15
        %v451 = vsub.s32 0, %v450
        %v452 = vsel %vm446, %v451, %v450
        %vm453 = vcmp.lt.s32.totalorder %v325, 0
        %v454 = vsub.s32 0, %v325
        %v455 = vsel %vm453, %v454, %v325
        %v456 = vshrl.u32 %v455, 4
        %v457 = vand.u32 %v455, 15
        %v458 = vsub.s32 0, %v457
        %v459 = vsel %vm453, %v458, %v457
        %vm460 = vcmp.lt.s32.totalorder %v326, 0
        %v461 = vsub.s32 0, %v326
        %v462 = vsel %vm460, %v461, %v326
        %v463 = vshrl.u32 %v462, 4
        %v464 = vand.u32 %v462, 15
        %v465 = vsub.s32 0, %v464
        %v466 = vsel %vm460, %v465, %v464
        %vm467 = vcmp.lt.s32.totalorder %v327, 0
        %v468 = vsub.s32 0, %v327
        %v469 = vsel %vm467, %v468, %v327
        %v470 = vshrl.u32 %v469, 4
        %v471 = vand.u32 %v469, 15
        %v472 = vsub.s32 0, %v471
        %v473 = vsel %vm467, %v472, %v471
        %vm474 = vcmp.lt.s32.totalorder %v328, 0
        %v475 = vsub.s32 0, %v328
        %v476 = vsel %vm474, %v475, %v328
        %v477 = vshrl.u32 %v476, 4
        %v478 = vand.u32 %v476, 15
        %v479 = vsub.s32 0, %v478
        %v480 = vsel %vm474, %v479, %v478
        %vm481 = vcmp.lt.s32.totalorder %v329, 0
        %v482 = vsub.s32 0, %v329
        %v483 = vsel %vm481, %v482, %v329
        %v484 = vshrl.u32 %v483, 4
        %v485 = vand.u32 %v483, 15
        %v486 = vsub.s32 0, %v485
        %v487 = vsel %vm481, %v486, %v485
        %vm488 = vcmp.lt.s32.totalorder %v330, 0
        %v489 = vsub.s32 0, %v330
        %v490 = vsel %vm488, %v489, %v330
        %v491 = vshrl.u32 %v490, 4
        %v492 = vand.u32 %v490, 15
        %v493 = vsub.s32 0, %v492
        %v494 = vsel %vm488, %v493, %v492
        %vm495 = vcmp.lt.s32.totalorder %v331, 0
        %v496 = vsub.s32 0, %v331
        %v497 = vsel %vm495, %v496, %v331
        %v498 = vshrl.u32 %v497, 4
        %v499 = vand.u32 %v497, 15
        %v500 = vsub.s32 0, %v499
        %v501 = vsel %vm495, %v500, %v499
        %vm502 = vcmp.lt.s32.totalorder %v332, 0
        %v503 = vsub.s32 0, %v332
        %v504 = vsel %vm502, %v503, %v332
        %v505 = vshrl.u32 %v504, 4
        %v506 = vand.u32 %v504, 15
        %v507 = vsub.s32 0, %v506
        %v508 = vsel %vm502, %v507, %v506
        %vm509 = vcmp.lt.s32.totalorder %v333, 0
        %v510 = vsub.s32 0, %v333
        %v511 = vsel %vm509, %v510, %v333
        %v512 = vshrl.u32 %v511, 4
        %v513 = vand.u32 %v511, 15
        %v514 = vsub.s32 0, %v513
        %v515 = vsel %vm509, %v514, %v513
        %vm516 = vcmp.lt.s32.totalorder %v334, 0
        %v517 = vsub.s32 0, %v334
        %v518 = vsel %vm516, %v517, %v334
        %v519 = vshrl.u32 %v518, 4
        %v520 = vand.u32 %v518, 15
        %v521 = vsub.s32 0, %v520
        %v522 = vsel %vm516, %v521, %v520
        %vm523 = vcmp.lt.s32.totalorder %v335, 0
        %v524 = vsub.s32 0, %v335
        %v525 = vsel %vm523, %v524, %v335
        %v526 = vshrl.u32 %v525, 4
        %v527 = vand.u32 %v525, 15
        %v528 = vsub.s32 0, %v527
        %v529 = vsel %vm523, %v528, %v527
        %vm530 = vcmp.lt.s32.totalorder %v336, 0
        %v531 = vsub.s32 0, %v336
        %v532 = vsel %vm530, %v531, %v336
        %v533 = vshrl.u32 %v532, 4
        %v534 = vand.u32 %v532, 15
        %v535 = vsub.s32 0, %v534
        %v536 = vsel %vm530, %v535, %v534
        %vm537 = vcmp.lt.s32.totalorder %v337, 0
        %v538 = vsub.s32 0, %v337
        %v539 = vsel %vm537, %v538, %v337
        %v540 = vshrl.u32 %v539, 4
        %v541 = vand.u32 %v539, 15
        %v542 = vsub.s32 0, %v541
        %v543 = vsel %vm537, %v542, %v541
        %vm544 = vcmp.lt.s32.totalorder %v338, 0
        %v545 = vsub.s32 0, %v338
        %v546 = vsel %vm544, %v545, %v338
        %v547 = vshrl.u32 %v546, 4
        %v548 = vand.u32 %v546, 15
        %v549 = vsub.s32 0, %v548
        %v550 = vsel %vm544, %v549, %v548
        %vm551 = vcmp.lt.s32.totalorder %v339, 0
        %v552 = vsub.s32 0, %v339
        %v553 = vsel %vm551, %v552, %v339
        %v554 = vshrl.u32 %v553, 4
        %v555 = vand.u32 %v553, 15
        %v556 = vsub.s32 0, %v555
        %v557 = vsel %vm551, %v556, %v555
        %vm558 = vcmp.lt.s32.totalorder %v340, 0
        %v559 = vsub.s32 0, %v340
        %v560 = vsel %vm558, %v559, %v340
        %v561 = vshrl.u32 %v560, 4
        %v562 = vand.u32 %v560, 15
        %v563 = vsub.s32 0, %v562
        %v564 = vsel %vm558, %v563, %v562
        %vm565 = vcmp.ne.s32.totalorder %v347, 0
        %vm566 = vcmp.ne.s32.totalorder %v354, 0
        %vm567 = vcmp.ne.s32.totalorder %v361, 0
        %vm568 = vcmp.ne.s32.totalorder %v368, 0
        %vm569 = vcmp.ne.s32.totalorder %v375, 0
        %vm570 = vcmp.ne.s32.totalorder %v382, 0
        %vm571 = vcmp.ne.s32.totalorder %v389, 0
        %vm572 = vcmp.ne.s32.totalorder %v396, 0
        %vm573 = vcmp.ne.s32.totalorder %v403, 0
        %vm574 = vcmp.ne.s32.totalorder %v410, 0
        %vm575 = vcmp.ne.s32.totalorder %v417, 0
        %vm576 = vcmp.ne.s32.totalorder %v424, 0
        %vm577 = vcmp.ne.s32.totalorder %v431, 0
        %vm578 = vcmp.ne.s32.totalorder %v438, 0
        %vm579 = vcmp.ne.s32.totalorder %v445, 0
        %vm580 = vcmp.ne.s32.totalorder %v452, 0
        %vm581 = vcmp.ne.s32.totalorder %v459, 0
        %vm582 = vcmp.ne.s32.totalorder %v466, 0
        %vm583 = vcmp.ne.s32.totalorder %v473, 0
        %vm584 = vcmp.ne.s32.totalorder %v480, 0
        %vm585 = vcmp.ne.s32.totalorder %v487, 0
        %vm586 = vcmp.ne.s32.totalorder %v494, 0
        %vm587 = vcmp.ne.s32.totalorder %v501, 0
        %vm588 = vcmp.ne.s32.totalorder %v508, 0
        %vm589 = vcmp.ne.s32.totalorder %v515, 0
        %vm590 = vcmp.ne.s32.totalorder %v522, 0
        %vm591 = vcmp.ne.s32.totalorder %v529, 0
        %vm592 = vcmp.ne.s32.totalorder %v536, 0
        %vm593 = vcmp.ne.s32.totalorder %v543, 0
        %vm594 = vcmp.ne.s32.totalorder %v550, 0
        %vm595 = vcmp.ne.s32.totalorder %v557, 0
        %vm596 = vcmp.ne.s32.totalorder %v564, 0
        %vm597 = vcmp.lt.s32.totalorder %v347, 0
        %vm598 = vcmp.lt.s32.totalorder %v354, 0
        %vm599 = vcmp.lt.s32.totalorder %v361, 0
        %vm600 = vcmp.lt.s32.totalorder %v368, 0
        %vm601 = vcmp.lt.s32.totalorder %v375, 0
        %vm602 = vcmp.lt.s32.totalorder %v382, 0
        %vm603 = vcmp.lt.s32.totalorder %v389, 0
        %vm604 = vcmp.lt.s32.totalorder %v396, 0
        %vm605 = vcmp.lt.s32.totalorder %v403, 0
        %vm606 = vcmp.lt.s32.totalorder %v410, 0
        %vm607 = vcmp.lt.s32.totalorder %v417, 0
        %vm608 = vcmp.lt.s32.totalorder %v424, 0
        %vm609 = vcmp.lt.s32.totalorder %v431, 0
        %vm610 = vcmp.lt.s32.totalorder %v438, 0
        %vm611 = vcmp.lt.s32.totalorder %v445, 0
        %vm612 = vcmp.lt.s32.totalorder %v452, 0
        %vm613 = vcmp.lt.s32.totalorder %v459, 0
        %vm614 = vcmp.lt.s32.totalorder %v466, 0
        %vm615 = vcmp.lt.s32.totalorder %v473, 0
        %vm616 = vcmp.lt.s32.totalorder %v480, 0
        %vm617 = vcmp.lt.s32.totalorder %v487, 0
        %vm618 = vcmp.lt.s32.totalorder %v494, 0
        %vm619 = vcmp.lt.s32.totalorder %v501, 0
        %vm620 = vcmp.lt.s32.totalorder %v508, 0
        %vm621 = vcmp.lt.s32.totalorder %v515, 0
        %vm622 = vcmp.lt.s32.totalorder %v522, 0
        %vm623 = vcmp.lt.s32.totalorder %v529, 0
        %vm624 = vcmp.lt.s32.totalorder %v536, 0
        %vm625 = vcmp.lt.s32.totalorder %v543, 0
        %vm626 = vcmp.lt.s32.totalorder %v550, 0
        %vm627 = vcmp.lt.s32.totalorder %v557, 0
        %vm628 = vcmp.lt.s32.totalorder %v564, 0
        %vm629 = vmand %vm597, %vm565
        %vm630 = vmand %vm598, %vm566
        %vm631 = vmand %vm599, %vm567
        %vm632 = vmand %vm600, %vm568
        %vm633 = vmand %vm601, %vm569
        %vm634 = vmand %vm602, %vm570
        %vm635 = vmand %vm603, %vm571
        %vm636 = vmand %vm604, %vm572
        %vm637 = vmand %vm605, %vm573
        %vm638 = vmand %vm606, %vm574
        %vm639 = vmand %vm607, %vm575
        %vm640 = vmand %vm608, %vm576
        %vm641 = vmand %vm609, %vm577
        %vm642 = vmand %vm610, %vm578
        %vm643 = vmand %vm611, %vm579
        %vm644 = vmand %vm612, %vm580
        %vm645 = vmand %vm613, %vm581
        %vm646 = vmand %vm614, %vm582
        %vm647 = vmand %vm615, %vm583
        %vm648 = vmand %vm616, %vm584
        %vm649 = vmand %vm617, %vm585
        %vm650 = vmand %vm618, %vm586
        %vm651 = vmand %vm619, %vm587
        %vm652 = vmand %vm620, %vm588
        %vm653 = vmand %vm621, %vm589
        %vm654 = vmand %vm622, %vm590
        %vm655 = vmand %vm623, %vm591
        %vm656 = vmand %vm624, %vm592
        %vm657 = vmand %vm625, %vm593
        %vm658 = vmand %vm626, %vm594
        %vm659 = vmand %vm627, %vm595
        %vm660 = vmand %vm628, %vm596
        %v661 = vadd.s32 %v347, 16
        %v662 = vadd.s32 %v354, 16
        %v663 = vadd.s32 %v361, 16
        %v664 = vadd.s32 %v368, 16
        %v665 = vadd.s32 %v375, 16
        %v666 = vadd.s32 %v382, 16
        %v667 = vadd.s32 %v389, 16
        %v668 = vadd.s32 %v396, 16
        %v669 = vadd.s32 %v403, 16
        %v670 = vadd.s32 %v410, 16
        %v671 = vadd.s32 %v417, 16
        %v672 = vadd.s32 %v424, 16
        %v673 = vadd.s32 %v431, 16
        %v674 = vadd.s32 %v438, 16
        %v675 = vadd.s32 %v445, 16
        %v676 = vadd.s32 %v452, 16
        %v677 = vadd.s32 %v459, 16
        %v678 = vadd.s32 %v466, 16
        %v679 = vadd.s32 %v473, 16
        %v680 = vadd.s32 %v480, 16
        %v681 = vadd.s32 %v487, 16
        %v682 = vadd.s32 %v494, 16
        %v683 = vadd.s32 %v501, 16
        %v684 = vadd.s32 %v508, 16
        %v685 = vadd.s32 %v515, 16
        %v686 = vadd.s32 %v522, 16
        %v687 = vadd.s32 %v529, 16
        %v688 = vadd.s32 %v536, 16
        %v689 = vadd.s32 %v543, 16
        %v690 = vadd.s32 %v550, 16
        %v691 = vadd.s32 %v557, 16
        %v692 = vadd.s32 %v564, 16
        %v693 = vsel %vm629, %v661, %v347
        %v694 = vsel %vm630, %v662, %v354
        %v695 = vsel %vm631, %v663, %v361
        %v696 = vsel %vm632, %v664, %v368
        %v697 = vsel %vm633, %v665, %v375
        %v698 = vsel %vm634, %v666, %v382
        %v699 = vsel %vm635, %v667, %v389
        %v700 = vsel %vm636, %v668, %v396
        %v701 = vsel %vm637, %v669, %v403
        %v702 = vsel %vm638, %v670, %v410
        %v703 = vsel %vm639, %v671, %v417
        %v704 = vsel %vm640, %v672, %v424
        %v705 = vsel %vm641, %v673, %v431
        %v706 = vsel %vm642, %v674, %v438
        %v707 = vsel %vm643, %v675, %v445
        %v708 = vsel %vm644, %v676, %v452
        %v709 = vsel %vm645, %v677, %v459
        %v710 = vsel %vm646, %v678, %v466
        %v711 = vsel %vm647, %v679, %v473
        %v712 = vsel %vm648, %v680, %v480
        %v713 = vsel %vm649, %v681, %v487
        %v714 = vsel %vm650, %v682, %v494
        %v715 = vsel %vm651, %v683, %v501
        %v716 = vsel %vm652, %v684, %v508
        %v717 = vsel %vm653, %v685, %v515
        %v718 = vsel %vm654, %v686, %v522
        %v719 = vsel %vm655, %v687, %v529
        %v720 = vsel %vm656, %v688, %v536
        %v721 = vsel %vm657, %v689, %v543
        %v722 = vsel %vm658, %v690, %v550
        %v723 = vsel %vm659, %v691, %v557
        %v724 = vsel %vm660, %v692, %v564
        %vm725 = vcmp.ge.s32.totalorder %v693, 1
        %vm726 = vcmp.ge.s32.totalorder %v694, 1
        %vm727 = vcmp.ge.s32.totalorder %v695, 1
        %vm728 = vcmp.ge.s32.totalorder %v696, 1
        %vm729 = vcmp.ge.s32.totalorder %v697, 1
        %vm730 = vcmp.ge.s32.totalorder %v698, 1
        %vm731 = vcmp.ge.s32.totalorder %v699, 1
        %vm732 = vcmp.ge.s32.totalorder %v700, 1
        %vm733 = vcmp.ge.s32.totalorder %v701, 1
        %vm734 = vcmp.ge.s32.totalorder %v702, 1
        %vm735 = vcmp.ge.s32.totalorder %v703, 1
        %vm736 = vcmp.ge.s32.totalorder %v704, 1
        %vm737 = vcmp.ge.s32.totalorder %v705, 1
        %vm738 = vcmp.ge.s32.totalorder %v706, 1
        %vm739 = vcmp.ge.s32.totalorder %v707, 1
        %vm740 = vcmp.ge.s32.totalorder %v708, 1
        %vm741 = vcmp.ge.s32.totalorder %v709, 1
        %vm742 = vcmp.ge.s32.totalorder %v710, 1
        %vm743 = vcmp.ge.s32.totalorder %v711, 1
        %vm744 = vcmp.ge.s32.totalorder %v712, 1
        %vm745 = vcmp.ge.s32.totalorder %v713, 1
        %vm746 = vcmp.ge.s32.totalorder %v714, 1
        %vm747 = vcmp.ge.s32.totalorder %v715, 1
        %vm748 = vcmp.ge.s32.totalorder %v716, 1
        %vm749 = vcmp.ge.s32.totalorder %v717, 1
        %vm750 = vcmp.ge.s32.totalorder %v718, 1
        %vm751 = vcmp.ge.s32.totalorder %v719, 1
        %vm752 = vcmp.ge.s32.totalorder %v720, 1
        %vm753 = vcmp.ge.s32.totalorder %v721, 1
        %vm754 = vcmp.ge.s32.totalorder %v722, 1
        %vm755 = vcmp.ge.s32.totalorder %v723, 1
        %vm756 = vcmp.ge.s32.totalorder %v724, 1
        %vm757 = vcmp.le.s32.totalorder %v693, 14
        %vm758 = vcmp.le.s32.totalorder %v694, 14
        %vm759 = vcmp.le.s32.totalorder %v695, 14
        %vm760 = vcmp.le.s32.totalorder %v696, 14
        %vm761 = vcmp.le.s32.totalorder %v697, 14
        %vm762 = vcmp.le.s32.totalorder %v698, 14
        %vm763 = vcmp.le.s32.totalorder %v699, 14
        %vm764 = vcmp.le.s32.totalorder %v700, 14
        %vm765 = vcmp.le.s32.totalorder %v701, 14
        %vm766 = vcmp.le.s32.totalorder %v702, 14
        %vm767 = vcmp.le.s32.totalorder %v703, 14
        %vm768 = vcmp.le.s32.totalorder %v704, 14
        %vm769 = vcmp.le.s32.totalorder %v705, 14
        %vm770 = vcmp.le.s32.totalorder %v706, 14
        %vm771 = vcmp.le.s32.totalorder %v707, 14
        %vm772 = vcmp.le.s32.totalorder %v708, 14
        %vm773 = vcmp.le.s32.totalorder %v709, 14
        %vm774 = vcmp.le.s32.totalorder %v710, 14
        %vm775 = vcmp.le.s32.totalorder %v711, 14
        %vm776 = vcmp.le.s32.totalorder %v712, 14
        %vm777 = vcmp.le.s32.totalorder %v713, 14
        %vm778 = vcmp.le.s32.totalorder %v714, 14
        %vm779 = vcmp.le.s32.totalorder %v715, 14
        %vm780 = vcmp.le.s32.totalorder %v716, 14
        %vm781 = vcmp.le.s32.totalorder %v717, 14
        %vm782 = vcmp.le.s32.totalorder %v718, 14
        %vm783 = vcmp.le.s32.totalorder %v719, 14
        %vm784 = vcmp.le.s32.totalorder %v720, 14
        %vm785 = vcmp.le.s32.totalorder %v721, 14
        %vm786 = vcmp.le.s32.totalorder %v722, 14
        %vm787 = vcmp.le.s32.totalorder %v723, 14
        %vm788 = vcmp.le.s32.totalorder %v724, 14
        %vm789 = vcmask 519168
        %790 = vst.msk [vmem:[#allocation2] sm:$0xf] %vm789, 0
        %791 = vst.msk [vmem:[#allocation2 + $0x4] sm:$0xf] %vm789, 0
        %792 = vst.msk [vmem:[#allocation2 + $0x8] sm:$0xf] %vm789, 0
        %793 = vst.msk [vmem:[#allocation2 + $0x8c] sm:$0xf] %vm789, 0
        %794 = vst.msk [vmem:[#allocation2 + $0x90] sm:$0xf] %vm789, 0
        %795 = vst.msk [vmem:[#allocation2 + $0x94] sm:$0xf] %vm789, 0
        %v796 = vld [vmem:[%s298] sm:$0xff]
        %v797 = vld [vmem:[%s298 + $0x8] sm:$0xff]
        %v798 = vld [vmem:[%s298 + $0x10] sm:$0xff]
        %v799 = vld [vmem:[%s298 + $0x18] sm:$0xff]
        %v800 = vld [vmem:[%s298 + $0x20] sm:$0xff]
        %v801 = vld [vmem:[%s298 + $0x28] sm:$0xff]
        %v802 = vld [vmem:[%s298 + $0x30] sm:$0xff]
        %v803 = vld [vmem:[%s298 + $0x38] sm:$0xff]
        %v804 = vld [vmem:[%s298 + $0x40] sm:$0xff]
        %v805 = vld [vmem:[%s298 + $0x48] sm:$0xff]
        %v806 = vld [vmem:[%s298 + $0x50] sm:$0xff]
        %v807 = vld [vmem:[%s298 + $0x58] sm:$0xff]
        %v808 = vld [vmem:[%s298 + $0x60] sm:$0xff]
        %v809 = vld [vmem:[%s298 + $0x68] sm:$0xff]
        %v810 = vld [vmem:[%s298 + $0x70] sm:$0xff]
        %v811 = vld [vmem:[%s298 + $0x78] sm:$0xff]
        %v812 = vld [vmem:[%s298 + $0x80] sm:$0xff]
        %v813 = vld [vmem:[%s298 + $0x88] sm:$0xff]
        %v814 = vld [vmem:[%s298 + $0x90] sm:$0xff]
        %v815 = vld [vmem:[%s298 + $0x98] sm:$0xff]
        %v816 = vld [vmem:[%s298 + $0xa0] sm:$0xff]
        %v817 = vld [vmem:[%s298 + $0xa8] sm:$0xff]
        %v818 = vld [vmem:[%s298 + $0xb0] sm:$0xff]
        %v819 = vld [vmem:[%s298 + $0xb8] sm:$0xff]
        %v820 = vld [vmem:[%s298 + $0xc0] sm:$0xff]
        %v821 = vld [vmem:[%s298 + $0xc8] sm:$0xff]
        %v822 = vld [vmem:[%s298 + $0xd0] sm:$0xff]
        %v823 = vld [vmem:[%s298 + $0xd8] sm:$0xff]
        %v824 = vld [vmem:[%s298 + $0xe0] sm:$0xff]
        %v825 = vld [vmem:[%s298 + $0xe8] sm:$0xff]
        %v826 = vld [vmem:[%s298 + $0xf0] sm:$0xff]
        %v827 = vld [vmem:[%s298 + $0xf8] sm:$0xff]
        %v828 = vpack.c.bf16 %v796, %v796
        %v829 = vpack.c.bf16 %v797, %v797
        %v830 = vpack.c.bf16 %v798, %v798
        %v831 = vpack.c.bf16 %v799, %v799
        %v832 = vpack.c.bf16 %v800, %v800
        %v833 = vpack.c.bf16 %v801, %v801
        %v834 = vpack.c.bf16 %v802, %v802
        %v835 = vpack.c.bf16 %v803, %v803
        %v836 = vpack.c.bf16 %v804, %v804
        %v837 = vpack.c.bf16 %v805, %v805
        %v838 = vpack.c.bf16 %v806, %v806
        %v839 = vpack.c.bf16 %v807, %v807
        %v840 = vpack.c.bf16 %v808, %v808
        %v841 = vpack.c.bf16 %v809, %v809
        %v842 = vpack.c.bf16 %v810, %v810
        %v843 = vpack.c.bf16 %v811, %v811
        %v844 = vpack.c.bf16 %v812, %v812
        %v845 = vpack.c.bf16 %v813, %v813
        %v846 = vpack.c.bf16 %v814, %v814
        %v847 = vpack.c.bf16 %v815, %v815
        %v848 = vpack.c.bf16 %v816, %v816
        %v849 = vpack.c.bf16 %v817, %v817
        %v850 = vpack.c.bf16 %v818, %v818
        %v851 = vpack.c.bf16 %v819, %v819
        %v852 = vpack.c.bf16 %v820, %v820
        %v853 = vpack.c.bf16 %v821, %v821
        %v854 = vpack.c.bf16 %v822, %v822
        %v855 = vpack.c.bf16 %v823, %v823
        %v856 = vpack.c.bf16 %v824, %v824
        %v857 = vpack.c.bf16 %v825, %v825
        %v858 = vpack.c.bf16 %v826, %v826
        %v859 = vpack.c.bf16 %v827, %v827
        %860 = vst.msk [vmem:[#allocation2 + $0xc] sm:$0xf] %vm789, %v828
        %861 = vst.msk [vmem:[#allocation2 + $0x10] sm:$0xf] %vm789, %v829
        %862 = vst.msk [vmem:[#allocation2 + $0x14] sm:$0xf] %vm789, %v830
        %863 = vst.msk [vmem:[#allocation2 + $0x18] sm:$0xf] %vm789, %v831
        %864 = vst.msk [vmem:[#allocation2 + $0x1c] sm:$0xf] %vm789, %v832
        %865 = vst.msk [vmem:[#allocation2 + $0x20] sm:$0xf] %vm789, %v833
        %866 = vst.msk [vmem:[#allocation2 + $0x24] sm:$0xf] %vm789, %v834
        %867 = vst.msk [vmem:[#allocation2 + $0x28] sm:$0xf] %vm789, %v835
        %868 = vst.msk [vmem:[#allocation2 + $0x2c] sm:$0xf] %vm789, %v836
        %869 = vst.msk [vmem:[#allocation2 + $0x30] sm:$0xf] %vm789, %v837
        %870 = vst.msk [vmem:[#allocation2 + $0x34] sm:$0xf] %vm789, %v838
        %871 = vst.msk [vmem:[#allocation2 + $0x38] sm:$0xf] %vm789, %v839
        %872 = vst.msk [vmem:[#allocation2 + $0x3c] sm:$0xf] %vm789, %v840
        %873 = vst.msk [vmem:[#allocation2 + $0x40] sm:$0xf] %vm789, %v841
        %874 = vst.msk [vmem:[#allocation2 + $0x44] sm:$0xf] %vm789, %v842
        %875 = vst.msk [vmem:[#allocation2 + $0x48] sm:$0xf] %vm789, %v843
        %876 = vst.msk [vmem:[#allocation2 + $0x4c] sm:$0xf] %vm789, %v844
        %877 = vst.msk [vmem:[#allocation2 + $0x50] sm:$0xf] %vm789, %v845
        %878 = vst.msk [vmem:[#allocation2 + $0x54] sm:$0xf] %vm789, %v846
        %879 = vst.msk [vmem:[#allocation2 + $0x58] sm:$0xf] %vm789, %v847
        %880 = vst.msk [vmem:[#allocation2 + $0x5c] sm:$0xf] %vm789, %v848
        %881 = vst.msk [vmem:[#allocation2 + $0x60] sm:$0xf] %vm789, %v849
        %882 = vst.msk [vmem:[#allocation2 + $0x64] sm:$0xf] %vm789, %v850
        %883 = vst.msk [vmem:[#allocation2 + $0x68] sm:$0xf] %vm789, %v851
        %884 = vst.msk [vmem:[#allocation2 + $0x6c] sm:$0xf] %vm789, %v852
        %885 = vst.msk [vmem:[#allocation2 + $0x70] sm:$0xf] %vm789, %v853
        %886 = vst.msk [vmem:[#allocation2 + $0x74] sm:$0xf] %vm789, %v854
        %887 = vst.msk [vmem:[#allocation2 + $0x78] sm:$0xf] %vm789, %v855
        %888 = vst.msk [vmem:[#allocation2 + $0x7c] sm:$0xf] %vm789, %v856
        %889 = vst.msk [vmem:[#allocation2 + $0x80] sm:$0xf] %vm789, %v857
        %890 = vst.msk [vmem:[#allocation2 + $0x84] sm:$0xf] %vm789, %v858
        %891 = vst.msk [vmem:[#allocation2 + $0x88] sm:$0xf] %vm789, %v859
        %v892 = vld [vmem:[#allocation2] sm:$0xf]
        %v893 = vld [vmem:[#allocation2 + $0x4] sm:$0xf]
        %v894 = vld [vmem:[#allocation2 + $0x8] sm:$0xf]
        %v895 = vld [vmem:[#allocation2 + $0xc] sm:$0xf]
        %v896 = vld [vmem:[#allocation2 + $0x10] sm:$0xf]
        %v897 = vld [vmem:[#allocation2 + $0x14] sm:$0xf]
        %v898 = vld [vmem:[#allocation2 + $0x18] sm:$0xf]
        %v899 = vld [vmem:[#allocation2 + $0x1c] sm:$0xf]
        %v900 = vld [vmem:[#allocation2 + $0x20] sm:$0xf]
        %v901 = vld [vmem:[#allocation2 + $0x24] sm:$0xf]
        %v902 = vld [vmem:[#allocation2 + $0x28] sm:$0xf]
        %v903 = vld [vmem:[#allocation2 + $0x2c] sm:$0xf]
        %v904 = vld [vmem:[#allocation2 + $0x30] sm:$0xf]
        %v905 = vld [vmem:[#allocation2 + $0x34] sm:$0xf]
        %v906 = vld [vmem:[#allocation2 + $0x38] sm:$0xf]
        %v907 = vld [vmem:[#allocation2 + $0x3c] sm:$0xf]
        %v908 = vld [vmem:[#allocation2 + $0x40] sm:$0xf]
        %v909 = vld [vmem:[#allocation2 + $0x44] sm:$0xf]
        %v910 = vld [vmem:[#allocation2 + $0x48] sm:$0xf]
        %v911 = vld [vmem:[#allocation2 + $0x4c] sm:$0xf]
        %v912 = vld [vmem:[#allocation2 + $0x50] sm:$0xf]
        %v913 = vld [vmem:[#allocation2 + $0x54] sm:$0xf]
        %v914 = vld [vmem:[#allocation2 + $0x58] sm:$0xf]
        %v915 = vld [vmem:[#allocation2 + $0x5c] sm:$0xf]
        %v916 = vld [vmem:[#allocation2 + $0x60] sm:$0xf]
        %v917 = vld [vmem:[#allocation2 + $0x64] sm:$0xf]
        %v918 = vld [vmem:[#allocation2 + $0x68] sm:$0xf]
        %v919 = vld [vmem:[#allocation2 + $0x6c] sm:$0xf]
        %v920 = vld [vmem:[#allocation2 + $0x70] sm:$0xf]
        %v921 = vld [vmem:[#allocation2 + $0x74] sm:$0xf]
        %v922 = vld [vmem:[#allocation2 + $0x78] sm:$0xf]
        %v923 = vld [vmem:[#allocation2 + $0x7c] sm:$0xf]
        %v924 = vld [vmem:[#allocation2 + $0x80] sm:$0xf]
        %v925 = vld [vmem:[#allocation2 + $0x84] sm:$0xf]
        %v926 = vld [vmem:[#allocation2 + $0x88] sm:$0xf]
        %v927 = vld [vmem:[#allocation2 + $0x8c] sm:$0xf]
        %v928 = vld [vmem:[#allocation2 + $0x90] sm:$0xf]
        %v929 = vld [vmem:[#allocation2 + $0x94] sm:$0xf]
        %vm930 = vmpackc.low %vm725, %vm725
        %vm931 = vmpackc.low %vm726, %vm726
        %vm932 = vmpackc.low %vm727, %vm727
        %vm933 = vmpackc.low %vm728, %vm728
        %vm934 = vmpackc.low %vm729, %vm729
        %vm935 = vmpackc.low %vm730, %vm730
        %vm936 = vmpackc.low %vm731, %vm731
        %vm937 = vmpackc.low %vm732, %vm732
        %vm938 = vmpackc.low %vm733, %vm733
        %vm939 = vmpackc.low %vm734, %vm734
        %vm940 = vmpackc.low %vm735, %vm735
        %vm941 = vmpackc.low %vm736, %vm736
        %vm942 = vmpackc.low %vm737, %vm737
        %vm943 = vmpackc.low %vm738, %vm738
        %vm944 = vmpackc.low %vm739, %vm739
        %vm945 = vmpackc.low %vm740, %vm740
        %vm946 = vmpackc.low %vm741, %vm741
        %vm947 = vmpackc.low %vm742, %vm742
        %vm948 = vmpackc.low %vm743, %vm743
        %vm949 = vmpackc.low %vm744, %vm744
        %vm950 = vmpackc.low %vm745, %vm745
        %vm951 = vmpackc.low %vm746, %vm746
        %vm952 = vmpackc.low %vm747, %vm747
        %vm953 = vmpackc.low %vm748, %vm748
        %vm954 = vmpackc.low %vm749, %vm749
        %vm955 = vmpackc.low %vm750, %vm750
        %vm956 = vmpackc.low %vm751, %vm751
        %vm957 = vmpackc.low %vm752, %vm752
        %vm958 = vmpackc.low %vm753, %vm753
        %vm959 = vmpackc.low %vm754, %vm754
        %vm960 = vmpackc.low %vm755, %vm755
        %vm961 = vmpackc.low %vm756, %vm756
        %v962 = vsel %vm930, 65537, 0
        %v963 = vsel %vm931, 65537, 0
        %v964 = vsel %vm932, 65537, 0
        %v965 = vsel %vm933, 65537, 0
        %v966 = vsel %vm934, 65537, 0
        %v967 = vsel %vm935, 65537, 0
        %v968 = vsel %vm936, 65537, 0
        %v969 = vsel %vm937, 65537, 0
        %v970 = vsel %vm938, 65537, 0
        %v971 = vsel %vm939, 65537, 0
        %v972 = vsel %vm940, 65537, 0
        %v973 = vsel %vm941, 65537, 0
        %v974 = vsel %vm942, 65537, 0
        %v975 = vsel %vm943, 65537, 0
        %v976 = vsel %vm944, 65537, 0
        %v977 = vsel %vm945, 65537, 0
        %v978 = vsel %vm946, 65537, 0
        %v979 = vsel %vm947, 65537, 0
        %v980 = vsel %vm948, 65537, 0
        %v981 = vsel %vm949, 65537, 0
        %v982 = vsel %vm950, 65537, 0
        %v983 = vsel %vm951, 65537, 0
        %v984 = vsel %vm952, 65537, 0
        %v985 = vsel %vm953, 65537, 0
        %v986 = vsel %vm954, 65537, 0
        %v987 = vsel %vm955, 65537, 0
        %v988 = vsel %vm956, 65537, 0
        %v989 = vsel %vm957, 65537, 0
        %v990 = vsel %vm958, 65537, 0
        %v991 = vsel %vm959, 65537, 0
        %v992 = vsel %vm960, 65537, 0
        %v993 = vsel %vm961, 65537, 0
        %vm994 = vsmask.f32 3328
        %vm995 = vsmask.f32 7440
        %vm996 = vmor %vm994, %vm995
        %v998 = vshll.u32 %v962, 16
        %v1000 = vrot.slane %v998, 5
        %v1001 = vshrl.u32 %v962, 16
        %v1003 = vrot.slane %v1001, 4
        %v1004 = vor.u32 %v1003, %v1000
        %v1005 = vrot.slane %v1004, 4
        %v1007 = vshll.u32 %v963, 16
        %v1009 = vrot.slane %v1007, 5
        %v1010 = vsel %vm996, %v1005, %v1009
        %v1011 = vshrl.u32 %v963, 16
        %v1013 = vrot.slane %v1011, 4
        %v1014 = vor.u32 %v1013, %v1009
        %v1015 = vrot.slane %v1014, 4
        %v1017 = vshll.u32 %v964, 16
        %v1019 = vrot.slane %v1017, 5
        %v1020 = vsel %vm996, %v1015, %v1019
        %v1021 = vshrl.u32 %v964, 16
        %v1023 = vrot.slane %v1021, 4
        %v1024 = vor.u32 %v1023, %v1019
        %v1025 = vrot.slane %v1024, 4
        %v1027 = vshll.u32 %v965, 16
        %v1029 = vrot.slane %v1027, 5
        %v1030 = vsel %vm996, %v1025, %v1029
        %v1031 = vshrl.u32 %v965, 16
        %v1033 = vrot.slane %v1031, 4
        %v1034 = vor.u32 %v1033, %v1029
        %v1035 = vrot.slane %v1034, 4
        %v1037 = vshll.u32 %v966, 16
        %v1039 = vrot.slane %v1037, 5
        %v1040 = vsel %vm996, %v1035, %v1039
        %v1041 = vshrl.u32 %v966, 16
        %v1043 = vrot.slane %v1041, 4
        %v1044 = vor.u32 %v1043, %v1039
        %v1045 = vrot.slane %v1044, 4
        %v1047 = vshll.u32 %v967, 16
        %v1049 = vrot.slane %v1047, 5
        %v1050 = vsel %vm996, %v1045, %v1049
        %v1051 = vshrl.u32 %v967, 16
        %v1053 = vrot.slane %v1051, 4
        %v1054 = vor.u32 %v1053, %v1049
        %v1055 = vrot.slane %v1054, 4
        %v1057 = vshll.u32 %v968, 16
        %v1059 = vrot.slane %v1057, 5
        %v1060 = vsel %vm996, %v1055, %v1059
        %v1061 = vshrl.u32 %v968, 16
        %v1063 = vrot.slane %v1061, 4
        %v1064 = vor.u32 %v1063, %v1059
        %v1065 = vrot.slane %v1064, 4
        %v1067 = vshll.u32 %v969, 16
        %v1069 = vrot.slane %v1067, 5
        %v1070 = vsel %vm996, %v1065, %v1069
        %v1071 = vshrl.u32 %v969, 16
        %v1073 = vrot.slane %v1071, 4
        %v1074 = vor.u32 %v1073, %v1069
        %v1075 = vrot.slane %v1074, 4
        %v1077 = vshll.u32 %v970, 16
        %v1079 = vrot.slane %v1077, 5
        %v1080 = vsel %vm996, %v1075, %v1079
        %v1081 = vshrl.u32 %v970, 16
        %v1083 = vrot.slane %v1081, 4
        %v1084 = vor.u32 %v1083, %v1079
        %v1085 = vrot.slane %v1084, 4
        %v1087 = vshll.u32 %v971, 16
        %v1089 = vrot.slane %v1087, 5
        %v1090 = vsel %vm996, %v1085, %v1089
        %v1091 = vshrl.u32 %v971, 16
        %v1093 = vrot.slane %v1091, 4
        %v1094 = vor.u32 %v1093, %v1089
        %v1095 = vrot.slane %v1094, 4
        %v1097 = vshll.u32 %v972, 16
        %v1099 = vrot.slane %v1097, 5
        %v1100 = vsel %vm996, %v1095, %v1099
        %v1101 = vshrl.u32 %v972, 16
        %v1103 = vrot.slane %v1101, 4
        %v1104 = vor.u32 %v1103, %v1099
        %v1105 = vrot.slane %v1104, 4
        %v1107 = vshll.u32 %v973, 16
        %v1109 = vrot.slane %v1107, 5
        %v1110 = vsel %vm996, %v1105, %v1109
        %v1111 = vshrl.u32 %v973, 16
        %v1113 = vrot.slane %v1111, 4
        %v1114 = vor.u32 %v1113, %v1109
        %v1115 = vrot.slane %v1114, 4
        %v1117 = vshll.u32 %v974, 16
        %v1119 = vrot.slane %v1117, 5
        %v1120 = vsel %vm996, %v1115, %v1119
        %v1121 = vshrl.u32 %v974, 16
        %v1123 = vrot.slane %v1121, 4
        %v1124 = vor.u32 %v1123, %v1119
        %v1125 = vrot.slane %v1124, 4
        %v1127 = vshll.u32 %v975, 16
        %v1129 = vrot.slane %v1127, 5
        %v1130 = vsel %vm996, %v1125, %v1129
        %v1131 = vshrl.u32 %v975, 16
        %v1133 = vrot.slane %v1131, 4
        %v1134 = vor.u32 %v1133, %v1129
        %v1135 = vrot.slane %v1134, 4
        %v1137 = vshll.u32 %v976, 16
        %v1139 = vrot.slane %v1137, 5
        %v1140 = vsel %vm996, %v1135, %v1139
        %v1141 = vshrl.u32 %v976, 16
        %v1143 = vrot.slane %v1141, 4
        %v1144 = vor.u32 %v1143, %v1139
        %v1145 = vrot.slane %v1144, 4
        %v1147 = vshll.u32 %v977, 16
        %v1149 = vrot.slane %v1147, 5
        %v1150 = vsel %vm996, %v1145, %v1149
        %v1151 = vshrl.u32 %v977, 16
        %v1153 = vrot.slane %v1151, 4
        %v1154 = vor.u32 %v1153, %v1149
        %v1155 = vrot.slane %v1154, 4
        %v1157 = vshll.u32 %v978, 16
        %v1159 = vrot.slane %v1157, 5
        %v1160 = vsel %vm996, %v1155, %v1159
        %v1161 = vshrl.u32 %v978, 16
        %v1163 = vrot.slane %v1161, 4
        %v1164 = vor.u32 %v1163, %v1159
        %v1165 = vrot.slane %v1164, 4
        %v1167 = vshll.u32 %v979, 16
        %v1169 = vrot.slane %v1167, 5
        %v1170 = vsel %vm996, %v1165, %v1169
        %v1171 = vshrl.u32 %v979, 16
        %v1173 = vrot.slane %v1171, 4
        %v1174 = vor.u32 %v1173, %v1169
        %v1175 = vrot.slane %v1174, 4
        %v1177 = vshll.u32 %v980, 16
        %v1179 = vrot.slane %v1177, 5
        %v1180 = vsel %vm996, %v1175, %v1179
        %v1181 = vshrl.u32 %v980, 16
        %v1183 = vrot.slane %v1181, 4
        %v1184 = vor.u32 %v1183, %v1179
        %v1185 = vrot.slane %v1184, 4
        %v1187 = vshll.u32 %v981, 16
        %v1189 = vrot.slane %v1187, 5
        %v1190 = vsel %vm996, %v1185, %v1189
        %v1191 = vshrl.u32 %v981, 16
        %v1193 = vrot.slane %v1191, 4
        %v1194 = vor.u32 %v1193, %v1189
        %v1195 = vrot.slane %v1194, 4
        %v1197 = vshll.u32 %v982, 16
        %v1199 = vrot.slane %v1197, 5
        %v1200 = vsel %vm996, %v1195, %v1199
        %v1201 = vshrl.u32 %v982, 16
        %v1203 = vrot.slane %v1201, 4
        %v1204 = vor.u32 %v1203, %v1199
        %v1205 = vrot.slane %v1204, 4
        %v1207 = vshll.u32 %v983, 16
        %v1209 = vrot.slane %v1207, 5
        %v1210 = vsel %vm996, %v1205, %v1209
        %v1211 = vshrl.u32 %v983, 16
        %v1213 = vrot.slane %v1211, 4
        %v1214 = vor.u32 %v1213, %v1209
        %v1215 = vrot.slane %v1214, 4
        %v1217 = vshll.u32 %v984, 16
        %v1219 = vrot.slane %v1217, 5
        %v1220 = vsel %vm996, %v1215, %v1219
        %v1221 = vshrl.u32 %v984, 16
        %v1223 = vrot.slane %v1221, 4
        %v1224 = vor.u32 %v1223, %v1219
        %v1225 = vrot.slane %v1224, 4
        %v1227 = vshll.u32 %v985, 16
        %v1229 = vrot.slane %v1227, 5
        %v1230 = vsel %vm996, %v1225, %v1229
        %v1231 = vshrl.u32 %v985, 16
        %v1233 = vrot.slane %v1231, 4
        %v1234 = vor.u32 %v1233, %v1229
        %v1235 = vrot.slane %v1234, 4
        %v1237 = vshll.u32 %v986, 16
        %v1239 = vrot.slane %v1237, 5
        %v1240 = vsel %vm996, %v1235, %v1239
        %v1241 = vshrl.u32 %v986, 16
        %v1243 = vrot.slane %v1241, 4
        %v1244 = vor.u32 %v1243, %v1239
        %v1245 = vrot.slane %v1244, 4
        %v1247 = vshll.u32 %v987, 16
        %v1249 = vrot.slane %v1247, 5
        %v1250 = vsel %vm996, %v1245, %v1249
        %v1251 = vshrl.u32 %v987, 16
        %v1253 = vrot.slane %v1251, 4
        %v1254 = vor.u32 %v1253, %v1249
        %v1255 = vrot.slane %v1254, 4
        %v1257 = vshll.u32 %v988, 16
        %v1259 = vrot.slane %v1257, 5
        %v1260 = vsel %vm996, %v1255, %v1259
        %v1261 = vshrl.u32 %v988, 16
        %v1263 = vrot.slane %v1261, 4
        %v1264 = vor.u32 %v1263, %v1259
        %v1265 = vrot.slane %v1264, 4
        %v1267 = vshll.u32 %v989, 16
        %v1269 = vrot.slane %v1267, 5
        %v1270 = vsel %vm996, %v1265, %v1269
        %v1271 = vshrl.u32 %v989, 16
        %v1273 = vrot.slane %v1271, 4
        %v1274 = vor.u32 %v1273, %v1269
        %v1275 = vrot.slane %v1274, 4
        %v1277 = vshll.u32 %v990, 16
        %v1279 = vrot.slane %v1277, 5
        %v1280 = vsel %vm996, %v1275, %v1279
        %v1281 = vshrl.u32 %v990, 16
        %v1283 = vrot.slane %v1281, 4
        %v1284 = vor.u32 %v1283, %v1279
        %v1285 = vrot.slane %v1284, 4
        %v1287 = vshll.u32 %v991, 16
        %v1289 = vrot.slane %v1287, 5
        %v1290 = vsel %vm996, %v1285, %v1289
        %v1291 = vshrl.u32 %v991, 16
        %v1293 = vrot.slane %v1291, 4
        %v1294 = vor.u32 %v1293, %v1289
        %v1295 = vrot.slane %v1294, 4
        %v1297 = vshll.u32 %v992, 16
        %v1299 = vrot.slane %v1297, 5
        %v1300 = vsel %vm996, %v1295, %v1299
        %v1301 = vshrl.u32 %v992, 16
        %v1303 = vrot.slane %v1301, 4
        %v1304 = vor.u32 %v1303, %v1299
        %v1305 = vrot.slane %v1304, 4
        %v1307 = vshll.u32 %v993, 16
        %v1309 = vrot.slane %v1307, 5
        %v1310 = vsel %vm996, %v1305, %v1309
        %v1311 = vshrl.u32 %v993, 16
        %v1313 = vrot.slane %v1311, 4
        %v1314 = vor.u32 %v1313, %v1309
        %v1315 = vrot.slane %v1314, 4
        %v1316 = vunpack.c.l.b16 %v1000
        %v1317 = vunpack.c.h.b16 %v1000
        %v1318 = vunpack.c.l.b16 0
        %v1319 = vunpack.c.h.b16 0
        %vm1320 = vcmp.ne.s32.totalorder %v1316, %v1318
        %vm1321 = vcmp.ne.s32.totalorder %v1317, %v1319
        %vm1322 = vmpackc.low %vm1321, %vm1320
        %v1323 = vunpack.c.l.b16 %v1010
        %v1324 = vunpack.c.h.b16 %v1010
        %v1325 = vunpack.c.l.b16 0
        %v1326 = vunpack.c.h.b16 0
        %vm1327 = vcmp.ne.s32.totalorder %v1323, %v1325
        %vm1328 = vcmp.ne.s32.totalorder %v1324, %v1326
        %vm1329 = vmpackc.low %vm1328, %vm1327
        %v1330 = vunpack.c.l.b16 %v1020
        %v1331 = vunpack.c.h.b16 %v1020
        %v1332 = vunpack.c.l.b16 0
        %v1333 = vunpack.c.h.b16 0
        %vm1334 = vcmp.ne.s32.totalorder %v1330, %v1332
        %vm1335 = vcmp.ne.s32.totalorder %v1331, %v1333
        %vm1336 = vmpackc.low %vm1335, %vm1334
        %v1337 = vunpack.c.l.b16 %v1030
        %v1338 = vunpack.c.h.b16 %v1030
        %v1339 = vunpack.c.l.b16 0
        %v1340 = vunpack.c.h.b16 0
        %vm1341 = vcmp.ne.s32.totalorder %v1337, %v1339
        %vm1342 = vcmp.ne.s32.totalorder %v1338, %v1340
        %vm1343 = vmpackc.low %vm1342, %vm1341
        %v1344 = vunpack.c.l.b16 %v1040
        %v1345 = vunpack.c.h.b16 %v1040
        %v1346 = vunpack.c.l.b16 0
        %v1347 = vunpack.c.h.b16 0
        %vm1348 = vcmp.ne.s32.totalorder %v1344, %v1346
        %vm1349 = vcmp.ne.s32.totalorder %v1345, %v1347
        %vm1350 = vmpackc.low %vm1349, %vm1348
        %v1351 = vunpack.c.l.b16 %v1050
        %v1352 = vunpack.c.h.b16 %v1050
        %v1353 = vunpack.c.l.b16 0
        %v1354 = vunpack.c.h.b16 0
        %vm1355 = vcmp.ne.s32.totalorder %v1351, %v1353
        %vm1356 = vcmp.ne.s32.totalorder %v1352, %v1354
        %vm1357 = vmpackc.low %vm1356, %vm1355
        %v1358 = vunpack.c.l.b16 %v1060
        %v1359 = vunpack.c.h.b16 %v1060
        %v1360 = vunpack.c.l.b16 0
        %v1361 = vunpack.c.h.b16 0
        %vm1362 = vcmp.ne.s32.totalorder %v1358, %v1360
        %vm1363 = vcmp.ne.s32.totalorder %v1359, %v1361
        %vm1364 = vmpackc.low %vm1363, %vm1362
        %v1365 = vunpack.c.l.b16 %v1070
        %v1366 = vunpack.c.h.b16 %v1070
        %v1367 = vunpack.c.l.b16 0
        %v1368 = vunpack.c.h.b16 0
        %vm1369 = vcmp.ne.s32.totalorder %v1365, %v1367
        %vm1370 = vcmp.ne.s32.totalorder %v1366, %v1368
        %vm1371 = vmpackc.low %vm1370, %vm1369
        %v1372 = vunpack.c.l.b16 %v1080
        %v1373 = vunpack.c.h.b16 %v1080
        %v1374 = vunpack.c.l.b16 0
        %v1375 = vunpack.c.h.b16 0
        %vm1376 = vcmp.ne.s32.totalorder %v1372, %v1374
        %vm1377 = vcmp.ne.s32.totalorder %v1373, %v1375
        %vm1378 = vmpackc.low %vm1377, %vm1376
        %v1379 = vunpack.c.l.b16 %v1090
        %v1380 = vunpack.c.h.b16 %v1090
        %v1381 = vunpack.c.l.b16 0
        %v1382 = vunpack.c.h.b16 0
        %vm1383 = vcmp.ne.s32.totalorder %v1379, %v1381
        %vm1384 = vcmp.ne.s32.totalorder %v1380, %v1382
        %vm1385 = vmpackc.low %vm1384, %vm1383
        %v1386 = vunpack.c.l.b16 %v1100
        %v1387 = vunpack.c.h.b16 %v1100
        %v1388 = vunpack.c.l.b16 0
        %v1389 = vunpack.c.h.b16 0
        %vm1390 = vcmp.ne.s32.totalorder %v1386, %v1388
        %vm1391 = vcmp.ne.s32.totalorder %v1387, %v1389
        %vm1392 = vmpackc.low %vm1391, %vm1390
        %v1393 = vunpack.c.l.b16 %v1110
        %v1394 = vunpack.c.h.b16 %v1110
        %v1395 = vunpack.c.l.b16 0
        %v1396 = vunpack.c.h.b16 0
        %vm1397 = vcmp.ne.s32.totalorder %v1393, %v1395
        %vm1398 = vcmp.ne.s32.totalorder %v1394, %v1396
        %vm1399 = vmpackc.low %vm1398, %vm1397
        %v1400 = vunpack.c.l.b16 %v1120
        %v1401 = vunpack.c.h.b16 %v1120
        %v1402 = vunpack.c.l.b16 0
        %v1403 = vunpack.c.h.b16 0
        %vm1404 = vcmp.ne.s32.totalorder %v1400, %v1402
        %vm1405 = vcmp.ne.s32.totalorder %v1401, %v1403
        %vm1406 = vmpackc.low %vm1405, %vm1404
        %v1407 = vunpack.c.l.b16 %v1130
        %v1408 = vunpack.c.h.b16 %v1130
        %v1409 = vunpack.c.l.b16 0
        %v1410 = vunpack.c.h.b16 0
        %vm1411 = vcmp.ne.s32.totalorder %v1407, %v1409
        %vm1412 = vcmp.ne.s32.totalorder %v1408, %v1410
        %vm1413 = vmpackc.low %vm1412, %vm1411
        %v1414 = vunpack.c.l.b16 %v1140
        %v1415 = vunpack.c.h.b16 %v1140
        %v1416 = vunpack.c.l.b16 0
        %v1417 = vunpack.c.h.b16 0
        %vm1418 = vcmp.ne.s32.totalorder %v1414, %v1416
        %vm1419 = vcmp.ne.s32.totalorder %v1415, %v1417
        %vm1420 = vmpackc.low %vm1419, %vm1418
        %v1421 = vunpack.c.l.b16 %v1150
        %v1422 = vunpack.c.h.b16 %v1150
        %v1423 = vunpack.c.l.b16 0
        %v1424 = vunpack.c.h.b16 0
        %vm1425 = vcmp.ne.s32.totalorder %v1421, %v1423
        %vm1426 = vcmp.ne.s32.totalorder %v1422, %v1424
        %vm1427 = vmpackc.low %vm1426, %vm1425
        %v1428 = vunpack.c.l.b16 %v1160
        %v1429 = vunpack.c.h.b16 %v1160
        %v1430 = vunpack.c.l.b16 0
        %v1431 = vunpack.c.h.b16 0
        %vm1432 = vcmp.ne.s32.totalorder %v1428, %v1430
        %vm1433 = vcmp.ne.s32.totalorder %v1429, %v1431
        %vm1434 = vmpackc.low %vm1433, %vm1432
        %v1435 = vunpack.c.l.b16 %v1170
        %v1436 = vunpack.c.h.b16 %v1170
        %v1437 = vunpack.c.l.b16 0
        %v1438 = vunpack.c.h.b16 0
        %vm1439 = vcmp.ne.s32.totalorder %v1435, %v1437
        %vm1440 = vcmp.ne.s32.totalorder %v1436, %v1438
        %vm1441 = vmpackc.low %vm1440, %vm1439
        %v1442 = vunpack.c.l.b16 %v1180
        %v1443 = vunpack.c.h.b16 %v1180
        %v1444 = vunpack.c.l.b16 0
        %v1445 = vunpack.c.h.b16 0
        %vm1446 = vcmp.ne.s32.totalorder %v1442, %v1444
        %vm1447 = vcmp.ne.s32.totalorder %v1443, %v1445
        %vm1448 = vmpackc.low %vm1447, %vm1446
        %v1449 = vunpack.c.l.b16 %v1190
        %v1450 = vunpack.c.h.b16 %v1190
        %v1451 = vunpack.c.l.b16 0
        %v1452 = vunpack.c.h.b16 0
        %vm1453 = vcmp.ne.s32.totalorder %v1449, %v1451
        %vm1454 = vcmp.ne.s32.totalorder %v1450, %v1452
        %vm1455 = vmpackc.low %vm1454, %vm1453
        %v1456 = vunpack.c.l.b16 %v1200
        %v1457 = vunpack.c.h.b16 %v1200
        %v1458 = vunpack.c.l.b16 0
        %v1459 = vunpack.c.h.b16 0
        %vm1460 = vcmp.ne.s32.totalorder %v1456, %v1458
        %vm1461 = vcmp.ne.s32.totalorder %v1457, %v1459
        %vm1462 = vmpackc.low %vm1461, %vm1460
        %v1463 = vunpack.c.l.b16 %v1210
        %v1464 = vunpack.c.h.b16 %v1210
        %v1465 = vunpack.c.l.b16 0
        %v1466 = vunpack.c.h.b16 0
        %vm1467 = vcmp.ne.s32.totalorder %v1463, %v1465
        %vm1468 = vcmp.ne.s32.totalorder %v1464, %v1466
        %vm1469 = vmpackc.low %vm1468, %vm1467
        %v1470 = vunpack.c.l.b16 %v1220
        %v1471 = vunpack.c.h.b16 %v1220
        %v1472 = vunpack.c.l.b16 0
        %v1473 = vunpack.c.h.b16 0
        %vm1474 = vcmp.ne.s32.totalorder %v1470, %v1472
        %vm1475 = vcmp.ne.s32.totalorder %v1471, %v1473
        %vm1476 = vmpackc.low %vm1475, %vm1474
        %v1477 = vunpack.c.l.b16 %v1230
        %v1478 = vunpack.c.h.b16 %v1230
        %v1479 = vunpack.c.l.b16 0
        %v1480 = vunpack.c.h.b16 0
        %vm1481 = vcmp.ne.s32.totalorder %v1477, %v1479
        %vm1482 = vcmp.ne.s32.totalorder %v1478, %v1480
        %vm1483 = vmpackc.low %vm1482, %vm1481
        %v1484 = vunpack.c.l.b16 %v1240
        %v1485 = vunpack.c.h.b16 %v1240
        %v1486 = vunpack.c.l.b16 0
        %v1487 = vunpack.c.h.b16 0
        %vm1488 = vcmp.ne.s32.totalorder %v1484, %v1486
        %vm1489 = vcmp.ne.s32.totalorder %v1485, %v1487
        %vm1490 = vmpackc.low %vm1489, %vm1488
        %v1491 = vunpack.c.l.b16 %v1250
        %v1492 = vunpack.c.h.b16 %v1250
        %v1493 = vunpack.c.l.b16 0
        %v1494 = vunpack.c.h.b16 0
        %vm1495 = vcmp.ne.s32.totalorder %v1491, %v1493
        %vm1496 = vcmp.ne.s32.totalorder %v1492, %v1494
        %vm1497 = vmpackc.low %vm1496, %vm1495
        %v1498 = vunpack.c.l.b16 %v1260
        %v1499 = vunpack.c.h.b16 %v1260
        %v1500 = vunpack.c.l.b16 0
        %v1501 = vunpack.c.h.b16 0
        %vm1502 = vcmp.ne.s32.totalorder %v1498, %v1500
        %vm1503 = vcmp.ne.s32.totalorder %v1499, %v1501
        %vm1504 = vmpackc.low %vm1503, %vm1502
        %v1505 = vunpack.c.l.b16 %v1270
        %v1506 = vunpack.c.h.b16 %v1270
        %v1507 = vunpack.c.l.b16 0
        %v1508 = vunpack.c.h.b16 0
        %vm1509 = vcmp.ne.s32.totalorder %v1505, %v1507
        %vm1510 = vcmp.ne.s32.totalorder %v1506, %v1508
        %vm1511 = vmpackc.low %vm1510, %vm1509
        %v1512 = vunpack.c.l.b16 %v1280
        %v1513 = vunpack.c.h.b16 %v1280
        %v1514 = vunpack.c.l.b16 0
        %v1515 = vunpack.c.h.b16 0
        %vm1516 = vcmp.ne.s32.totalorder %v1512, %v1514
        %vm1517 = vcmp.ne.s32.totalorder %v1513, %v1515
        %vm1518 = vmpackc.low %vm1517, %vm1516
        %v1519 = vunpack.c.l.b16 %v1290
        %v1520 = vunpack.c.h.b16 %v1290
        %v1521 = vunpack.c.l.b16 0
        %v1522 = vunpack.c.h.b16 0
        %vm1523 = vcmp.ne.s32.totalorder %v1519, %v1521
        %vm1524 = vcmp.ne.s32.totalorder %v1520, %v1522
        %vm1525 = vmpackc.low %vm1524, %vm1523
        %v1526 = vunpack.c.l.b16 %v1300
        %v1527 = vunpack.c.h.b16 %v1300
        %v1528 = vunpack.c.l.b16 0
        %v1529 = vunpack.c.h.b16 0
        %vm1530 = vcmp.ne.s32.totalorder %v1526, %v1528
        %vm1531 = vcmp.ne.s32.totalorder %v1527, %v1529
        %vm1532 = vmpackc.low %vm1531, %vm1530
        %v1533 = vunpack.c.l.b16 %v1310
        %v1534 = vunpack.c.h.b16 %v1310
        %v1535 = vunpack.c.l.b16 0
        %v1536 = vunpack.c.h.b16 0
        %vm1537 = vcmp.ne.s32.totalorder %v1533, %v1535
        %vm1538 = vcmp.ne.s32.totalorder %v1534, %v1536
        %vm1539 = vmpackc.low %vm1538, %vm1537
        %v1540 = vunpack.c.l.b16 %v1315
        %v1541 = vunpack.c.h.b16 %v1315
        %v1542 = vunpack.c.l.b16 0
        %v1543 = vunpack.c.h.b16 0
        %vm1544 = vcmp.ne.s32.totalorder %v1540, %v1542
        %vm1545 = vcmp.ne.s32.totalorder %v1541, %v1543
        %vm1546 = vmpackc.low %vm1545, %vm1544
        %v1547 = vsel %vm1322, %v892, 0
        %v1548 = vsel %vm1329, %v893, 0
        %v1549 = vsel %vm1336, %v894, 0
        %v1550 = vsel %vm1343, %v895, 0
        %v1551 = vsel %vm1350, %v896, 0
        %v1552 = vsel %vm1357, %v897, 0
        %v1553 = vsel %vm1364, %v898, 0
        %v1554 = vsel %vm1371, %v899, 0
        %v1555 = vsel %vm1378, %v900, 0
        %v1556 = vsel %vm1385, %v901, 0
        %v1557 = vsel %vm1392, %v902, 0
        %v1558 = vsel %vm1399, %v903, 0
        %v1559 = vsel %vm1406, %v904, 0
        %v1560 = vsel %vm1413, %v905, 0
        %v1561 = vsel %vm1420, %v906, 0
        %v1562 = vsel %vm1427, %v907, 0
        %v1563 = vsel %vm1434, %v908, 0
        %v1564 = vsel %vm1441, %v909, 0
        %v1565 = vsel %vm1448, %v910, 0
        %v1566 = vsel %vm1455, %v911, 0
        %v1567 = vsel %vm1462, %v912, 0
        %v1568 = vsel %vm1469, %v913, 0
        %v1569 = vsel %vm1476, %v914, 0
        %v1570 = vsel %vm1483, %v915, 0
        %v1571 = vsel %vm1490, %v916, 0
        %v1572 = vsel %vm1497, %v917, 0
        %v1573 = vsel %vm1504, %v918, 0
        %v1574 = vsel %vm1511, %v919, 0
        %v1575 = vsel %vm1518, %v920, 0
        %v1576 = vsel %vm1525, %v921, 0
        %v1577 = vsel %vm1532, %v922, 0
        %v1578 = vsel %vm1539, %v923, 0
        %v1579 = vsel %vm1546, %v924, 0
        %v1580 = vld [vmem:[%s1] sm:$0xf]
        %v1581 = vld [vmem:[%s1 + $0x4] sm:$0xf]
        %v1582 = vld [vmem:[%s1 + $0x8] sm:$0xf]
        %v1583 = vld [vmem:[%s1 + $0xc] sm:$0xf]
        %v1584 = vld [vmem:[%s1 + $0x10] sm:$0xf]
        %v1585 = vld [vmem:[%s1 + $0x14] sm:$0xf]
        %v1586 = vld [vmem:[%s1 + $0x18] sm:$0xf]
        %v1587 = vld [vmem:[%s1 + $0x1c] sm:$0xf]
        %v1588 = vld [vmem:[%s1 + $0x20] sm:$0xf]
        %v1589 = vld [vmem:[%s1 + $0x24] sm:$0xf]
        %v1590 = vld [vmem:[%s1 + $0x28] sm:$0xf]
        %v1591 = vld [vmem:[%s1 + $0x2c] sm:$0xf]
        %v1592 = vld [vmem:[%s1 + $0x30] sm:$0xf]
        %v1593 = vld [vmem:[%s1 + $0x34] sm:$0xf]
        %v1594 = vld [vmem:[%s1 + $0x38] sm:$0xf]
        %v1595 = vld [vmem:[%s1 + $0x3c] sm:$0xf]
        %v1628 = vunpack.c.l.b16 %v893
        %v1629 = vunpack.c.l.b16 %v894
        %v1630 = vunpack.c.l.b16 %v895
        %v1631 = vunpack.c.l.b16 %v896
        %v1632 = vunpack.c.l.b16 %v897
        %v1633 = vunpack.c.l.b16 %v898
        %v1634 = vunpack.c.l.b16 %v899
        %v1635 = vunpack.c.l.b16 %v900
        %v1636 = vunpack.c.l.b16 %v901
        %v1637 = vunpack.c.l.b16 %v902
        %v1638 = vunpack.c.l.b16 %v903
        %v1639 = vunpack.c.l.b16 %v904
        %v1640 = vunpack.c.l.b16 %v905
        %v1641 = vunpack.c.l.b16 %v906
        %v1642 = vunpack.c.l.b16 %v907
        %v1643 = vunpack.c.l.b16 %v908
        %v1644 = vunpack.c.l.b16 %v909
        %v1645 = vunpack.c.l.b16 %v910
        %v1646 = vunpack.c.l.b16 %v911
        %v1647 = vunpack.c.l.b16 %v912
        %v1648 = vunpack.c.l.b16 %v913
        %v1649 = vunpack.c.l.b16 %v914
        %v1650 = vunpack.c.l.b16 %v915
        %v1651 = vunpack.c.l.b16 %v916
        %v1652 = vunpack.c.l.b16 %v917
        %v1653 = vunpack.c.l.b16 %v918
        %v1654 = vunpack.c.l.b16 %v919
        %v1655 = vunpack.c.l.b16 %v920
        %v1656 = vunpack.c.l.b16 %v921
        %v1657 = vunpack.c.l.b16 %v922
        %v1658 = vunpack.c.l.b16 %v923
        %v1659 = vunpack.c.l.b16 %v924
        %v1660 = vpack.c.b16 %v1629, %v1628
        %v1661 = vpack.c.b16 %v1631, %v1630
        %v1662 = vpack.c.b16 %v1633, %v1632
        %v1663 = vpack.c.b16 %v1635, %v1634
        %v1664 = vpack.c.b16 %v1637, %v1636
        %v1665 = vpack.c.b16 %v1639, %v1638
        %v1666 = vpack.c.b16 %v1641, %v1640
        %v1667 = vpack.c.b16 %v1643, %v1642
        %v1668 = vpack.c.b16 %v1645, %v1644
        %v1669 = vpack.c.b16 %v1647, %v1646
        %v1670 = vpack.c.b16 %v1649, %v1648
        %v1671 = vpack.c.b16 %v1651, %v1650
        %v1672 = vpack.c.b16 %v1653, %v1652
        %v1673 = vpack.c.b16 %v1655, %v1654
        %v1674 = vpack.c.b16 %v1657, %v1656
        %v1675 = vpack.c.b16 %v1659, %v1658
        %v1684 = vunpack.c.l.b16 %v1588
        %v1685 = vunpack.c.l.b16 %v1589
        %v1686 = vunpack.c.l.b16 %v1590
        %v1687 = vunpack.c.l.b16 %v1591
        %v1688 = vunpack.c.l.b16 %v1592
        %v1689 = vunpack.c.l.b16 %v1593
        %v1690 = vunpack.c.l.b16 %v1594
        %v1691 = vunpack.c.l.b16 %v1595
        %v1692 = vpack.c.b16 %v1685, %v1684
        %v1693 = vpack.c.b16 %v1687, %v1686
        %v1694 = vpack.c.b16 %v1689, %v1688
        %v1695 = vpack.c.b16 %v1691, %v1690
        %vm1700 = vcmask 523264
        %v1702 = vsel %vm1700, %v1660, 0
        %v1705 = vsel %vm1700, %v1661, 0
        %v1708 = vsel %vm1700, %v1662, 0
        %v1711 = vsel %vm1700, %v1663, 0
        %v1714 = vsel %vm1700, %v1664, 0
        %v1717 = vsel %vm1700, %v1665, 0
        %v1720 = vsel %vm1700, %v1666, 0
        %v1723 = vsel %vm1700, %v1667, 0
        %v1726 = vsel %vm1700, %v1668, 0
        %v1729 = vsel %vm1700, %v1669, 0
        %v1732 = vsel %vm1700, %v1670, 0
        %v1735 = vsel %vm1700, %v1671, 0
        %v1738 = vsel %vm1700, %v1672, 0
        %v1741 = vsel %vm1700, %v1673, 0
        %v1744 = vsel %vm1700, %v1674, 0
        %v1747 = vsel %vm1700, %v1675, 0
        %1749 = vmatpush.bf16.msra.mxu0 0
        %1750 = vmatpush.bf16.msra.mxu0 0
        %1751 = vmatpush.bf16.msra.mxu0 0
        %1752 = vmatpush.bf16.msra.mxu0 0
        %1753 = vmatpush.bf16.msra.mxu0 %v1695
        %1754 = vmatpush.bf16.msra.mxu0 %v1694
        %1755 = vmatpush.bf16.msra.mxu0 %v1693
        %1756 = vmatpush.bf16.msra.mxu0 %v1692
        %1757 = vmatmul.bf16.gmra.mxu0 %v1702
        %v1758 = vpop.f32.mrf.mxu0
        %v1759 = vadd.f32 0.0, %v1758
        %v1760 = vpop.f32.mrf.mxu0
        %v1761 = vadd.f32 0.0, %v1760
        %1762 = vmatmul.bf16.gmra.mxu0 %v1705
        %v1763 = vpop.f32.mrf.mxu0
        %v1764 = vadd.f32 0.0, %v1763
        %v1765 = vpop.f32.mrf.mxu0
        %v1766 = vadd.f32 0.0, %v1765
        %1767 = vmatmul.bf16.gmra.mxu0 %v1708
        %v1768 = vpop.f32.mrf.mxu0
        %v1769 = vadd.f32 0.0, %v1768
        %v1770 = vpop.f32.mrf.mxu0
        %v1771 = vadd.f32 0.0, %v1770
        %1772 = vmatmul.bf16.gmra.mxu0 %v1711
        %v1773 = vpop.f32.mrf.mxu0
        %v1774 = vadd.f32 0.0, %v1773
        %v1775 = vpop.f32.mrf.mxu0
        %v1776 = vadd.f32 0.0, %v1775
        %1777 = vmatmul.bf16.gmra.mxu0 %v1714
        %v1778 = vpop.f32.mrf.mxu0
        %v1779 = vadd.f32 0.0, %v1778
        %v1780 = vpop.f32.mrf.mxu0
        %v1781 = vadd.f32 0.0, %v1780
        %1782 = vmatmul.bf16.gmra.mxu0 %v1717
        %v1783 = vpop.f32.mrf.mxu0
        %v1784 = vadd.f32 0.0, %v1783
        %v1785 = vpop.f32.mrf.mxu0
        %v1786 = vadd.f32 0.0, %v1785
        %1787 = vmatmul.bf16.gmra.mxu0 %v1720
        %v1788 = vpop.f32.mrf.mxu0
        %v1789 = vadd.f32 0.0, %v1788
        %v1790 = vpop.f32.mrf.mxu0
        %v1791 = vadd.f32 0.0, %v1790
        %1792 = vmatmul.bf16.gmra.mxu0 %v1723
        %v1793 = vpop.f32.mrf.mxu0
        %v1794 = vadd.f32 0.0, %v1793
        %v1795 = vpop.f32.mrf.mxu0
        %v1796 = vadd.f32 0.0, %v1795
        %1797 = vmatmul.bf16.gmra.mxu0 %v1726
        %v1798 = vpop.f32.mrf.mxu0
        %v1799 = vadd.f32 0.0, %v1798
        %v1800 = vpop.f32.mrf.mxu0
        %v1801 = vadd.f32 0.0, %v1800
        %1802 = vmatmul.bf16.gmra.mxu0 %v1729
        %v1803 = vpop.f32.mrf.mxu0
        %v1804 = vadd.f32 0.0, %v1803
        %v1805 = vpop.f32.mrf.mxu0
        %v1806 = vadd.f32 0.0, %v1805
        %1807 = vmatmul.bf16.gmra.mxu0 %v1732
        %v1808 = vpop.f32.mrf.mxu0
        %v1809 = vadd.f32 0.0, %v1808
        %v1810 = vpop.f32.mrf.mxu0
        %v1811 = vadd.f32 0.0, %v1810
        %1812 = vmatmul.bf16.gmra.mxu0 %v1735
        %v1813 = vpop.f32.mrf.mxu0
        %v1814 = vadd.f32 0.0, %v1813
        %v1815 = vpop.f32.mrf.mxu0
        %v1816 = vadd.f32 0.0, %v1815
        %1817 = vmatmul.bf16.gmra.mxu0 %v1738
        %v1818 = vpop.f32.mrf.mxu0
        %v1819 = vadd.f32 0.0, %v1818
        %v1820 = vpop.f32.mrf.mxu0
        %v1821 = vadd.f32 0.0, %v1820
        %1822 = vmatmul.bf16.gmra.mxu0 %v1741
        %v1823 = vpop.f32.mrf.mxu0
        %v1824 = vadd.f32 0.0, %v1823
        %v1825 = vpop.f32.mrf.mxu0
        %v1826 = vadd.f32 0.0, %v1825
        %1827 = vmatmul.bf16.gmra.mxu0 %v1744
        %v1828 = vpop.f32.mrf.mxu0
        %v1829 = vadd.f32 0.0, %v1828
        %v1830 = vpop.f32.mrf.mxu0
        %v1831 = vadd.f32 0.0, %v1830
        %1832 = vmatmul.bf16.gmra.mxu0 %v1747
        %v1833 = vpop.f32.mrf.mxu0
        %v1834 = vadd.f32 0.0, %v1833
        %v1835 = vpop.f32.mrf.mxu0
        %v1836 = vadd.f32 0.0, %v1835
        %1837 = vdwg.mxu0
        %v1871 = vunpack.c.l.b16 %v1547
        %v1872 = vunpack.c.l.b16 %v1548
        %v1873 = vunpack.c.l.b16 %v1549
        %v1874 = vunpack.c.l.b16 %v1550
        %v1875 = vunpack.c.l.b16 %v1551
        %v1876 = vunpack.c.l.b16 %v1552
        %v1877 = vunpack.c.l.b16 %v1553
        %v1878 = vunpack.c.l.b16 %v1554
        %v1879 = vunpack.c.l.b16 %v1555
        %v1880 = vunpack.c.l.b16 %v1556
        %v1881 = vunpack.c.l.b16 %v1557
        %v1882 = vunpack.c.l.b16 %v1558
        %v1883 = vunpack.c.l.b16 %v1559
        %v1884 = vunpack.c.l.b16 %v1560
        %v1885 = vunpack.c.l.b16 %v1561
        %v1886 = vunpack.c.l.b16 %v1562
        %v1887 = vunpack.c.l.b16 %v1563
        %v1888 = vunpack.c.l.b16 %v1564
        %v1889 = vunpack.c.l.b16 %v1565
        %v1890 = vunpack.c.l.b16 %v1566
        %v1891 = vunpack.c.l.b16 %v1567
        %v1892 = vunpack.c.l.b16 %v1568
        %v1893 = vunpack.c.l.b16 %v1569
        %v1894 = vunpack.c.l.b16 %v1570
        %v1895 = vunpack.c.l.b16 %v1571
        %v1896 = vunpack.c.l.b16 %v1572
        %v1897 = vunpack.c.l.b16 %v1573
        %v1898 = vunpack.c.l.b16 %v1574
        %v1899 = vunpack.c.l.b16 %v1575
        %v1900 = vunpack.c.l.b16 %v1576
        %v1901 = vunpack.c.l.b16 %v1577
        %v1902 = vunpack.c.l.b16 %v1578
        %v1903 = vunpack.c.l.b16 %v1579
        %v1904 = vpack.c.b16 %v1872, %v1871
        %v1905 = vpack.c.b16 %v1874, %v1873
        %v1906 = vpack.c.b16 %v1876, %v1875
        %v1907 = vpack.c.b16 %v1878, %v1877
        %v1908 = vpack.c.b16 %v1880, %v1879
        %v1909 = vpack.c.b16 %v1882, %v1881
        %v1910 = vpack.c.b16 %v1884, %v1883
        %v1911 = vpack.c.b16 %v1886, %v1885
        %v1912 = vpack.c.b16 %v1888, %v1887
        %v1913 = vpack.c.b16 %v1890, %v1889
        %v1914 = vpack.c.b16 %v1892, %v1891
        %v1915 = vpack.c.b16 %v1894, %v1893
        %v1916 = vpack.c.b16 %v1896, %v1895
        %v1917 = vpack.c.b16 %v1898, %v1897
        %v1918 = vpack.c.b16 %v1900, %v1899
        %v1919 = vpack.c.b16 %v1902, %v1901
        %v1920 = vpack.c.b16 %v1903, %v1903
        %vm1921 = vsmask.f32 4352
        %v1923 = vshrl.u32 %v1904, 16
        %v1925 = vrot.slane %v1923, 3
        %v1926 = vshll.u32 %v1904, 16
        %v1928 = vrot.slane %v1926, 4
        %v1929 = vor.u32 %v1925, %v1928
        %v1931 = vshrl.u32 %v1905, 16
        %v1933 = vrot.slane %v1931, 3
        %v1934 = vshll.u32 %v1905, 16
        %v1936 = vrot.slane %v1934, 4
        %v1937 = vor.u32 %v1933, %v1936
        %v1938 = vsel %vm1921, %v1929, %v1937
        %v1940 = vshrl.u32 %v1906, 16
        %v1942 = vrot.slane %v1940, 3
        %v1943 = vshll.u32 %v1906, 16
        %v1945 = vrot.slane %v1943, 4
        %v1946 = vor.u32 %v1942, %v1945
        %v1947 = vsel %vm1921, %v1937, %v1946
        %v1949 = vshrl.u32 %v1907, 16
        %v1951 = vrot.slane %v1949, 3
        %v1952 = vshll.u32 %v1907, 16
        %v1954 = vrot.slane %v1952, 4
        %v1955 = vor.u32 %v1951, %v1954
        %v1956 = vsel %vm1921, %v1946, %v1955
        %v1958 = vshrl.u32 %v1908, 16
        %v1960 = vrot.slane %v1958, 3
        %v1961 = vshll.u32 %v1908, 16
        %v1963 = vrot.slane %v1961, 4
        %v1964 = vor.u32 %v1960, %v1963
        %v1965 = vsel %vm1921, %v1955, %v1964
        %v1967 = vshrl.u32 %v1909, 16
        %v1969 = vrot.slane %v1967, 3
        %v1970 = vshll.u32 %v1909, 16
        %v1972 = vrot.slane %v1970, 4
        %v1973 = vor.u32 %v1969, %v1972
        %v1974 = vsel %vm1921, %v1964, %v1973
        %v1976 = vshrl.u32 %v1910, 16
        %v1978 = vrot.slane %v1976, 3
        %v1979 = vshll.u32 %v1910, 16
        %v1981 = vrot.slane %v1979, 4
        %v1982 = vor.u32 %v1978, %v1981
        %v1983 = vsel %vm1921, %v1973, %v1982
        %v1985 = vshrl.u32 %v1911, 16
        %v1987 = vrot.slane %v1985, 3
        %v1988 = vshll.u32 %v1911, 16
        %v1990 = vrot.slane %v1988, 4
        %v1991 = vor.u32 %v1987, %v1990
        %v1992 = vsel %vm1921, %v1982, %v1991
        %v1994 = vshrl.u32 %v1912, 16
        %v1996 = vrot.slane %v1994, 3
        %v1997 = vshll.u32 %v1912, 16
        %v1999 = vrot.slane %v1997, 4
        %v2000 = vor.u32 %v1996, %v1999
        %v2001 = vsel %vm1921, %v1991, %v2000
        %v2003 = vshrl.u32 %v1913, 16
        %v2005 = vrot.slane %v2003, 3
        %v2006 = vshll.u32 %v1913, 16
        %v2008 = vrot.slane %v2006, 4
        %v2009 = vor.u32 %v2005, %v2008
        %v2010 = vsel %vm1921, %v2000, %v2009
        %v2012 = vshrl.u32 %v1914, 16
        %v2014 = vrot.slane %v2012, 3
        %v2015 = vshll.u32 %v1914, 16
        %v2017 = vrot.slane %v2015, 4
        %v2018 = vor.u32 %v2014, %v2017
        %v2019 = vsel %vm1921, %v2009, %v2018
        %v2021 = vshrl.u32 %v1915, 16
        %v2023 = vrot.slane %v2021, 3
        %v2024 = vshll.u32 %v1915, 16
        %v2026 = vrot.slane %v2024, 4
        %v2027 = vor.u32 %v2023, %v2026
        %v2028 = vsel %vm1921, %v2018, %v2027
        %v2030 = vshrl.u32 %v1916, 16
        %v2032 = vrot.slane %v2030, 3
        %v2033 = vshll.u32 %v1916, 16
        %v2035 = vrot.slane %v2033, 4
        %v2036 = vor.u32 %v2032, %v2035
        %v2037 = vsel %vm1921, %v2027, %v2036
        %v2039 = vshrl.u32 %v1917, 16
        %v2041 = vrot.slane %v2039, 3
        %v2042 = vshll.u32 %v1917, 16
        %v2044 = vrot.slane %v2042, 4
        %v2045 = vor.u32 %v2041, %v2044
        %v2046 = vsel %vm1921, %v2036, %v2045
        %v2048 = vshrl.u32 %v1918, 16
        %v2050 = vrot.slane %v2048, 3
        %v2051 = vshll.u32 %v1918, 16
        %v2053 = vrot.slane %v2051, 4
        %v2054 = vor.u32 %v2050, %v2053
        %v2055 = vsel %vm1921, %v2045, %v2054
        %v2057 = vshrl.u32 %v1919, 16
        %v2059 = vrot.slane %v2057, 3
        %v2060 = vshll.u32 %v1919, 16
        %v2062 = vrot.slane %v2060, 4
        %v2063 = vor.u32 %v2059, %v2062
        %v2064 = vsel %vm1921, %v2054, %v2063
        %v2066 = vshrl.u32 %v1920, 16
        %v2068 = vrot.slane %v2066, 3
        %v2069 = vshll.u32 %v1920, 16
        %v2071 = vrot.slane %v2069, 4
        %v2072 = vor.u32 %v2068, %v2071
        %v2073 = vsel %vm1921, %v2063, %v2072
        %v2082 = vunpack.c.l.b16 %v1580
        %v2083 = vunpack.c.l.b16 %v1581
        %v2084 = vunpack.c.l.b16 %v1582
        %v2085 = vunpack.c.l.b16 %v1583
        %v2086 = vunpack.c.l.b16 %v1584
        %v2087 = vunpack.c.l.b16 %v1585
        %v2088 = vunpack.c.l.b16 %v1586
        %v2089 = vunpack.c.l.b16 %v1587
        %v2090 = vpack.c.b16 %v2083, %v2082
        %v2091 = vpack.c.b16 %v2085, %v2084
        %v2092 = vpack.c.b16 %v2087, %v2086
        %v2093 = vpack.c.b16 %v2089, %v2088
        %v2099 = vsel %vm1700, %v1938, 0
        %v2102 = vsel %vm1700, %v1947, 0
        %v2105 = vsel %vm1700, %v1956, 0
        %v2108 = vsel %vm1700, %v1965, 0
        %v2111 = vsel %vm1700, %v1974, 0
        %v2114 = vsel %vm1700, %v1983, 0
        %v2117 = vsel %vm1700, %v1992, 0
        %v2120 = vsel %vm1700, %v2001, 0
        %v2123 = vsel %vm1700, %v2010, 0
        %v2126 = vsel %vm1700, %v2019, 0
        %v2129 = vsel %vm1700, %v2028, 0
        %v2132 = vsel %vm1700, %v2037, 0
        %v2135 = vsel %vm1700, %v2046, 0
        %v2138 = vsel %vm1700, %v2055, 0
        %v2141 = vsel %vm1700, %v2064, 0
        %v2144 = vsel %vm1700, %v2073, 0
        %2146 = vmatpush.bf16.msra.mxu0 0
        %2147 = vmatpush.bf16.msra.mxu0 0
        %2148 = vmatpush.bf16.msra.mxu0 0
        %2149 = vmatpush.bf16.msra.mxu0 0
        %2150 = vmatpush.bf16.msra.mxu0 %v2093
        %2151 = vmatpush.bf16.msra.mxu0 %v2092
        %2152 = vmatpush.bf16.msra.mxu0 %v2091
        %2153 = vmatpush.bf16.msra.mxu0 %v2090
        %2154 = vmatmul.bf16.gmra.mxu0 %v2099
        %v2155 = vpop.f32.mrf.mxu0
        %v2156 = vadd.f32 %v1759, %v2155
        %v2157 = vpop.f32.mrf.mxu0
        %v2158 = vadd.f32 %v1761, %v2157
        %2159 = vmatmul.bf16.gmra.mxu0 %v2102
        %v2160 = vpop.f32.mrf.mxu0
        %v2161 = vadd.f32 %v1764, %v2160
        %v2162 = vpop.f32.mrf.mxu0
        %v2163 = vadd.f32 %v1766, %v2162
        %2164 = vmatmul.bf16.gmra.mxu0 %v2105
        %v2165 = vpop.f32.mrf.mxu0
        %v2166 = vadd.f32 %v1769, %v2165
        %v2167 = vpop.f32.mrf.mxu0
        %v2168 = vadd.f32 %v1771, %v2167
        %2169 = vmatmul.bf16.gmra.mxu0 %v2108
        %v2170 = vpop.f32.mrf.mxu0
        %v2171 = vadd.f32 %v1774, %v2170
        %v2172 = vpop.f32.mrf.mxu0
        %v2173 = vadd.f32 %v1776, %v2172
        %2174 = vmatmul.bf16.gmra.mxu0 %v2111
        %v2175 = vpop.f32.mrf.mxu0
        %v2176 = vadd.f32 %v1779, %v2175
        %v2177 = vpop.f32.mrf.mxu0
        %v2178 = vadd.f32 %v1781, %v2177
        %2179 = vmatmul.bf16.gmra.mxu0 %v2114
        %v2180 = vpop.f32.mrf.mxu0
        %v2181 = vadd.f32 %v1784, %v2180
        %v2182 = vpop.f32.mrf.mxu0
        %v2183 = vadd.f32 %v1786, %v2182
        %2184 = vmatmul.bf16.gmra.mxu0 %v2117
        %v2185 = vpop.f32.mrf.mxu0
        %v2186 = vadd.f32 %v1789, %v2185
        %v2187 = vpop.f32.mrf.mxu0
        %v2188 = vadd.f32 %v1791, %v2187
        %2189 = vmatmul.bf16.gmra.mxu0 %v2120
        %v2190 = vpop.f32.mrf.mxu0
        %v2191 = vadd.f32 %v1794, %v2190
        %v2192 = vpop.f32.mrf.mxu0
        %v2193 = vadd.f32 %v1796, %v2192
        %2194 = vmatmul.bf16.gmra.mxu0 %v2123
        %v2195 = vpop.f32.mrf.mxu0
        %v2196 = vadd.f32 %v1799, %v2195
        %v2197 = vpop.f32.mrf.mxu0
        %v2198 = vadd.f32 %v1801, %v2197
        %2199 = vmatmul.bf16.gmra.mxu0 %v2126
        %v2200 = vpop.f32.mrf.mxu0
        %v2201 = vadd.f32 %v1804, %v2200
        %v2202 = vpop.f32.mrf.mxu0
        %v2203 = vadd.f32 %v1806, %v2202
        %2204 = vmatmul.bf16.gmra.mxu0 %v2129
        %v2205 = vpop.f32.mrf.mxu0
        %v2206 = vadd.f32 %v1809, %v2205
        %v2207 = vpop.f32.mrf.mxu0
        %v2208 = vadd.f32 %v1811, %v2207
        %2209 = vmatmul.bf16.gmra.mxu0 %v2132
        %v2210 = vpop.f32.mrf.mxu0
        %v2211 = vadd.f32 %v1814, %v2210
        %v2212 = vpop.f32.mrf.mxu0
        %v2213 = vadd.f32 %v1816, %v2212
        %2214 = vmatmul.bf16.gmra.mxu0 %v2135
        %v2215 = vpop.f32.mrf.mxu0
        %v2216 = vadd.f32 %v1819, %v2215
        %v2217 = vpop.f32.mrf.mxu0
        %v2218 = vadd.f32 %v1821, %v2217
        %2219 = vmatmul.bf16.gmra.mxu0 %v2138
        %v2220 = vpop.f32.mrf.mxu0
        %v2221 = vadd.f32 %v1824, %v2220
        %v2222 = vpop.f32.mrf.mxu0
        %v2223 = vadd.f32 %v1826, %v2222
        %2224 = vmatmul.bf16.gmra.mxu0 %v2141
        %v2225 = vpop.f32.mrf.mxu0
        %v2226 = vadd.f32 %v1829, %v2225
        %v2227 = vpop.f32.mrf.mxu0
        %v2228 = vadd.f32 %v1831, %v2227
        %2229 = vmatmul.bf16.gmra.mxu0 %v2144
        %v2230 = vpop.f32.mrf.mxu0
        %v2231 = vadd.f32 %v1834, %v2230
        %v2232 = vpop.f32.mrf.mxu0
        %v2233 = vadd.f32 %v1836, %v2232
        %2234 = vdwg.mxu0
        %vm2235 = vmpackc.low %vm757, %vm757
        %vm2236 = vmpackc.low %vm758, %vm758
        %vm2237 = vmpackc.low %vm759, %vm759
        %vm2238 = vmpackc.low %vm760, %vm760
        %vm2239 = vmpackc.low %vm761, %vm761
        %vm2240 = vmpackc.low %vm762, %vm762
        %vm2241 = vmpackc.low %vm763, %vm763
        %vm2242 = vmpackc.low %vm764, %vm764
        %vm2243 = vmpackc.low %vm765, %vm765
        %vm2244 = vmpackc.low %vm766, %vm766
        %vm2245 = vmpackc.low %vm767, %vm767
        %vm2246 = vmpackc.low %vm768, %vm768
        %vm2247 = vmpackc.low %vm769, %vm769
        %vm2248 = vmpackc.low %vm770, %vm770
        %vm2249 = vmpackc.low %vm771, %vm771
        %vm2250 = vmpackc.low %vm772, %vm772
        %vm2251 = vmpackc.low %vm773, %vm773
        %vm2252 = vmpackc.low %vm774, %vm774
        %vm2253 = vmpackc.low %vm775, %vm775
        %vm2254 = vmpackc.low %vm776, %vm776
        %vm2255 = vmpackc.low %vm777, %vm777
        %vm2256 = vmpackc.low %vm778, %vm778
        %vm2257 = vmpackc.low %vm779, %vm779
        %vm2258 = vmpackc.low %vm780, %vm780
        %vm2259 = vmpackc.low %vm781, %vm781
        %vm2260 = vmpackc.low %vm782, %vm782
        %vm2261 = vmpackc.low %vm783, %vm783
        %vm2262 = vmpackc.low %vm784, %vm784
        %vm2263 = vmpackc.low %vm785, %vm785
        %vm2264 = vmpackc.low %vm786, %vm786
        %vm2265 = vmpackc.low %vm787, %vm787
        %vm2266 = vmpackc.low %vm788, %vm788
        %v2267 = vsel %vm2235, 65537, 0
        %v2268 = vsel %vm2236, 65537, 0
        %v2269 = vsel %vm2237, 65537, 0
        %v2270 = vsel %vm2238, 65537, 0
        %v2271 = vsel %vm2239, 65537, 0
        %v2272 = vsel %vm2240, 65537, 0
        %v2273 = vsel %vm2241, 65537, 0
        %v2274 = vsel %vm2242, 65537, 0
        %v2275 = vsel %vm2243, 65537, 0
        %v2276 = vsel %vm2244, 65537, 0
        %v2277 = vsel %vm2245, 65537, 0
        %v2278 = vsel %vm2246, 65537, 0
        %v2279 = vsel %vm2247, 65537, 0
        %v2280 = vsel %vm2248, 65537, 0
        %v2281 = vsel %vm2249, 65537, 0
        %v2282 = vsel %vm2250, 65537, 0
        %v2283 = vsel %vm2251, 65537, 0
        %v2284 = vsel %vm2252, 65537, 0
        %v2285 = vsel %vm2253, 65537, 0
        %v2286 = vsel %vm2254, 65537, 0
        %v2287 = vsel %vm2255, 65537, 0
        %v2288 = vsel %vm2256, 65537, 0
        %v2289 = vsel %vm2257, 65537, 0
        %v2290 = vsel %vm2258, 65537, 0
        %v2291 = vsel %vm2259, 65537, 0
        %v2292 = vsel %vm2260, 65537, 0
        %v2293 = vsel %vm2261, 65537, 0
        %v2294 = vsel %vm2262, 65537, 0
        %v2295 = vsel %vm2263, 65537, 0
        %v2296 = vsel %vm2264, 65537, 0
        %v2297 = vsel %vm2265, 65537, 0
        %v2298 = vsel %vm2266, 65537, 0
        %vm2299 = vsmask.f32 256
        %vm2300 = vsmask.f32 4368
        %vm2301 = vmor %vm2299, %vm2300
        %v2303 = vshrl.u32 %v2267, 16
        %v2305 = vrot.slane %v2303, 7
        %v2306 = vshll.u32 %v2267, 16
        %v2308 = vor.u32 %v2305, %v2306
        %v2309 = vrot.slane %v2305, 4
        %v2311 = vshrl.u32 %v2268, 16
        %v2313 = vrot.slane %v2311, 7
        %v2314 = vshll.u32 %v2268, 16
        %v2316 = vor.u32 %v2313, %v2314
        %v2317 = vsel %vm2301, %v2309, %v2316
        %v2318 = vrot.slane %v2313, 4
        %v2320 = vshrl.u32 %v2269, 16
        %v2322 = vrot.slane %v2320, 7
        %v2323 = vshll.u32 %v2269, 16
        %v2325 = vor.u32 %v2322, %v2323
        %v2326 = vsel %vm2301, %v2318, %v2325
        %v2327 = vrot.slane %v2322, 4
        %v2329 = vshrl.u32 %v2270, 16
        %v2331 = vrot.slane %v2329, 7
        %v2332 = vshll.u32 %v2270, 16
        %v2334 = vor.u32 %v2331, %v2332
        %v2335 = vsel %vm2301, %v2327, %v2334
        %v2336 = vrot.slane %v2331, 4
        %v2338 = vshrl.u32 %v2271, 16
        %v2340 = vrot.slane %v2338, 7
        %v2341 = vshll.u32 %v2271, 16
        %v2343 = vor.u32 %v2340, %v2341
        %v2344 = vsel %vm2301, %v2336, %v2343
        %v2345 = vrot.slane %v2340, 4
        %v2347 = vshrl.u32 %v2272, 16
        %v2349 = vrot.slane %v2347, 7
        %v2350 = vshll.u32 %v2272, 16
        %v2352 = vor.u32 %v2349, %v2350
        %v2353 = vsel %vm2301, %v2345, %v2352
        %v2354 = vrot.slane %v2349, 4
        %v2356 = vshrl.u32 %v2273, 16
        %v2358 = vrot.slane %v2356, 7
        %v2359 = vshll.u32 %v2273, 16
        %v2361 = vor.u32 %v2358, %v2359
        %v2362 = vsel %vm2301, %v2354, %v2361
        %v2363 = vrot.slane %v2358, 4
        %v2365 = vshrl.u32 %v2274, 16
        %v2367 = vrot.slane %v2365, 7
        %v2368 = vshll.u32 %v2274, 16
        %v2370 = vor.u32 %v2367, %v2368
        %v2371 = vsel %vm2301, %v2363, %v2370
        %v2372 = vrot.slane %v2367, 4
        %v2374 = vshrl.u32 %v2275, 16
        %v2376 = vrot.slane %v2374, 7
        %v2377 = vshll.u32 %v2275, 16
        %v2379 = vor.u32 %v2376, %v2377
        %v2380 = vsel %vm2301, %v2372, %v2379
        %v2381 = vrot.slane %v2376, 4
        %v2383 = vshrl.u32 %v2276, 16
        %v2385 = vrot.slane %v2383, 7
        %v2386 = vshll.u32 %v2276, 16
        %v2388 = vor.u32 %v2385, %v2386
        %v2389 = vsel %vm2301, %v2381, %v2388
        %v2390 = vrot.slane %v2385, 4
        %v2392 = vshrl.u32 %v2277, 16
        %v2394 = vrot.slane %v2392, 7
        %v2395 = vshll.u32 %v2277, 16
        %v2397 = vor.u32 %v2394, %v2395
        %v2398 = vsel %vm2301, %v2390, %v2397
        %v2399 = vrot.slane %v2394, 4
        %v2401 = vshrl.u32 %v2278, 16
        %v2403 = vrot.slane %v2401, 7
        %v2404 = vshll.u32 %v2278, 16
        %v2406 = vor.u32 %v2403, %v2404
        %v2407 = vsel %vm2301, %v2399, %v2406
        %v2408 = vrot.slane %v2403, 4
        %v2410 = vshrl.u32 %v2279, 16
        %v2412 = vrot.slane %v2410, 7
        %v2413 = vshll.u32 %v2279, 16
        %v2415 = vor.u32 %v2412, %v2413
        %v2416 = vsel %vm2301, %v2408, %v2415
        %v2417 = vrot.slane %v2412, 4
        %v2419 = vshrl.u32 %v2280, 16
        %v2421 = vrot.slane %v2419, 7
        %v2422 = vshll.u32 %v2280, 16
        %v2424 = vor.u32 %v2421, %v2422
        %v2425 = vsel %vm2301, %v2417, %v2424
        %v2426 = vrot.slane %v2421, 4
        %v2428 = vshrl.u32 %v2281, 16
        %v2430 = vrot.slane %v2428, 7
        %v2431 = vshll.u32 %v2281, 16
        %v2433 = vor.u32 %v2430, %v2431
        %v2434 = vsel %vm2301, %v2426, %v2433
        %v2435 = vrot.slane %v2430, 4
        %v2437 = vshrl.u32 %v2282, 16
        %v2439 = vrot.slane %v2437, 7
        %v2440 = vshll.u32 %v2282, 16
        %v2442 = vor.u32 %v2439, %v2440
        %v2443 = vsel %vm2301, %v2435, %v2442
        %v2444 = vrot.slane %v2439, 4
        %v2446 = vshrl.u32 %v2283, 16
        %v2448 = vrot.slane %v2446, 7
        %v2449 = vshll.u32 %v2283, 16
        %v2451 = vor.u32 %v2448, %v2449
        %v2452 = vsel %vm2301, %v2444, %v2451
        %v2453 = vrot.slane %v2448, 4
        %v2455 = vshrl.u32 %v2284, 16
        %v2457 = vrot.slane %v2455, 7
        %v2458 = vshll.u32 %v2284, 16
        %v2460 = vor.u32 %v2457, %v2458
        %v2461 = vsel %vm2301, %v2453, %v2460
        %v2462 = vrot.slane %v2457, 4
        %v2464 = vshrl.u32 %v2285, 16
        %v2466 = vrot.slane %v2464, 7
        %v2467 = vshll.u32 %v2285, 16
        %v2469 = vor.u32 %v2466, %v2467
        %v2470 = vsel %vm2301, %v2462, %v2469
        %v2471 = vrot.slane %v2466, 4
        %v2473 = vshrl.u32 %v2286, 16
        %v2475 = vrot.slane %v2473, 7
        %v2476 = vshll.u32 %v2286, 16
        %v2478 = vor.u32 %v2475, %v2476
        %v2479 = vsel %vm2301, %v2471, %v2478
        %v2480 = vrot.slane %v2475, 4
        %v2482 = vshrl.u32 %v2287, 16
        %v2484 = vrot.slane %v2482, 7
        %v2485 = vshll.u32 %v2287, 16
        %v2487 = vor.u32 %v2484, %v2485
        %v2488 = vsel %vm2301, %v2480, %v2487
        %v2489 = vrot.slane %v2484, 4
        %v2491 = vshrl.u32 %v2288, 16
        %v2493 = vrot.slane %v2491, 7
        %v2494 = vshll.u32 %v2288, 16
        %v2496 = vor.u32 %v2493, %v2494
        %v2497 = vsel %vm2301, %v2489, %v2496
        %v2498 = vrot.slane %v2493, 4
        %v2500 = vshrl.u32 %v2289, 16
        %v2502 = vrot.slane %v2500, 7
        %v2503 = vshll.u32 %v2289, 16
        %v2505 = vor.u32 %v2502, %v2503
        %v2506 = vsel %vm2301, %v2498, %v2505
        %v2507 = vrot.slane %v2502, 4
        %v2509 = vshrl.u32 %v2290, 16
        %v2511 = vrot.slane %v2509, 7
        %v2512 = vshll.u32 %v2290, 16
        %v2514 = vor.u32 %v2511, %v2512
        %v2515 = vsel %vm2301, %v2507, %v2514
        %v2516 = vrot.slane %v2511, 4
        %v2518 = vshrl.u32 %v2291, 16
        %v2520 = vrot.slane %v2518, 7
        %v2521 = vshll.u32 %v2291, 16
        %v2523 = vor.u32 %v2520, %v2521
        %v2524 = vsel %vm2301, %v2516, %v2523
        %v2525 = vrot.slane %v2520, 4
        %v2527 = vshrl.u32 %v2292, 16
        %v2529 = vrot.slane %v2527, 7
        %v2530 = vshll.u32 %v2292, 16
        %v2532 = vor.u32 %v2529, %v2530
        %v2533 = vsel %vm2301, %v2525, %v2532
        %v2534 = vrot.slane %v2529, 4
        %v2536 = vshrl.u32 %v2293, 16
        %v2538 = vrot.slane %v2536, 7
        %v2539 = vshll.u32 %v2293, 16
        %v2541 = vor.u32 %v2538, %v2539
        %v2542 = vsel %vm2301, %v2534, %v2541
        %v2543 = vrot.slane %v2538, 4
        %v2545 = vshrl.u32 %v2294, 16
        %v2547 = vrot.slane %v2545, 7
        %v2548 = vshll.u32 %v2294, 16
        %v2550 = vor.u32 %v2547, %v2548
        %v2551 = vsel %vm2301, %v2543, %v2550
        %v2552 = vrot.slane %v2547, 4
        %v2554 = vshrl.u32 %v2295, 16
        %v2556 = vrot.slane %v2554, 7
        %v2557 = vshll.u32 %v2295, 16
        %v2559 = vor.u32 %v2556, %v2557
        %v2560 = vsel %vm2301, %v2552, %v2559
        %v2561 = vrot.slane %v2556, 4
        %v2563 = vshrl.u32 %v2296, 16
        %v2565 = vrot.slane %v2563, 7
        %v2566 = vshll.u32 %v2296, 16
        %v2568 = vor.u32 %v2565, %v2566
        %v2569 = vsel %vm2301, %v2561, %v2568
        %v2570 = vrot.slane %v2565, 4
        %v2572 = vshrl.u32 %v2297, 16
        %v2574 = vrot.slane %v2572, 7
        %v2575 = vshll.u32 %v2297, 16
        %v2577 = vor.u32 %v2574, %v2575
        %v2578 = vsel %vm2301, %v2570, %v2577
        %v2579 = vrot.slane %v2574, 4
        %v2581 = vshrl.u32 %v2298, 16
        %v2583 = vrot.slane %v2581, 7
        %v2584 = vshll.u32 %v2298, 16
        %v2586 = vor.u32 %v2583, %v2584
        %v2587 = vsel %vm2301, %v2579, %v2586
        %v2588 = vrot.slane %v2583, 4
        %v2589 = vunpack.c.l.b16 %v2308
        %v2590 = vunpack.c.h.b16 %v2308
        %v2591 = vunpack.c.l.b16 0
        %v2592 = vunpack.c.h.b16 0
        %vm2593 = vcmp.ne.s32.totalorder %v2589, %v2591
        %vm2594 = vcmp.ne.s32.totalorder %v2590, %v2592
        %vm2595 = vmpackc.low %vm2594, %vm2593
        %v2596 = vunpack.c.l.b16 %v2317
        %v2597 = vunpack.c.h.b16 %v2317
        %v2598 = vunpack.c.l.b16 0
        %v2599 = vunpack.c.h.b16 0
        %vm2600 = vcmp.ne.s32.totalorder %v2596, %v2598
        %vm2601 = vcmp.ne.s32.totalorder %v2597, %v2599
        %vm2602 = vmpackc.low %vm2601, %vm2600
        %v2603 = vunpack.c.l.b16 %v2326
        %v2604 = vunpack.c.h.b16 %v2326
        %v2605 = vunpack.c.l.b16 0
        %v2606 = vunpack.c.h.b16 0
        %vm2607 = vcmp.ne.s32.totalorder %v2603, %v2605
        %vm2608 = vcmp.ne.s32.totalorder %v2604, %v2606
        %vm2609 = vmpackc.low %vm2608, %vm2607
        %v2610 = vunpack.c.l.b16 %v2335
        %v2611 = vunpack.c.h.b16 %v2335
        %v2612 = vunpack.c.l.b16 0
        %v2613 = vunpack.c.h.b16 0
        %vm2614 = vcmp.ne.s32.totalorder %v2610, %v2612
        %vm2615 = vcmp.ne.s32.totalorder %v2611, %v2613
        %vm2616 = vmpackc.low %vm2615, %vm2614
        %v2617 = vunpack.c.l.b16 %v2344
        %v2618 = vunpack.c.h.b16 %v2344
        %v2619 = vunpack.c.l.b16 0
        %v2620 = vunpack.c.h.b16 0
        %vm2621 = vcmp.ne.s32.totalorder %v2617, %v2619
        %vm2622 = vcmp.ne.s32.totalorder %v2618, %v2620
        %vm2623 = vmpackc.low %vm2622, %vm2621
        %v2624 = vunpack.c.l.b16 %v2353
        %v2625 = vunpack.c.h.b16 %v2353
        %v2626 = vunpack.c.l.b16 0
        %v2627 = vunpack.c.h.b16 0
        %vm2628 = vcmp.ne.s32.totalorder %v2624, %v2626
        %vm2629 = vcmp.ne.s32.totalorder %v2625, %v2627
        %vm2630 = vmpackc.low %vm2629, %vm2628
        %v2631 = vunpack.c.l.b16 %v2362
        %v2632 = vunpack.c.h.b16 %v2362
        %v2633 = vunpack.c.l.b16 0
        %v2634 = vunpack.c.h.b16 0
        %vm2635 = vcmp.ne.s32.totalorder %v2631, %v2633
        %vm2636 = vcmp.ne.s32.totalorder %v2632, %v2634
        %vm2637 = vmpackc.low %vm2636, %vm2635
        %v2638 = vunpack.c.l.b16 %v2371
        %v2639 = vunpack.c.h.b16 %v2371
        %v2640 = vunpack.c.l.b16 0
        %v2641 = vunpack.c.h.b16 0
        %vm2642 = vcmp.ne.s32.totalorder %v2638, %v2640
        %vm2643 = vcmp.ne.s32.totalorder %v2639, %v2641
        %vm2644 = vmpackc.low %vm2643, %vm2642
        %v2645 = vunpack.c.l.b16 %v2380
        %v2646 = vunpack.c.h.b16 %v2380
        %v2647 = vunpack.c.l.b16 0
        %v2648 = vunpack.c.h.b16 0
        %vm2649 = vcmp.ne.s32.totalorder %v2645, %v2647
        %vm2650 = vcmp.ne.s32.totalorder %v2646, %v2648
        %vm2651 = vmpackc.low %vm2650, %vm2649
        %v2652 = vunpack.c.l.b16 %v2389
        %v2653 = vunpack.c.h.b16 %v2389
        %v2654 = vunpack.c.l.b16 0
        %v2655 = vunpack.c.h.b16 0
        %vm2656 = vcmp.ne.s32.totalorder %v2652, %v2654
        %vm2657 = vcmp.ne.s32.totalorder %v2653, %v2655
        %vm2658 = vmpackc.low %vm2657, %vm2656
        %v2659 = vunpack.c.l.b16 %v2398
        %v2660 = vunpack.c.h.b16 %v2398
        %v2661 = vunpack.c.l.b16 0
        %v2662 = vunpack.c.h.b16 0
        %vm2663 = vcmp.ne.s32.totalorder %v2659, %v2661
        %vm2664 = vcmp.ne.s32.totalorder %v2660, %v2662
        %vm2665 = vmpackc.low %vm2664, %vm2663
        %v2666 = vunpack.c.l.b16 %v2407
        %v2667 = vunpack.c.h.b16 %v2407
        %v2668 = vunpack.c.l.b16 0
        %v2669 = vunpack.c.h.b16 0
        %vm2670 = vcmp.ne.s32.totalorder %v2666, %v2668
        %vm2671 = vcmp.ne.s32.totalorder %v2667, %v2669
        %vm2672 = vmpackc.low %vm2671, %vm2670
        %v2673 = vunpack.c.l.b16 %v2416
        %v2674 = vunpack.c.h.b16 %v2416
        %v2675 = vunpack.c.l.b16 0
        %v2676 = vunpack.c.h.b16 0
        %vm2677 = vcmp.ne.s32.totalorder %v2673, %v2675
        %vm2678 = vcmp.ne.s32.totalorder %v2674, %v2676
        %vm2679 = vmpackc.low %vm2678, %vm2677
        %v2680 = vunpack.c.l.b16 %v2425
        %v2681 = vunpack.c.h.b16 %v2425
        %v2682 = vunpack.c.l.b16 0
        %v2683 = vunpack.c.h.b16 0
        %vm2684 = vcmp.ne.s32.totalorder %v2680, %v2682
        %vm2685 = vcmp.ne.s32.totalorder %v2681, %v2683
        %vm2686 = vmpackc.low %vm2685, %vm2684
        %v2687 = vunpack.c.l.b16 %v2434
        %v2688 = vunpack.c.h.b16 %v2434
        %v2689 = vunpack.c.l.b16 0
        %v2690 = vunpack.c.h.b16 0
        %vm2691 = vcmp.ne.s32.totalorder %v2687, %v2689
        %vm2692 = vcmp.ne.s32.totalorder %v2688, %v2690
        %vm2693 = vmpackc.low %vm2692, %vm2691
        %v2694 = vunpack.c.l.b16 %v2443
        %v2695 = vunpack.c.h.b16 %v2443
        %v2696 = vunpack.c.l.b16 0
        %v2697 = vunpack.c.h.b16 0
        %vm2698 = vcmp.ne.s32.totalorder %v2694, %v2696
        %vm2699 = vcmp.ne.s32.totalorder %v2695, %v2697
        %vm2700 = vmpackc.low %vm2699, %vm2698
        %v2701 = vunpack.c.l.b16 %v2452
        %v2702 = vunpack.c.h.b16 %v2452
        %v2703 = vunpack.c.l.b16 0
        %v2704 = vunpack.c.h.b16 0
        %vm2705 = vcmp.ne.s32.totalorder %v2701, %v2703
        %vm2706 = vcmp.ne.s32.totalorder %v2702, %v2704
        %vm2707 = vmpackc.low %vm2706, %vm2705
        %v2708 = vunpack.c.l.b16 %v2461
        %v2709 = vunpack.c.h.b16 %v2461
        %v2710 = vunpack.c.l.b16 0
        %v2711 = vunpack.c.h.b16 0
        %vm2712 = vcmp.ne.s32.totalorder %v2708, %v2710
        %vm2713 = vcmp.ne.s32.totalorder %v2709, %v2711
        %vm2714 = vmpackc.low %vm2713, %vm2712
        %v2715 = vunpack.c.l.b16 %v2470
        %v2716 = vunpack.c.h.b16 %v2470
        %v2717 = vunpack.c.l.b16 0
        %v2718 = vunpack.c.h.b16 0
        %vm2719 = vcmp.ne.s32.totalorder %v2715, %v2717
        %vm2720 = vcmp.ne.s32.totalorder %v2716, %v2718
        %vm2721 = vmpackc.low %vm2720, %vm2719
        %v2722 = vunpack.c.l.b16 %v2479
        %v2723 = vunpack.c.h.b16 %v2479
        %v2724 = vunpack.c.l.b16 0
        %v2725 = vunpack.c.h.b16 0
        %vm2726 = vcmp.ne.s32.totalorder %v2722, %v2724
        %vm2727 = vcmp.ne.s32.totalorder %v2723, %v2725
        %vm2728 = vmpackc.low %vm2727, %vm2726
        %v2729 = vunpack.c.l.b16 %v2488
        %v2730 = vunpack.c.h.b16 %v2488
        %v2731 = vunpack.c.l.b16 0
        %v2732 = vunpack.c.h.b16 0
        %vm2733 = vcmp.ne.s32.totalorder %v2729, %v2731
        %vm2734 = vcmp.ne.s32.totalorder %v2730, %v2732
        %vm2735 = vmpackc.low %vm2734, %vm2733
        %v2736 = vunpack.c.l.b16 %v2497
        %v2737 = vunpack.c.h.b16 %v2497
        %v2738 = vunpack.c.l.b16 0
        %v2739 = vunpack.c.h.b16 0
        %vm2740 = vcmp.ne.s32.totalorder %v2736, %v2738
        %vm2741 = vcmp.ne.s32.totalorder %v2737, %v2739
        %vm2742 = vmpackc.low %vm2741, %vm2740
        %v2743 = vunpack.c.l.b16 %v2506
        %v2744 = vunpack.c.h.b16 %v2506
        %v2745 = vunpack.c.l.b16 0
        %v2746 = vunpack.c.h.b16 0
        %vm2747 = vcmp.ne.s32.totalorder %v2743, %v2745
        %vm2748 = vcmp.ne.s32.totalorder %v2744, %v2746
        %vm2749 = vmpackc.low %vm2748, %vm2747
        %v2750 = vunpack.c.l.b16 %v2515
        %v2751 = vunpack.c.h.b16 %v2515
        %v2752 = vunpack.c.l.b16 0
        %v2753 = vunpack.c.h.b16 0
        %vm2754 = vcmp.ne.s32.totalorder %v2750, %v2752
        %vm2755 = vcmp.ne.s32.totalorder %v2751, %v2753
        %vm2756 = vmpackc.low %vm2755, %vm2754
        %v2757 = vunpack.c.l.b16 %v2524
        %v2758 = vunpack.c.h.b16 %v2524
        %v2759 = vunpack.c.l.b16 0
        %v2760 = vunpack.c.h.b16 0
        %vm2761 = vcmp.ne.s32.totalorder %v2757, %v2759
        %vm2762 = vcmp.ne.s32.totalorder %v2758, %v2760
        %vm2763 = vmpackc.low %vm2762, %vm2761
        %v2764 = vunpack.c.l.b16 %v2533
        %v2765 = vunpack.c.h.b16 %v2533
        %v2766 = vunpack.c.l.b16 0
        %v2767 = vunpack.c.h.b16 0
        %vm2768 = vcmp.ne.s32.totalorder %v2764, %v2766
        %vm2769 = vcmp.ne.s32.totalorder %v2765, %v2767
        %vm2770 = vmpackc.low %vm2769, %vm2768
        %v2771 = vunpack.c.l.b16 %v2542
        %v2772 = vunpack.c.h.b16 %v2542
        %v2773 = vunpack.c.l.b16 0
        %v2774 = vunpack.c.h.b16 0
        %vm2775 = vcmp.ne.s32.totalorder %v2771, %v2773
        %vm2776 = vcmp.ne.s32.totalorder %v2772, %v2774
        %vm2777 = vmpackc.low %vm2776, %vm2775
        %v2778 = vunpack.c.l.b16 %v2551
        %v2779 = vunpack.c.h.b16 %v2551
        %v2780 = vunpack.c.l.b16 0
        %v2781 = vunpack.c.h.b16 0
        %vm2782 = vcmp.ne.s32.totalorder %v2778, %v2780
        %vm2783 = vcmp.ne.s32.totalorder %v2779, %v2781
        %vm2784 = vmpackc.low %vm2783, %vm2782
        %v2785 = vunpack.c.l.b16 %v2560
        %v2786 = vunpack.c.h.b16 %v2560
        %v2787 = vunpack.c.l.b16 0
        %v2788 = vunpack.c.h.b16 0
        %vm2789 = vcmp.ne.s32.totalorder %v2785, %v2787
        %vm2790 = vcmp.ne.s32.totalorder %v2786, %v2788
        %vm2791 = vmpackc.low %vm2790, %vm2789
        %v2792 = vunpack.c.l.b16 %v2569
        %v2793 = vunpack.c.h.b16 %v2569
        %v2794 = vunpack.c.l.b16 0
        %v2795 = vunpack.c.h.b16 0
        %vm2796 = vcmp.ne.s32.totalorder %v2792, %v2794
        %vm2797 = vcmp.ne.s32.totalorder %v2793, %v2795
        %vm2798 = vmpackc.low %vm2797, %vm2796
        %v2799 = vunpack.c.l.b16 %v2578
        %v2800 = vunpack.c.h.b16 %v2578
        %v2801 = vunpack.c.l.b16 0
        %v2802 = vunpack.c.h.b16 0
        %vm2803 = vcmp.ne.s32.totalorder %v2799, %v2801
        %vm2804 = vcmp.ne.s32.totalorder %v2800, %v2802
        %vm2805 = vmpackc.low %vm2804, %vm2803
        %v2806 = vunpack.c.l.b16 %v2587
        %v2807 = vunpack.c.h.b16 %v2587
        %v2808 = vunpack.c.l.b16 0
        %v2809 = vunpack.c.h.b16 0
        %vm2810 = vcmp.ne.s32.totalorder %v2806, %v2808
        %vm2811 = vcmp.ne.s32.totalorder %v2807, %v2809
        %vm2812 = vmpackc.low %vm2811, %vm2810
        %v2813 = vunpack.c.l.b16 %v2588
        %v2814 = vunpack.c.h.b16 %v2588
        %v2815 = vunpack.c.l.b16 0
        %v2816 = vunpack.c.h.b16 0
        %vm2817 = vcmp.ne.s32.totalorder %v2813, %v2815
        %vm2818 = vcmp.ne.s32.totalorder %v2814, %v2816
        %vm2819 = vmpackc.low %vm2818, %vm2817
        %v2820 = vsel %vm2595, %v893, 0
        %v2821 = vsel %vm2602, %v894, 0
        %v2822 = vsel %vm2609, %v895, 0
        %v2823 = vsel %vm2616, %v896, 0
        %v2824 = vsel %vm2623, %v897, 0
        %v2825 = vsel %vm2630, %v898, 0
        %v2826 = vsel %vm2637, %v899, 0
        %v2827 = vsel %vm2644, %v900, 0
        %v2828 = vsel %vm2651, %v901, 0
        %v2829 = vsel %vm2658, %v902, 0
        %v2830 = vsel %vm2665, %v903, 0
        %v2831 = vsel %vm2672, %v904, 0
        %v2832 = vsel %vm2679, %v905, 0
        %v2833 = vsel %vm2686, %v906, 0
        %v2834 = vsel %vm2693, %v907, 0
        %v2835 = vsel %vm2700, %v908, 0
        %v2836 = vsel %vm2707, %v909, 0
        %v2837 = vsel %vm2714, %v910, 0
        %v2838 = vsel %vm2721, %v911, 0
        %v2839 = vsel %vm2728, %v912, 0
        %v2840 = vsel %vm2735, %v913, 0
        %v2841 = vsel %vm2742, %v914, 0
        %v2842 = vsel %vm2749, %v915, 0
        %v2843 = vsel %vm2756, %v916, 0
        %v2844 = vsel %vm2763, %v917, 0
        %v2845 = vsel %vm2770, %v918, 0
        %v2846 = vsel %vm2777, %v919, 0
        %v2847 = vsel %vm2784, %v920, 0
        %v2848 = vsel %vm2791, %v921, 0
        %v2849 = vsel %vm2798, %v922, 0
        %v2850 = vsel %vm2805, %v923, 0
        %v2851 = vsel %vm2812, %v924, 0
        %v2852 = vsel %vm2819, %v925, 0
        %v2853 = vld [vmem:[%s1 + $0x40] sm:$0xf]
        %v2854 = vld [vmem:[%s1 + $0x44] sm:$0xf]
        %v2855 = vld [vmem:[%s1 + $0x48] sm:$0xf]
        %v2856 = vld [vmem:[%s1 + $0x4c] sm:$0xf]
        %v2857 = vld [vmem:[%s1 + $0x50] sm:$0xf]
        %v2858 = vld [vmem:[%s1 + $0x54] sm:$0xf]
        %v2859 = vld [vmem:[%s1 + $0x58] sm:$0xf]
        %v2860 = vld [vmem:[%s1 + $0x5c] sm:$0xf]
        %v2894 = vunpack.c.l.b16 %v2820
        %v2895 = vunpack.c.l.b16 %v2821
        %v2896 = vunpack.c.l.b16 %v2822
        %v2897 = vunpack.c.l.b16 %v2823
        %v2898 = vunpack.c.l.b16 %v2824
        %v2899 = vunpack.c.l.b16 %v2825
        %v2900 = vunpack.c.l.b16 %v2826
        %v2901 = vunpack.c.l.b16 %v2827
        %v2902 = vunpack.c.l.b16 %v2828
        %v2903 = vunpack.c.l.b16 %v2829
        %v2904 = vunpack.c.l.b16 %v2830
        %v2905 = vunpack.c.l.b16 %v2831
        %v2906 = vunpack.c.l.b16 %v2832
        %v2907 = vunpack.c.l.b16 %v2833
        %v2908 = vunpack.c.l.b16 %v2834
        %v2909 = vunpack.c.l.b16 %v2835
        %v2910 = vunpack.c.l.b16 %v2836
        %v2911 = vunpack.c.l.b16 %v2837
        %v2912 = vunpack.c.l.b16 %v2838
        %v2913 = vunpack.c.l.b16 %v2839
        %v2914 = vunpack.c.l.b16 %v2840
        %v2915 = vunpack.c.l.b16 %v2841
        %v2916 = vunpack.c.l.b16 %v2842
        %v2917 = vunpack.c.l.b16 %v2843
        %v2918 = vunpack.c.l.b16 %v2844
        %v2919 = vunpack.c.l.b16 %v2845
        %v2920 = vunpack.c.l.b16 %v2846
        %v2921 = vunpack.c.l.b16 %v2847
        %v2922 = vunpack.c.l.b16 %v2848
        %v2923 = vunpack.c.l.b16 %v2849
        %v2924 = vunpack.c.l.b16 %v2850
        %v2925 = vunpack.c.l.b16 %v2851
        %v2926 = vunpack.c.l.b16 %v2852
        %v2927 = vpack.c.b16 %v2895, %v2894
        %v2928 = vpack.c.b16 %v2897, %v2896
        %v2929 = vpack.c.b16 %v2899, %v2898
        %v2930 = vpack.c.b16 %v2901, %v2900
        %v2931 = vpack.c.b16 %v2903, %v2902
        %v2932 = vpack.c.b16 %v2905, %v2904
        %v2933 = vpack.c.b16 %v2907, %v2906
        %v2934 = vpack.c.b16 %v2909, %v2908
        %v2935 = vpack.c.b16 %v2911, %v2910
        %v2936 = vpack.c.b16 %v2913, %v2912
        %v2937 = vpack.c.b16 %v2915, %v2914
        %v2938 = vpack.c.b16 %v2917, %v2916
        %v2939 = vpack.c.b16 %v2919, %v2918
        %v2940 = vpack.c.b16 %v2921, %v2920
        %v2941 = vpack.c.b16 %v2923, %v2922
        %v2942 = vpack.c.b16 %v2925, %v2924
        %v2943 = vpack.c.b16 %v2926, %v2926
        %vm2944 = vsmask.f32 7424
        %v2946 = vshrl.u32 %v2927, 16
        %v2948 = vshll.u32 %v2927, 16
        %v2950 = vrot.slane %v2948, 1
        %v2951 = vor.u32 %v2946, %v2950
        %v2953 = vshll.u32 %v2928, 16
        %v2955 = vrot.slane %v2953, 1
        %v2956 = vsel %vm2944, %v2951, %v2955
        %v2957 = vshrl.u32 %v2928, 16
        %v2959 = vor.u32 %v2957, %v2955
        %v2961 = vshll.u32 %v2929, 16
        %v2963 = vrot.slane %v2961, 1
        %v2964 = vsel %vm2944, %v2959, %v2963
        %v2965 = vshrl.u32 %v2929, 16
        %v2967 = vor.u32 %v2965, %v2963
        %v2969 = vshll.u32 %v2930, 16
        %v2971 = vrot.slane %v2969, 1
        %v2972 = vsel %vm2944, %v2967, %v2971
        %v2973 = vshrl.u32 %v2930, 16
        %v2975 = vor.u32 %v2973, %v2971
        %v2977 = vshll.u32 %v2931, 16
        %v2979 = vrot.slane %v2977, 1
        %v2980 = vsel %vm2944, %v2975, %v2979
        %v2981 = vshrl.u32 %v2931, 16
        %v2983 = vor.u32 %v2981, %v2979
        %v2985 = vshll.u32 %v2932, 16
        %v2987 = vrot.slane %v2985, 1
        %v2988 = vsel %vm2944, %v2983, %v2987
        %v2989 = vshrl.u32 %v2932, 16
        %v2991 = vor.u32 %v2989, %v2987
        %v2993 = vshll.u32 %v2933, 16
        %v2995 = vrot.slane %v2993, 1
        %v2996 = vsel %vm2944, %v2991, %v2995
        %v2997 = vshrl.u32 %v2933, 16
        %v2999 = vor.u32 %v2997, %v2995
        %v3001 = vshll.u32 %v2934, 16
        %v3003 = vrot.slane %v3001, 1
        %v3004 = vsel %vm2944, %v2999, %v3003
        %v3005 = vshrl.u32 %v2934, 16
        %v3007 = vor.u32 %v3005, %v3003
        %v3009 = vshll.u32 %v2935, 16
        %v3011 = vrot.slane %v3009, 1
        %v3012 = vsel %vm2944, %v3007, %v3011
        %v3013 = vshrl.u32 %v2935, 16
        %v3015 = vor.u32 %v3013, %v3011
        %v3017 = vshll.u32 %v2936, 16
        %v3019 = vrot.slane %v3017, 1
        %v3020 = vsel %vm2944, %v3015, %v3019
        %v3021 = vshrl.u32 %v2936, 16
        %v3023 = vor.u32 %v3021, %v3019
        %v3025 = vshll.u32 %v2937, 16
        %v3027 = vrot.slane %v3025, 1
        %v3028 = vsel %vm2944, %v3023, %v3027
        %v3029 = vshrl.u32 %v2937, 16
        %v3031 = vor.u32 %v3029, %v3027
        %v3033 = vshll.u32 %v2938, 16
        %v3035 = vrot.slane %v3033, 1
        %v3036 = vsel %vm2944, %v3031, %v3035
        %v3037 = vshrl.u32 %v2938, 16
        %v3039 = vor.u32 %v3037, %v3035
        %v3041 = vshll.u32 %v2939, 16
        %v3043 = vrot.slane %v3041, 1
        %v3044 = vsel %vm2944, %v3039, %v3043
        %v3045 = vshrl.u32 %v2939, 16
        %v3047 = vor.u32 %v3045, %v3043
        %v3049 = vshll.u32 %v2940, 16
        %v3051 = vrot.slane %v3049, 1
        %v3052 = vsel %vm2944, %v3047, %v3051
        %v3053 = vshrl.u32 %v2940, 16
        %v3055 = vor.u32 %v3053, %v3051
        %v3057 = vshll.u32 %v2941, 16
        %v3059 = vrot.slane %v3057, 1
        %v3060 = vsel %vm2944, %v3055, %v3059
        %v3061 = vshrl.u32 %v2941, 16
        %v3063 = vor.u32 %v3061, %v3059
        %v3065 = vshll.u32 %v2942, 16
        %v3067 = vrot.slane %v3065, 1
        %v3068 = vsel %vm2944, %v3063, %v3067
        %v3069 = vshrl.u32 %v2942, 16
        %v3071 = vor.u32 %v3069, %v3067
        %v3073 = vshll.u32 %v2943, 16
        %v3075 = vrot.slane %v3073, 1
        %v3076 = vsel %vm2944, %v3071, %v3075
        %v3085 = vunpack.c.l.b16 %v2853
        %v3086 = vunpack.c.l.b16 %v2854
        %v3087 = vunpack.c.l.b16 %v2855
        %v3088 = vunpack.c.l.b16 %v2856
        %v3089 = vunpack.c.l.b16 %v2857
        %v3090 = vunpack.c.l.b16 %v2858
        %v3091 = vunpack.c.l.b16 %v2859
        %v3092 = vunpack.c.l.b16 %v2860
        %v3093 = vpack.c.b16 %v3086, %v3085
        %v3094 = vpack.c.b16 %v3088, %v3087
        %v3095 = vpack.c.b16 %v3090, %v3089
        %v3096 = vpack.c.b16 %v3092, %v3091
        %v3102 = vsel %vm1700, %v2956, 0
        %v3105 = vsel %vm1700, %v2964, 0
        %v3108 = vsel %vm1700, %v2972, 0
        %v3111 = vsel %vm1700, %v2980, 0
        %v3114 = vsel %vm1700, %v2988, 0
        %v3117 = vsel %vm1700, %v2996, 0
        %v3120 = vsel %vm1700, %v3004, 0
        %v3123 = vsel %vm1700, %v3012, 0
        %v3126 = vsel %vm1700, %v3020, 0
        %v3129 = vsel %vm1700, %v3028, 0
        %v3132 = vsel %vm1700, %v3036, 0
        %v3135 = vsel %vm1700, %v3044, 0
        %v3138 = vsel %vm1700, %v3052, 0
        %v3141 = vsel %vm1700, %v3060, 0
        %v3144 = vsel %vm1700, %v3068, 0
        %v3147 = vsel %vm1700, %v3076, 0
        %3149 = vmatpush.bf16.msra.mxu0 0
        %3150 = vmatpush.bf16.msra.mxu0 0
        %3151 = vmatpush.bf16.msra.mxu0 0
        %3152 = vmatpush.bf16.msra.mxu0 0
        %3153 = vmatpush.bf16.msra.mxu0 %v3096
        %3154 = vmatpush.bf16.msra.mxu0 %v3095
        %3155 = vmatpush.bf16.msra.mxu0 %v3094
        %3156 = vmatpush.bf16.msra.mxu0 %v3093
        %3157 = vmatmul.bf16.gmra.mxu0 %v3102
        %v3158 = vpop.f32.mrf.mxu0
        %v3159 = vadd.f32 0.0, %v3158
        %v3160 = vpop.f32.mrf.mxu0
        %v3161 = vadd.f32 0.0, %v3160
        %3162 = vmatmul.bf16.gmra.mxu0 %v3105
        %v3163 = vpop.f32.mrf.mxu0
        %v3164 = vadd.f32 0.0, %v3163
        %v3165 = vpop.f32.mrf.mxu0
        %v3166 = vadd.f32 0.0, %v3165
        %3167 = vmatmul.bf16.gmra.mxu0 %v3108
        %v3168 = vpop.f32.mrf.mxu0
        %v3169 = vadd.f32 0.0, %v3168
        %v3170 = vpop.f32.mrf.mxu0
        %v3171 = vadd.f32 0.0, %v3170
        %3172 = vmatmul.bf16.gmra.mxu0 %v3111
        %v3173 = vpop.f32.mrf.mxu0
        %v3174 = vadd.f32 0.0, %v3173
        %v3175 = vpop.f32.mrf.mxu0
        %v3176 = vadd.f32 0.0, %v3175
        %3177 = vmatmul.bf16.gmra.mxu0 %v3114
        %v3178 = vpop.f32.mrf.mxu0
        %v3179 = vadd.f32 0.0, %v3178
        %v3180 = vpop.f32.mrf.mxu0
        %v3181 = vadd.f32 0.0, %v3180
        %3182 = vmatmul.bf16.gmra.mxu0 %v3117
        %v3183 = vpop.f32.mrf.mxu0
        %v3184 = vadd.f32 0.0, %v3183
        %v3185 = vpop.f32.mrf.mxu0
        %v3186 = vadd.f32 0.0, %v3185
        %3187 = vmatmul.bf16.gmra.mxu0 %v3120
        %v3188 = vpop.f32.mrf.mxu0
        %v3189 = vadd.f32 0.0, %v3188
        %v3190 = vpop.f32.mrf.mxu0
        %v3191 = vadd.f32 0.0, %v3190
        %3192 = vmatmul.bf16.gmra.mxu0 %v3123
        %v3193 = vpop.f32.mrf.mxu0
        %v3194 = vadd.f32 0.0, %v3193
        %v3195 = vpop.f32.mrf.mxu0
        %v3196 = vadd.f32 0.0, %v3195
        %3197 = vmatmul.bf16.gmra.mxu0 %v3126
        %v3198 = vpop.f32.mrf.mxu0
        %v3199 = vadd.f32 0.0, %v3198
        %v3200 = vpop.f32.mrf.mxu0
        %v3201 = vadd.f32 0.0, %v3200
        %3202 = vmatmul.bf16.gmra.mxu0 %v3129
        %v3203 = vpop.f32.mrf.mxu0
        %v3204 = vadd.f32 0.0, %v3203
        %v3205 = vpop.f32.mrf.mxu0
        %v3206 = vadd.f32 0.0, %v3205
        %3207 = vmatmul.bf16.gmra.mxu0 %v3132
        %v3208 = vpop.f32.mrf.mxu0
        %v3209 = vadd.f32 0.0, %v3208
        %v3210 = vpop.f32.mrf.mxu0
        %v3211 = vadd.f32 0.0, %v3210
        %3212 = vmatmul.bf16.gmra.mxu0 %v3135
        %v3213 = vpop.f32.mrf.mxu0
        %v3214 = vadd.f32 0.0, %v3213
        %v3215 = vpop.f32.mrf.mxu0
        %v3216 = vadd.f32 0.0, %v3215
        %3217 = vmatmul.bf16.gmra.mxu0 %v3138
        %v3218 = vpop.f32.mrf.mxu0
        %v3219 = vadd.f32 0.0, %v3218
        %v3220 = vpop.f32.mrf.mxu0
        %v3221 = vadd.f32 0.0, %v3220
        %3222 = vmatmul.bf16.gmra.mxu0 %v3141
        %v3223 = vpop.f32.mrf.mxu0
        %v3224 = vadd.f32 0.0, %v3223
        %v3225 = vpop.f32.mrf.mxu0
        %v3226 = vadd.f32 0.0, %v3225
        %3227 = vmatmul.bf16.gmra.mxu0 %v3144
        %v3228 = vpop.f32.mrf.mxu0
        %v3229 = vadd.f32 0.0, %v3228
        %v3230 = vpop.f32.mrf.mxu0
        %v3231 = vadd.f32 0.0, %v3230
        %3232 = vmatmul.bf16.gmra.mxu0 %v3147
        %v3233 = vpop.f32.mrf.mxu0
        %v3234 = vadd.f32 0.0, %v3233
        %v3235 = vpop.f32.mrf.mxu0
        %v3236 = vadd.f32 0.0, %v3235
        %3237 = vdwg.mxu0
        %v3238 = vadd.f32 %v2156, %v3159
        %v3239 = vadd.f32 %v2158, %v3161
        %v3240 = vadd.f32 %v2161, %v3164
        %v3241 = vadd.f32 %v2163, %v3166
        %v3242 = vadd.f32 %v2166, %v3169
        %v3243 = vadd.f32 %v2168, %v3171
        %v3244 = vadd.f32 %v2171, %v3174
        %v3245 = vadd.f32 %v2173, %v3176
        %v3246 = vadd.f32 %v2176, %v3179
        %v3247 = vadd.f32 %v2178, %v3181
        %v3248 = vadd.f32 %v2181, %v3184
        %v3249 = vadd.f32 %v2183, %v3186
        %v3250 = vadd.f32 %v2186, %v3189
        %v3251 = vadd.f32 %v2188, %v3191
        %v3252 = vadd.f32 %v2191, %v3194
        %v3253 = vadd.f32 %v2193, %v3196
        %v3254 = vadd.f32 %v2196, %v3199
        %v3255 = vadd.f32 %v2198, %v3201
        %v3256 = vadd.f32 %v2201, %v3204
        %v3257 = vadd.f32 %v2203, %v3206
        %v3258 = vadd.f32 %v2206, %v3209
        %v3259 = vadd.f32 %v2208, %v3211
        %v3260 = vadd.f32 %v2211, %v3214
        %v3261 = vadd.f32 %v2213, %v3216
        %v3262 = vadd.f32 %v2216, %v3219
        %v3263 = vadd.f32 %v2218, %v3221
        %v3264 = vadd.f32 %v2221, %v3224
        %v3265 = vadd.f32 %v2223, %v3226
        %v3266 = vadd.f32 %v2226, %v3229
        %v3267 = vadd.f32 %v2228, %v3231
        %v3268 = vadd.f32 %v2231, %v3234
        %v3269 = vadd.f32 %v2233, %v3236
        %v3270 = vsel %vm1322, %v894, 0
        %v3271 = vsel %vm1329, %v895, 0
        %v3272 = vsel %vm1336, %v896, 0
        %v3273 = vsel %vm1343, %v897, 0
        %v3274 = vsel %vm1350, %v898, 0
        %v3275 = vsel %vm1357, %v899, 0
        %v3276 = vsel %vm1364, %v900, 0
        %v3277 = vsel %vm1371, %v901, 0
        %v3278 = vsel %vm1378, %v902, 0
        %v3279 = vsel %vm1385, %v903, 0
        %v3280 = vsel %vm1392, %v904, 0
        %v3281 = vsel %vm1399, %v905, 0
        %v3282 = vsel %vm1406, %v906, 0
        %v3283 = vsel %vm1413, %v907, 0
        %v3284 = vsel %vm1420, %v908, 0
        %v3285 = vsel %vm1427, %v909, 0
        %v3286 = vsel %vm1434, %v910, 0
        %v3287 = vsel %vm1441, %v911, 0
        %v3288 = vsel %vm1448, %v912, 0
        %v3289 = vsel %vm1455, %v913, 0
        %v3290 = vsel %vm1462, %v914, 0
        %v3291 = vsel %vm1469, %v915, 0
        %v3292 = vsel %vm1476, %v916, 0
        %v3293 = vsel %vm1483, %v917, 0
        %v3294 = vsel %vm1490, %v918, 0
        %v3295 = vsel %vm1497, %v919, 0
        %v3296 = vsel %vm1504, %v920, 0
        %v3297 = vsel %vm1511, %v921, 0
        %v3298 = vsel %vm1518, %v922, 0
        %v3299 = vsel %vm1525, %v923, 0
        %v3300 = vsel %vm1532, %v924, 0
        %v3301 = vsel %vm1539, %v925, 0
        %v3302 = vsel %vm1546, %v926, 0
        %v3303 = vld [vmem:[%s1 + $0x60] sm:$0xf]
        %v3304 = vld [vmem:[%s1 + $0x64] sm:$0xf]
        %v3305 = vld [vmem:[%s1 + $0x68] sm:$0xf]
        %v3306 = vld [vmem:[%s1 + $0x6c] sm:$0xf]
        %v3307 = vld [vmem:[%s1 + $0x70] sm:$0xf]
        %v3308 = vld [vmem:[%s1 + $0x74] sm:$0xf]
        %v3309 = vld [vmem:[%s1 + $0x78] sm:$0xf]
        %v3310 = vld [vmem:[%s1 + $0x7c] sm:$0xf]
        %v3344 = vunpack.c.l.b16 %v3270
        %v3345 = vunpack.c.l.b16 %v3271
        %v3346 = vunpack.c.l.b16 %v3272
        %v3347 = vunpack.c.l.b16 %v3273
        %v3348 = vunpack.c.l.b16 %v3274
        %v3349 = vunpack.c.l.b16 %v3275
        %v3350 = vunpack.c.l.b16 %v3276
        %v3351 = vunpack.c.l.b16 %v3277
        %v3352 = vunpack.c.l.b16 %v3278
        %v3353 = vunpack.c.l.b16 %v3279
        %v3354 = vunpack.c.l.b16 %v3280
        %v3355 = vunpack.c.l.b16 %v3281
        %v3356 = vunpack.c.l.b16 %v3282
        %v3357 = vunpack.c.l.b16 %v3283
        %v3358 = vunpack.c.l.b16 %v3284
        %v3359 = vunpack.c.l.b16 %v3285
        %v3360 = vunpack.c.l.b16 %v3286
        %v3361 = vunpack.c.l.b16 %v3287
        %v3362 = vunpack.c.l.b16 %v3288
        %v3363 = vunpack.c.l.b16 %v3289
        %v3364 = vunpack.c.l.b16 %v3290
        %v3365 = vunpack.c.l.b16 %v3291
        %v3366 = vunpack.c.l.b16 %v3292
        %v3367 = vunpack.c.l.b16 %v3293
        %v3368 = vunpack.c.l.b16 %v3294
        %v3369 = vunpack.c.l.b16 %v3295
        %v3370 = vunpack.c.l.b16 %v3296
        %v3371 = vunpack.c.l.b16 %v3297
        %v3372 = vunpack.c.l.b16 %v3298
        %v3373 = vunpack.c.l.b16 %v3299
        %v3374 = vunpack.c.l.b16 %v3300
        %v3375 = vunpack.c.l.b16 %v3301
        %v3376 = vunpack.c.l.b16 %v3302
        %v3377 = vpack.c.b16 %v3345, %v3344
        %v3378 = vpack.c.b16 %v3347, %v3346
        %v3379 = vpack.c.b16 %v3349, %v3348
        %v3380 = vpack.c.b16 %v3351, %v3350
        %v3381 = vpack.c.b16 %v3353, %v3352
        %v3382 = vpack.c.b16 %v3355, %v3354
        %v3383 = vpack.c.b16 %v3357, %v3356
        %v3384 = vpack.c.b16 %v3359, %v3358
        %v3385 = vpack.c.b16 %v3361, %v3360
        %v3386 = vpack.c.b16 %v3363, %v3362
        %v3387 = vpack.c.b16 %v3365, %v3364
        %v3388 = vpack.c.b16 %v3367, %v3366
        %v3389 = vpack.c.b16 %v3369, %v3368
        %v3390 = vpack.c.b16 %v3371, %v3370
        %v3391 = vpack.c.b16 %v3373, %v3372
        %v3392 = vpack.c.b16 %v3375, %v3374
        %v3393 = vpack.c.b16 %v3376, %v3376
        %v3395 = vshrl.u32 %v3377, 16
        %v3397 = vrot.slane %v3395, 3
        %v3398 = vshll.u32 %v3377, 16
        %v3400 = vrot.slane %v3398, 4
        %v3401 = vor.u32 %v3397, %v3400
        %v3403 = vshrl.u32 %v3378, 16
        %v3405 = vrot.slane %v3403, 3
        %v3406 = vshll.u32 %v3378, 16
        %v3408 = vrot.slane %v3406, 4
        %v3409 = vor.u32 %v3405, %v3408
        %v3410 = vsel %vm1921, %v3401, %v3409
        %v3412 = vshrl.u32 %v3379, 16
        %v3414 = vrot.slane %v3412, 3
        %v3415 = vshll.u32 %v3379, 16
        %v3417 = vrot.slane %v3415, 4
        %v3418 = vor.u32 %v3414, %v3417
        %v3419 = vsel %vm1921, %v3409, %v3418
        %v3421 = vshrl.u32 %v3380, 16
        %v3423 = vrot.slane %v3421, 3
        %v3424 = vshll.u32 %v3380, 16
        %v3426 = vrot.slane %v3424, 4
        %v3427 = vor.u32 %v3423, %v3426
        %v3428 = vsel %vm1921, %v3418, %v3427
        %v3430 = vshrl.u32 %v3381, 16
        %v3432 = vrot.slane %v3430, 3
        %v3433 = vshll.u32 %v3381, 16
        %v3435 = vrot.slane %v3433, 4
        %v3436 = vor.u32 %v3432, %v3435
        %v3437 = vsel %vm1921, %v3427, %v3436
        %v3439 = vshrl.u32 %v3382, 16
        %v3441 = vrot.slane %v3439, 3
        %v3442 = vshll.u32 %v3382, 16
        %v3444 = vrot.slane %v3442, 4
        %v3445 = vor.u32 %v3441, %v3444
        %v3446 = vsel %vm1921, %v3436, %v3445
        %v3448 = vshrl.u32 %v3383, 16
        %v3450 = vrot.slane %v3448, 3
        %v3451 = vshll.u32 %v3383, 16
        %v3453 = vrot.slane %v3451, 4
        %v3454 = vor.u32 %v3450, %v3453
        %v3455 = vsel %vm1921, %v3445, %v3454
        %v3457 = vshrl.u32 %v3384, 16
        %v3459 = vrot.slane %v3457, 3
        %v3460 = vshll.u32 %v3384, 16
        %v3462 = vrot.slane %v3460, 4
        %v3463 = vor.u32 %v3459, %v3462
        %v3464 = vsel %vm1921, %v3454, %v3463
        %v3466 = vshrl.u32 %v3385, 16
        %v3468 = vrot.slane %v3466, 3
        %v3469 = vshll.u32 %v3385, 16
        %v3471 = vrot.slane %v3469, 4
        %v3472 = vor.u32 %v3468, %v3471
        %v3473 = vsel %vm1921, %v3463, %v3472
        %v3475 = vshrl.u32 %v3386, 16
        %v3477 = vrot.slane %v3475, 3
        %v3478 = vshll.u32 %v3386, 16
        %v3480 = vrot.slane %v3478, 4
        %v3481 = vor.u32 %v3477, %v3480
        %v3482 = vsel %vm1921, %v3472, %v3481
        %v3484 = vshrl.u32 %v3387, 16
        %v3486 = vrot.slane %v3484, 3
        %v3487 = vshll.u32 %v3387, 16
        %v3489 = vrot.slane %v3487, 4
        %v3490 = vor.u32 %v3486, %v3489
        %v3491 = vsel %vm1921, %v3481, %v3490
        %v3493 = vshrl.u32 %v3388, 16
        %v3495 = vrot.slane %v3493, 3
        %v3496 = vshll.u32 %v3388, 16
        %v3498 = vrot.slane %v3496, 4
        %v3499 = vor.u32 %v3495, %v3498
        %v3500 = vsel %vm1921, %v3490, %v3499
        %v3502 = vshrl.u32 %v3389, 16
        %v3504 = vrot.slane %v3502, 3
        %v3505 = vshll.u32 %v3389, 16
        %v3507 = vrot.slane %v3505, 4
        %v3508 = vor.u32 %v3504, %v3507
        %v3509 = vsel %vm1921, %v3499, %v3508
        %v3511 = vshrl.u32 %v3390, 16
        %v3513 = vrot.slane %v3511, 3
        %v3514 = vshll.u32 %v3390, 16
        %v3516 = vrot.slane %v3514, 4
        %v3517 = vor.u32 %v3513, %v3516
        %v3518 = vsel %vm1921, %v3508, %v3517
        %v3520 = vshrl.u32 %v3391, 16
        %v3522 = vrot.slane %v3520, 3
        %v3523 = vshll.u32 %v3391, 16
        %v3525 = vrot.slane %v3523, 4
        %v3526 = vor.u32 %v3522, %v3525
        %v3527 = vsel %vm1921, %v3517, %v3526
        %v3529 = vshrl.u32 %v3392, 16
        %v3531 = vrot.slane %v3529, 3
        %v3532 = vshll.u32 %v3392, 16
        %v3534 = vrot.slane %v3532, 4
        %v3535 = vor.u32 %v3531, %v3534
        %v3536 = vsel %vm1921, %v3526, %v3535
        %v3538 = vshrl.u32 %v3393, 16
        %v3540 = vrot.slane %v3538, 3
        %v3541 = vshll.u32 %v3393, 16
        %v3543 = vrot.slane %v3541, 4
        %v3544 = vor.u32 %v3540, %v3543
        %v3545 = vsel %vm1921, %v3535, %v3544
        %v3554 = vunpack.c.l.b16 %v3303
        %v3555 = vunpack.c.l.b16 %v3304
        %v3556 = vunpack.c.l.b16 %v3305
        %v3557 = vunpack.c.l.b16 %v3306
        %v3558 = vunpack.c.l.b16 %v3307
        %v3559 = vunpack.c.l.b16 %v3308
        %v3560 = vunpack.c.l.b16 %v3309
        %v3561 = vunpack.c.l.b16 %v3310
        %v3562 = vpack.c.b16 %v3555, %v3554
        %v3563 = vpack.c.b16 %v3557, %v3556
        %v3564 = vpack.c.b16 %v3559, %v3558
        %v3565 = vpack.c.b16 %v3561, %v3560
        %v3571 = vsel %vm1700, %v3410, 0
        %v3574 = vsel %vm1700, %v3419, 0
        %v3577 = vsel %vm1700, %v3428, 0
        %v3580 = vsel %vm1700, %v3437, 0
        %v3583 = vsel %vm1700, %v3446, 0
        %v3586 = vsel %vm1700, %v3455, 0
        %v3589 = vsel %vm1700, %v3464, 0
        %v3592 = vsel %vm1700, %v3473, 0
        %v3595 = vsel %vm1700, %v3482, 0
        %v3598 = vsel %vm1700, %v3491, 0
        %v3601 = vsel %vm1700, %v3500, 0
        %v3604 = vsel %vm1700, %v3509, 0
        %v3607 = vsel %vm1700, %v3518, 0
        %v3610 = vsel %vm1700, %v3527, 0
        %v3613 = vsel %vm1700, %v3536, 0
        %v3616 = vsel %vm1700, %v3545, 0
        %3618 = vmatpush.bf16.msra.mxu0 0
        %3619 = vmatpush.bf16.msra.mxu0 0
        %3620 = vmatpush.bf16.msra.mxu0 0
        %3621 = vmatpush.bf16.msra.mxu0 0
        %3622 = vmatpush.bf16.msra.mxu0 %v3565
        %3623 = vmatpush.bf16.msra.mxu0 %v3564
        %3624 = vmatpush.bf16.msra.mxu0 %v3563
        %3625 = vmatpush.bf16.msra.mxu0 %v3562
        %3626 = vmatmul.bf16.gmra.mxu0 %v3571
        %v3627 = vpop.f32.mrf.mxu0
        %v3628 = vadd.f32 0.0, %v3627
        %v3629 = vpop.f32.mrf.mxu0
        %v3630 = vadd.f32 0.0, %v3629
        %3631 = vmatmul.bf16.gmra.mxu0 %v3574
        %v3632 = vpop.f32.mrf.mxu0
        %v3633 = vadd.f32 0.0, %v3632
        %v3634 = vpop.f32.mrf.mxu0
        %v3635 = vadd.f32 0.0, %v3634
        %3636 = vmatmul.bf16.gmra.mxu0 %v3577
        %v3637 = vpop.f32.mrf.mxu0
        %v3638 = vadd.f32 0.0, %v3637
        %v3639 = vpop.f32.mrf.mxu0
        %v3640 = vadd.f32 0.0, %v3639
        %3641 = vmatmul.bf16.gmra.mxu0 %v3580
        %v3642 = vpop.f32.mrf.mxu0
        %v3643 = vadd.f32 0.0, %v3642
        %v3644 = vpop.f32.mrf.mxu0
        %v3645 = vadd.f32 0.0, %v3644
        %3646 = vmatmul.bf16.gmra.mxu0 %v3583
        %v3647 = vpop.f32.mrf.mxu0
        %v3648 = vadd.f32 0.0, %v3647
        %v3649 = vpop.f32.mrf.mxu0
        %v3650 = vadd.f32 0.0, %v3649
        %3651 = vmatmul.bf16.gmra.mxu0 %v3586
        %v3652 = vpop.f32.mrf.mxu0
        %v3653 = vadd.f32 0.0, %v3652
        %v3654 = vpop.f32.mrf.mxu0
        %v3655 = vadd.f32 0.0, %v3654
        %3656 = vmatmul.bf16.gmra.mxu0 %v3589
        %v3657 = vpop.f32.mrf.mxu0
        %v3658 = vadd.f32 0.0, %v3657
        %v3659 = vpop.f32.mrf.mxu0
        %v3660 = vadd.f32 0.0, %v3659
        %3661 = vmatmul.bf16.gmra.mxu0 %v3592
        %v3662 = vpop.f32.mrf.mxu0
        %v3663 = vadd.f32 0.0, %v3662
        %v3664 = vpop.f32.mrf.mxu0
        %v3665 = vadd.f32 0.0, %v3664
        %3666 = vmatmul.bf16.gmra.mxu0 %v3595
        %v3667 = vpop.f32.mrf.mxu0
        %v3668 = vadd.f32 0.0, %v3667
        %v3669 = vpop.f32.mrf.mxu0
        %v3670 = vadd.f32 0.0, %v3669
        %3671 = vmatmul.bf16.gmra.mxu0 %v3598
        %v3672 = vpop.f32.mrf.mxu0
        %v3673 = vadd.f32 0.0, %v3672
        %v3674 = vpop.f32.mrf.mxu0
        %v3675 = vadd.f32 0.0, %v3674
        %3676 = vmatmul.bf16.gmra.mxu0 %v3601
        %v3677 = vpop.f32.mrf.mxu0
        %v3678 = vadd.f32 0.0, %v3677
        %v3679 = vpop.f32.mrf.mxu0
        %v3680 = vadd.f32 0.0, %v3679
        %3681 = vmatmul.bf16.gmra.mxu0 %v3604
        %v3682 = vpop.f32.mrf.mxu0
        %v3683 = vadd.f32 0.0, %v3682
        %v3684 = vpop.f32.mrf.mxu0
        %v3685 = vadd.f32 0.0, %v3684
        %3686 = vmatmul.bf16.gmra.mxu0 %v3607
        %v3687 = vpop.f32.mrf.mxu0
        %v3688 = vadd.f32 0.0, %v3687
        %v3689 = vpop.f32.mrf.mxu0
        %v3690 = vadd.f32 0.0, %v3689
        %3691 = vmatmul.bf16.gmra.mxu0 %v3610
        %v3692 = vpop.f32.mrf.mxu0
        %v3693 = vadd.f32 0.0, %v3692
        %v3694 = vpop.f32.mrf.mxu0
        %v3695 = vadd.f32 0.0, %v3694
        %3696 = vmatmul.bf16.gmra.mxu0 %v3613
        %v3697 = vpop.f32.mrf.mxu0
        %v3698 = vadd.f32 0.0, %v3697
        %v3699 = vpop.f32.mrf.mxu0
        %v3700 = vadd.f32 0.0, %v3699
        %3701 = vmatmul.bf16.gmra.mxu0 %v3616
        %v3702 = vpop.f32.mrf.mxu0
        %v3703 = vadd.f32 0.0, %v3702
        %v3704 = vpop.f32.mrf.mxu0
        %v3705 = vadd.f32 0.0, %v3704
        %3706 = vdwg.mxu0
        %v3707 = vadd.f32 %v3238, %v3628
        %v3708 = vadd.f32 %v3239, %v3630
        %v3709 = vadd.f32 %v3240, %v3633
        %v3710 = vadd.f32 %v3241, %v3635
        %v3711 = vadd.f32 %v3242, %v3638
        %v3712 = vadd.f32 %v3243, %v3640
        %v3713 = vadd.f32 %v3244, %v3643
        %v3714 = vadd.f32 %v3245, %v3645
        %v3715 = vadd.f32 %v3246, %v3648
        %v3716 = vadd.f32 %v3247, %v3650
        %v3717 = vadd.f32 %v3248, %v3653
        %v3718 = vadd.f32 %v3249, %v3655
        %v3719 = vadd.f32 %v3250, %v3658
        %v3720 = vadd.f32 %v3251, %v3660
        %v3721 = vadd.f32 %v3252, %v3663
        %v3722 = vadd.f32 %v3253, %v3665
        %v3723 = vadd.f32 %v3254, %v3668
        %v3724 = vadd.f32 %v3255, %v3670
        %v3725 = vadd.f32 %v3256, %v3673
        %v3726 = vadd.f32 %v3257, %v3675
        %v3727 = vadd.f32 %v3258, %v3678
        %v3728 = vadd.f32 %v3259, %v3680
        %v3729 = vadd.f32 %v3260, %v3683
        %v3730 = vadd.f32 %v3261, %v3685
        %v3731 = vadd.f32 %v3262, %v3688
        %v3732 = vadd.f32 %v3263, %v3690
        %v3733 = vadd.f32 %v3264, %v3693
        %v3734 = vadd.f32 %v3265, %v3695
        %v3735 = vadd.f32 %v3266, %v3698
        %v3736 = vadd.f32 %v3267, %v3700
        %v3737 = vadd.f32 %v3268, %v3703
        %v3738 = vadd.f32 %v3269, %v3705
        %v3739 = vld [vmem:[%s1 + $0x80] sm:$0xf]
        %v3740 = vld [vmem:[%s1 + $0x84] sm:$0xf]
        %v3741 = vld [vmem:[%s1 + $0x88] sm:$0xf]
        %v3742 = vld [vmem:[%s1 + $0x8c] sm:$0xf]
        %v3743 = vld [vmem:[%s1 + $0x90] sm:$0xf]
        %v3744 = vld [vmem:[%s1 + $0x94] sm:$0xf]
        %v3745 = vld [vmem:[%s1 + $0x98] sm:$0xf]
        %v3746 = vld [vmem:[%s1 + $0x9c] sm:$0xf]
        %v3749 = vunpack.c.l.b16 %v925
        %v3750 = vunpack.c.l.b16 %v926
        %v3751 = vpack.c.b16 %v3750, %v3749
        %v3760 = vunpack.c.l.b16 %v3739
        %v3761 = vunpack.c.l.b16 %v3740
        %v3762 = vunpack.c.l.b16 %v3741
        %v3763 = vunpack.c.l.b16 %v3742
        %v3764 = vunpack.c.l.b16 %v3743
        %v3765 = vunpack.c.l.b16 %v3744
        %v3766 = vunpack.c.l.b16 %v3745
        %v3767 = vunpack.c.l.b16 %v3746
        %v3768 = vpack.c.b16 %v3761, %v3760
        %v3769 = vpack.c.b16 %v3763, %v3762
        %v3770 = vpack.c.b16 %v3765, %v3764
        %v3771 = vpack.c.b16 %v3767, %v3766
        %v3777 = vsel %vm1700, %v3751, 0
        %3779 = vmatpush.bf16.msra.mxu0 0
        %3780 = vmatpush.bf16.msra.mxu0 0
        %3781 = vmatpush.bf16.msra.mxu0 0
        %3782 = vmatpush.bf16.msra.mxu0 0
        %3783 = vmatpush.bf16.msra.mxu0 %v3771
        %3784 = vmatpush.bf16.msra.mxu0 %v3770
        %3785 = vmatpush.bf16.msra.mxu0 %v3769
        %3786 = vmatpush.bf16.msra.mxu0 %v3768
        %3787 = vmatmul.bf16.gmra.mxu0 %v1705
        %v3788 = vpop.f32.mrf.mxu0
        %v3789 = vadd.f32 0.0, %v3788
        %v3790 = vpop.f32.mrf.mxu0
        %v3791 = vadd.f32 0.0, %v3790
        %3792 = vmatmul.bf16.gmra.mxu0 %v1708
        %v3793 = vpop.f32.mrf.mxu0
        %v3794 = vadd.f32 0.0, %v3793
        %v3795 = vpop.f32.mrf.mxu0
        %v3796 = vadd.f32 0.0, %v3795
        %3797 = vmatmul.bf16.gmra.mxu0 %v1711
        %v3798 = vpop.f32.mrf.mxu0
        %v3799 = vadd.f32 0.0, %v3798
        %v3800 = vpop.f32.mrf.mxu0
        %v3801 = vadd.f32 0.0, %v3800
        %3802 = vmatmul.bf16.gmra.mxu0 %v1714
        %v3803 = vpop.f32.mrf.mxu0
        %v3804 = vadd.f32 0.0, %v3803
        %v3805 = vpop.f32.mrf.mxu0
        %v3806 = vadd.f32 0.0, %v3805
        %3807 = vmatmul.bf16.gmra.mxu0 %v1717
        %v3808 = vpop.f32.mrf.mxu0
        %v3809 = vadd.f32 0.0, %v3808
        %v3810 = vpop.f32.mrf.mxu0
        %v3811 = vadd.f32 0.0, %v3810
        %3812 = vmatmul.bf16.gmra.mxu0 %v1720
        %v3813 = vpop.f32.mrf.mxu0
        %v3814 = vadd.f32 0.0, %v3813
        %v3815 = vpop.f32.mrf.mxu0
        %v3816 = vadd.f32 0.0, %v3815
        %3817 = vmatmul.bf16.gmra.mxu0 %v1723
        %v3818 = vpop.f32.mrf.mxu0
        %v3819 = vadd.f32 0.0, %v3818
        %v3820 = vpop.f32.mrf.mxu0
        %v3821 = vadd.f32 0.0, %v3820
        %3822 = vmatmul.bf16.gmra.mxu0 %v1726
        %v3823 = vpop.f32.mrf.mxu0
        %v3824 = vadd.f32 0.0, %v3823
        %v3825 = vpop.f32.mrf.mxu0
        %v3826 = vadd.f32 0.0, %v3825
        %3827 = vmatmul.bf16.gmra.mxu0 %v1729
        %v3828 = vpop.f32.mrf.mxu0
        %v3829 = vadd.f32 0.0, %v3828
        %v3830 = vpop.f32.mrf.mxu0
        %v3831 = vadd.f32 0.0, %v3830
        %3832 = vmatmul.bf16.gmra.mxu0 %v1732
        %v3833 = vpop.f32.mrf.mxu0
        %v3834 = vadd.f32 0.0, %v3833
        %v3835 = vpop.f32.mrf.mxu0
        %v3836 = vadd.f32 0.0, %v3835
        %3837 = vmatmul.bf16.gmra.mxu0 %v1735
        %v3838 = vpop.f32.mrf.mxu0
        %v3839 = vadd.f32 0.0, %v3838
        %v3840 = vpop.f32.mrf.mxu0
        %v3841 = vadd.f32 0.0, %v3840
        %3842 = vmatmul.bf16.gmra.mxu0 %v1738
        %v3843 = vpop.f32.mrf.mxu0
        %v3844 = vadd.f32 0.0, %v3843
        %v3845 = vpop.f32.mrf.mxu0
        %v3846 = vadd.f32 0.0, %v3845
        %3847 = vmatmul.bf16.gmra.mxu0 %v1741
        %v3848 = vpop.f32.mrf.mxu0
        %v3849 = vadd.f32 0.0, %v3848
        %v3850 = vpop.f32.mrf.mxu0
        %v3851 = vadd.f32 0.0, %v3850
        %3852 = vmatmul.bf16.gmra.mxu0 %v1744
        %v3853 = vpop.f32.mrf.mxu0
        %v3854 = vadd.f32 0.0, %v3853
        %v3855 = vpop.f32.mrf.mxu0
        %v3856 = vadd.f32 0.0, %v3855
        %3857 = vmatmul.bf16.gmra.mxu0 %v1747
        %v3858 = vpop.f32.mrf.mxu0
        %v3859 = vadd.f32 0.0, %v3858
        %v3860 = vpop.f32.mrf.mxu0
        %v3861 = vadd.f32 0.0, %v3860
        %3862 = vmatmul.bf16.gmra.mxu0 %v3777
        %v3863 = vpop.f32.mrf.mxu0
        %v3864 = vadd.f32 0.0, %v3863
        %v3865 = vpop.f32.mrf.mxu0
        %v3866 = vadd.f32 0.0, %v3865
        %3867 = vdwg.mxu0
        %v3868 = vadd.f32 %v3707, %v3789
        %v3869 = vadd.f32 %v3708, %v3791
        %v3870 = vadd.f32 %v3709, %v3794
        %v3871 = vadd.f32 %v3710, %v3796
        %v3872 = vadd.f32 %v3711, %v3799
        %v3873 = vadd.f32 %v3712, %v3801
        %v3874 = vadd.f32 %v3713, %v3804
        %v3875 = vadd.f32 %v3714, %v3806
        %v3876 = vadd.f32 %v3715, %v3809
        %v3877 = vadd.f32 %v3716, %v3811
        %v3878 = vadd.f32 %v3717, %v3814
        %v3879 = vadd.f32 %v3718, %v3816
        %v3880 = vadd.f32 %v3719, %v3819
        %v3881 = vadd.f32 %v3720, %v3821
        %v3882 = vadd.f32 %v3721, %v3824
        %v3883 = vadd.f32 %v3722, %v3826
        %v3884 = vadd.f32 %v3723, %v3829
        %v3885 = vadd.f32 %v3724, %v3831
        %v3886 = vadd.f32 %v3725, %v3834
        %v3887 = vadd.f32 %v3726, %v3836
        %v3888 = vadd.f32 %v3727, %v3839
        %v3889 = vadd.f32 %v3728, %v3841
        %v3890 = vadd.f32 %v3729, %v3844
        %v3891 = vadd.f32 %v3730, %v3846
        %v3892 = vadd.f32 %v3731, %v3849
        %v3893 = vadd.f32 %v3732, %v3851
        %v3894 = vadd.f32 %v3733, %v3854
        %v3895 = vadd.f32 %v3734, %v3856
        %v3896 = vadd.f32 %v3735, %v3859
        %v3897 = vadd.f32 %v3736, %v3861
        %v3898 = vadd.f32 %v3737, %v3864
        %v3899 = vadd.f32 %v3738, %v3866
        %v3900 = vsel %vm2595, %v895, 0
        %v3901 = vsel %vm2602, %v896, 0
        %v3902 = vsel %vm2609, %v897, 0
        %v3903 = vsel %vm2616, %v898, 0
        %v3904 = vsel %vm2623, %v899, 0
        %v3905 = vsel %vm2630, %v900, 0
        %v3906 = vsel %vm2637, %v901, 0
        %v3907 = vsel %vm2644, %v902, 0
        %v3908 = vsel %vm2651, %v903, 0
        %v3909 = vsel %vm2658, %v904, 0
        %v3910 = vsel %vm2665, %v905, 0
        %v3911 = vsel %vm2672, %v906, 0
        %v3912 = vsel %vm2679, %v907, 0
        %v3913 = vsel %vm2686, %v908, 0
        %v3914 = vsel %vm2693, %v909, 0
        %v3915 = vsel %vm2700, %v910, 0
        %v3916 = vsel %vm2707, %v911, 0
        %v3917 = vsel %vm2714, %v912, 0
        %v3918 = vsel %vm2721, %v913, 0
        %v3919 = vsel %vm2728, %v914, 0
        %v3920 = vsel %vm2735, %v915, 0
        %v3921 = vsel %vm2742, %v916, 0
        %v3922 = vsel %vm2749, %v917, 0
        %v3923 = vsel %vm2756, %v918, 0
        %v3924 = vsel %vm2763, %v919, 0
        %v3925 = vsel %vm2770, %v920, 0
        %v3926 = vsel %vm2777, %v921, 0
        %v3927 = vsel %vm2784, %v922, 0
        %v3928 = vsel %vm2791, %v923, 0
        %v3929 = vsel %vm2798, %v924, 0
        %v3930 = vsel %vm2805, %v925, 0
        %v3931 = vsel %vm2812, %v926, 0
        %v3932 = vsel %vm2819, %v927, 0
        %v3933 = vld [vmem:[%s1 + $0xa0] sm:$0xf]
        %v3934 = vld [vmem:[%s1 + $0xa4] sm:$0xf]
        %v3935 = vld [vmem:[%s1 + $0xa8] sm:$0xf]
        %v3936 = vld [vmem:[%s1 + $0xac] sm:$0xf]
        %v3937 = vld [vmem:[%s1 + $0xb0] sm:$0xf]
        %v3938 = vld [vmem:[%s1 + $0xb4] sm:$0xf]
        %v3939 = vld [vmem:[%s1 + $0xb8] sm:$0xf]
        %v3940 = vld [vmem:[%s1 + $0xbc] sm:$0xf]
        %v3974 = vunpack.c.l.b16 %v3900
        %v3975 = vunpack.c.l.b16 %v3901
        %v3976 = vunpack.c.l.b16 %v3902
        %v3977 = vunpack.c.l.b16 %v3903
        %v3978 = vunpack.c.l.b16 %v3904
        %v3979 = vunpack.c.l.b16 %v3905
        %v3980 = vunpack.c.l.b16 %v3906
        %v3981 = vunpack.c.l.b16 %v3907
        %v3982 = vunpack.c.l.b16 %v3908
        %v3983 = vunpack.c.l.b16 %v3909
        %v3984 = vunpack.c.l.b16 %v3910
        %v3985 = vunpack.c.l.b16 %v3911
        %v3986 = vunpack.c.l.b16 %v3912
        %v3987 = vunpack.c.l.b16 %v3913
        %v3988 = vunpack.c.l.b16 %v3914
        %v3989 = vunpack.c.l.b16 %v3915
        %v3990 = vunpack.c.l.b16 %v3916
        %v3991 = vunpack.c.l.b16 %v3917
        %v3992 = vunpack.c.l.b16 %v3918
        %v3993 = vunpack.c.l.b16 %v3919
        %v3994 = vunpack.c.l.b16 %v3920
        %v3995 = vunpack.c.l.b16 %v3921
        %v3996 = vunpack.c.l.b16 %v3922
        %v3997 = vunpack.c.l.b16 %v3923
        %v3998 = vunpack.c.l.b16 %v3924
        %v3999 = vunpack.c.l.b16 %v3925
        %v4000 = vunpack.c.l.b16 %v3926
        %v4001 = vunpack.c.l.b16 %v3927
        %v4002 = vunpack.c.l.b16 %v3928
        %v4003 = vunpack.c.l.b16 %v3929
        %v4004 = vunpack.c.l.b16 %v3930
        %v4005 = vunpack.c.l.b16 %v3931
        %v4006 = vunpack.c.l.b16 %v3932
        %v4007 = vpack.c.b16 %v3975, %v3974
        %v4008 = vpack.c.b16 %v3977, %v3976
        %v4009 = vpack.c.b16 %v3979, %v3978
        %v4010 = vpack.c.b16 %v3981, %v3980
        %v4011 = vpack.c.b16 %v3983, %v3982
        %v4012 = vpack.c.b16 %v3985, %v3984
        %v4013 = vpack.c.b16 %v3987, %v3986
        %v4014 = vpack.c.b16 %v3989, %v3988
        %v4015 = vpack.c.b16 %v3991, %v3990
        %v4016 = vpack.c.b16 %v3993, %v3992
        %v4017 = vpack.c.b16 %v3995, %v3994
        %v4018 = vpack.c.b16 %v3997, %v3996
        %v4019 = vpack.c.b16 %v3999, %v3998
        %v4020 = vpack.c.b16 %v4001, %v4000
        %v4021 = vpack.c.b16 %v4003, %v4002
        %v4022 = vpack.c.b16 %v4005, %v4004
        %v4023 = vpack.c.b16 %v4006, %v4006
        %v4025 = vshrl.u32 %v4007, 16
        %v4027 = vshll.u32 %v4007, 16
        %v4029 = vrot.slane %v4027, 1
        %v4030 = vor.u32 %v4025, %v4029
        %v4032 = vshll.u32 %v4008, 16
        %v4034 = vrot.slane %v4032, 1
        %v4035 = vsel %vm2944, %v4030, %v4034
        %v4036 = vshrl.u32 %v4008, 16
        %v4038 = vor.u32 %v4036, %v4034
        %v4040 = vshll.u32 %v4009, 16
        %v4042 = vrot.slane %v4040, 1
        %v4043 = vsel %vm2944, %v4038, %v4042
        %v4044 = vshrl.u32 %v4009, 16
        %v4046 = vor.u32 %v4044, %v4042
        %v4048 = vshll.u32 %v4010, 16
        %v4050 = vrot.slane %v4048, 1
        %v4051 = vsel %vm2944, %v4046, %v4050
        %v4052 = vshrl.u32 %v4010, 16
        %v4054 = vor.u32 %v4052, %v4050
        %v4056 = vshll.u32 %v4011, 16
        %v4058 = vrot.slane %v4056, 1
        %v4059 = vsel %vm2944, %v4054, %v4058
        %v4060 = vshrl.u32 %v4011, 16
        %v4062 = vor.u32 %v4060, %v4058
        %v4064 = vshll.u32 %v4012, 16
        %v4066 = vrot.slane %v4064, 1
        %v4067 = vsel %vm2944, %v4062, %v4066
        %v4068 = vshrl.u32 %v4012, 16
        %v4070 = vor.u32 %v4068, %v4066
        %v4072 = vshll.u32 %v4013, 16
        %v4074 = vrot.slane %v4072, 1
        %v4075 = vsel %vm2944, %v4070, %v4074
        %v4076 = vshrl.u32 %v4013, 16
        %v4078 = vor.u32 %v4076, %v4074
        %v4080 = vshll.u32 %v4014, 16
        %v4082 = vrot.slane %v4080, 1
        %v4083 = vsel %vm2944, %v4078, %v4082
        %v4084 = vshrl.u32 %v4014, 16
        %v4086 = vor.u32 %v4084, %v4082
        %v4088 = vshll.u32 %v4015, 16
        %v4090 = vrot.slane %v4088, 1
        %v4091 = vsel %vm2944, %v4086, %v4090
        %v4092 = vshrl.u32 %v4015, 16
        %v4094 = vor.u32 %v4092, %v4090
        %v4096 = vshll.u32 %v4016, 16
        %v4098 = vrot.slane %v4096, 1
        %v4099 = vsel %vm2944, %v4094, %v4098
        %v4100 = vshrl.u32 %v4016, 16
        %v4102 = vor.u32 %v4100, %v4098
        %v4104 = vshll.u32 %v4017, 16
        %v4106 = vrot.slane %v4104, 1
        %v4107 = vsel %vm2944, %v4102, %v4106
        %v4108 = vshrl.u32 %v4017, 16
        %v4110 = vor.u32 %v4108, %v4106
        %v4112 = vshll.u32 %v4018, 16
        %v4114 = vrot.slane %v4112, 1
        %v4115 = vsel %vm2944, %v4110, %v4114
        %v4116 = vshrl.u32 %v4018, 16
        %v4118 = vor.u32 %v4116, %v4114
        %v4120 = vshll.u32 %v4019, 16
        %v4122 = vrot.slane %v4120, 1
        %v4123 = vsel %vm2944, %v4118, %v4122
        %v4124 = vshrl.u32 %v4019, 16
        %v4126 = vor.u32 %v4124, %v4122
        %v4128 = vshll.u32 %v4020, 16
        %v4130 = vrot.slane %v4128, 1
        %v4131 = vsel %vm2944, %v4126, %v4130
        %v4132 = vshrl.u32 %v4020, 16
        %v4134 = vor.u32 %v4132, %v4130
        %v4136 = vshll.u32 %v4021, 16
        %v4138 = vrot.slane %v4136, 1
        %v4139 = vsel %vm2944, %v4134, %v4138
        %v4140 = vshrl.u32 %v4021, 16
        %v4142 = vor.u32 %v4140, %v4138
        %v4144 = vshll.u32 %v4022, 16
        %v4146 = vrot.slane %v4144, 1
        %v4147 = vsel %vm2944, %v4142, %v4146
        %v4148 = vshrl.u32 %v4022, 16
        %v4150 = vor.u32 %v4148, %v4146
        %v4152 = vshll.u32 %v4023, 16
        %v4154 = vrot.slane %v4152, 1
        %v4155 = vsel %vm2944, %v4150, %v4154
        %v4164 = vunpack.c.l.b16 %v3933
        %v4165 = vunpack.c.l.b16 %v3934
        %v4166 = vunpack.c.l.b16 %v3935
        %v4167 = vunpack.c.l.b16 %v3936
        %v4168 = vunpack.c.l.b16 %v3937
        %v4169 = vunpack.c.l.b16 %v3938
        %v4170 = vunpack.c.l.b16 %v3939
        %v4171 = vunpack.c.l.b16 %v3940
        %v4172 = vpack.c.b16 %v4165, %v4164
        %v4173 = vpack.c.b16 %v4167, %v4166
        %v4174 = vpack.c.b16 %v4169, %v4168
        %v4175 = vpack.c.b16 %v4171, %v4170
        %v4181 = vsel %vm1700, %v4035, 0
        %v4184 = vsel %vm1700, %v4043, 0
        %v4187 = vsel %vm1700, %v4051, 0
        %v4190 = vsel %vm1700, %v4059, 0
        %v4193 = vsel %vm1700, %v4067, 0
        %v4196 = vsel %vm1700, %v4075, 0
        %v4199 = vsel %vm1700, %v4083, 0
        %v4202 = vsel %vm1700, %v4091, 0
        %v4205 = vsel %vm1700, %v4099, 0
        %v4208 = vsel %vm1700, %v4107, 0
        %v4211 = vsel %vm1700, %v4115, 0
        %v4214 = vsel %vm1700, %v4123, 0
        %v4217 = vsel %vm1700, %v4131, 0
        %v4220 = vsel %vm1700, %v4139, 0
        %v4223 = vsel %vm1700, %v4147, 0
        %v4226 = vsel %vm1700, %v4155, 0
        %4228 = vmatpush.bf16.msra.mxu0 0
        %4229 = vmatpush.bf16.msra.mxu0 0
        %4230 = vmatpush.bf16.msra.mxu0 0
        %4231 = vmatpush.bf16.msra.mxu0 0
        %4232 = vmatpush.bf16.msra.mxu0 %v4175
        %4233 = vmatpush.bf16.msra.mxu0 %v4174
        %4234 = vmatpush.bf16.msra.mxu0 %v4173
        %4235 = vmatpush.bf16.msra.mxu0 %v4172
        %4236 = vmatmul.bf16.gmra.mxu0 %v4181
        %v4237 = vpop.f32.mrf.mxu0
        %v4238 = vadd.f32 0.0, %v4237
        %v4239 = vpop.f32.mrf.mxu0
        %v4240 = vadd.f32 0.0, %v4239
        %4241 = vmatmul.bf16.gmra.mxu0 %v4184
        %v4242 = vpop.f32.mrf.mxu0
        %v4243 = vadd.f32 0.0, %v4242
        %v4244 = vpop.f32.mrf.mxu0
        %v4245 = vadd.f32 0.0, %v4244
        %4246 = vmatmul.bf16.gmra.mxu0 %v4187
        %v4247 = vpop.f32.mrf.mxu0
        %v4248 = vadd.f32 0.0, %v4247
        %v4249 = vpop.f32.mrf.mxu0
        %v4250 = vadd.f32 0.0, %v4249
        %4251 = vmatmul.bf16.gmra.mxu0 %v4190
        %v4252 = vpop.f32.mrf.mxu0
        %v4253 = vadd.f32 0.0, %v4252
        %v4254 = vpop.f32.mrf.mxu0
        %v4255 = vadd.f32 0.0, %v4254
        %4256 = vmatmul.bf16.gmra.mxu0 %v4193
        %v4257 = vpop.f32.mrf.mxu0
        %v4258 = vadd.f32 0.0, %v4257
        %v4259 = vpop.f32.mrf.mxu0
        %v4260 = vadd.f32 0.0, %v4259
        %4261 = vmatmul.bf16.gmra.mxu0 %v4196
        %v4262 = vpop.f32.mrf.mxu0
        %v4263 = vadd.f32 0.0, %v4262
        %v4264 = vpop.f32.mrf.mxu0
        %v4265 = vadd.f32 0.0, %v4264
        %4266 = vmatmul.bf16.gmra.mxu0 %v4199
        %v4267 = vpop.f32.mrf.mxu0
        %v4268 = vadd.f32 0.0, %v4267
        %v4269 = vpop.f32.mrf.mxu0
        %v4270 = vadd.f32 0.0, %v4269
        %4271 = vmatmul.bf16.gmra.mxu0 %v4202
        %v4272 = vpop.f32.mrf.mxu0
        %v4273 = vadd.f32 0.0, %v4272
        %v4274 = vpop.f32.mrf.mxu0
        %v4275 = vadd.f32 0.0, %v4274
        %4276 = vmatmul.bf16.gmra.mxu0 %v4205
        %v4277 = vpop.f32.mrf.mxu0
        %v4278 = vadd.f32 0.0, %v4277
        %v4279 = vpop.f32.mrf.mxu0
        %v4280 = vadd.f32 0.0, %v4279
        %4281 = vmatmul.bf16.gmra.mxu0 %v4208
        %v4282 = vpop.f32.mrf.mxu0
        %v4283 = vadd.f32 0.0, %v4282
        %v4284 = vpop.f32.mrf.mxu0
        %v4285 = vadd.f32 0.0, %v4284
        %4286 = vmatmul.bf16.gmra.mxu0 %v4211
        %v4287 = vpop.f32.mrf.mxu0
        %v4288 = vadd.f32 0.0, %v4287
        %v4289 = vpop.f32.mrf.mxu0
        %v4290 = vadd.f32 0.0, %v4289
        %4291 = vmatmul.bf16.gmra.mxu0 %v4214
        %v4292 = vpop.f32.mrf.mxu0
        %v4293 = vadd.f32 0.0, %v4292
        %v4294 = vpop.f32.mrf.mxu0
        %v4295 = vadd.f32 0.0, %v4294
        %4296 = vmatmul.bf16.gmra.mxu0 %v4217
        %v4297 = vpop.f32.mrf.mxu0
        %v4298 = vadd.f32 0.0, %v4297
        %v4299 = vpop.f32.mrf.mxu0
        %v4300 = vadd.f32 0.0, %v4299
        %4301 = vmatmul.bf16.gmra.mxu0 %v4220
        %v4302 = vpop.f32.mrf.mxu0
        %v4303 = vadd.f32 0.0, %v4302
        %v4304 = vpop.f32.mrf.mxu0
        %v4305 = vadd.f32 0.0, %v4304
        %4306 = vmatmul.bf16.gmra.mxu0 %v4223
        %v4307 = vpop.f32.mrf.mxu0
        %v4308 = vadd.f32 0.0, %v4307
        %v4309 = vpop.f32.mrf.mxu0
        %v4310 = vadd.f32 0.0, %v4309
        %4311 = vmatmul.bf16.gmra.mxu0 %v4226
        %v4312 = vpop.f32.mrf.mxu0
        %v4313 = vadd.f32 0.0, %v4312
        %v4314 = vpop.f32.mrf.mxu0
        %v4315 = vadd.f32 0.0, %v4314
        %4316 = vdwg.mxu0
        %v4317 = vadd.f32 %v3868, %v4238
        %v4318 = vadd.f32 %v3869, %v4240
        %v4319 = vadd.f32 %v3870, %v4243
        %v4320 = vadd.f32 %v3871, %v4245
        %v4321 = vadd.f32 %v3872, %v4248
        %v4322 = vadd.f32 %v3873, %v4250
        %v4323 = vadd.f32 %v3874, %v4253
        %v4324 = vadd.f32 %v3875, %v4255
        %v4325 = vadd.f32 %v3876, %v4258
        %v4326 = vadd.f32 %v3877, %v4260
        %v4327 = vadd.f32 %v3878, %v4263
        %v4328 = vadd.f32 %v3879, %v4265
        %v4329 = vadd.f32 %v3880, %v4268
        %v4330 = vadd.f32 %v3881, %v4270
        %v4331 = vadd.f32 %v3882, %v4273
        %v4332 = vadd.f32 %v3883, %v4275
        %v4333 = vadd.f32 %v3884, %v4278
        %v4334 = vadd.f32 %v3885, %v4280
        %v4335 = vadd.f32 %v3886, %v4283
        %v4336 = vadd.f32 %v3887, %v4285
        %v4337 = vadd.f32 %v3888, %v4288
        %v4338 = vadd.f32 %v3889, %v4290
        %v4339 = vadd.f32 %v3890, %v4293
        %v4340 = vadd.f32 %v3891, %v4295
        %v4341 = vadd.f32 %v3892, %v4298
        %v4342 = vadd.f32 %v3893, %v4300
        %v4343 = vadd.f32 %v3894, %v4303
        %v4344 = vadd.f32 %v3895, %v4305
        %v4345 = vadd.f32 %v3896, %v4308
        %v4346 = vadd.f32 %v3897, %v4310
        %v4347 = vadd.f32 %v3898, %v4313
        %v4348 = vadd.f32 %v3899, %v4315
        %v4349 = vsel %vm1322, %v896, 0
        %v4350 = vsel %vm1329, %v897, 0
        %v4351 = vsel %vm1336, %v898, 0
        %v4352 = vsel %vm1343, %v899, 0
        %v4353 = vsel %vm1350, %v900, 0
        %v4354 = vsel %vm1357, %v901, 0
        %v4355 = vsel %vm1364, %v902, 0
        %v4356 = vsel %vm1371, %v903, 0
        %v4357 = vsel %vm1378, %v904, 0
        %v4358 = vsel %vm1385, %v905, 0
        %v4359 = vsel %vm1392, %v906, 0
        %v4360 = vsel %vm1399, %v907, 0
        %v4361 = vsel %vm1406, %v908, 0
        %v4362 = vsel %vm1413, %v909, 0
        %v4363 = vsel %vm1420, %v910, 0
        %v4364 = vsel %vm1427, %v911, 0
        %v4365 = vsel %vm1434, %v912, 0
        %v4366 = vsel %vm1441, %v913, 0
        %v4367 = vsel %vm1448, %v914, 0
        %v4368 = vsel %vm1455, %v915, 0
        %v4369 = vsel %vm1462, %v916, 0
        %v4370 = vsel %vm1469, %v917, 0
        %v4371 = vsel %vm1476, %v918, 0
        %v4372 = vsel %vm1483, %v919, 0
        %v4373 = vsel %vm1490, %v920, 0
        %v4374 = vsel %vm1497, %v921, 0
        %v4375 = vsel %vm1504, %v922, 0
        %v4376 = vsel %vm1511, %v923, 0
        %v4377 = vsel %vm1518, %v924, 0
        %v4378 = vsel %vm1525, %v925, 0
        %v4379 = vsel %vm1532, %v926, 0
        %v4380 = vsel %vm1539, %v927, 0
        %v4381 = vsel %vm1546, %v928, 0
        %v4382 = vld [vmem:[%s1 + $0xc0] sm:$0xf]
        %v4383 = vld [vmem:[%s1 + $0xc4] sm:$0xf]
        %v4384 = vld [vmem:[%s1 + $0xc8] sm:$0xf]
        %v4385 = vld [vmem:[%s1 + $0xcc] sm:$0xf]
        %v4386 = vld [vmem:[%s1 + $0xd0] sm:$0xf]
        %v4387 = vld [vmem:[%s1 + $0xd4] sm:$0xf]
        %v4388 = vld [vmem:[%s1 + $0xd8] sm:$0xf]
        %v4389 = vld [vmem:[%s1 + $0xdc] sm:$0xf]
        %v4423 = vunpack.c.l.b16 %v4349
        %v4424 = vunpack.c.l.b16 %v4350
        %v4425 = vunpack.c.l.b16 %v4351
        %v4426 = vunpack.c.l.b16 %v4352
        %v4427 = vunpack.c.l.b16 %v4353
        %v4428 = vunpack.c.l.b16 %v4354
        %v4429 = vunpack.c.l.b16 %v4355
        %v4430 = vunpack.c.l.b16 %v4356
        %v4431 = vunpack.c.l.b16 %v4357
        %v4432 = vunpack.c.l.b16 %v4358
        %v4433 = vunpack.c.l.b16 %v4359
        %v4434 = vunpack.c.l.b16 %v4360
        %v4435 = vunpack.c.l.b16 %v4361
        %v4436 = vunpack.c.l.b16 %v4362
        %v4437 = vunpack.c.l.b16 %v4363
        %v4438 = vunpack.c.l.b16 %v4364
        %v4439 = vunpack.c.l.b16 %v4365
        %v4440 = vunpack.c.l.b16 %v4366
        %v4441 = vunpack.c.l.b16 %v4367
        %v4442 = vunpack.c.l.b16 %v4368
        %v4443 = vunpack.c.l.b16 %v4369
        %v4444 = vunpack.c.l.b16 %v4370
        %v4445 = vunpack.c.l.b16 %v4371
        %v4446 = vunpack.c.l.b16 %v4372
        %v4447 = vunpack.c.l.b16 %v4373
        %v4448 = vunpack.c.l.b16 %v4374
        %v4449 = vunpack.c.l.b16 %v4375
        %v4450 = vunpack.c.l.b16 %v4376
        %v4451 = vunpack.c.l.b16 %v4377
        %v4452 = vunpack.c.l.b16 %v4378
        %v4453 = vunpack.c.l.b16 %v4379
        %v4454 = vunpack.c.l.b16 %v4380
        %v4455 = vunpack.c.l.b16 %v4381
        %v4456 = vpack.c.b16 %v4424, %v4423
        %v4457 = vpack.c.b16 %v4426, %v4425
        %v4458 = vpack.c.b16 %v4428, %v4427
        %v4459 = vpack.c.b16 %v4430, %v4429
        %v4460 = vpack.c.b16 %v4432, %v4431
        %v4461 = vpack.c.b16 %v4434, %v4433
        %v4462 = vpack.c.b16 %v4436, %v4435
        %v4463 = vpack.c.b16 %v4438, %v4437
        %v4464 = vpack.c.b16 %v4440, %v4439
        %v4465 = vpack.c.b16 %v4442, %v4441
        %v4466 = vpack.c.b16 %v4444, %v4443
        %v4467 = vpack.c.b16 %v4446, %v4445
        %v4468 = vpack.c.b16 %v4448, %v4447
        %v4469 = vpack.c.b16 %v4450, %v4449
        %v4470 = vpack.c.b16 %v4452, %v4451
        %v4471 = vpack.c.b16 %v4454, %v4453
        %v4472 = vpack.c.b16 %v4455, %v4455
        %v4474 = vshrl.u32 %v4456, 16
        %v4476 = vrot.slane %v4474, 3
        %v4477 = vshll.u32 %v4456, 16
        %v4479 = vrot.slane %v4477, 4
        %v4480 = vor.u32 %v4476, %v4479
        %v4482 = vshrl.u32 %v4457, 16
        %v4484 = vrot.slane %v4482, 3
        %v4485 = vshll.u32 %v4457, 16
        %v4487 = vrot.slane %v4485, 4
        %v4488 = vor.u32 %v4484, %v4487
        %v4489 = vsel %vm1921, %v4480, %v4488
        %v4491 = vshrl.u32 %v4458, 16
        %v4493 = vrot.slane %v4491, 3
        %v4494 = vshll.u32 %v4458, 16
        %v4496 = vrot.slane %v4494, 4
        %v4497 = vor.u32 %v4493, %v4496
        %v4498 = vsel %vm1921, %v4488, %v4497
        %v4500 = vshrl.u32 %v4459, 16
        %v4502 = vrot.slane %v4500, 3
        %v4503 = vshll.u32 %v4459, 16
        %v4505 = vrot.slane %v4503, 4
        %v4506 = vor.u32 %v4502, %v4505
        %v4507 = vsel %vm1921, %v4497, %v4506
        %v4509 = vshrl.u32 %v4460, 16
        %v4511 = vrot.slane %v4509, 3
        %v4512 = vshll.u32 %v4460, 16
        %v4514 = vrot.slane %v4512, 4
        %v4515 = vor.u32 %v4511, %v4514
        %v4516 = vsel %vm1921, %v4506, %v4515
        %v4518 = vshrl.u32 %v4461, 16
        %v4520 = vrot.slane %v4518, 3
        %v4521 = vshll.u32 %v4461, 16
        %v4523 = vrot.slane %v4521, 4
        %v4524 = vor.u32 %v4520, %v4523
        %v4525 = vsel %vm1921, %v4515, %v4524
        %v4527 = vshrl.u32 %v4462, 16
        %v4529 = vrot.slane %v4527, 3
        %v4530 = vshll.u32 %v4462, 16
        %v4532 = vrot.slane %v4530, 4
        %v4533 = vor.u32 %v4529, %v4532
        %v4534 = vsel %vm1921, %v4524, %v4533
        %v4536 = vshrl.u32 %v4463, 16
        %v4538 = vrot.slane %v4536, 3
        %v4539 = vshll.u32 %v4463, 16
        %v4541 = vrot.slane %v4539, 4
        %v4542 = vor.u32 %v4538, %v4541
        %v4543 = vsel %vm1921, %v4533, %v4542
        %v4545 = vshrl.u32 %v4464, 16
        %v4547 = vrot.slane %v4545, 3
        %v4548 = vshll.u32 %v4464, 16
        %v4550 = vrot.slane %v4548, 4
        %v4551 = vor.u32 %v4547, %v4550
        %v4552 = vsel %vm1921, %v4542, %v4551
        %v4554 = vshrl.u32 %v4465, 16
        %v4556 = vrot.slane %v4554, 3
        %v4557 = vshll.u32 %v4465, 16
        %v4559 = vrot.slane %v4557, 4
        %v4560 = vor.u32 %v4556, %v4559
        %v4561 = vsel %vm1921, %v4551, %v4560
        %v4563 = vshrl.u32 %v4466, 16
        %v4565 = vrot.slane %v4563, 3
        %v4566 = vshll.u32 %v4466, 16
        %v4568 = vrot.slane %v4566, 4
        %v4569 = vor.u32 %v4565, %v4568
        %v4570 = vsel %vm1921, %v4560, %v4569
        %v4572 = vshrl.u32 %v4467, 16
        %v4574 = vrot.slane %v4572, 3
        %v4575 = vshll.u32 %v4467, 16
        %v4577 = vrot.slane %v4575, 4
        %v4578 = vor.u32 %v4574, %v4577
        %v4579 = vsel %vm1921, %v4569, %v4578
        %v4581 = vshrl.u32 %v4468, 16
        %v4583 = vrot.slane %v4581, 3
        %v4584 = vshll.u32 %v4468, 16
        %v4586 = vrot.slane %v4584, 4
        %v4587 = vor.u32 %v4583, %v4586
        %v4588 = vsel %vm1921, %v4578, %v4587
        %v4590 = vshrl.u32 %v4469, 16
        %v4592 = vrot.slane %v4590, 3
        %v4593 = vshll.u32 %v4469, 16
        %v4595 = vrot.slane %v4593, 4
        %v4596 = vor.u32 %v4592, %v4595
        %v4597 = vsel %vm1921, %v4587, %v4596
        %v4599 = vshrl.u32 %v4470, 16
        %v4601 = vrot.slane %v4599, 3
        %v4602 = vshll.u32 %v4470, 16
        %v4604 = vrot.slane %v4602, 4
        %v4605 = vor.u32 %v4601, %v4604
        %v4606 = vsel %vm1921, %v4596, %v4605
        %v4608 = vshrl.u32 %v4471, 16
        %v4610 = vrot.slane %v4608, 3
        %v4611 = vshll.u32 %v4471, 16
        %v4613 = vrot.slane %v4611, 4
        %v4614 = vor.u32 %v4610, %v4613
        %v4615 = vsel %vm1921, %v4605, %v4614
        %v4617 = vshrl.u32 %v4472, 16
        %v4619 = vrot.slane %v4617, 3
        %v4620 = vshll.u32 %v4472, 16
        %v4622 = vrot.slane %v4620, 4
        %v4623 = vor.u32 %v4619, %v4622
        %v4624 = vsel %vm1921, %v4614, %v4623
        %v4633 = vunpack.c.l.b16 %v4382
        %v4634 = vunpack.c.l.b16 %v4383
        %v4635 = vunpack.c.l.b16 %v4384
        %v4636 = vunpack.c.l.b16 %v4385
        %v4637 = vunpack.c.l.b16 %v4386
        %v4638 = vunpack.c.l.b16 %v4387
        %v4639 = vunpack.c.l.b16 %v4388
        %v4640 = vunpack.c.l.b16 %v4389
        %v4641 = vpack.c.b16 %v4634, %v4633
        %v4642 = vpack.c.b16 %v4636, %v4635
        %v4643 = vpack.c.b16 %v4638, %v4637
        %v4644 = vpack.c.b16 %v4640, %v4639
        %v4650 = vsel %vm1700, %v4489, 0
        %v4653 = vsel %vm1700, %v4498, 0
        %v4656 = vsel %vm1700, %v4507, 0
        %v4659 = vsel %vm1700, %v4516, 0
        %v4662 = vsel %vm1700, %v4525, 0
        %v4665 = vsel %vm1700, %v4534, 0
        %v4668 = vsel %vm1700, %v4543, 0
        %v4671 = vsel %vm1700, %v4552, 0
        %v4674 = vsel %vm1700, %v4561, 0
        %v4677 = vsel %vm1700, %v4570, 0
        %v4680 = vsel %vm1700, %v4579, 0
        %v4683 = vsel %vm1700, %v4588, 0
        %v4686 = vsel %vm1700, %v4597, 0
        %v4689 = vsel %vm1700, %v4606, 0
        %v4692 = vsel %vm1700, %v4615, 0
        %v4695 = vsel %vm1700, %v4624, 0
        %4697 = vmatpush.bf16.msra.mxu0 0
        %4698 = vmatpush.bf16.msra.mxu0 0
        %4699 = vmatpush.bf16.msra.mxu0 0
        %4700 = vmatpush.bf16.msra.mxu0 0
        %4701 = vmatpush.bf16.msra.mxu0 %v4644
        %4702 = vmatpush.bf16.msra.mxu0 %v4643
        %4703 = vmatpush.bf16.msra.mxu0 %v4642
        %4704 = vmatpush.bf16.msra.mxu0 %v4641
        %4705 = vmatmul.bf16.gmra.mxu0 %v4650
        %v4706 = vpop.f32.mrf.mxu0
        %v4707 = vadd.f32 0.0, %v4706
        %v4708 = vpop.f32.mrf.mxu0
        %v4709 = vadd.f32 0.0, %v4708
        %4710 = vmatmul.bf16.gmra.mxu0 %v4653
        %v4711 = vpop.f32.mrf.mxu0
        %v4712 = vadd.f32 0.0, %v4711
        %v4713 = vpop.f32.mrf.mxu0
        %v4714 = vadd.f32 0.0, %v4713
        %4715 = vmatmul.bf16.gmra.mxu0 %v4656
        %v4716 = vpop.f32.mrf.mxu0
        %v4717 = vadd.f32 0.0, %v4716
        %v4718 = vpop.f32.mrf.mxu0
        %v4719 = vadd.f32 0.0, %v4718
        %4720 = vmatmul.bf16.gmra.mxu0 %v4659
        %v4721 = vpop.f32.mrf.mxu0
        %v4722 = vadd.f32 0.0, %v4721
        %v4723 = vpop.f32.mrf.mxu0
        %v4724 = vadd.f32 0.0, %v4723
        %4725 = vmatmul.bf16.gmra.mxu0 %v4662
        %v4726 = vpop.f32.mrf.mxu0
        %v4727 = vadd.f32 0.0, %v4726
        %v4728 = vpop.f32.mrf.mxu0
        %v4729 = vadd.f32 0.0, %v4728
        %4730 = vmatmul.bf16.gmra.mxu0 %v4665
        %v4731 = vpop.f32.mrf.mxu0
        %v4732 = vadd.f32 0.0, %v4731
        %v4733 = vpop.f32.mrf.mxu0
        %v4734 = vadd.f32 0.0, %v4733
        %4735 = vmatmul.bf16.gmra.mxu0 %v4668
        %v4736 = vpop.f32.mrf.mxu0
        %v4737 = vadd.f32 0.0, %v4736
        %v4738 = vpop.f32.mrf.mxu0
        %v4739 = vadd.f32 0.0, %v4738
        %4740 = vmatmul.bf16.gmra.mxu0 %v4671
        %v4741 = vpop.f32.mrf.mxu0
        %v4742 = vadd.f32 0.0, %v4741
        %v4743 = vpop.f32.mrf.mxu0
        %v4744 = vadd.f32 0.0, %v4743
        %4745 = vmatmul.bf16.gmra.mxu0 %v4674
        %v4746 = vpop.f32.mrf.mxu0
        %v4747 = vadd.f32 0.0, %v4746
        %v4748 = vpop.f32.mrf.mxu0
        %v4749 = vadd.f32 0.0, %v4748
        %4750 = vmatmul.bf16.gmra.mxu0 %v4677
        %v4751 = vpop.f32.mrf.mxu0
        %v4752 = vadd.f32 0.0, %v4751
        %v4753 = vpop.f32.mrf.mxu0
        %v4754 = vadd.f32 0.0, %v4753
        %4755 = vmatmul.bf16.gmra.mxu0 %v4680
        %v4756 = vpop.f32.mrf.mxu0
        %v4757 = vadd.f32 0.0, %v4756
        %v4758 = vpop.f32.mrf.mxu0
        %v4759 = vadd.f32 0.0, %v4758
        %4760 = vmatmul.bf16.gmra.mxu0 %v4683
        %v4761 = vpop.f32.mrf.mxu0
        %v4762 = vadd.f32 0.0, %v4761
        %v4763 = vpop.f32.mrf.mxu0
        %v4764 = vadd.f32 0.0, %v4763
        %4765 = vmatmul.bf16.gmra.mxu0 %v4686
        %v4766 = vpop.f32.mrf.mxu0
        %v4767 = vadd.f32 0.0, %v4766
        %v4768 = vpop.f32.mrf.mxu0
        %v4769 = vadd.f32 0.0, %v4768
        %4770 = vmatmul.bf16.gmra.mxu0 %v4689
        %v4771 = vpop.f32.mrf.mxu0
        %v4772 = vadd.f32 0.0, %v4771
        %v4773 = vpop.f32.mrf.mxu0
        %v4774 = vadd.f32 0.0, %v4773
        %4775 = vmatmul.bf16.gmra.mxu0 %v4692
        %v4776 = vpop.f32.mrf.mxu0
        %v4777 = vadd.f32 0.0, %v4776
        %v4778 = vpop.f32.mrf.mxu0
        %v4779 = vadd.f32 0.0, %v4778
        %4780 = vmatmul.bf16.gmra.mxu0 %v4695
        %v4781 = vpop.f32.mrf.mxu0
        %v4782 = vadd.f32 0.0, %v4781
        %v4783 = vpop.f32.mrf.mxu0
        %v4784 = vadd.f32 0.0, %v4783
        %4785 = vdwg.mxu0
        %v4786 = vadd.f32 %v4317, %v4707
        %v4787 = vadd.f32 %v4318, %v4709
        %v4788 = vadd.f32 %v4319, %v4712
        %v4789 = vadd.f32 %v4320, %v4714
        %v4790 = vadd.f32 %v4321, %v4717
        %v4791 = vadd.f32 %v4322, %v4719
        %v4792 = vadd.f32 %v4323, %v4722
        %v4793 = vadd.f32 %v4324, %v4724
        %v4794 = vadd.f32 %v4325, %v4727
        %v4795 = vadd.f32 %v4326, %v4729
        %v4796 = vadd.f32 %v4327, %v4732
        %v4797 = vadd.f32 %v4328, %v4734
        %v4798 = vadd.f32 %v4329, %v4737
        %v4799 = vadd.f32 %v4330, %v4739
        %v4800 = vadd.f32 %v4331, %v4742
        %v4801 = vadd.f32 %v4332, %v4744
        %v4802 = vadd.f32 %v4333, %v4747
        %v4803 = vadd.f32 %v4334, %v4749
        %v4804 = vadd.f32 %v4335, %v4752
        %v4805 = vadd.f32 %v4336, %v4754
        %v4806 = vadd.f32 %v4337, %v4757
        %v4807 = vadd.f32 %v4338, %v4759
        %v4808 = vadd.f32 %v4339, %v4762
        %v4809 = vadd.f32 %v4340, %v4764
        %v4810 = vadd.f32 %v4341, %v4767
        %v4811 = vadd.f32 %v4342, %v4769
        %v4812 = vadd.f32 %v4343, %v4772
        %v4813 = vadd.f32 %v4344, %v4774
        %v4814 = vadd.f32 %v4345, %v4777
        %v4815 = vadd.f32 %v4346, %v4779
        %v4816 = vadd.f32 %v4347, %v4782
        %v4817 = vadd.f32 %v4348, %v4784
        %v4818 = vld [vmem:[%s1 + $0xe0] sm:$0xf]
        %v4819 = vld [vmem:[%s1 + $0xe4] sm:$0xf]
        %v4820 = vld [vmem:[%s1 + $0xe8] sm:$0xf]
        %v4821 = vld [vmem:[%s1 + $0xec] sm:$0xf]
        %v4822 = vld [vmem:[%s1 + $0xf0] sm:$0xf]
        %v4823 = vld [vmem:[%s1 + $0xf4] sm:$0xf]
        %v4824 = vld [vmem:[%s1 + $0xf8] sm:$0xf]
        %v4825 = vld [vmem:[%s1 + $0xfc] sm:$0xf]
        %v4828 = vunpack.c.l.b16 %v927
        %v4829 = vunpack.c.l.b16 %v928
        %v4830 = vpack.c.b16 %v4829, %v4828
        %v4839 = vunpack.c.l.b16 %v4818
        %v4840 = vunpack.c.l.b16 %v4819
        %v4841 = vunpack.c.l.b16 %v4820
        %v4842 = vunpack.c.l.b16 %v4821
        %v4843 = vunpack.c.l.b16 %v4822
        %v4844 = vunpack.c.l.b16 %v4823
        %v4845 = vunpack.c.l.b16 %v4824
        %v4846 = vunpack.c.l.b16 %v4825
        %v4847 = vpack.c.b16 %v4840, %v4839
        %v4848 = vpack.c.b16 %v4842, %v4841
        %v4849 = vpack.c.b16 %v4844, %v4843
        %v4850 = vpack.c.b16 %v4846, %v4845
        %v4856 = vsel %vm1700, %v4830, 0
        %4858 = vmatpush.bf16.msra.mxu0 0
        %4859 = vmatpush.bf16.msra.mxu0 0
        %4860 = vmatpush.bf16.msra.mxu0 0
        %4861 = vmatpush.bf16.msra.mxu0 0
        %4862 = vmatpush.bf16.msra.mxu0 %v4850
        %4863 = vmatpush.bf16.msra.mxu0 %v4849
        %4864 = vmatpush.bf16.msra.mxu0 %v4848
        %4865 = vmatpush.bf16.msra.mxu0 %v4847
        %4866 = vmatmul.bf16.gmra.mxu0 %v1708
        %v4867 = vpop.f32.mrf.mxu0
        %v4868 = vadd.f32 0.0, %v4867
        %v4869 = vpop.f32.mrf.mxu0
        %v4870 = vadd.f32 0.0, %v4869
        %4871 = vmatmul.bf16.gmra.mxu0 %v1711
        %v4872 = vpop.f32.mrf.mxu0
        %v4873 = vadd.f32 0.0, %v4872
        %v4874 = vpop.f32.mrf.mxu0
        %v4875 = vadd.f32 0.0, %v4874
        %4876 = vmatmul.bf16.gmra.mxu0 %v1714
        %v4877 = vpop.f32.mrf.mxu0
        %v4878 = vadd.f32 0.0, %v4877
        %v4879 = vpop.f32.mrf.mxu0
        %v4880 = vadd.f32 0.0, %v4879
        %4881 = vmatmul.bf16.gmra.mxu0 %v1717
        %v4882 = vpop.f32.mrf.mxu0
        %v4883 = vadd.f32 0.0, %v4882
        %v4884 = vpop.f32.mrf.mxu0
        %v4885 = vadd.f32 0.0, %v4884
        %4886 = vmatmul.bf16.gmra.mxu0 %v1720
        %v4887 = vpop.f32.mrf.mxu0
        %v4888 = vadd.f32 0.0, %v4887
        %v4889 = vpop.f32.mrf.mxu0
        %v4890 = vadd.f32 0.0, %v4889
        %4891 = vmatmul.bf16.gmra.mxu0 %v1723
        %v4892 = vpop.f32.mrf.mxu0
        %v4893 = vadd.f32 0.0, %v4892
        %v4894 = vpop.f32.mrf.mxu0
        %v4895 = vadd.f32 0.0, %v4894
        %4896 = vmatmul.bf16.gmra.mxu0 %v1726
        %v4897 = vpop.f32.mrf.mxu0
        %v4898 = vadd.f32 0.0, %v4897
        %v4899 = vpop.f32.mrf.mxu0
        %v4900 = vadd.f32 0.0, %v4899
        %4901 = vmatmul.bf16.gmra.mxu0 %v1729
        %v4902 = vpop.f32.mrf.mxu0
        %v4903 = vadd.f32 0.0, %v4902
        %v4904 = vpop.f32.mrf.mxu0
        %v4905 = vadd.f32 0.0, %v4904
        %4906 = vmatmul.bf16.gmra.mxu0 %v1732
        %v4907 = vpop.f32.mrf.mxu0
        %v4908 = vadd.f32 0.0, %v4907
        %v4909 = vpop.f32.mrf.mxu0
        %v4910 = vadd.f32 0.0, %v4909
        %4911 = vmatmul.bf16.gmra.mxu0 %v1735
        %v4912 = vpop.f32.mrf.mxu0
        %v4913 = vadd.f32 0.0, %v4912
        %v4914 = vpop.f32.mrf.mxu0
        %v4915 = vadd.f32 0.0, %v4914
        %4916 = vmatmul.bf16.gmra.mxu0 %v1738
        %v4917 = vpop.f32.mrf.mxu0
        %v4918 = vadd.f32 0.0, %v4917
        %v4919 = vpop.f32.mrf.mxu0
        %v4920 = vadd.f32 0.0, %v4919
        %4921 = vmatmul.bf16.gmra.mxu0 %v1741
        %v4922 = vpop.f32.mrf.mxu0
        %v4923 = vadd.f32 0.0, %v4922
        %v4924 = vpop.f32.mrf.mxu0
        %v4925 = vadd.f32 0.0, %v4924
        %4926 = vmatmul.bf16.gmra.mxu0 %v1744
        %v4927 = vpop.f32.mrf.mxu0
        %v4928 = vadd.f32 0.0, %v4927
        %v4929 = vpop.f32.mrf.mxu0
        %v4930 = vadd.f32 0.0, %v4929
        %4931 = vmatmul.bf16.gmra.mxu0 %v1747
        %v4932 = vpop.f32.mrf.mxu0
        %v4933 = vadd.f32 0.0, %v4932
        %v4934 = vpop.f32.mrf.mxu0
        %v4935 = vadd.f32 0.0, %v4934
        %4936 = vmatmul.bf16.gmra.mxu0 %v3777
        %v4937 = vpop.f32.mrf.mxu0
        %v4938 = vadd.f32 0.0, %v4937
        %v4939 = vpop.f32.mrf.mxu0
        %v4940 = vadd.f32 0.0, %v4939
        %4941 = vmatmul.bf16.gmra.mxu0 %v4856
        %v4942 = vpop.f32.mrf.mxu0
        %v4943 = vadd.f32 0.0, %v4942
        %v4944 = vpop.f32.mrf.mxu0
        %v4945 = vadd.f32 0.0, %v4944
        %4946 = vdwg.mxu0
        %v4947 = vadd.f32 %v4786, %v4868
        %v4948 = vadd.f32 %v4787, %v4870
        %v4949 = vadd.f32 %v4788, %v4873
        %v4950 = vadd.f32 %v4789, %v4875
        %v4951 = vadd.f32 %v4790, %v4878
        %v4952 = vadd.f32 %v4791, %v4880
        %v4953 = vadd.f32 %v4792, %v4883
        %v4954 = vadd.f32 %v4793, %v4885
        %v4955 = vadd.f32 %v4794, %v4888
        %v4956 = vadd.f32 %v4795, %v4890
        %v4957 = vadd.f32 %v4796, %v4893
        %v4958 = vadd.f32 %v4797, %v4895
        %v4959 = vadd.f32 %v4798, %v4898
        %v4960 = vadd.f32 %v4799, %v4900
        %v4961 = vadd.f32 %v4800, %v4903
        %v4962 = vadd.f32 %v4801, %v4905
        %v4963 = vadd.f32 %v4802, %v4908
        %v4964 = vadd.f32 %v4803, %v4910
        %v4965 = vadd.f32 %v4804, %v4913
        %v4966 = vadd.f32 %v4805, %v4915
        %v4967 = vadd.f32 %v4806, %v4918
        %v4968 = vadd.f32 %v4807, %v4920
        %v4969 = vadd.f32 %v4808, %v4923
        %v4970 = vadd.f32 %v4809, %v4925
        %v4971 = vadd.f32 %v4810, %v4928
        %v4972 = vadd.f32 %v4811, %v4930
        %v4973 = vadd.f32 %v4812, %v4933
        %v4974 = vadd.f32 %v4813, %v4935
        %v4975 = vadd.f32 %v4814, %v4938
        %v4976 = vadd.f32 %v4815, %v4940
        %v4977 = vadd.f32 %v4816, %v4943
        %v4978 = vadd.f32 %v4817, %v4945
        %v4979 = vsel %vm2595, %v897, 0
        %v4980 = vsel %vm2602, %v898, 0
        %v4981 = vsel %vm2609, %v899, 0
        %v4982 = vsel %vm2616, %v900, 0
        %v4983 = vsel %vm2623, %v901, 0
        %v4984 = vsel %vm2630, %v902, 0
        %v4985 = vsel %vm2637, %v903, 0
        %v4986 = vsel %vm2644, %v904, 0
        %v4987 = vsel %vm2651, %v905, 0
        %v4988 = vsel %vm2658, %v906, 0
        %v4989 = vsel %vm2665, %v907, 0
        %v4990 = vsel %vm2672, %v908, 0
        %v4991 = vsel %vm2679, %v909, 0
        %v4992 = vsel %vm2686, %v910, 0
        %v4993 = vsel %vm2693, %v911, 0
        %v4994 = vsel %vm2700, %v912, 0
        %v4995 = vsel %vm2707, %v913, 0
        %v4996 = vsel %vm2714, %v914, 0
        %v4997 = vsel %vm2721, %v915, 0
        %v4998 = vsel %vm2728, %v916, 0
        %v4999 = vsel %vm2735, %v917, 0
        %v5000 = vsel %vm2742, %v918, 0
        %v5001 = vsel %vm2749, %v919, 0
        %v5002 = vsel %vm2756, %v920, 0
        %v5003 = vsel %vm2763, %v921, 0
        %v5004 = vsel %vm2770, %v922, 0
        %v5005 = vsel %vm2777, %v923, 0
        %v5006 = vsel %vm2784, %v924, 0
        %v5007 = vsel %vm2791, %v925, 0
        %v5008 = vsel %vm2798, %v926, 0
        %v5009 = vsel %vm2805, %v927, 0
        %v5010 = vsel %vm2812, %v928, 0
        %v5011 = vsel %vm2819, %v929, 0
        %v5012 = vld [vmem:[%s1 + $0x100] sm:$0xf]
        %v5013 = vld [vmem:[%s1 + $0x104] sm:$0xf]
        %v5014 = vld [vmem:[%s1 + $0x108] sm:$0xf]
        %v5015 = vld [vmem:[%s1 + $0x10c] sm:$0xf]
        %v5016 = vld [vmem:[%s1 + $0x110] sm:$0xf]
        %v5017 = vld [vmem:[%s1 + $0x114] sm:$0xf]
        %v5018 = vld [vmem:[%s1 + $0x118] sm:$0xf]
        %v5019 = vld [vmem:[%s1 + $0x11c] sm:$0xf]
        %v5053 = vunpack.c.l.b16 %v4979
        %v5054 = vunpack.c.l.b16 %v4980
        %v5055 = vunpack.c.l.b16 %v4981
        %v5056 = vunpack.c.l.b16 %v4982
        %v5057 = vunpack.c.l.b16 %v4983
        %v5058 = vunpack.c.l.b16 %v4984
        %v5059 = vunpack.c.l.b16 %v4985
        %v5060 = vunpack.c.l.b16 %v4986
        %v5061 = vunpack.c.l.b16 %v4987
        %v5062 = vunpack.c.l.b16 %v4988
        %v5063 = vunpack.c.l.b16 %v4989
        %v5064 = vunpack.c.l.b16 %v4990
        %v5065 = vunpack.c.l.b16 %v4991
        %v5066 = vunpack.c.l.b16 %v4992
        %v5067 = vunpack.c.l.b16 %v4993
        %v5068 = vunpack.c.l.b16 %v4994
        %v5069 = vunpack.c.l.b16 %v4995
        %v5070 = vunpack.c.l.b16 %v4996
        %v5071 = vunpack.c.l.b16 %v4997
        %v5072 = vunpack.c.l.b16 %v4998
        %v5073 = vunpack.c.l.b16 %v4999
        %v5074 = vunpack.c.l.b16 %v5000
        %v5075 = vunpack.c.l.b16 %v5001
        %v5076 = vunpack.c.l.b16 %v5002
        %v5077 = vunpack.c.l.b16 %v5003
        %v5078 = vunpack.c.l.b16 %v5004
        %v5079 = vunpack.c.l.b16 %v5005
        %v5080 = vunpack.c.l.b16 %v5006
        %v5081 = vunpack.c.l.b16 %v5007
        %v5082 = vunpack.c.l.b16 %v5008
        %v5083 = vunpack.c.l.b16 %v5009
        %v5084 = vunpack.c.l.b16 %v5010
        %v5085 = vunpack.c.l.b16 %v5011
        %v5086 = vpack.c.b16 %v5054, %v5053
        %v5087 = vpack.c.b16 %v5056, %v5055
        %v5088 = vpack.c.b16 %v5058, %v5057
        %v5089 = vpack.c.b16 %v5060, %v5059
        %v5090 = vpack.c.b16 %v5062, %v5061
        %v5091 = vpack.c.b16 %v5064, %v5063
        %v5092 = vpack.c.b16 %v5066, %v5065
        %v5093 = vpack.c.b16 %v5068, %v5067
        %v5094 = vpack.c.b16 %v5070, %v5069
        %v5095 = vpack.c.b16 %v5072, %v5071
        %v5096 = vpack.c.b16 %v5074, %v5073
        %v5097 = vpack.c.b16 %v5076, %v5075
        %v5098 = vpack.c.b16 %v5078, %v5077
        %v5099 = vpack.c.b16 %v5080, %v5079
        %v5100 = vpack.c.b16 %v5082, %v5081
        %v5101 = vpack.c.b16 %v5084, %v5083
        %v5102 = vpack.c.b16 %v5085, %v5085
        %v5104 = vshrl.u32 %v5086, 16
        %v5106 = vshll.u32 %v5086, 16
        %v5108 = vrot.slane %v5106, 1
        %v5109 = vor.u32 %v5104, %v5108
        %v5111 = vshll.u32 %v5087, 16
        %v5113 = vrot.slane %v5111, 1
        %v5114 = vsel %vm2944, %v5109, %v5113
        %v5115 = vshrl.u32 %v5087, 16
        %v5117 = vor.u32 %v5115, %v5113
        %v5119 = vshll.u32 %v5088, 16
        %v5121 = vrot.slane %v5119, 1
        %v5122 = vsel %vm2944, %v5117, %v5121
        %v5123 = vshrl.u32 %v5088, 16
        %v5125 = vor.u32 %v5123, %v5121
        %v5127 = vshll.u32 %v5089, 16
        %v5129 = vrot.slane %v5127, 1
        %v5130 = vsel %vm2944, %v5125, %v5129
        %v5131 = vshrl.u32 %v5089, 16
        %v5133 = vor.u32 %v5131, %v5129
        %v5135 = vshll.u32 %v5090, 16
        %v5137 = vrot.slane %v5135, 1
        %v5138 = vsel %vm2944, %v5133, %v5137
        %v5139 = vshrl.u32 %v5090, 16
        %v5141 = vor.u32 %v5139, %v5137
        %v5143 = vshll.u32 %v5091, 16
        %v5145 = vrot.slane %v5143, 1
        %v5146 = vsel %vm2944, %v5141, %v5145
        %v5147 = vshrl.u32 %v5091, 16
        %v5149 = vor.u32 %v5147, %v5145
        %v5151 = vshll.u32 %v5092, 16
        %v5153 = vrot.slane %v5151, 1
        %v5154 = vsel %vm2944, %v5149, %v5153
        %v5155 = vshrl.u32 %v5092, 16
        %v5157 = vor.u32 %v5155, %v5153
        %v5159 = vshll.u32 %v5093, 16
        %v5161 = vrot.slane %v5159, 1
        %v5162 = vsel %vm2944, %v5157, %v5161
        %v5163 = vshrl.u32 %v5093, 16
        %v5165 = vor.u32 %v5163, %v5161
        %v5167 = vshll.u32 %v5094, 16
        %v5169 = vrot.slane %v5167, 1
        %v5170 = vsel %vm2944, %v5165, %v5169
        %v5171 = vshrl.u32 %v5094, 16
        %v5173 = vor.u32 %v5171, %v5169
        %v5175 = vshll.u32 %v5095, 16
        %v5177 = vrot.slane %v5175, 1
        %v5178 = vsel %vm2944, %v5173, %v5177
        %v5179 = vshrl.u32 %v5095, 16
        %v5181 = vor.u32 %v5179, %v5177
        %v5183 = vshll.u32 %v5096, 16
        %v5185 = vrot.slane %v5183, 1
        %v5186 = vsel %vm2944, %v5181, %v5185
        %v5187 = vshrl.u32 %v5096, 16
        %v5189 = vor.u32 %v5187, %v5185
        %v5191 = vshll.u32 %v5097, 16
        %v5193 = vrot.slane %v5191, 1
        %v5194 = vsel %vm2944, %v5189, %v5193
        %v5195 = vshrl.u32 %v5097, 16
        %v5197 = vor.u32 %v5195, %v5193
        %v5199 = vshll.u32 %v5098, 16
        %v5201 = vrot.slane %v5199, 1
        %v5202 = vsel %vm2944, %v5197, %v5201
        %v5203 = vshrl.u32 %v5098, 16
        %v5205 = vor.u32 %v5203, %v5201
        %v5207 = vshll.u32 %v5099, 16
        %v5209 = vrot.slane %v5207, 1
        %v5210 = vsel %vm2944, %v5205, %v5209
        %v5211 = vshrl.u32 %v5099, 16
        %v5213 = vor.u32 %v5211, %v5209
        %v5215 = vshll.u32 %v5100, 16
        %v5217 = vrot.slane %v5215, 1
        %v5218 = vsel %vm2944, %v5213, %v5217
        %v5219 = vshrl.u32 %v5100, 16
        %v5221 = vor.u32 %v5219, %v5217
        %v5223 = vshll.u32 %v5101, 16
        %v5225 = vrot.slane %v5223, 1
        %v5226 = vsel %vm2944, %v5221, %v5225
        %v5227 = vshrl.u32 %v5101, 16
        %v5229 = vor.u32 %v5227, %v5225
        %v5231 = vshll.u32 %v5102, 16
        %v5233 = vrot.slane %v5231, 1
        %v5234 = vsel %vm2944, %v5229, %v5233
        %v5243 = vunpack.c.l.b16 %v5012
        %v5244 = vunpack.c.l.b16 %v5013
        %v5245 = vunpack.c.l.b16 %v5014
        %v5246 = vunpack.c.l.b16 %v5015
        %v5247 = vunpack.c.l.b16 %v5016
        %v5248 = vunpack.c.l.b16 %v5017
        %v5249 = vunpack.c.l.b16 %v5018
        %v5250 = vunpack.c.l.b16 %v5019
        %v5251 = vpack.c.b16 %v5244, %v5243
        %v5252 = vpack.c.b16 %v5246, %v5245
        %v5253 = vpack.c.b16 %v5248, %v5247
        %v5254 = vpack.c.b16 %v5250, %v5249
        %v5260 = vsel %vm1700, %v5114, 0
        %v5263 = vsel %vm1700, %v5122, 0
        %v5266 = vsel %vm1700, %v5130, 0
        %v5269 = vsel %vm1700, %v5138, 0
        %v5272 = vsel %vm1700, %v5146, 0
        %v5275 = vsel %vm1700, %v5154, 0
        %v5278 = vsel %vm1700, %v5162, 0
        %v5281 = vsel %vm1700, %v5170, 0
        %v5284 = vsel %vm1700, %v5178, 0
        %v5287 = vsel %vm1700, %v5186, 0
        %v5290 = vsel %vm1700, %v5194, 0
        %v5293 = vsel %vm1700, %v5202, 0
        %v5296 = vsel %vm1700, %v5210, 0
        %v5299 = vsel %vm1700, %v5218, 0
        %v5302 = vsel %vm1700, %v5226, 0
        %v5305 = vsel %vm1700, %v5234, 0
        %5307 = vmatpush.bf16.msra.mxu0 0
        %5308 = vmatpush.bf16.msra.mxu0 0
        %5309 = vmatpush.bf16.msra.mxu0 0
        %5310 = vmatpush.bf16.msra.mxu0 0
        %5311 = vmatpush.bf16.msra.mxu0 %v5254
        %5312 = vmatpush.bf16.msra.mxu0 %v5253
        %5313 = vmatpush.bf16.msra.mxu0 %v5252
        %5314 = vmatpush.bf16.msra.mxu0 %v5251
        %5315 = vmatmul.bf16.gmra.mxu0 %v5260
        %v5316 = vpop.f32.mrf.mxu0
        %v5317 = vadd.f32 0.0, %v5316
        %v5318 = vpop.f32.mrf.mxu0
        %v5319 = vadd.f32 0.0, %v5318
        %5320 = vmatmul.bf16.gmra.mxu0 %v5263
        %v5321 = vpop.f32.mrf.mxu0
        %v5322 = vadd.f32 0.0, %v5321
        %v5323 = vpop.f32.mrf.mxu0
        %v5324 = vadd.f32 0.0, %v5323
        %5325 = vmatmul.bf16.gmra.mxu0 %v5266
        %v5326 = vpop.f32.mrf.mxu0
        %v5327 = vadd.f32 0.0, %v5326
        %v5328 = vpop.f32.mrf.mxu0
        %v5329 = vadd.f32 0.0, %v5328
        %5330 = vmatmul.bf16.gmra.mxu0 %v5269
        %v5331 = vpop.f32.mrf.mxu0
        %v5332 = vadd.f32 0.0, %v5331
        %v5333 = vpop.f32.mrf.mxu0
        %v5334 = vadd.f32 0.0, %v5333
        %5335 = vmatmul.bf16.gmra.mxu0 %v5272
        %v5336 = vpop.f32.mrf.mxu0
        %v5337 = vadd.f32 0.0, %v5336
        %v5338 = vpop.f32.mrf.mxu0
        %v5339 = vadd.f32 0.0, %v5338
        %5340 = vmatmul.bf16.gmra.mxu0 %v5275
        %v5341 = vpop.f32.mrf.mxu0
        %v5342 = vadd.f32 0.0, %v5341
        %v5343 = vpop.f32.mrf.mxu0
        %v5344 = vadd.f32 0.0, %v5343
        %5345 = vmatmul.bf16.gmra.mxu0 %v5278
        %v5346 = vpop.f32.mrf.mxu0
        %v5347 = vadd.f32 0.0, %v5346
        %v5348 = vpop.f32.mrf.mxu0
        %v5349 = vadd.f32 0.0, %v5348
        %5350 = vmatmul.bf16.gmra.mxu0 %v5281
        %v5351 = vpop.f32.mrf.mxu0
        %v5352 = vadd.f32 0.0, %v5351
        %v5353 = vpop.f32.mrf.mxu0
        %v5354 = vadd.f32 0.0, %v5353
        %5355 = vmatmul.bf16.gmra.mxu0 %v5284
        %v5356 = vpop.f32.mrf.mxu0
        %v5357 = vadd.f32 0.0, %v5356
        %v5358 = vpop.f32.mrf.mxu0
        %v5359 = vadd.f32 0.0, %v5358
        %5360 = vmatmul.bf16.gmra.mxu0 %v5287
        %v5361 = vpop.f32.mrf.mxu0
        %v5362 = vadd.f32 0.0, %v5361
        %v5363 = vpop.f32.mrf.mxu0
        %v5364 = vadd.f32 0.0, %v5363
        %5365 = vmatmul.bf16.gmra.mxu0 %v5290
        %v5366 = vpop.f32.mrf.mxu0
        %v5367 = vadd.f32 0.0, %v5366
        %v5368 = vpop.f32.mrf.mxu0
        %v5369 = vadd.f32 0.0, %v5368
        %5370 = vmatmul.bf16.gmra.mxu0 %v5293
        %v5371 = vpop.f32.mrf.mxu0
        %v5372 = vadd.f32 0.0, %v5371
        %v5373 = vpop.f32.mrf.mxu0
        %v5374 = vadd.f32 0.0, %v5373
        %5375 = vmatmul.bf16.gmra.mxu0 %v5296
        %v5376 = vpop.f32.mrf.mxu0
        %v5377 = vadd.f32 0.0, %v5376
        %v5378 = vpop.f32.mrf.mxu0
        %v5379 = vadd.f32 0.0, %v5378
        %5380 = vmatmul.bf16.gmra.mxu0 %v5299
        %v5381 = vpop.f32.mrf.mxu0
        %v5382 = vadd.f32 0.0, %v5381
        %v5383 = vpop.f32.mrf.mxu0
        %v5384 = vadd.f32 0.0, %v5383
        %5385 = vmatmul.bf16.gmra.mxu0 %v5302
        %v5386 = vpop.f32.mrf.mxu0
        %v5387 = vadd.f32 0.0, %v5386
        %v5388 = vpop.f32.mrf.mxu0
        %v5389 = vadd.f32 0.0, %v5388
        %5390 = vmatmul.bf16.gmra.mxu0 %v5305
        %v5391 = vpop.f32.mrf.mxu0
        %v5392 = vadd.f32 0.0, %v5391
        %v5393 = vpop.f32.mrf.mxu0
        %v5394 = vadd.f32 0.0, %v5393
        %5395 = vdwg.mxu0
        %v5396 = vadd.f32 %v4947, %v5317
        %v5397 = vadd.f32 %v4948, %v5319
        %v5398 = vadd.f32 %v4949, %v5322
        %v5399 = vadd.f32 %v4950, %v5324
        %v5400 = vadd.f32 %v4951, %v5327
        %v5401 = vadd.f32 %v4952, %v5329
        %v5402 = vadd.f32 %v4953, %v5332
        %v5403 = vadd.f32 %v4954, %v5334
        %v5404 = vadd.f32 %v4955, %v5337
        %v5405 = vadd.f32 %v4956, %v5339
        %v5406 = vadd.f32 %v4957, %v5342
        %v5407 = vadd.f32 %v4958, %v5344
        %v5408 = vadd.f32 %v4959, %v5347
        %v5409 = vadd.f32 %v4960, %v5349
        %v5410 = vadd.f32 %v4961, %v5352
        %v5411 = vadd.f32 %v4962, %v5354
        %v5412 = vadd.f32 %v4963, %v5357
        %v5413 = vadd.f32 %v4964, %v5359
        %v5414 = vadd.f32 %v4965, %v5362
        %v5415 = vadd.f32 %v4966, %v5364
        %v5416 = vadd.f32 %v4967, %v5367
        %v5417 = vadd.f32 %v4968, %v5369
        %v5418 = vadd.f32 %v4969, %v5372
        %v5419 = vadd.f32 %v4970, %v5374
        %v5420 = vadd.f32 %v4971, %v5377
        %v5421 = vadd.f32 %v4972, %v5379
        %v5422 = vadd.f32 %v4973, %v5382
        %v5423 = vadd.f32 %v4974, %v5384
        %v5424 = vadd.f32 %v4975, %v5387
        %v5425 = vadd.f32 %v4976, %v5389
        %v5426 = vadd.f32 %v4977, %v5392
        %v5427 = vadd.f32 %v4978, %v5394
        %v5428 = vld [vmem:[%s2] sm:$0x1]
        %v5430 = vperm.slane %v5428, 0
        %v5432 = vadd.f32 %v5396, %v5430
        %v5433 = vadd.f32 %v5397, %v5430
        %v5434 = vadd.f32 %v5398, %v5430
        %v5435 = vadd.f32 %v5399, %v5430
        %v5436 = vadd.f32 %v5400, %v5430
        %v5437 = vadd.f32 %v5401, %v5430
        %v5438 = vadd.f32 %v5402, %v5430
        %v5439 = vadd.f32 %v5403, %v5430
        %v5440 = vadd.f32 %v5404, %v5430
        %v5441 = vadd.f32 %v5405, %v5430
        %v5442 = vadd.f32 %v5406, %v5430
        %v5443 = vadd.f32 %v5407, %v5430
        %v5444 = vadd.f32 %v5408, %v5430
        %v5445 = vadd.f32 %v5409, %v5430
        %v5446 = vadd.f32 %v5410, %v5430
        %v5447 = vadd.f32 %v5411, %v5430
        %v5448 = vadd.f32 %v5412, %v5430
        %v5449 = vadd.f32 %v5413, %v5430
        %v5450 = vadd.f32 %v5414, %v5430
        %v5451 = vadd.f32 %v5415, %v5430
        %v5452 = vadd.f32 %v5416, %v5430
        %v5453 = vadd.f32 %v5417, %v5430
        %v5454 = vadd.f32 %v5418, %v5430
        %v5455 = vadd.f32 %v5419, %v5430
        %v5456 = vadd.f32 %v5420, %v5430
        %v5457 = vadd.f32 %v5421, %v5430
        %v5458 = vadd.f32 %v5422, %v5430
        %v5459 = vadd.f32 %v5423, %v5430
        %v5460 = vadd.f32 %v5424, %v5430
        %v5461 = vadd.f32 %v5425, %v5430
        %v5462 = vadd.f32 %v5426, %v5430
        %v5463 = vadd.f32 %v5427, %v5430
        %v5464 = vmax.f32 %v5432, 0.0
        %v5465 = vmax.f32 %v5433, 0.0
        %v5466 = vmax.f32 %v5434, 0.0
        %v5467 = vmax.f32 %v5435, 0.0
        %v5468 = vmax.f32 %v5436, 0.0
        %v5469 = vmax.f32 %v5437, 0.0
        %v5470 = vmax.f32 %v5438, 0.0
        %v5471 = vmax.f32 %v5439, 0.0
        %v5472 = vmax.f32 %v5440, 0.0
        %v5473 = vmax.f32 %v5441, 0.0
        %v5474 = vmax.f32 %v5442, 0.0
        %v5475 = vmax.f32 %v5443, 0.0
        %v5476 = vmax.f32 %v5444, 0.0
        %v5477 = vmax.f32 %v5445, 0.0
        %v5478 = vmax.f32 %v5446, 0.0
        %v5479 = vmax.f32 %v5447, 0.0
        %v5480 = vmax.f32 %v5448, 0.0
        %v5481 = vmax.f32 %v5449, 0.0
        %v5482 = vmax.f32 %v5450, 0.0
        %v5483 = vmax.f32 %v5451, 0.0
        %v5484 = vmax.f32 %v5452, 0.0
        %v5485 = vmax.f32 %v5453, 0.0
        %v5486 = vmax.f32 %v5454, 0.0
        %v5487 = vmax.f32 %v5455, 0.0
        %v5488 = vmax.f32 %v5456, 0.0
        %v5489 = vmax.f32 %v5457, 0.0
        %v5490 = vmax.f32 %v5458, 0.0
        %v5491 = vmax.f32 %v5459, 0.0
        %v5492 = vmax.f32 %v5460, 0.0
        %v5493 = vmax.f32 %v5461, 0.0
        %v5494 = vmax.f32 %v5462, 0.0
        %v5495 = vmax.f32 %v5463, 0.0
        %v5496 = vpack.c.bf16 %v5464, %v5464
        %v5497 = vpack.c.bf16 %v5465, %v5465
        %v5498 = vpack.c.bf16 %v5466, %v5466
        %v5499 = vpack.c.bf16 %v5467, %v5467
        %v5500 = vpack.c.bf16 %v5468, %v5468
        %v5501 = vpack.c.bf16 %v5469, %v5469
        %v5502 = vpack.c.bf16 %v5470, %v5470
        %v5503 = vpack.c.bf16 %v5471, %v5471
        %v5504 = vpack.c.bf16 %v5472, %v5472
        %v5505 = vpack.c.bf16 %v5473, %v5473
        %v5506 = vpack.c.bf16 %v5474, %v5474
        %v5507 = vpack.c.bf16 %v5475, %v5475
        %v5508 = vpack.c.bf16 %v5476, %v5476
        %v5509 = vpack.c.bf16 %v5477, %v5477
        %v5510 = vpack.c.bf16 %v5478, %v5478
        %v5511 = vpack.c.bf16 %v5479, %v5479
        %v5512 = vpack.c.bf16 %v5480, %v5480
        %v5513 = vpack.c.bf16 %v5481, %v5481
        %v5514 = vpack.c.bf16 %v5482, %v5482
        %v5515 = vpack.c.bf16 %v5483, %v5483
        %v5516 = vpack.c.bf16 %v5484, %v5484
        %v5517 = vpack.c.bf16 %v5485, %v5485
        %v5518 = vpack.c.bf16 %v5486, %v5486
        %v5519 = vpack.c.bf16 %v5487, %v5487
        %v5520 = vpack.c.bf16 %v5488, %v5488
        %v5521 = vpack.c.bf16 %v5489, %v5489
        %v5522 = vpack.c.bf16 %v5490, %v5490
        %v5523 = vpack.c.bf16 %v5491, %v5491
        %v5524 = vpack.c.bf16 %v5492, %v5492
        %v5525 = vpack.c.bf16 %v5493, %v5493
        %v5526 = vpack.c.bf16 %v5494, %v5494
        %v5527 = vpack.c.bf16 %v5495, %v5495
        %5528 = vst.msk [vmem:[#allocation2 + $0xc] sm:$0xf] %vm789, %v5496
        %5529 = vst.msk [vmem:[#allocation2 + $0x10] sm:$0xf] %vm789, %v5497
        %5530 = vst.msk [vmem:[#allocation2 + $0x14] sm:$0xf] %vm789, %v5498
        %5531 = vst.msk [vmem:[#allocation2 + $0x18] sm:$0xf] %vm789, %v5499
        %5532 = vst.msk [vmem:[#allocation2 + $0x1c] sm:$0xf] %vm789, %v5500
        %5533 = vst.msk [vmem:[#allocation2 + $0x20] sm:$0xf] %vm789, %v5501
        %5534 = vst.msk [vmem:[#allocation2 + $0x24] sm:$0xf] %vm789, %v5502
        %5535 = vst.msk [vmem:[#allocation2 + $0x28] sm:$0xf] %vm789, %v5503
        %5536 = vst.msk [vmem:[#allocation2 + $0x2c] sm:$0xf] %vm789, %v5504
        %5537 = vst.msk [vmem:[#allocation2 + $0x30] sm:$0xf] %vm789, %v5505
        %5538 = vst.msk [vmem:[#allocation2 + $0x34] sm:$0xf] %vm789, %v5506
        %5539 = vst.msk [vmem:[#allocation2 + $0x38] sm:$0xf] %vm789, %v5507
        %5540 = vst.msk [vmem:[#allocation2 + $0x3c] sm:$0xf] %vm789, %v5508
        %5541 = vst.msk [vmem:[#allocation2 + $0x40] sm:$0xf] %vm789, %v5509
        %5542 = vst.msk [vmem:[#allocation2 + $0x44] sm:$0xf] %vm789, %v5510
        %5543 = vst.msk [vmem:[#allocation2 + $0x48] sm:$0xf] %vm789, %v5511
        %5544 = vst.msk [vmem:[#allocation2 + $0x4c] sm:$0xf] %vm789, %v5512
        %5545 = vst.msk [vmem:[#allocation2 + $0x50] sm:$0xf] %vm789, %v5513
        %5546 = vst.msk [vmem:[#allocation2 + $0x54] sm:$0xf] %vm789, %v5514
        %5547 = vst.msk [vmem:[#allocation2 + $0x58] sm:$0xf] %vm789, %v5515
        %5548 = vst.msk [vmem:[#allocation2 + $0x5c] sm:$0xf] %vm789, %v5516
        %5549 = vst.msk [vmem:[#allocation2 + $0x60] sm:$0xf] %vm789, %v5517
        %5550 = vst.msk [vmem:[#allocation2 + $0x64] sm:$0xf] %vm789, %v5518
        %5551 = vst.msk [vmem:[#allocation2 + $0x68] sm:$0xf] %vm789, %v5519
        %5552 = vst.msk [vmem:[#allocation2 + $0x6c] sm:$0xf] %vm789, %v5520
        %5553 = vst.msk [vmem:[#allocation2 + $0x70] sm:$0xf] %vm789, %v5521
        %5554 = vst.msk [vmem:[#allocation2 + $0x74] sm:$0xf] %vm789, %v5522
        %5555 = vst.msk [vmem:[#allocation2 + $0x78] sm:$0xf] %vm789, %v5523
        %5556 = vst.msk [vmem:[#allocation2 + $0x7c] sm:$0xf] %vm789, %v5524
        %5557 = vst.msk [vmem:[#allocation2 + $0x80] sm:$0xf] %vm789, %v5525
        %5558 = vst.msk [vmem:[#allocation2 + $0x84] sm:$0xf] %vm789, %v5526
        %5559 = vst.msk [vmem:[#allocation2 + $0x88] sm:$0xf] %vm789, %v5527
        %v5560 = vld [vmem:[#allocation2] sm:$0xf]
        %v5561 = vld [vmem:[#allocation2 + $0x4] sm:$0xf]
        %v5562 = vld [vmem:[#allocation2 + $0x8] sm:$0xf]
        %v5563 = vld [vmem:[#allocation2 + $0xc] sm:$0xf]
        %v5564 = vld [vmem:[#allocation2 + $0x10] sm:$0xf]
        %v5565 = vld [vmem:[#allocation2 + $0x14] sm:$0xf]
        %v5566 = vld [vmem:[#allocation2 + $0x18] sm:$0xf]
        %v5567 = vld [vmem:[#allocation2 + $0x1c] sm:$0xf]
        %v5568 = vld [vmem:[#allocation2 + $0x20] sm:$0xf]
        %v5569 = vld [vmem:[#allocation2 + $0x24] sm:$0xf]
        %v5570 = vld [vmem:[#allocation2 + $0x28] sm:$0xf]
        %v5571 = vld [vmem:[#allocation2 + $0x2c] sm:$0xf]
        %v5572 = vld [vmem:[#allocation2 + $0x30] sm:$0xf]
        %v5573 = vld [vmem:[#allocation2 + $0x34] sm:$0xf]
        %v5574 = vld [vmem:[#allocation2 + $0x38] sm:$0xf]
        %v5575 = vld [vmem:[#allocation2 + $0x3c] sm:$0xf]
        %v5576 = vld [vmem:[#allocation2 + $0x40] sm:$0xf]
        %v5577 = vld [vmem:[#allocation2 + $0x44] sm:$0xf]
        %v5578 = vld [vmem:[#allocation2 + $0x48] sm:$0xf]
        %v5579 = vld [vmem:[#allocation2 + $0x4c] sm:$0xf]
        %v5580 = vld [vmem:[#allocation2 + $0x50] sm:$0xf]
        %v5581 = vld [vmem:[#allocation2 + $0x54] sm:$0xf]
        %v5582 = vld [vmem:[#allocation2 + $0x58] sm:$0xf]
        %v5583 = vld [vmem:[#allocation2 + $0x5c] sm:$0xf]
        %v5584 = vld [vmem:[#allocation2 + $0x60] sm:$0xf]
        %v5585 = vld [vmem:[#allocation2 + $0x64] sm:$0xf]
        %v5586 = vld [vmem:[#allocation2 + $0x68] sm:$0xf]
        %v5587 = vld [vmem:[#allocation2 + $0x6c] sm:$0xf]
        %v5588 = vld [vmem:[#allocation2 + $0x70] sm:$0xf]
        %v5589 = vld [vmem:[#allocation2 + $0x74] sm:$0xf]
        %v5590 = vld [vmem:[#allocation2 + $0x78] sm:$0xf]
        %v5591 = vld [vmem:[#allocation2 + $0x7c] sm:$0xf]
        %v5592 = vld [vmem:[#allocation2 + $0x80] sm:$0xf]
        %v5593 = vld [vmem:[#allocation2 + $0x84] sm:$0xf]
        %v5594 = vld [vmem:[#allocation2 + $0x88] sm:$0xf]
        %v5595 = vld [vmem:[#allocation2 + $0x8c] sm:$0xf]
        %v5596 = vld [vmem:[#allocation2 + $0x90] sm:$0xf]
        %v5597 = vld [vmem:[#allocation2 + $0x94] sm:$0xf]
        %v5598 = vsel %vm1322, %v5560, 0
        %v5599 = vsel %vm1329, %v5561, 0
        %v5600 = vsel %vm1336, %v5562, 0
        %v5601 = vsel %vm1343, %v5563, 0
        %v5602 = vsel %vm1350, %v5564, 0
        %v5603 = vsel %vm1357, %v5565, 0
        %v5604 = vsel %vm1364, %v5566, 0
        %v5605 = vsel %vm1371, %v5567, 0
        %v5606 = vsel %vm1378, %v5568, 0
        %v5607 = vsel %vm1385, %v5569, 0
        %v5608 = vsel %vm1392, %v5570, 0
        %v5609 = vsel %vm1399, %v5571, 0
        %v5610 = vsel %vm1406, %v5572, 0
        %v5611 = vsel %vm1413, %v5573, 0
        %v5612 = vsel %vm1420, %v5574, 0
        %v5613 = vsel %vm1427, %v5575, 0
        %v5614 = vsel %vm1434, %v5576, 0
        %v5615 = vsel %vm1441, %v5577, 0
        %v5616 = vsel %vm1448, %v5578, 0
        %v5617 = vsel %vm1455, %v5579, 0
        %v5618 = vsel %vm1462, %v5580, 0
        %v5619 = vsel %vm1469, %v5581, 0
        %v5620 = vsel %vm1476, %v5582, 0
        %v5621 = vsel %vm1483, %v5583, 0
        %v5622 = vsel %vm1490, %v5584, 0
        %v5623 = vsel %vm1497, %v5585, 0
        %v5624 = vsel %vm1504, %v5586, 0
        %v5625 = vsel %vm1511, %v5587, 0
        %v5626 = vsel %vm1518, %v5588, 0
        %v5627 = vsel %vm1525, %v5589, 0
        %v5628 = vsel %vm1532, %v5590, 0
        %v5629 = vsel %vm1539, %v5591, 0
        %v5630 = vsel %vm1546, %v5592, 0
        %v5631 = vld [vmem:[%s3] sm:$0xf]
        %v5632 = vld [vmem:[%s3 + $0x4] sm:$0xf]
        %v5633 = vld [vmem:[%s3 + $0x8] sm:$0xf]
        %v5634 = vld [vmem:[%s3 + $0xc] sm:$0xf]
        %v5635 = vld [vmem:[%s3 + $0x10] sm:$0xf]
        %v5636 = vld [vmem:[%s3 + $0x14] sm:$0xf]
        %v5637 = vld [vmem:[%s3 + $0x18] sm:$0xf]
        %v5638 = vld [vmem:[%s3 + $0x1c] sm:$0xf]
        %v5639 = vld [vmem:[%s3 + $0x20] sm:$0xf]
        %v5640 = vld [vmem:[%s3 + $0x24] sm:$0xf]
        %v5641 = vld [vmem:[%s3 + $0x28] sm:$0xf]
        %v5642 = vld [vmem:[%s3 + $0x2c] sm:$0xf]
        %v5643 = vld [vmem:[%s3 + $0x30] sm:$0xf]
        %v5644 = vld [vmem:[%s3 + $0x34] sm:$0xf]
        %v5645 = vld [vmem:[%s3 + $0x38] sm:$0xf]
        %v5646 = vld [vmem:[%s3 + $0x3c] sm:$0xf]
        %v5679 = vunpack.c.l.b16 %v5561
        %v5680 = vunpack.c.l.b16 %v5562
        %v5681 = vunpack.c.l.b16 %v5563
        %v5682 = vunpack.c.l.b16 %v5564
        %v5683 = vunpack.c.l.b16 %v5565
        %v5684 = vunpack.c.l.b16 %v5566
        %v5685 = vunpack.c.l.b16 %v5567
        %v5686 = vunpack.c.l.b16 %v5568
        %v5687 = vunpack.c.l.b16 %v5569
        %v5688 = vunpack.c.l.b16 %v5570
        %v5689 = vunpack.c.l.b16 %v5571
        %v5690 = vunpack.c.l.b16 %v5572
        %v5691 = vunpack.c.l.b16 %v5573
        %v5692 = vunpack.c.l.b16 %v5574
        %v5693 = vunpack.c.l.b16 %v5575
        %v5694 = vunpack.c.l.b16 %v5576
        %v5695 = vunpack.c.l.b16 %v5577
        %v5696 = vunpack.c.l.b16 %v5578
        %v5697 = vunpack.c.l.b16 %v5579
        %v5698 = vunpack.c.l.b16 %v5580
        %v5699 = vunpack.c.l.b16 %v5581
        %v5700 = vunpack.c.l.b16 %v5582
        %v5701 = vunpack.c.l.b16 %v5583
        %v5702 = vunpack.c.l.b16 %v5584
        %v5703 = vunpack.c.l.b16 %v5585
        %v5704 = vunpack.c.l.b16 %v5586
        %v5705 = vunpack.c.l.b16 %v5587
        %v5706 = vunpack.c.l.b16 %v5588
        %v5707 = vunpack.c.l.b16 %v5589
        %v5708 = vunpack.c.l.b16 %v5590
        %v5709 = vunpack.c.l.b16 %v5591
        %v5710 = vunpack.c.l.b16 %v5592
        %v5711 = vpack.c.b16 %v5680, %v5679
        %v5712 = vpack.c.b16 %v5682, %v5681
        %v5713 = vpack.c.b16 %v5684, %v5683
        %v5714 = vpack.c.b16 %v5686, %v5685
        %v5715 = vpack.c.b16 %v5688, %v5687
        %v5716 = vpack.c.b16 %v5690, %v5689
        %v5717 = vpack.c.b16 %v5692, %v5691
        %v5718 = vpack.c.b16 %v5694, %v5693
        %v5719 = vpack.c.b16 %v5696, %v5695
        %v5720 = vpack.c.b16 %v5698, %v5697
        %v5721 = vpack.c.b16 %v5700, %v5699
        %v5722 = vpack.c.b16 %v5702, %v5701
        %v5723 = vpack.c.b16 %v5704, %v5703
        %v5724 = vpack.c.b16 %v5706, %v5705
        %v5725 = vpack.c.b16 %v5708, %v5707
        %v5726 = vpack.c.b16 %v5710, %v5709
        %v5735 = vunpack.c.l.b16 %v5639
        %v5736 = vunpack.c.l.b16 %v5640
        %v5737 = vunpack.c.l.b16 %v5641
        %v5738 = vunpack.c.l.b16 %v5642
        %v5739 = vunpack.c.l.b16 %v5643
        %v5740 = vunpack.c.l.b16 %v5644
        %v5741 = vunpack.c.l.b16 %v5645
        %v5742 = vunpack.c.l.b16 %v5646
        %v5743 = vpack.c.b16 %v5736, %v5735
        %v5744 = vpack.c.b16 %v5738, %v5737
        %v5745 = vpack.c.b16 %v5740, %v5739
        %v5746 = vpack.c.b16 %v5742, %v5741
        %v5752 = vsel %vm1700, %v5711, 0
        %v5755 = vsel %vm1700, %v5712, 0
        %v5758 = vsel %vm1700, %v5713, 0
        %v5761 = vsel %vm1700, %v5714, 0
        %v5764 = vsel %vm1700, %v5715, 0
        %v5767 = vsel %vm1700, %v5716, 0
        %v5770 = vsel %vm1700, %v5717, 0
        %v5773 = vsel %vm1700, %v5718, 0
        %v5776 = vsel %vm1700, %v5719, 0
        %v5779 = vsel %vm1700, %v5720, 0
        %v5782 = vsel %vm1700, %v5721, 0
        %v5785 = vsel %vm1700, %v5722, 0
        %v5788 = vsel %vm1700, %v5723, 0
        %v5791 = vsel %vm1700, %v5724, 0
        %v5794 = vsel %vm1700, %v5725, 0
        %v5797 = vsel %vm1700, %v5726, 0
        %5799 = vmatpush.bf16.msra.mxu0 0
        %5800 = vmatpush.bf16.msra.mxu0 0
        %5801 = vmatpush.bf16.msra.mxu0 0
        %5802 = vmatpush.bf16.msra.mxu0 0
        %5803 = vmatpush.bf16.msra.mxu0 %v5746
        %5804 = vmatpush.bf16.msra.mxu0 %v5745
        %5805 = vmatpush.bf16.msra.mxu0 %v5744
        %5806 = vmatpush.bf16.msra.mxu0 %v5743
        %5807 = vmatmul.bf16.gmra.mxu0 %v5752
        %v5808 = vpop.f32.mrf.mxu0
        %v5809 = vadd.f32 0.0, %v5808
        %v5810 = vpop.f32.mrf.mxu0
        %v5811 = vadd.f32 0.0, %v5810
        %5812 = vmatmul.bf16.gmra.mxu0 %v5755
        %v5813 = vpop.f32.mrf.mxu0
        %v5814 = vadd.f32 0.0, %v5813
        %v5815 = vpop.f32.mrf.mxu0
        %v5816 = vadd.f32 0.0, %v5815
        %5817 = vmatmul.bf16.gmra.mxu0 %v5758
        %v5818 = vpop.f32.mrf.mxu0
        %v5819 = vadd.f32 0.0, %v5818
        %v5820 = vpop.f32.mrf.mxu0
        %v5821 = vadd.f32 0.0, %v5820
        %5822 = vmatmul.bf16.gmra.mxu0 %v5761
        %v5823 = vpop.f32.mrf.mxu0
        %v5824 = vadd.f32 0.0, %v5823
        %v5825 = vpop.f32.mrf.mxu0
        %v5826 = vadd.f32 0.0, %v5825
        %5827 = vmatmul.bf16.gmra.mxu0 %v5764
        %v5828 = vpop.f32.mrf.mxu0
        %v5829 = vadd.f32 0.0, %v5828
        %v5830 = vpop.f32.mrf.mxu0
        %v5831 = vadd.f32 0.0, %v5830
        %5832 = vmatmul.bf16.gmra.mxu0 %v5767
        %v5833 = vpop.f32.mrf.mxu0
        %v5834 = vadd.f32 0.0, %v5833
        %v5835 = vpop.f32.mrf.mxu0
        %v5836 = vadd.f32 0.0, %v5835
        %5837 = vmatmul.bf16.gmra.mxu0 %v5770
        %v5838 = vpop.f32.mrf.mxu0
        %v5839 = vadd.f32 0.0, %v5838
        %v5840 = vpop.f32.mrf.mxu0
        %v5841 = vadd.f32 0.0, %v5840
        %5842 = vmatmul.bf16.gmra.mxu0 %v5773
        %v5843 = vpop.f32.mrf.mxu0
        %v5844 = vadd.f32 0.0, %v5843
        %v5845 = vpop.f32.mrf.mxu0
        %v5846 = vadd.f32 0.0, %v5845
        %5847 = vmatmul.bf16.gmra.mxu0 %v5776
        %v5848 = vpop.f32.mrf.mxu0
        %v5849 = vadd.f32 0.0, %v5848
        %v5850 = vpop.f32.mrf.mxu0
        %v5851 = vadd.f32 0.0, %v5850
        %5852 = vmatmul.bf16.gmra.mxu0 %v5779
        %v5853 = vpop.f32.mrf.mxu0
        %v5854 = vadd.f32 0.0, %v5853
        %v5855 = vpop.f32.mrf.mxu0
        %v5856 = vadd.f32 0.0, %v5855
        %5857 = vmatmul.bf16.gmra.mxu0 %v5782
        %v5858 = vpop.f32.mrf.mxu0
        %v5859 = vadd.f32 0.0, %v5858
        %v5860 = vpop.f32.mrf.mxu0
        %v5861 = vadd.f32 0.0, %v5860
        %5862 = vmatmul.bf16.gmra.mxu0 %v5785
        %v5863 = vpop.f32.mrf.mxu0
        %v5864 = vadd.f32 0.0, %v5863
        %v5865 = vpop.f32.mrf.mxu0
        %v5866 = vadd.f32 0.0, %v5865
        %5867 = vmatmul.bf16.gmra.mxu0 %v5788
        %v5868 = vpop.f32.mrf.mxu0
        %v5869 = vadd.f32 0.0, %v5868
        %v5870 = vpop.f32.mrf.mxu0
        %v5871 = vadd.f32 0.0, %v5870
        %5872 = vmatmul.bf16.gmra.mxu0 %v5791
        %v5873 = vpop.f32.mrf.mxu0
        %v5874 = vadd.f32 0.0, %v5873
        %v5875 = vpop.f32.mrf.mxu0
        %v5876 = vadd.f32 0.0, %v5875
        %5877 = vmatmul.bf16.gmra.mxu0 %v5794
        %v5878 = vpop.f32.mrf.mxu0
        %v5879 = vadd.f32 0.0, %v5878
        %v5880 = vpop.f32.mrf.mxu0
        %v5881 = vadd.f32 0.0, %v5880
        %5882 = vmatmul.bf16.gmra.mxu0 %v5797
        %v5883 = vpop.f32.mrf.mxu0
        %v5884 = vadd.f32 0.0, %v5883
        %v5885 = vpop.f32.mrf.mxu0
        %v5886 = vadd.f32 0.0, %v5885
        %5887 = vdwg.mxu0
        %v5921 = vunpack.c.l.b16 %v5598
        %v5922 = vunpack.c.l.b16 %v5599
        %v5923 = vunpack.c.l.b16 %v5600
        %v5924 = vunpack.c.l.b16 %v5601
        %v5925 = vunpack.c.l.b16 %v5602
        %v5926 = vunpack.c.l.b16 %v5603
        %v5927 = vunpack.c.l.b16 %v5604
        %v5928 = vunpack.c.l.b16 %v5605
        %v5929 = vunpack.c.l.b16 %v5606
        %v5930 = vunpack.c.l.b16 %v5607
        %v5931 = vunpack.c.l.b16 %v5608
        %v5932 = vunpack.c.l.b16 %v5609
        %v5933 = vunpack.c.l.b16 %v5610
        %v5934 = vunpack.c.l.b16 %v5611
        %v5935 = vunpack.c.l.b16 %v5612
        %v5936 = vunpack.c.l.b16 %v5613
        %v5937 = vunpack.c.l.b16 %v5614
        %v5938 = vunpack.c.l.b16 %v5615
        %v5939 = vunpack.c.l.b16 %v5616
        %v5940 = vunpack.c.l.b16 %v5617
        %v5941 = vunpack.c.l.b16 %v5618
        %v5942 = vunpack.c.l.b16 %v5619
        %v5943 = vunpack.c.l.b16 %v5620
        %v5944 = vunpack.c.l.b16 %v5621
        %v5945 = vunpack.c.l.b16 %v5622
        %v5946 = vunpack.c.l.b16 %v5623
        %v5947 = vunpack.c.l.b16 %v5624
        %v5948 = vunpack.c.l.b16 %v5625
        %v5949 = vunpack.c.l.b16 %v5626
        %v5950 = vunpack.c.l.b16 %v5627
        %v5951 = vunpack.c.l.b16 %v5628
        %v5952 = vunpack.c.l.b16 %v5629
        %v5953 = vunpack.c.l.b16 %v5630
        %v5954 = vpack.c.b16 %v5922, %v5921
        %v5955 = vpack.c.b16 %v5924, %v5923
        %v5956 = vpack.c.b16 %v5926, %v5925
        %v5957 = vpack.c.b16 %v5928, %v5927
        %v5958 = vpack.c.b16 %v5930, %v5929
        %v5959 = vpack.c.b16 %v5932, %v5931
        %v5960 = vpack.c.b16 %v5934, %v5933
        %v5961 = vpack.c.b16 %v5936, %v5935
        %v5962 = vpack.c.b16 %v5938, %v5937
        %v5963 = vpack.c.b16 %v5940, %v5939
        %v5964 = vpack.c.b16 %v5942, %v5941
        %v5965 = vpack.c.b16 %v5944, %v5943
        %v5966 = vpack.c.b16 %v5946, %v5945
        %v5967 = vpack.c.b16 %v5948, %v5947
        %v5968 = vpack.c.b16 %v5950, %v5949
        %v5969 = vpack.c.b16 %v5952, %v5951
        %v5970 = vpack.c.b16 %v5953, %v5953
        %v5972 = vshrl.u32 %v5954, 16
        %v5974 = vrot.slane %v5972, 3
        %v5975 = vshll.u32 %v5954, 16
        %v5977 = vrot.slane %v5975, 4
        %v5978 = vor.u32 %v5974, %v5977
        %v5980 = vshrl.u32 %v5955, 16
        %v5982 = vrot.slane %v5980, 3
        %v5983 = vshll.u32 %v5955, 16
        %v5985 = vrot.slane %v5983, 4
        %v5986 = vor.u32 %v5982, %v5985
        %v5987 = vsel %vm1921, %v5978, %v5986
        %v5989 = vshrl.u32 %v5956, 16
        %v5991 = vrot.slane %v5989, 3
        %v5992 = vshll.u32 %v5956, 16
        %v5994 = vrot.slane %v5992, 4
        %v5995 = vor.u32 %v5991, %v5994
        %v5996 = vsel %vm1921, %v5986, %v5995
        %v5998 = vshrl.u32 %v5957, 16
        %v6000 = vrot.slane %v5998, 3
        %v6001 = vshll.u32 %v5957, 16
        %v6003 = vrot.slane %v6001, 4
        %v6004 = vor.u32 %v6000, %v6003
        %v6005 = vsel %vm1921, %v5995, %v6004
        %v6007 = vshrl.u32 %v5958, 16
        %v6009 = vrot.slane %v6007, 3
        %v6010 = vshll.u32 %v5958, 16
        %v6012 = vrot.slane %v6010, 4
        %v6013 = vor.u32 %v6009, %v6012
        %v6014 = vsel %vm1921, %v6004, %v6013
        %v6016 = vshrl.u32 %v5959, 16
        %v6018 = vrot.slane %v6016, 3
        %v6019 = vshll.u32 %v5959, 16
        %v6021 = vrot.slane %v6019, 4
        %v6022 = vor.u32 %v6018, %v6021
        %v6023 = vsel %vm1921, %v6013, %v6022
        %v6025 = vshrl.u32 %v5960, 16
        %v6027 = vrot.slane %v6025, 3
        %v6028 = vshll.u32 %v5960, 16
        %v6030 = vrot.slane %v6028, 4
        %v6031 = vor.u32 %v6027, %v6030
        %v6032 = vsel %vm1921, %v6022, %v6031
        %v6034 = vshrl.u32 %v5961, 16
        %v6036 = vrot.slane %v6034, 3
        %v6037 = vshll.u32 %v5961, 16
        %v6039 = vrot.slane %v6037, 4
        %v6040 = vor.u32 %v6036, %v6039
        %v6041 = vsel %vm1921, %v6031, %v6040
        %v6043 = vshrl.u32 %v5962, 16
        %v6045 = vrot.slane %v6043, 3
        %v6046 = vshll.u32 %v5962, 16
        %v6048 = vrot.slane %v6046, 4
        %v6049 = vor.u32 %v6045, %v6048
        %v6050 = vsel %vm1921, %v6040, %v6049
        %v6052 = vshrl.u32 %v5963, 16
        %v6054 = vrot.slane %v6052, 3
        %v6055 = vshll.u32 %v5963, 16
        %v6057 = vrot.slane %v6055, 4
        %v6058 = vor.u32 %v6054, %v6057
        %v6059 = vsel %vm1921, %v6049, %v6058
        %v6061 = vshrl.u32 %v5964, 16
        %v6063 = vrot.slane %v6061, 3
        %v6064 = vshll.u32 %v5964, 16
        %v6066 = vrot.slane %v6064, 4
        %v6067 = vor.u32 %v6063, %v6066
        %v6068 = vsel %vm1921, %v6058, %v6067
        %v6070 = vshrl.u32 %v5965, 16
        %v6072 = vrot.slane %v6070, 3
        %v6073 = vshll.u32 %v5965, 16
        %v6075 = vrot.slane %v6073, 4
        %v6076 = vor.u32 %v6072, %v6075
        %v6077 = vsel %vm1921, %v6067, %v6076
        %v6079 = vshrl.u32 %v5966, 16
        %v6081 = vrot.slane %v6079, 3
        %v6082 = vshll.u32 %v5966, 16
        %v6084 = vrot.slane %v6082, 4
        %v6085 = vor.u32 %v6081, %v6084
        %v6086 = vsel %vm1921, %v6076, %v6085
        %v6088 = vshrl.u32 %v5967, 16
        %v6090 = vrot.slane %v6088, 3
        %v6091 = vshll.u32 %v5967, 16
        %v6093 = vrot.slane %v6091, 4
        %v6094 = vor.u32 %v6090, %v6093
        %v6095 = vsel %vm1921, %v6085, %v6094
        %v6097 = vshrl.u32 %v5968, 16
        %v6099 = vrot.slane %v6097, 3
        %v6100 = vshll.u32 %v5968, 16
        %v6102 = vrot.slane %v6100, 4
        %v6103 = vor.u32 %v6099, %v6102
        %v6104 = vsel %vm1921, %v6094, %v6103
        %v6106 = vshrl.u32 %v5969, 16
        %v6108 = vrot.slane %v6106, 3
        %v6109 = vshll.u32 %v5969, 16
        %v6111 = vrot.slane %v6109, 4
        %v6112 = vor.u32 %v6108, %v6111
        %v6113 = vsel %vm1921, %v6103, %v6112
        %v6115 = vshrl.u32 %v5970, 16
        %v6117 = vrot.slane %v6115, 3
        %v6118 = vshll.u32 %v5970, 16
        %v6120 = vrot.slane %v6118, 4
        %v6121 = vor.u32 %v6117, %v6120
        %v6122 = vsel %vm1921, %v6112, %v6121
        %v6131 = vunpack.c.l.b16 %v5631
        %v6132 = vunpack.c.l.b16 %v5632
        %v6133 = vunpack.c.l.b16 %v5633
        %v6134 = vunpack.c.l.b16 %v5634
        %v6135 = vunpack.c.l.b16 %v5635
        %v6136 = vunpack.c.l.b16 %v5636
        %v6137 = vunpack.c.l.b16 %v5637
        %v6138 = vunpack.c.l.b16 %v5638
        %v6139 = vpack.c.b16 %v6132, %v6131
        %v6140 = vpack.c.b16 %v6134, %v6133
        %v6141 = vpack.c.b16 %v6136, %v6135
        %v6142 = vpack.c.b16 %v6138, %v6137
        %v6148 = vsel %vm1700, %v5987, 0
        %v6151 = vsel %vm1700, %v5996, 0
        %v6154 = vsel %vm1700, %v6005, 0
        %v6157 = vsel %vm1700, %v6014, 0
        %v6160 = vsel %vm1700, %v6023, 0
        %v6163 = vsel %vm1700, %v6032, 0
        %v6166 = vsel %vm1700, %v6041, 0
        %v6169 = vsel %vm1700, %v6050, 0
        %v6172 = vsel %vm1700, %v6059, 0
        %v6175 = vsel %vm1700, %v6068, 0
        %v6178 = vsel %vm1700, %v6077, 0
        %v6181 = vsel %vm1700, %v6086, 0
        %v6184 = vsel %vm1700, %v6095, 0
        %v6187 = vsel %vm1700, %v6104, 0
        %v6190 = vsel %vm1700, %v6113, 0
        %v6193 = vsel %vm1700, %v6122, 0
        %6195 = vmatpush.bf16.msra.mxu0 0
        %6196 = vmatpush.bf16.msra.mxu0 0
        %6197 = vmatpush.bf16.msra.mxu0 0
        %6198 = vmatpush.bf16.msra.mxu0 0
        %6199 = vmatpush.bf16.msra.mxu0 %v6142
        %6200 = vmatpush.bf16.msra.mxu0 %v6141
        %6201 = vmatpush.bf16.msra.mxu0 %v6140
        %6202 = vmatpush.bf16.msra.mxu0 %v6139
        %6203 = vmatmul.bf16.gmra.mxu0 %v6148
        %v6204 = vpop.f32.mrf.mxu0
        %v6205 = vadd.f32 %v5809, %v6204
        %v6206 = vpop.f32.mrf.mxu0
        %v6207 = vadd.f32 %v5811, %v6206
        %6208 = vmatmul.bf16.gmra.mxu0 %v6151
        %v6209 = vpop.f32.mrf.mxu0
        %v6210 = vadd.f32 %v5814, %v6209
        %v6211 = vpop.f32.mrf.mxu0
        %v6212 = vadd.f32 %v5816, %v6211
        %6213 = vmatmul.bf16.gmra.mxu0 %v6154
        %v6214 = vpop.f32.mrf.mxu0
        %v6215 = vadd.f32 %v5819, %v6214
        %v6216 = vpop.f32.mrf.mxu0
        %v6217 = vadd.f32 %v5821, %v6216
        %6218 = vmatmul.bf16.gmra.mxu0 %v6157
        %v6219 = vpop.f32.mrf.mxu0
        %v6220 = vadd.f32 %v5824, %v6219
        %v6221 = vpop.f32.mrf.mxu0
        %v6222 = vadd.f32 %v5826, %v6221
        %6223 = vmatmul.bf16.gmra.mxu0 %v6160
        %v6224 = vpop.f32.mrf.mxu0
        %v6225 = vadd.f32 %v5829, %v6224
        %v6226 = vpop.f32.mrf.mxu0
        %v6227 = vadd.f32 %v5831, %v6226
        %6228 = vmatmul.bf16.gmra.mxu0 %v6163
        %v6229 = vpop.f32.mrf.mxu0
        %v6230 = vadd.f32 %v5834, %v6229
        %v6231 = vpop.f32.mrf.mxu0
        %v6232 = vadd.f32 %v5836, %v6231
        %6233 = vmatmul.bf16.gmra.mxu0 %v6166
        %v6234 = vpop.f32.mrf.mxu0
        %v6235 = vadd.f32 %v5839, %v6234
        %v6236 = vpop.f32.mrf.mxu0
        %v6237 = vadd.f32 %v5841, %v6236
        %6238 = vmatmul.bf16.gmra.mxu0 %v6169
        %v6239 = vpop.f32.mrf.mxu0
        %v6240 = vadd.f32 %v5844, %v6239
        %v6241 = vpop.f32.mrf.mxu0
        %v6242 = vadd.f32 %v5846, %v6241
        %6243 = vmatmul.bf16.gmra.mxu0 %v6172
        %v6244 = vpop.f32.mrf.mxu0
        %v6245 = vadd.f32 %v5849, %v6244
        %v6246 = vpop.f32.mrf.mxu0
        %v6247 = vadd.f32 %v5851, %v6246
        %6248 = vmatmul.bf16.gmra.mxu0 %v6175
        %v6249 = vpop.f32.mrf.mxu0
        %v6250 = vadd.f32 %v5854, %v6249
        %v6251 = vpop.f32.mrf.mxu0
        %v6252 = vadd.f32 %v5856, %v6251
        %6253 = vmatmul.bf16.gmra.mxu0 %v6178
        %v6254 = vpop.f32.mrf.mxu0
        %v6255 = vadd.f32 %v5859, %v6254
        %v6256 = vpop.f32.mrf.mxu0
        %v6257 = vadd.f32 %v5861, %v6256
        %6258 = vmatmul.bf16.gmra.mxu0 %v6181
        %v6259 = vpop.f32.mrf.mxu0
        %v6260 = vadd.f32 %v5864, %v6259
        %v6261 = vpop.f32.mrf.mxu0
        %v6262 = vadd.f32 %v5866, %v6261
        %6263 = vmatmul.bf16.gmra.mxu0 %v6184
        %v6264 = vpop.f32.mrf.mxu0
        %v6265 = vadd.f32 %v5869, %v6264
        %v6266 = vpop.f32.mrf.mxu0
        %v6267 = vadd.f32 %v5871, %v6266
        %6268 = vmatmul.bf16.gmra.mxu0 %v6187
        %v6269 = vpop.f32.mrf.mxu0
        %v6270 = vadd.f32 %v5874, %v6269
        %v6271 = vpop.f32.mrf.mxu0
        %v6272 = vadd.f32 %v5876, %v6271
        %6273 = vmatmul.bf16.gmra.mxu0 %v6190
        %v6274 = vpop.f32.mrf.mxu0
        %v6275 = vadd.f32 %v5879, %v6274
        %v6276 = vpop.f32.mrf.mxu0
        %v6277 = vadd.f32 %v5881, %v6276
        %6278 = vmatmul.bf16.gmra.mxu0 %v6193
        %v6279 = vpop.f32.mrf.mxu0
        %v6280 = vadd.f32 %v5884, %v6279
        %v6281 = vpop.f32.mrf.mxu0
        %v6282 = vadd.f32 %v5886, %v6281
        %6283 = vdwg.mxu0
        %v6284 = vsel %vm2595, %v5561, 0
        %v6285 = vsel %vm2602, %v5562, 0
        %v6286 = vsel %vm2609, %v5563, 0
        %v6287 = vsel %vm2616, %v5564, 0
        %v6288 = vsel %vm2623, %v5565, 0
        %v6289 = vsel %vm2630, %v5566, 0
        %v6290 = vsel %vm2637, %v5567, 0
        %v6291 = vsel %vm2644, %v5568, 0
        %v6292 = vsel %vm2651, %v5569, 0
        %v6293 = vsel %vm2658, %v5570, 0
        %v6294 = vsel %vm2665, %v5571, 0
        %v6295 = vsel %vm2672, %v5572, 0
        %v6296 = vsel %vm2679, %v5573, 0
        %v6297 = vsel %vm2686, %v5574, 0
        %v6298 = vsel %vm2693, %v5575, 0
        %v6299 = vsel %vm2700, %v5576, 0
        %v6300 = vsel %vm2707, %v5577, 0
        %v6301 = vsel %vm2714, %v5578, 0
        %v6302 = vsel %vm2721, %v5579, 0
        %v6303 = vsel %vm2728, %v5580, 0
        %v6304 = vsel %vm2735, %v5581, 0
        %v6305 = vsel %vm2742, %v5582, 0
        %v6306 = vsel %vm2749, %v5583, 0
        %v6307 = vsel %vm2756, %v5584, 0
        %v6308 = vsel %vm2763, %v5585, 0
        %v6309 = vsel %vm2770, %v5586, 0
        %v6310 = vsel %vm2777, %v5587, 0
        %v6311 = vsel %vm2784, %v5588, 0
        %v6312 = vsel %vm2791, %v5589, 0
        %v6313 = vsel %vm2798, %v5590, 0
        %v6314 = vsel %vm2805, %v5591, 0
        %v6315 = vsel %vm2812, %v5592, 0
        %v6316 = vsel %vm2819, %v5593, 0
        %v6317 = vld [vmem:[%s3 + $0x40] sm:$0xf]
        %v6318 = vld [vmem:[%s3 + $0x44] sm:$0xf]
        %v6319 = vld [vmem:[%s3 + $0x48] sm:$0xf]
        %v6320 = vld [vmem:[%s3 + $0x4c] sm:$0xf]
        %v6321 = vld [vmem:[%s3 + $0x50] sm:$0xf]
        %v6322 = vld [vmem:[%s3 + $0x54] sm:$0xf]
        %v6323 = vld [vmem:[%s3 + $0x58] sm:$0xf]
        %v6324 = vld [vmem:[%s3 + $0x5c] sm:$0xf]
        %v6358 = vunpack.c.l.b16 %v6284
        %v6359 = vunpack.c.l.b16 %v6285
        %v6360 = vunpack.c.l.b16 %v6286
        %v6361 = vunpack.c.l.b16 %v6287
        %v6362 = vunpack.c.l.b16 %v6288
        %v6363 = vunpack.c.l.b16 %v6289
        %v6364 = vunpack.c.l.b16 %v6290
        %v6365 = vunpack.c.l.b16 %v6291
        %v6366 = vunpack.c.l.b16 %v6292
        %v6367 = vunpack.c.l.b16 %v6293
        %v6368 = vunpack.c.l.b16 %v6294
        %v6369 = vunpack.c.l.b16 %v6295
        %v6370 = vunpack.c.l.b16 %v6296
        %v6371 = vunpack.c.l.b16 %v6297
        %v6372 = vunpack.c.l.b16 %v6298
        %v6373 = vunpack.c.l.b16 %v6299
        %v6374 = vunpack.c.l.b16 %v6300
        %v6375 = vunpack.c.l.b16 %v6301
        %v6376 = vunpack.c.l.b16 %v6302
        %v6377 = vunpack.c.l.b16 %v6303
        %v6378 = vunpack.c.l.b16 %v6304
        %v6379 = vunpack.c.l.b16 %v6305
        %v6380 = vunpack.c.l.b16 %v6306
        %v6381 = vunpack.c.l.b16 %v6307
        %v6382 = vunpack.c.l.b16 %v6308
        %v6383 = vunpack.c.l.b16 %v6309
        %v6384 = vunpack.c.l.b16 %v6310
        %v6385 = vunpack.c.l.b16 %v6311
        %v6386 = vunpack.c.l.b16 %v6312
        %v6387 = vunpack.c.l.b16 %v6313
        %v6388 = vunpack.c.l.b16 %v6314
        %v6389 = vunpack.c.l.b16 %v6315
        %v6390 = vunpack.c.l.b16 %v6316
        %v6391 = vpack.c.b16 %v6359, %v6358
        %v6392 = vpack.c.b16 %v6361, %v6360
        %v6393 = vpack.c.b16 %v6363, %v6362
        %v6394 = vpack.c.b16 %v6365, %v6364
        %v6395 = vpack.c.b16 %v6367, %v6366
        %v6396 = vpack.c.b16 %v6369, %v6368
        %v6397 = vpack.c.b16 %v6371, %v6370
        %v6398 = vpack.c.b16 %v6373, %v6372
        %v6399 = vpack.c.b16 %v6375, %v6374
        %v6400 = vpack.c.b16 %v6377, %v6376
        %v6401 = vpack.c.b16 %v6379, %v6378
        %v6402 = vpack.c.b16 %v6381, %v6380
        %v6403 = vpack.c.b16 %v6383, %v6382
        %v6404 = vpack.c.b16 %v6385, %v6384
        %v6405 = vpack.c.b16 %v6387, %v6386
        %v6406 = vpack.c.b16 %v6389, %v6388
        %v6407 = vpack.c.b16 %v6390, %v6390
        %v6409 = vshrl.u32 %v6391, 16
        %v6411 = vshll.u32 %v6391, 16
        %v6413 = vrot.slane %v6411, 1
        %v6414 = vor.u32 %v6409, %v6413
        %v6416 = vshll.u32 %v6392, 16
        %v6418 = vrot.slane %v6416, 1
        %v6419 = vsel %vm2944, %v6414, %v6418
        %v6420 = vshrl.u32 %v6392, 16
        %v6422 = vor.u32 %v6420, %v6418
        %v6424 = vshll.u32 %v6393, 16
        %v6426 = vrot.slane %v6424, 1
        %v6427 = vsel %vm2944, %v6422, %v6426
        %v6428 = vshrl.u32 %v6393, 16
        %v6430 = vor.u32 %v6428, %v6426
        %v6432 = vshll.u32 %v6394, 16
        %v6434 = vrot.slane %v6432, 1
        %v6435 = vsel %vm2944, %v6430, %v6434
        %v6436 = vshrl.u32 %v6394, 16
        %v6438 = vor.u32 %v6436, %v6434
        %v6440 = vshll.u32 %v6395, 16
        %v6442 = vrot.slane %v6440, 1
        %v6443 = vsel %vm2944, %v6438, %v6442
        %v6444 = vshrl.u32 %v6395, 16
        %v6446 = vor.u32 %v6444, %v6442
        %v6448 = vshll.u32 %v6396, 16
        %v6450 = vrot.slane %v6448, 1
        %v6451 = vsel %vm2944, %v6446, %v6450
        %v6452 = vshrl.u32 %v6396, 16
        %v6454 = vor.u32 %v6452, %v6450
        %v6456 = vshll.u32 %v6397, 16
        %v6458 = vrot.slane %v6456, 1
        %v6459 = vsel %vm2944, %v6454, %v6458
        %v6460 = vshrl.u32 %v6397, 16
        %v6462 = vor.u32 %v6460, %v6458
        %v6464 = vshll.u32 %v6398, 16
        %v6466 = vrot.slane %v6464, 1
        %v6467 = vsel %vm2944, %v6462, %v6466
        %v6468 = vshrl.u32 %v6398, 16
        %v6470 = vor.u32 %v6468, %v6466
        %v6472 = vshll.u32 %v6399, 16
        %v6474 = vrot.slane %v6472, 1
        %v6475 = vsel %vm2944, %v6470, %v6474
        %v6476 = vshrl.u32 %v6399, 16
        %v6478 = vor.u32 %v6476, %v6474
        %v6480 = vshll.u32 %v6400, 16
        %v6482 = vrot.slane %v6480, 1
        %v6483 = vsel %vm2944, %v6478, %v6482
        %v6484 = vshrl.u32 %v6400, 16
        %v6486 = vor.u32 %v6484, %v6482
        %v6488 = vshll.u32 %v6401, 16
        %v6490 = vrot.slane %v6488, 1
        %v6491 = vsel %vm2944, %v6486, %v6490
        %v6492 = vshrl.u32 %v6401, 16
        %v6494 = vor.u32 %v6492, %v6490
        %v6496 = vshll.u32 %v6402, 16
        %v6498 = vrot.slane %v6496, 1
        %v6499 = vsel %vm2944, %v6494, %v6498
        %v6500 = vshrl.u32 %v6402, 16
        %v6502 = vor.u32 %v6500, %v6498
        %v6504 = vshll.u32 %v6403, 16
        %v6506 = vrot.slane %v6504, 1
        %v6507 = vsel %vm2944, %v6502, %v6506
        %v6508 = vshrl.u32 %v6403, 16
        %v6510 = vor.u32 %v6508, %v6506
        %v6512 = vshll.u32 %v6404, 16
        %v6514 = vrot.slane %v6512, 1
        %v6515 = vsel %vm2944, %v6510, %v6514
        %v6516 = vshrl.u32 %v6404, 16
        %v6518 = vor.u32 %v6516, %v6514
        %v6520 = vshll.u32 %v6405, 16
        %v6522 = vrot.slane %v6520, 1
        %v6523 = vsel %vm2944, %v6518, %v6522
        %v6524 = vshrl.u32 %v6405, 16
        %v6526 = vor.u32 %v6524, %v6522
        %v6528 = vshll.u32 %v6406, 16
        %v6530 = vrot.slane %v6528, 1
        %v6531 = vsel %vm2944, %v6526, %v6530
        %v6532 = vshrl.u32 %v6406, 16
        %v6534 = vor.u32 %v6532, %v6530
        %v6536 = vshll.u32 %v6407, 16
        %v6538 = vrot.slane %v6536, 1
        %v6539 = vsel %vm2944, %v6534, %v6538
        %v6548 = vunpack.c.l.b16 %v6317
        %v6549 = vunpack.c.l.b16 %v6318
        %v6550 = vunpack.c.l.b16 %v6319
        %v6551 = vunpack.c.l.b16 %v6320
        %v6552 = vunpack.c.l.b16 %v6321
        %v6553 = vunpack.c.l.b16 %v6322
        %v6554 = vunpack.c.l.b16 %v6323
        %v6555 = vunpack.c.l.b16 %v6324
        %v6556 = vpack.c.b16 %v6549, %v6548
        %v6557 = vpack.c.b16 %v6551, %v6550
        %v6558 = vpack.c.b16 %v6553, %v6552
        %v6559 = vpack.c.b16 %v6555, %v6554
        %v6565 = vsel %vm1700, %v6419, 0
        %v6568 = vsel %vm1700, %v6427, 0
        %v6571 = vsel %vm1700, %v6435, 0
        %v6574 = vsel %vm1700, %v6443, 0
        %v6577 = vsel %vm1700, %v6451, 0
        %v6580 = vsel %vm1700, %v6459, 0
        %v6583 = vsel %vm1700, %v6467, 0
        %v6586 = vsel %vm1700, %v6475, 0
        %v6589 = vsel %vm1700, %v6483, 0
        %v6592 = vsel %vm1700, %v6491, 0
        %v6595 = vsel %vm1700, %v6499, 0
        %v6598 = vsel %vm1700, %v6507, 0
        %v6601 = vsel %vm1700, %v6515, 0
        %v6604 = vsel %vm1700, %v6523, 0
        %v6607 = vsel %vm1700, %v6531, 0
        %v6610 = vsel %vm1700, %v6539, 0
        %6612 = vmatpush.bf16.msra.mxu0 0
        %6613 = vmatpush.bf16.msra.mxu0 0
        %6614 = vmatpush.bf16.msra.mxu0 0
        %6615 = vmatpush.bf16.msra.mxu0 0
        %6616 = vmatpush.bf16.msra.mxu0 %v6559
        %6617 = vmatpush.bf16.msra.mxu0 %v6558
        %6618 = vmatpush.bf16.msra.mxu0 %v6557
        %6619 = vmatpush.bf16.msra.mxu0 %v6556
        %6620 = vmatmul.bf16.gmra.mxu0 %v6565
        %v6621 = vpop.f32.mrf.mxu0
        %v6622 = vadd.f32 0.0, %v6621
        %v6623 = vpop.f32.mrf.mxu0
        %v6624 = vadd.f32 0.0, %v6623
        %6625 = vmatmul.bf16.gmra.mxu0 %v6568
        %v6626 = vpop.f32.mrf.mxu0
        %v6627 = vadd.f32 0.0, %v6626
        %v6628 = vpop.f32.mrf.mxu0
        %v6629 = vadd.f32 0.0, %v6628
        %6630 = vmatmul.bf16.gmra.mxu0 %v6571
        %v6631 = vpop.f32.mrf.mxu0
        %v6632 = vadd.f32 0.0, %v6631
        %v6633 = vpop.f32.mrf.mxu0
        %v6634 = vadd.f32 0.0, %v6633
        %6635 = vmatmul.bf16.gmra.mxu0 %v6574
        %v6636 = vpop.f32.mrf.mxu0
        %v6637 = vadd.f32 0.0, %v6636
        %v6638 = vpop.f32.mrf.mxu0
        %v6639 = vadd.f32 0.0, %v6638
        %6640 = vmatmul.bf16.gmra.mxu0 %v6577
        %v6641 = vpop.f32.mrf.mxu0
        %v6642 = vadd.f32 0.0, %v6641
        %v6643 = vpop.f32.mrf.mxu0
        %v6644 = vadd.f32 0.0, %v6643
        %6645 = vmatmul.bf16.gmra.mxu0 %v6580
        %v6646 = vpop.f32.mrf.mxu0
        %v6647 = vadd.f32 0.0, %v6646
        %v6648 = vpop.f32.mrf.mxu0
        %v6649 = vadd.f32 0.0, %v6648
        %6650 = vmatmul.bf16.gmra.mxu0 %v6583
        %v6651 = vpop.f32.mrf.mxu0
        %v6652 = vadd.f32 0.0, %v6651
        %v6653 = vpop.f32.mrf.mxu0
        %v6654 = vadd.f32 0.0, %v6653
        %6655 = vmatmul.bf16.gmra.mxu0 %v6586
        %v6656 = vpop.f32.mrf.mxu0
        %v6657 = vadd.f32 0.0, %v6656
        %v6658 = vpop.f32.mrf.mxu0
        %v6659 = vadd.f32 0.0, %v6658
        %6660 = vmatmul.bf16.gmra.mxu0 %v6589
        %v6661 = vpop.f32.mrf.mxu0
        %v6662 = vadd.f32 0.0, %v6661
        %v6663 = vpop.f32.mrf.mxu0
        %v6664 = vadd.f32 0.0, %v6663
        %6665 = vmatmul.bf16.gmra.mxu0 %v6592
        %v6666 = vpop.f32.mrf.mxu0
        %v6667 = vadd.f32 0.0, %v6666
        %v6668 = vpop.f32.mrf.mxu0
        %v6669 = vadd.f32 0.0, %v6668
        %6670 = vmatmul.bf16.gmra.mxu0 %v6595
        %v6671 = vpop.f32.mrf.mxu0
        %v6672 = vadd.f32 0.0, %v6671
        %v6673 = vpop.f32.mrf.mxu0
        %v6674 = vadd.f32 0.0, %v6673
        %6675 = vmatmul.bf16.gmra.mxu0 %v6598
        %v6676 = vpop.f32.mrf.mxu0
        %v6677 = vadd.f32 0.0, %v6676
        %v6678 = vpop.f32.mrf.mxu0
        %v6679 = vadd.f32 0.0, %v6678
        %6680 = vmatmul.bf16.gmra.mxu0 %v6601
        %v6681 = vpop.f32.mrf.mxu0
        %v6682 = vadd.f32 0.0, %v6681
        %v6683 = vpop.f32.mrf.mxu0
        %v6684 = vadd.f32 0.0, %v6683
        %6685 = vmatmul.bf16.gmra.mxu0 %v6604
        %v6686 = vpop.f32.mrf.mxu0
        %v6687 = vadd.f32 0.0, %v6686
        %v6688 = vpop.f32.mrf.mxu0
        %v6689 = vadd.f32 0.0, %v6688
        %6690 = vmatmul.bf16.gmra.mxu0 %v6607
        %v6691 = vpop.f32.mrf.mxu0
        %v6692 = vadd.f32 0.0, %v6691
        %v6693 = vpop.f32.mrf.mxu0
        %v6694 = vadd.f32 0.0, %v6693
        %6695 = vmatmul.bf16.gmra.mxu0 %v6610
        %v6696 = vpop.f32.mrf.mxu0
        %v6697 = vadd.f32 0.0, %v6696
        %v6698 = vpop.f32.mrf.mxu0
        %v6699 = vadd.f32 0.0, %v6698
        %6700 = vdwg.mxu0
        %v6701 = vadd.f32 %v6205, %v6622
        %v6702 = vadd.f32 %v6207, %v6624
        %v6703 = vadd.f32 %v6210, %v6627
        %v6704 = vadd.f32 %v6212, %v6629
        %v6705 = vadd.f32 %v6215, %v6632
        %v6706 = vadd.f32 %v6217, %v6634
        %v6707 = vadd.f32 %v6220, %v6637
        %v6708 = vadd.f32 %v6222, %v6639
        %v6709 = vadd.f32 %v6225, %v6642
        %v6710 = vadd.f32 %v6227, %v6644
        %v6711 = vadd.f32 %v6230, %v6647
        %v6712 = vadd.f32 %v6232, %v6649
        %v6713 = vadd.f32 %v6235, %v6652
        %v6714 = vadd.f32 %v6237, %v6654
        %v6715 = vadd.f32 %v6240, %v6657
        %v6716 = vadd.f32 %v6242, %v6659
        %v6717 = vadd.f32 %v6245, %v6662
        %v6718 = vadd.f32 %v6247, %v6664
        %v6719 = vadd.f32 %v6250, %v6667
        %v6720 = vadd.f32 %v6252, %v6669
        %v6721 = vadd.f32 %v6255, %v6672
        %v6722 = vadd.f32 %v6257, %v6674
        %v6723 = vadd.f32 %v6260, %v6677
        %v6724 = vadd.f32 %v6262, %v6679
        %v6725 = vadd.f32 %v6265, %v6682
        %v6726 = vadd.f32 %v6267, %v6684
        %v6727 = vadd.f32 %v6270, %v6687
        %v6728 = vadd.f32 %v6272, %v6689
        %v6729 = vadd.f32 %v6275, %v6692
        %v6730 = vadd.f32 %v6277, %v6694
        %v6731 = vadd.f32 %v6280, %v6697
        %v6732 = vadd.f32 %v6282, %v6699
        %v6733 = vsel %vm1322, %v5562, 0
        %v6734 = vsel %vm1329, %v5563, 0
        %v6735 = vsel %vm1336, %v5564, 0
        %v6736 = vsel %vm1343, %v5565, 0
        %v6737 = vsel %vm1350, %v5566, 0
        %v6738 = vsel %vm1357, %v5567, 0
        %v6739 = vsel %vm1364, %v5568, 0
        %v6740 = vsel %vm1371, %v5569, 0
        %v6741 = vsel %vm1378, %v5570, 0
        %v6742 = vsel %vm1385, %v5571, 0
        %v6743 = vsel %vm1392, %v5572, 0
        %v6744 = vsel %vm1399, %v5573, 0
        %v6745 = vsel %vm1406, %v5574, 0
        %v6746 = vsel %vm1413, %v5575, 0
        %v6747 = vsel %vm1420, %v5576, 0
        %v6748 = vsel %vm1427, %v5577, 0
        %v6749 = vsel %vm1434, %v5578, 0
        %v6750 = vsel %vm1441, %v5579, 0
        %v6751 = vsel %vm1448, %v5580, 0
        %v6752 = vsel %vm1455, %v5581, 0
        %v6753 = vsel %vm1462, %v5582, 0
        %v6754 = vsel %vm1469, %v5583, 0
        %v6755 = vsel %vm1476, %v5584, 0
        %v6756 = vsel %vm1483, %v5585, 0
        %v6757 = vsel %vm1490, %v5586, 0
        %v6758 = vsel %vm1497, %v5587, 0
        %v6759 = vsel %vm1504, %v5588, 0
        %v6760 = vsel %vm1511, %v5589, 0
        %v6761 = vsel %vm1518, %v5590, 0
        %v6762 = vsel %vm1525, %v5591, 0
        %v6763 = vsel %vm1532, %v5592, 0
        %v6764 = vsel %vm1539, %v5593, 0
        %v6765 = vsel %vm1546, %v5594, 0
        %v6766 = vld [vmem:[%s3 + $0x60] sm:$0xf]
        %v6767 = vld [vmem:[%s3 + $0x64] sm:$0xf]
        %v6768 = vld [vmem:[%s3 + $0x68] sm:$0xf]
        %v6769 = vld [vmem:[%s3 + $0x6c] sm:$0xf]
        %v6770 = vld [vmem:[%s3 + $0x70] sm:$0xf]
        %v6771 = vld [vmem:[%s3 + $0x74] sm:$0xf]
        %v6772 = vld [vmem:[%s3 + $0x78] sm:$0xf]
        %v6773 = vld [vmem:[%s3 + $0x7c] sm:$0xf]
        %v6807 = vunpack.c.l.b16 %v6733
        %v6808 = vunpack.c.l.b16 %v6734
        %v6809 = vunpack.c.l.b16 %v6735
        %v6810 = vunpack.c.l.b16 %v6736
        %v6811 = vunpack.c.l.b16 %v6737
        %v6812 = vunpack.c.l.b16 %v6738
        %v6813 = vunpack.c.l.b16 %v6739
        %v6814 = vunpack.c.l.b16 %v6740
        %v6815 = vunpack.c.l.b16 %v6741
        %v6816 = vunpack.c.l.b16 %v6742
        %v6817 = vunpack.c.l.b16 %v6743
        %v6818 = vunpack.c.l.b16 %v6744
        %v6819 = vunpack.c.l.b16 %v6745
        %v6820 = vunpack.c.l.b16 %v6746
        %v6821 = vunpack.c.l.b16 %v6747
        %v6822 = vunpack.c.l.b16 %v6748
        %v6823 = vunpack.c.l.b16 %v6749
        %v6824 = vunpack.c.l.b16 %v6750
        %v6825 = vunpack.c.l.b16 %v6751
        %v6826 = vunpack.c.l.b16 %v6752
        %v6827 = vunpack.c.l.b16 %v6753
        %v6828 = vunpack.c.l.b16 %v6754
        %v6829 = vunpack.c.l.b16 %v6755
        %v6830 = vunpack.c.l.b16 %v6756
        %v6831 = vunpack.c.l.b16 %v6757
        %v6832 = vunpack.c.l.b16 %v6758
        %v6833 = vunpack.c.l.b16 %v6759
        %v6834 = vunpack.c.l.b16 %v6760
        %v6835 = vunpack.c.l.b16 %v6761
        %v6836 = vunpack.c.l.b16 %v6762
        %v6837 = vunpack.c.l.b16 %v6763
        %v6838 = vunpack.c.l.b16 %v6764
        %v6839 = vunpack.c.l.b16 %v6765
        %v6840 = vpack.c.b16 %v6808, %v6807
        %v6841 = vpack.c.b16 %v6810, %v6809
        %v6842 = vpack.c.b16 %v6812, %v6811
        %v6843 = vpack.c.b16 %v6814, %v6813
        %v6844 = vpack.c.b16 %v6816, %v6815
        %v6845 = vpack.c.b16 %v6818, %v6817
        %v6846 = vpack.c.b16 %v6820, %v6819
        %v6847 = vpack.c.b16 %v6822, %v6821
        %v6848 = vpack.c.b16 %v6824, %v6823
        %v6849 = vpack.c.b16 %v6826, %v6825
        %v6850 = vpack.c.b16 %v6828, %v6827
        %v6851 = vpack.c.b16 %v6830, %v6829
        %v6852 = vpack.c.b16 %v6832, %v6831
        %v6853 = vpack.c.b16 %v6834, %v6833
        %v6854 = vpack.c.b16 %v6836, %v6835
        %v6855 = vpack.c.b16 %v6838, %v6837
        %v6856 = vpack.c.b16 %v6839, %v6839
        %v6858 = vshrl.u32 %v6840, 16
        %v6860 = vrot.slane %v6858, 3
        %v6861 = vshll.u32 %v6840, 16
        %v6863 = vrot.slane %v6861, 4
        %v6864 = vor.u32 %v6860, %v6863
        %v6866 = vshrl.u32 %v6841, 16
        %v6868 = vrot.slane %v6866, 3
        %v6869 = vshll.u32 %v6841, 16
        %v6871 = vrot.slane %v6869, 4
        %v6872 = vor.u32 %v6868, %v6871
        %v6873 = vsel %vm1921, %v6864, %v6872
        %v6875 = vshrl.u32 %v6842, 16
        %v6877 = vrot.slane %v6875, 3
        %v6878 = vshll.u32 %v6842, 16
        %v6880 = vrot.slane %v6878, 4
        %v6881 = vor.u32 %v6877, %v6880
        %v6882 = vsel %vm1921, %v6872, %v6881
        %v6884 = vshrl.u32 %v6843, 16
        %v6886 = vrot.slane %v6884, 3
        %v6887 = vshll.u32 %v6843, 16
        %v6889 = vrot.slane %v6887, 4
        %v6890 = vor.u32 %v6886, %v6889
        %v6891 = vsel %vm1921, %v6881, %v6890
        %v6893 = vshrl.u32 %v6844, 16
        %v6895 = vrot.slane %v6893, 3
        %v6896 = vshll.u32 %v6844, 16
        %v6898 = vrot.slane %v6896, 4
        %v6899 = vor.u32 %v6895, %v6898
        %v6900 = vsel %vm1921, %v6890, %v6899
        %v6902 = vshrl.u32 %v6845, 16
        %v6904 = vrot.slane %v6902, 3
        %v6905 = vshll.u32 %v6845, 16
        %v6907 = vrot.slane %v6905, 4
        %v6908 = vor.u32 %v6904, %v6907
        %v6909 = vsel %vm1921, %v6899, %v6908
        %v6911 = vshrl.u32 %v6846, 16
        %v6913 = vrot.slane %v6911, 3
        %v6914 = vshll.u32 %v6846, 16
        %v6916 = vrot.slane %v6914, 4
        %v6917 = vor.u32 %v6913, %v6916
        %v6918 = vsel %vm1921, %v6908, %v6917
        %v6920 = vshrl.u32 %v6847, 16
        %v6922 = vrot.slane %v6920, 3
        %v6923 = vshll.u32 %v6847, 16
        %v6925 = vrot.slane %v6923, 4
        %v6926 = vor.u32 %v6922, %v6925
        %v6927 = vsel %vm1921, %v6917, %v6926
        %v6929 = vshrl.u32 %v6848, 16
        %v6931 = vrot.slane %v6929, 3
        %v6932 = vshll.u32 %v6848, 16
        %v6934 = vrot.slane %v6932, 4
        %v6935 = vor.u32 %v6931, %v6934
        %v6936 = vsel %vm1921, %v6926, %v6935
        %v6938 = vshrl.u32 %v6849, 16
        %v6940 = vrot.slane %v6938, 3
        %v6941 = vshll.u32 %v6849, 16
        %v6943 = vrot.slane %v6941, 4
        %v6944 = vor.u32 %v6940, %v6943
        %v6945 = vsel %vm1921, %v6935, %v6944
        %v6947 = vshrl.u32 %v6850, 16
        %v6949 = vrot.slane %v6947, 3
        %v6950 = vshll.u32 %v6850, 16
        %v6952 = vrot.slane %v6950, 4
        %v6953 = vor.u32 %v6949, %v6952
        %v6954 = vsel %vm1921, %v6944, %v6953
        %v6956 = vshrl.u32 %v6851, 16
        %v6958 = vrot.slane %v6956, 3
        %v6959 = vshll.u32 %v6851, 16
        %v6961 = vrot.slane %v6959, 4
        %v6962 = vor.u32 %v6958, %v6961
        %v6963 = vsel %vm1921, %v6953, %v6962
        %v6965 = vshrl.u32 %v6852, 16
        %v6967 = vrot.slane %v6965, 3
        %v6968 = vshll.u32 %v6852, 16
        %v6970 = vrot.slane %v6968, 4
        %v6971 = vor.u32 %v6967, %v6970
        %v6972 = vsel %vm1921, %v6962, %v6971
        %v6974 = vshrl.u32 %v6853, 16
        %v6976 = vrot.slane %v6974, 3
        %v6977 = vshll.u32 %v6853, 16
        %v6979 = vrot.slane %v6977, 4
        %v6980 = vor.u32 %v6976, %v6979
        %v6981 = vsel %vm1921, %v6971, %v6980
        %v6983 = vshrl.u32 %v6854, 16
        %v6985 = vrot.slane %v6983, 3
        %v6986 = vshll.u32 %v6854, 16
        %v6988 = vrot.slane %v6986, 4
        %v6989 = vor.u32 %v6985, %v6988
        %v6990 = vsel %vm1921, %v6980, %v6989
        %v6992 = vshrl.u32 %v6855, 16
        %v6994 = vrot.slane %v6992, 3
        %v6995 = vshll.u32 %v6855, 16
        %v6997 = vrot.slane %v6995, 4
        %v6998 = vor.u32 %v6994, %v6997
        %v6999 = vsel %vm1921, %v6989, %v6998
        %v7001 = vshrl.u32 %v6856, 16
        %v7003 = vrot.slane %v7001, 3
        %v7004 = vshll.u32 %v6856, 16
        %v7006 = vrot.slane %v7004, 4
        %v7007 = vor.u32 %v7003, %v7006
        %v7008 = vsel %vm1921, %v6998, %v7007
        %v7017 = vunpack.c.l.b16 %v6766
        %v7018 = vunpack.c.l.b16 %v6767
        %v7019 = vunpack.c.l.b16 %v6768
        %v7020 = vunpack.c.l.b16 %v6769
        %v7021 = vunpack.c.l.b16 %v6770
        %v7022 = vunpack.c.l.b16 %v6771
        %v7023 = vunpack.c.l.b16 %v6772
        %v7024 = vunpack.c.l.b16 %v6773
        %v7025 = vpack.c.b16 %v7018, %v7017
        %v7026 = vpack.c.b16 %v7020, %v7019
        %v7027 = vpack.c.b16 %v7022, %v7021
        %v7028 = vpack.c.b16 %v7024, %v7023
        %v7034 = vsel %vm1700, %v6873, 0
        %v7037 = vsel %vm1700, %v6882, 0
        %v7040 = vsel %vm1700, %v6891, 0
        %v7043 = vsel %vm1700, %v6900, 0
        %v7046 = vsel %vm1700, %v6909, 0
        %v7049 = vsel %vm1700, %v6918, 0
        %v7052 = vsel %vm1700, %v6927, 0
        %v7055 = vsel %vm1700, %v6936, 0
        %v7058 = vsel %vm1700, %v6945, 0
        %v7061 = vsel %vm1700, %v6954, 0
        %v7064 = vsel %vm1700, %v6963, 0
        %v7067 = vsel %vm1700, %v6972, 0
        %v7070 = vsel %vm1700, %v6981, 0
        %v7073 = vsel %vm1700, %v6990, 0
        %v7076 = vsel %vm1700, %v6999, 0
        %v7079 = vsel %vm1700, %v7008, 0
        %7081 = vmatpush.bf16.msra.mxu0 0
        %7082 = vmatpush.bf16.msra.mxu0 0
        %7083 = vmatpush.bf16.msra.mxu0 0
        %7084 = vmatpush.bf16.msra.mxu0 0
        %7085 = vmatpush.bf16.msra.mxu0 %v7028
        %7086 = vmatpush.bf16.msra.mxu0 %v7027
        %7087 = vmatpush.bf16.msra.mxu0 %v7026
        %7088 = vmatpush.bf16.msra.mxu0 %v7025
        %7089 = vmatmul.bf16.gmra.mxu0 %v7034
        %v7090 = vpop.f32.mrf.mxu0
        %v7091 = vadd.f32 0.0, %v7090
        %v7092 = vpop.f32.mrf.mxu0
        %v7093 = vadd.f32 0.0, %v7092
        %7094 = vmatmul.bf16.gmra.mxu0 %v7037
        %v7095 = vpop.f32.mrf.mxu0
        %v7096 = vadd.f32 0.0, %v7095
        %v7097 = vpop.f32.mrf.mxu0
        %v7098 = vadd.f32 0.0, %v7097
        %7099 = vmatmul.bf16.gmra.mxu0 %v7040
        %v7100 = vpop.f32.mrf.mxu0
        %v7101 = vadd.f32 0.0, %v7100
        %v7102 = vpop.f32.mrf.mxu0
        %v7103 = vadd.f32 0.0, %v7102
        %7104 = vmatmul.bf16.gmra.mxu0 %v7043
        %v7105 = vpop.f32.mrf.mxu0
        %v7106 = vadd.f32 0.0, %v7105
        %v7107 = vpop.f32.mrf.mxu0
        %v7108 = vadd.f32 0.0, %v7107
        %7109 = vmatmul.bf16.gmra.mxu0 %v7046
        %v7110 = vpop.f32.mrf.mxu0
        %v7111 = vadd.f32 0.0, %v7110
        %v7112 = vpop.f32.mrf.mxu0
        %v7113 = vadd.f32 0.0, %v7112
        %7114 = vmatmul.bf16.gmra.mxu0 %v7049
        %v7115 = vpop.f32.mrf.mxu0
        %v7116 = vadd.f32 0.0, %v7115
        %v7117 = vpop.f32.mrf.mxu0
        %v7118 = vadd.f32 0.0, %v7117
        %7119 = vmatmul.bf16.gmra.mxu0 %v7052
        %v7120 = vpop.f32.mrf.mxu0
        %v7121 = vadd.f32 0.0, %v7120
        %v7122 = vpop.f32.mrf.mxu0
        %v7123 = vadd.f32 0.0, %v7122
        %7124 = vmatmul.bf16.gmra.mxu0 %v7055
        %v7125 = vpop.f32.mrf.mxu0
        %v7126 = vadd.f32 0.0, %v7125
        %v7127 = vpop.f32.mrf.mxu0
        %v7128 = vadd.f32 0.0, %v7127
        %7129 = vmatmul.bf16.gmra.mxu0 %v7058
        %v7130 = vpop.f32.mrf.mxu0
        %v7131 = vadd.f32 0.0, %v7130
        %v7132 = vpop.f32.mrf.mxu0
        %v7133 = vadd.f32 0.0, %v7132
        %7134 = vmatmul.bf16.gmra.mxu0 %v7061
        %v7135 = vpop.f32.mrf.mxu0
        %v7136 = vadd.f32 0.0, %v7135
        %v7137 = vpop.f32.mrf.mxu0
        %v7138 = vadd.f32 0.0, %v7137
        %7139 = vmatmul.bf16.gmra.mxu0 %v7064
        %v7140 = vpop.f32.mrf.mxu0
        %v7141 = vadd.f32 0.0, %v7140
        %v7142 = vpop.f32.mrf.mxu0
        %v7143 = vadd.f32 0.0, %v7142
        %7144 = vmatmul.bf16.gmra.mxu0 %v7067
        %v7145 = vpop.f32.mrf.mxu0
        %v7146 = vadd.f32 0.0, %v7145
        %v7147 = vpop.f32.mrf.mxu0
        %v7148 = vadd.f32 0.0, %v7147
        %7149 = vmatmul.bf16.gmra.mxu0 %v7070
        %v7150 = vpop.f32.mrf.mxu0
        %v7151 = vadd.f32 0.0, %v7150
        %v7152 = vpop.f32.mrf.mxu0
        %v7153 = vadd.f32 0.0, %v7152
        %7154 = vmatmul.bf16.gmra.mxu0 %v7073
        %v7155 = vpop.f32.mrf.mxu0
        %v7156 = vadd.f32 0.0, %v7155
        %v7157 = vpop.f32.mrf.mxu0
        %v7158 = vadd.f32 0.0, %v7157
        %7159 = vmatmul.bf16.gmra.mxu0 %v7076
        %v7160 = vpop.f32.mrf.mxu0
        %v7161 = vadd.f32 0.0, %v7160
        %v7162 = vpop.f32.mrf.mxu0
        %v7163 = vadd.f32 0.0, %v7162
        %7164 = vmatmul.bf16.gmra.mxu0 %v7079
        %v7165 = vpop.f32.mrf.mxu0
        %v7166 = vadd.f32 0.0, %v7165
        %v7167 = vpop.f32.mrf.mxu0
        %v7168 = vadd.f32 0.0, %v7167
        %7169 = vdwg.mxu0
        %v7170 = vadd.f32 %v6701, %v7091
        %v7171 = vadd.f32 %v6702, %v7093
        %v7172 = vadd.f32 %v6703, %v7096
        %v7173 = vadd.f32 %v6704, %v7098
        %v7174 = vadd.f32 %v6705, %v7101
        %v7175 = vadd.f32 %v6706, %v7103
        %v7176 = vadd.f32 %v6707, %v7106
        %v7177 = vadd.f32 %v6708, %v7108
        %v7178 = vadd.f32 %v6709, %v7111
        %v7179 = vadd.f32 %v6710, %v7113
        %v7180 = vadd.f32 %v6711, %v7116
        %v7181 = vadd.f32 %v6712, %v7118
        %v7182 = vadd.f32 %v6713, %v7121
        %v7183 = vadd.f32 %v6714, %v7123
        %v7184 = vadd.f32 %v6715, %v7126
        %v7185 = vadd.f32 %v6716, %v7128
        %v7186 = vadd.f32 %v6717, %v7131
        %v7187 = vadd.f32 %v6718, %v7133
        %v7188 = vadd.f32 %v6719, %v7136
        %v7189 = vadd.f32 %v6720, %v7138
        %v7190 = vadd.f32 %v6721, %v7141
        %v7191 = vadd.f32 %v6722, %v7143
        %v7192 = vadd.f32 %v6723, %v7146
        %v7193 = vadd.f32 %v6724, %v7148
        %v7194 = vadd.f32 %v6725, %v7151
        %v7195 = vadd.f32 %v6726, %v7153
        %v7196 = vadd.f32 %v6727, %v7156
        %v7197 = vadd.f32 %v6728, %v7158
        %v7198 = vadd.f32 %v6729, %v7161
        %v7199 = vadd.f32 %v6730, %v7163
        %v7200 = vadd.f32 %v6731, %v7166
        %v7201 = vadd.f32 %v6732, %v7168
        %v7202 = vld [vmem:[%s3 + $0x80] sm:$0xf]
        %v7203 = vld [vmem:[%s3 + $0x84] sm:$0xf]
        %v7204 = vld [vmem:[%s3 + $0x88] sm:$0xf]
        %v7205 = vld [vmem:[%s3 + $0x8c] sm:$0xf]
        %v7206 = vld [vmem:[%s3 + $0x90] sm:$0xf]
        %v7207 = vld [vmem:[%s3 + $0x94] sm:$0xf]
        %v7208 = vld [vmem:[%s3 + $0x98] sm:$0xf]
        %v7209 = vld [vmem:[%s3 + $0x9c] sm:$0xf]
        %v7212 = vunpack.c.l.b16 %v5593
        %v7213 = vunpack.c.l.b16 %v5594
        %v7214 = vpack.c.b16 %v7213, %v7212
        %v7223 = vunpack.c.l.b16 %v7202
        %v7224 = vunpack.c.l.b16 %v7203
        %v7225 = vunpack.c.l.b16 %v7204
        %v7226 = vunpack.c.l.b16 %v7205
        %v7227 = vunpack.c.l.b16 %v7206
        %v7228 = vunpack.c.l.b16 %v7207
        %v7229 = vunpack.c.l.b16 %v7208
        %v7230 = vunpack.c.l.b16 %v7209
        %v7231 = vpack.c.b16 %v7224, %v7223
        %v7232 = vpack.c.b16 %v7226, %v7225
        %v7233 = vpack.c.b16 %v7228, %v7227
        %v7234 = vpack.c.b16 %v7230, %v7229
        %v7240 = vsel %vm1700, %v7214, 0
        %7242 = vmatpush.bf16.msra.mxu0 0
        %7243 = vmatpush.bf16.msra.mxu0 0
        %7244 = vmatpush.bf16.msra.mxu0 0
        %7245 = vmatpush.bf16.msra.mxu0 0
        %7246 = vmatpush.bf16.msra.mxu0 %v7234
        %7247 = vmatpush.bf16.msra.mxu0 %v7233
        %7248 = vmatpush.bf16.msra.mxu0 %v7232
        %7249 = vmatpush.bf16.msra.mxu0 %v7231
        %7250 = vmatmul.bf16.gmra.mxu0 %v5755
        %v7251 = vpop.f32.mrf.mxu0
        %v7252 = vadd.f32 0.0, %v7251
        %v7253 = vpop.f32.mrf.mxu0
        %v7254 = vadd.f32 0.0, %v7253
        %7255 = vmatmul.bf16.gmra.mxu0 %v5758
        %v7256 = vpop.f32.mrf.mxu0
        %v7257 = vadd.f32 0.0, %v7256
        %v7258 = vpop.f32.mrf.mxu0
        %v7259 = vadd.f32 0.0, %v7258
        %7260 = vmatmul.bf16.gmra.mxu0 %v5761
        %v7261 = vpop.f32.mrf.mxu0
        %v7262 = vadd.f32 0.0, %v7261
        %v7263 = vpop.f32.mrf.mxu0
        %v7264 = vadd.f32 0.0, %v7263
        %7265 = vmatmul.bf16.gmra.mxu0 %v5764
        %v7266 = vpop.f32.mrf.mxu0
        %v7267 = vadd.f32 0.0, %v7266
        %v7268 = vpop.f32.mrf.mxu0
        %v7269 = vadd.f32 0.0, %v7268
        %7270 = vmatmul.bf16.gmra.mxu0 %v5767
        %v7271 = vpop.f32.mrf.mxu0
        %v7272 = vadd.f32 0.0, %v7271
        %v7273 = vpop.f32.mrf.mxu0
        %v7274 = vadd.f32 0.0, %v7273
        %7275 = vmatmul.bf16.gmra.mxu0 %v5770
        %v7276 = vpop.f32.mrf.mxu0
        %v7277 = vadd.f32 0.0, %v7276
        %v7278 = vpop.f32.mrf.mxu0
        %v7279 = vadd.f32 0.0, %v7278
        %7280 = vmatmul.bf16.gmra.mxu0 %v5773
        %v7281 = vpop.f32.mrf.mxu0
        %v7282 = vadd.f32 0.0, %v7281
        %v7283 = vpop.f32.mrf.mxu0
        %v7284 = vadd.f32 0.0, %v7283
        %7285 = vmatmul.bf16.gmra.mxu0 %v5776
        %v7286 = vpop.f32.mrf.mxu0
        %v7287 = vadd.f32 0.0, %v7286
        %v7288 = vpop.f32.mrf.mxu0
        %v7289 = vadd.f32 0.0, %v7288
        %7290 = vmatmul.bf16.gmra.mxu0 %v5779
        %v7291 = vpop.f32.mrf.mxu0
        %v7292 = vadd.f32 0.0, %v7291
        %v7293 = vpop.f32.mrf.mxu0
        %v7294 = vadd.f32 0.0, %v7293
        %7295 = vmatmul.bf16.gmra.mxu0 %v5782
        %v7296 = vpop.f32.mrf.mxu0
        %v7297 = vadd.f32 0.0, %v7296
        %v7298 = vpop.f32.mrf.mxu0
        %v7299 = vadd.f32 0.0, %v7298
        %7300 = vmatmul.bf16.gmra.mxu0 %v5785
        %v7301 = vpop.f32.mrf.mxu0
        %v7302 = vadd.f32 0.0, %v7301
        %v7303 = vpop.f32.mrf.mxu0
        %v7304 = vadd.f32 0.0, %v7303
        %7305 = vmatmul.bf16.gmra.mxu0 %v5788
        %v7306 = vpop.f32.mrf.mxu0
        %v7307 = vadd.f32 0.0, %v7306
        %v7308 = vpop.f32.mrf.mxu0
        %v7309 = vadd.f32 0.0, %v7308
        %7310 = vmatmul.bf16.gmra.mxu0 %v5791
        %v7311 = vpop.f32.mrf.mxu0
        %v7312 = vadd.f32 0.0, %v7311
        %v7313 = vpop.f32.mrf.mxu0
        %v7314 = vadd.f32 0.0, %v7313
        %7315 = vmatmul.bf16.gmra.mxu0 %v5794
        %v7316 = vpop.f32.mrf.mxu0
        %v7317 = vadd.f32 0.0, %v7316
        %v7318 = vpop.f32.mrf.mxu0
        %v7319 = vadd.f32 0.0, %v7318
        %7320 = vmatmul.bf16.gmra.mxu0 %v5797
        %v7321 = vpop.f32.mrf.mxu0
        %v7322 = vadd.f32 0.0, %v7321
        %v7323 = vpop.f32.mrf.mxu0
        %v7324 = vadd.f32 0.0, %v7323
        %7325 = vmatmul.bf16.gmra.mxu0 %v7240
        %v7326 = vpop.f32.mrf.mxu0
        %v7327 = vadd.f32 0.0, %v7326
        %v7328 = vpop.f32.mrf.mxu0
        %v7329 = vadd.f32 0.0, %v7328
        %7330 = vdwg.mxu0
        %v7331 = vadd.f32 %v7170, %v7252
        %v7332 = vadd.f32 %v7171, %v7254
        %v7333 = vadd.f32 %v7172, %v7257
        %v7334 = vadd.f32 %v7173, %v7259
        %v7335 = vadd.f32 %v7174, %v7262
        %v7336 = vadd.f32 %v7175, %v7264
        %v7337 = vadd.f32 %v7176, %v7267
        %v7338 = vadd.f32 %v7177, %v7269
        %v7339 = vadd.f32 %v7178, %v7272
        %v7340 = vadd.f32 %v7179, %v7274
        %v7341 = vadd.f32 %v7180, %v7277
        %v7342 = vadd.f32 %v7181, %v7279
        %v7343 = vadd.f32 %v7182, %v7282
        %v7344 = vadd.f32 %v7183, %v7284
        %v7345 = vadd.f32 %v7184, %v7287
        %v7346 = vadd.f32 %v7185, %v7289
        %v7347 = vadd.f32 %v7186, %v7292
        %v7348 = vadd.f32 %v7187, %v7294
        %v7349 = vadd.f32 %v7188, %v7297
        %v7350 = vadd.f32 %v7189, %v7299
        %v7351 = vadd.f32 %v7190, %v7302
        %v7352 = vadd.f32 %v7191, %v7304
        %v7353 = vadd.f32 %v7192, %v7307
        %v7354 = vadd.f32 %v7193, %v7309
        %v7355 = vadd.f32 %v7194, %v7312
        %v7356 = vadd.f32 %v7195, %v7314
        %v7357 = vadd.f32 %v7196, %v7317
        %v7358 = vadd.f32 %v7197, %v7319
        %v7359 = vadd.f32 %v7198, %v7322
        %v7360 = vadd.f32 %v7199, %v7324
        %v7361 = vadd.f32 %v7200, %v7327
        %v7362 = vadd.f32 %v7201, %v7329
        %v7363 = vsel %vm2595, %v5563, 0
        %v7364 = vsel %vm2602, %v5564, 0
        %v7365 = vsel %vm2609, %v5565, 0
        %v7366 = vsel %vm2616, %v5566, 0
        %v7367 = vsel %vm2623, %v5567, 0
        %v7368 = vsel %vm2630, %v5568, 0
        %v7369 = vsel %vm2637, %v5569, 0
        %v7370 = vsel %vm2644, %v5570, 0
        %v7371 = vsel %vm2651, %v5571, 0
        %v7372 = vsel %vm2658, %v5572, 0
        %v7373 = vsel %vm2665, %v5573, 0
        %v7374 = vsel %vm2672, %v5574, 0
        %v7375 = vsel %vm2679, %v5575, 0
        %v7376 = vsel %vm2686, %v5576, 0
        %v7377 = vsel %vm2693, %v5577, 0
        %v7378 = vsel %vm2700, %v5578, 0
        %v7379 = vsel %vm2707, %v5579, 0
        %v7380 = vsel %vm2714, %v5580, 0
        %v7381 = vsel %vm2721, %v5581, 0
        %v7382 = vsel %vm2728, %v5582, 0
        %v7383 = vsel %vm2735, %v5583, 0
        %v7384 = vsel %vm2742, %v5584, 0
        %v7385 = vsel %vm2749, %v5585, 0
        %v7386 = vsel %vm2756, %v5586, 0
        %v7387 = vsel %vm2763, %v5587, 0
        %v7388 = vsel %vm2770, %v5588, 0
        %v7389 = vsel %vm2777, %v5589, 0
        %v7390 = vsel %vm2784, %v5590, 0
        %v7391 = vsel %vm2791, %v5591, 0
        %v7392 = vsel %vm2798, %v5592, 0
        %v7393 = vsel %vm2805, %v5593, 0
        %v7394 = vsel %vm2812, %v5594, 0
        %v7395 = vsel %vm2819, %v5595, 0
        %v7396 = vld [vmem:[%s3 + $0xa0] sm:$0xf]
        %v7397 = vld [vmem:[%s3 + $0xa4] sm:$0xf]
        %v7398 = vld [vmem:[%s3 + $0xa8] sm:$0xf]
        %v7399 = vld [vmem:[%s3 + $0xac] sm:$0xf]
        %v7400 = vld [vmem:[%s3 + $0xb0] sm:$0xf]
        %v7401 = vld [vmem:[%s3 + $0xb4] sm:$0xf]
        %v7402 = vld [vmem:[%s3 + $0xb8] sm:$0xf]
        %v7403 = vld [vmem:[%s3 + $0xbc] sm:$0xf]
        %v7437 = vunpack.c.l.b16 %v7363
        %v7438 = vunpack.c.l.b16 %v7364
        %v7439 = vunpack.c.l.b16 %v7365
        %v7440 = vunpack.c.l.b16 %v7366
        %v7441 = vunpack.c.l.b16 %v7367
        %v7442 = vunpack.c.l.b16 %v7368
        %v7443 = vunpack.c.l.b16 %v7369
        %v7444 = vunpack.c.l.b16 %v7370
        %v7445 = vunpack.c.l.b16 %v7371
        %v7446 = vunpack.c.l.b16 %v7372
        %v7447 = vunpack.c.l.b16 %v7373
        %v7448 = vunpack.c.l.b16 %v7374
        %v7449 = vunpack.c.l.b16 %v7375
        %v7450 = vunpack.c.l.b16 %v7376
        %v7451 = vunpack.c.l.b16 %v7377
        %v7452 = vunpack.c.l.b16 %v7378
        %v7453 = vunpack.c.l.b16 %v7379
        %v7454 = vunpack.c.l.b16 %v7380
        %v7455 = vunpack.c.l.b16 %v7381
        %v7456 = vunpack.c.l.b16 %v7382
        %v7457 = vunpack.c.l.b16 %v7383
        %v7458 = vunpack.c.l.b16 %v7384
        %v7459 = vunpack.c.l.b16 %v7385
        %v7460 = vunpack.c.l.b16 %v7386
        %v7461 = vunpack.c.l.b16 %v7387
        %v7462 = vunpack.c.l.b16 %v7388
        %v7463 = vunpack.c.l.b16 %v7389
        %v7464 = vunpack.c.l.b16 %v7390
        %v7465 = vunpack.c.l.b16 %v7391
        %v7466 = vunpack.c.l.b16 %v7392
        %v7467 = vunpack.c.l.b16 %v7393
        %v7468 = vunpack.c.l.b16 %v7394
        %v7469 = vunpack.c.l.b16 %v7395
        %v7470 = vpack.c.b16 %v7438, %v7437
        %v7471 = vpack.c.b16 %v7440, %v7439
        %v7472 = vpack.c.b16 %v7442, %v7441
        %v7473 = vpack.c.b16 %v7444, %v7443
        %v7474 = vpack.c.b16 %v7446, %v7445
        %v7475 = vpack.c.b16 %v7448, %v7447
        %v7476 = vpack.c.b16 %v7450, %v7449
        %v7477 = vpack.c.b16 %v7452, %v7451
        %v7478 = vpack.c.b16 %v7454, %v7453
        %v7479 = vpack.c.b16 %v7456, %v7455
        %v7480 = vpack.c.b16 %v7458, %v7457
        %v7481 = vpack.c.b16 %v7460, %v7459
        %v7482 = vpack.c.b16 %v7462, %v7461
        %v7483 = vpack.c.b16 %v7464, %v7463
        %v7484 = vpack.c.b16 %v7466, %v7465
        %v7485 = vpack.c.b16 %v7468, %v7467
        %v7486 = vpack.c.b16 %v7469, %v7469
        %v7488 = vshrl.u32 %v7470, 16
        %v7490 = vshll.u32 %v7470, 16
        %v7492 = vrot.slane %v7490, 1
        %v7493 = vor.u32 %v7488, %v7492
        %v7495 = vshll.u32 %v7471, 16
        %v7497 = vrot.slane %v7495, 1
        %v7498 = vsel %vm2944, %v7493, %v7497
        %v7499 = vshrl.u32 %v7471, 16
        %v7501 = vor.u32 %v7499, %v7497
        %v7503 = vshll.u32 %v7472, 16
        %v7505 = vrot.slane %v7503, 1
        %v7506 = vsel %vm2944, %v7501, %v7505
        %v7507 = vshrl.u32 %v7472, 16
        %v7509 = vor.u32 %v7507, %v7505
        %v7511 = vshll.u32 %v7473, 16
        %v7513 = vrot.slane %v7511, 1
        %v7514 = vsel %vm2944, %v7509, %v7513
        %v7515 = vshrl.u32 %v7473, 16
        %v7517 = vor.u32 %v7515, %v7513
        %v7519 = vshll.u32 %v7474, 16
        %v7521 = vrot.slane %v7519, 1
        %v7522 = vsel %vm2944, %v7517, %v7521
        %v7523 = vshrl.u32 %v7474, 16
        %v7525 = vor.u32 %v7523, %v7521
        %v7527 = vshll.u32 %v7475, 16
        %v7529 = vrot.slane %v7527, 1
        %v7530 = vsel %vm2944, %v7525, %v7529
        %v7531 = vshrl.u32 %v7475, 16
        %v7533 = vor.u32 %v7531, %v7529
        %v7535 = vshll.u32 %v7476, 16
        %v7537 = vrot.slane %v7535, 1
        %v7538 = vsel %vm2944, %v7533, %v7537
        %v7539 = vshrl.u32 %v7476, 16
        %v7541 = vor.u32 %v7539, %v7537
        %v7543 = vshll.u32 %v7477, 16
        %v7545 = vrot.slane %v7543, 1
        %v7546 = vsel %vm2944, %v7541, %v7545
        %v7547 = vshrl.u32 %v7477, 16
        %v7549 = vor.u32 %v7547, %v7545
        %v7551 = vshll.u32 %v7478, 16
        %v7553 = vrot.slane %v7551, 1
        %v7554 = vsel %vm2944, %v7549, %v7553
        %v7555 = vshrl.u32 %v7478, 16
        %v7557 = vor.u32 %v7555, %v7553
        %v7559 = vshll.u32 %v7479, 16
        %v7561 = vrot.slane %v7559, 1
        %v7562 = vsel %vm2944, %v7557, %v7561
        %v7563 = vshrl.u32 %v7479, 16
        %v7565 = vor.u32 %v7563, %v7561
        %v7567 = vshll.u32 %v7480, 16
        %v7569 = vrot.slane %v7567, 1
        %v7570 = vsel %vm2944, %v7565, %v7569
        %v7571 = vshrl.u32 %v7480, 16
        %v7573 = vor.u32 %v7571, %v7569
        %v7575 = vshll.u32 %v7481, 16
        %v7577 = vrot.slane %v7575, 1
        %v7578 = vsel %vm2944, %v7573, %v7577
        %v7579 = vshrl.u32 %v7481, 16
        %v7581 = vor.u32 %v7579, %v7577
        %v7583 = vshll.u32 %v7482, 16
        %v7585 = vrot.slane %v7583, 1
        %v7586 = vsel %vm2944, %v7581, %v7585
        %v7587 = vshrl.u32 %v7482, 16
        %v7589 = vor.u32 %v7587, %v7585
        %v7591 = vshll.u32 %v7483, 16
        %v7593 = vrot.slane %v7591, 1
        %v7594 = vsel %vm2944, %v7589, %v7593
        %v7595 = vshrl.u32 %v7483, 16
        %v7597 = vor.u32 %v7595, %v7593
        %v7599 = vshll.u32 %v7484, 16
        %v7601 = vrot.slane %v7599, 1
        %v7602 = vsel %vm2944, %v7597, %v7601
        %v7603 = vshrl.u32 %v7484, 16
        %v7605 = vor.u32 %v7603, %v7601
        %v7607 = vshll.u32 %v7485, 16
        %v7609 = vrot.slane %v7607, 1
        %v7610 = vsel %vm2944, %v7605, %v7609
        %v7611 = vshrl.u32 %v7485, 16
        %v7613 = vor.u32 %v7611, %v7609
        %v7615 = vshll.u32 %v7486, 16
        %v7617 = vrot.slane %v7615, 1
        %v7618 = vsel %vm2944, %v7613, %v7617
        %v7627 = vunpack.c.l.b16 %v7396
        %v7628 = vunpack.c.l.b16 %v7397
        %v7629 = vunpack.c.l.b16 %v7398
        %v7630 = vunpack.c.l.b16 %v7399
        %v7631 = vunpack.c.l.b16 %v7400
        %v7632 = vunpack.c.l.b16 %v7401
        %v7633 = vunpack.c.l.b16 %v7402
        %v7634 = vunpack.c.l.b16 %v7403
        %v7635 = vpack.c.b16 %v7628, %v7627
        %v7636 = vpack.c.b16 %v7630, %v7629
        %v7637 = vpack.c.b16 %v7632, %v7631
        %v7638 = vpack.c.b16 %v7634, %v7633
        %v7644 = vsel %vm1700, %v7498, 0
        %v7647 = vsel %vm1700, %v7506, 0
        %v7650 = vsel %vm1700, %v7514, 0
        %v7653 = vsel %vm1700, %v7522, 0
        %v7656 = vsel %vm1700, %v7530, 0
        %v7659 = vsel %vm1700, %v7538, 0
        %v7662 = vsel %vm1700, %v7546, 0
        %v7665 = vsel %vm1700, %v7554, 0
        %v7668 = vsel %vm1700, %v7562, 0
        %v7671 = vsel %vm1700, %v7570, 0
        %v7674 = vsel %vm1700, %v7578, 0
        %v7677 = vsel %vm1700, %v7586, 0
        %v7680 = vsel %vm1700, %v7594, 0
        %v7683 = vsel %vm1700, %v7602, 0
        %v7686 = vsel %vm1700, %v7610, 0
        %v7689 = vsel %vm1700, %v7618, 0
        %7691 = vmatpush.bf16.msra.mxu0 0
        %7692 = vmatpush.bf16.msra.mxu0 0
        %7693 = vmatpush.bf16.msra.mxu0 0
        %7694 = vmatpush.bf16.msra.mxu0 0
        %7695 = vmatpush.bf16.msra.mxu0 %v7638
        %7696 = vmatpush.bf16.msra.mxu0 %v7637
        %7697 = vmatpush.bf16.msra.mxu0 %v7636
        %7698 = vmatpush.bf16.msra.mxu0 %v7635
        %7699 = vmatmul.bf16.gmra.mxu0 %v7644
        %v7700 = vpop.f32.mrf.mxu0
        %v7701 = vadd.f32 0.0, %v7700
        %v7702 = vpop.f32.mrf.mxu0
        %v7703 = vadd.f32 0.0, %v7702
        %7704 = vmatmul.bf16.gmra.mxu0 %v7647
        %v7705 = vpop.f32.mrf.mxu0
        %v7706 = vadd.f32 0.0, %v7705
        %v7707 = vpop.f32.mrf.mxu0
        %v7708 = vadd.f32 0.0, %v7707
        %7709 = vmatmul.bf16.gmra.mxu0 %v7650
        %v7710 = vpop.f32.mrf.mxu0
        %v7711 = vadd.f32 0.0, %v7710
        %v7712 = vpop.f32.mrf.mxu0
        %v7713 = vadd.f32 0.0, %v7712
        %7714 = vmatmul.bf16.gmra.mxu0 %v7653
        %v7715 = vpop.f32.mrf.mxu0
        %v7716 = vadd.f32 0.0, %v7715
        %v7717 = vpop.f32.mrf.mxu0
        %v7718 = vadd.f32 0.0, %v7717
        %7719 = vmatmul.bf16.gmra.mxu0 %v7656
        %v7720 = vpop.f32.mrf.mxu0
        %v7721 = vadd.f32 0.0, %v7720
        %v7722 = vpop.f32.mrf.mxu0
        %v7723 = vadd.f32 0.0, %v7722
        %7724 = vmatmul.bf16.gmra.mxu0 %v7659
        %v7725 = vpop.f32.mrf.mxu0
        %v7726 = vadd.f32 0.0, %v7725
        %v7727 = vpop.f32.mrf.mxu0
        %v7728 = vadd.f32 0.0, %v7727
        %7729 = vmatmul.bf16.gmra.mxu0 %v7662
        %v7730 = vpop.f32.mrf.mxu0
        %v7731 = vadd.f32 0.0, %v7730
        %v7732 = vpop.f32.mrf.mxu0
        %v7733 = vadd.f32 0.0, %v7732
        %7734 = vmatmul.bf16.gmra.mxu0 %v7665
        %v7735 = vpop.f32.mrf.mxu0
        %v7736 = vadd.f32 0.0, %v7735
        %v7737 = vpop.f32.mrf.mxu0
        %v7738 = vadd.f32 0.0, %v7737
        %7739 = vmatmul.bf16.gmra.mxu0 %v7668
        %v7740 = vpop.f32.mrf.mxu0
        %v7741 = vadd.f32 0.0, %v7740
        %v7742 = vpop.f32.mrf.mxu0
        %v7743 = vadd.f32 0.0, %v7742
        %7744 = vmatmul.bf16.gmra.mxu0 %v7671
        %v7745 = vpop.f32.mrf.mxu0
        %v7746 = vadd.f32 0.0, %v7745
        %v7747 = vpop.f32.mrf.mxu0
        %v7748 = vadd.f32 0.0, %v7747
        %7749 = vmatmul.bf16.gmra.mxu0 %v7674
        %v7750 = vpop.f32.mrf.mxu0
        %v7751 = vadd.f32 0.0, %v7750
        %v7752 = vpop.f32.mrf.mxu0
        %v7753 = vadd.f32 0.0, %v7752
        %7754 = vmatmul.bf16.gmra.mxu0 %v7677
        %v7755 = vpop.f32.mrf.mxu0
        %v7756 = vadd.f32 0.0, %v7755
        %v7757 = vpop.f32.mrf.mxu0
        %v7758 = vadd.f32 0.0, %v7757
        %7759 = vmatmul.bf16.gmra.mxu0 %v7680
        %v7760 = vpop.f32.mrf.mxu0
        %v7761 = vadd.f32 0.0, %v7760
        %v7762 = vpop.f32.mrf.mxu0
        %v7763 = vadd.f32 0.0, %v7762
        %7764 = vmatmul.bf16.gmra.mxu0 %v7683
        %v7765 = vpop.f32.mrf.mxu0
        %v7766 = vadd.f32 0.0, %v7765
        %v7767 = vpop.f32.mrf.mxu0
        %v7768 = vadd.f32 0.0, %v7767
        %7769 = vmatmul.bf16.gmra.mxu0 %v7686
        %v7770 = vpop.f32.mrf.mxu0
        %v7771 = vadd.f32 0.0, %v7770
        %v7772 = vpop.f32.mrf.mxu0
        %v7773 = vadd.f32 0.0, %v7772
        %7774 = vmatmul.bf16.gmra.mxu0 %v7689
        %v7775 = vpop.f32.mrf.mxu0
        %v7776 = vadd.f32 0.0, %v7775
        %v7777 = vpop.f32.mrf.mxu0
        %v7778 = vadd.f32 0.0, %v7777
        %7779 = vdwg.mxu0
        %v7780 = vadd.f32 %v7331, %v7701
        %v7781 = vadd.f32 %v7332, %v7703
        %v7782 = vadd.f32 %v7333, %v7706
        %v7783 = vadd.f32 %v7334, %v7708
        %v7784 = vadd.f32 %v7335, %v7711
        %v7785 = vadd.f32 %v7336, %v7713
        %v7786 = vadd.f32 %v7337, %v7716
        %v7787 = vadd.f32 %v7338, %v7718
        %v7788 = vadd.f32 %v7339, %v7721
        %v7789 = vadd.f32 %v7340, %v7723
        %v7790 = vadd.f32 %v7341, %v7726
        %v7791 = vadd.f32 %v7342, %v7728
        %v7792 = vadd.f32 %v7343, %v7731
        %v7793 = vadd.f32 %v7344, %v7733
        %v7794 = vadd.f32 %v7345, %v7736
        %v7795 = vadd.f32 %v7346, %v7738
        %v7796 = vadd.f32 %v7347, %v7741
        %v7797 = vadd.f32 %v7348, %v7743
        %v7798 = vadd.f32 %v7349, %v7746
        %v7799 = vadd.f32 %v7350, %v7748
        %v7800 = vadd.f32 %v7351, %v7751
        %v7801 = vadd.f32 %v7352, %v7753
        %v7802 = vadd.f32 %v7353, %v7756
        %v7803 = vadd.f32 %v7354, %v7758
        %v7804 = vadd.f32 %v7355, %v7761
        %v7805 = vadd.f32 %v7356, %v7763
        %v7806 = vadd.f32 %v7357, %v7766
        %v7807 = vadd.f32 %v7358, %v7768
        %v7808 = vadd.f32 %v7359, %v7771
        %v7809 = vadd.f32 %v7360, %v7773
        %v7810 = vadd.f32 %v7361, %v7776
        %v7811 = vadd.f32 %v7362, %v7778
        %v7812 = vsel %vm1322, %v5564, 0
        %v7813 = vsel %vm1329, %v5565, 0
        %v7814 = vsel %vm1336, %v5566, 0
        %v7815 = vsel %vm1343, %v5567, 0
        %v7816 = vsel %vm1350, %v5568, 0
        %v7817 = vsel %vm1357, %v5569, 0
        %v7818 = vsel %vm1364, %v5570, 0
        %v7819 = vsel %vm1371, %v5571, 0
        %v7820 = vsel %vm1378, %v5572, 0
        %v7821 = vsel %vm1385, %v5573, 0
        %v7822 = vsel %vm1392, %v5574, 0
        %v7823 = vsel %vm1399, %v5575, 0
        %v7824 = vsel %vm1406, %v5576, 0
        %v7825 = vsel %vm1413, %v5577, 0
        %v7826 = vsel %vm1420, %v5578, 0
        %v7827 = vsel %vm1427, %v5579, 0
        %v7828 = vsel %vm1434, %v5580, 0
        %v7829 = vsel %vm1441, %v5581, 0
        %v7830 = vsel %vm1448, %v5582, 0
        %v7831 = vsel %vm1455, %v5583, 0
        %v7832 = vsel %vm1462, %v5584, 0
        %v7833 = vsel %vm1469, %v5585, 0
        %v7834 = vsel %vm1476, %v5586, 0
        %v7835 = vsel %vm1483, %v5587, 0
        %v7836 = vsel %vm1490, %v5588, 0
        %v7837 = vsel %vm1497, %v5589, 0
        %v7838 = vsel %vm1504, %v5590, 0
        %v7839 = vsel %vm1511, %v5591, 0
        %v7840 = vsel %vm1518, %v5592, 0
        %v7841 = vsel %vm1525, %v5593, 0
        %v7842 = vsel %vm1532, %v5594, 0
        %v7843 = vsel %vm1539, %v5595, 0
        %v7844 = vsel %vm1546, %v5596, 0
        %v7845 = vld [vmem:[%s3 + $0xc0] sm:$0xf]
        %v7846 = vld [vmem:[%s3 + $0xc4] sm:$0xf]
        %v7847 = vld [vmem:[%s3 + $0xc8] sm:$0xf]
        %v7848 = vld [vmem:[%s3 + $0xcc] sm:$0xf]
        %v7849 = vld [vmem:[%s3 + $0xd0] sm:$0xf]
        %v7850 = vld [vmem:[%s3 + $0xd4] sm:$0xf]
        %v7851 = vld [vmem:[%s3 + $0xd8] sm:$0xf]
        %v7852 = vld [vmem:[%s3 + $0xdc] sm:$0xf]
        %v7886 = vunpack.c.l.b16 %v7812
        %v7887 = vunpack.c.l.b16 %v7813
        %v7888 = vunpack.c.l.b16 %v7814
        %v7889 = vunpack.c.l.b16 %v7815
        %v7890 = vunpack.c.l.b16 %v7816
        %v7891 = vunpack.c.l.b16 %v7817
        %v7892 = vunpack.c.l.b16 %v7818
        %v7893 = vunpack.c.l.b16 %v7819
        %v7894 = vunpack.c.l.b16 %v7820
        %v7895 = vunpack.c.l.b16 %v7821
        %v7896 = vunpack.c.l.b16 %v7822
        %v7897 = vunpack.c.l.b16 %v7823
        %v7898 = vunpack.c.l.b16 %v7824
        %v7899 = vunpack.c.l.b16 %v7825
        %v7900 = vunpack.c.l.b16 %v7826
        %v7901 = vunpack.c.l.b16 %v7827
        %v7902 = vunpack.c.l.b16 %v7828
        %v7903 = vunpack.c.l.b16 %v7829
        %v7904 = vunpack.c.l.b16 %v7830
        %v7905 = vunpack.c.l.b16 %v7831
        %v7906 = vunpack.c.l.b16 %v7832
        %v7907 = vunpack.c.l.b16 %v7833
        %v7908 = vunpack.c.l.b16 %v7834
        %v7909 = vunpack.c.l.b16 %v7835
        %v7910 = vunpack.c.l.b16 %v7836
        %v7911 = vunpack.c.l.b16 %v7837
        %v7912 = vunpack.c.l.b16 %v7838
        %v7913 = vunpack.c.l.b16 %v7839
        %v7914 = vunpack.c.l.b16 %v7840
        %v7915 = vunpack.c.l.b16 %v7841
        %v7916 = vunpack.c.l.b16 %v7842
        %v7917 = vunpack.c.l.b16 %v7843
        %v7918 = vunpack.c.l.b16 %v7844
        %v7919 = vpack.c.b16 %v7887, %v7886
        %v7920 = vpack.c.b16 %v7889, %v7888
        %v7921 = vpack.c.b16 %v7891, %v7890
        %v7922 = vpack.c.b16 %v7893, %v7892
        %v7923 = vpack.c.b16 %v7895, %v7894
        %v7924 = vpack.c.b16 %v7897, %v7896
        %v7925 = vpack.c.b16 %v7899, %v7898
        %v7926 = vpack.c.b16 %v7901, %v7900
        %v7927 = vpack.c.b16 %v7903, %v7902
        %v7928 = vpack.c.b16 %v7905, %v7904
        %v7929 = vpack.c.b16 %v7907, %v7906
        %v7930 = vpack.c.b16 %v7909, %v7908
        %v7931 = vpack.c.b16 %v7911, %v7910
        %v7932 = vpack.c.b16 %v7913, %v7912
        %v7933 = vpack.c.b16 %v7915, %v7914
        %v7934 = vpack.c.b16 %v7917, %v7916
        %v7935 = vpack.c.b16 %v7918, %v7918
        %v7937 = vshrl.u32 %v7919, 16
        %v7939 = vrot.slane %v7937, 3
        %v7940 = vshll.u32 %v7919, 16
        %v7942 = vrot.slane %v7940, 4
        %v7943 = vor.u32 %v7939, %v7942
        %v7945 = vshrl.u32 %v7920, 16
        %v7947 = vrot.slane %v7945, 3
        %v7948 = vshll.u32 %v7920, 16
        %v7950 = vrot.slane %v7948, 4
        %v7951 = vor.u32 %v7947, %v7950
        %v7952 = vsel %vm1921, %v7943, %v7951
        %v7954 = vshrl.u32 %v7921, 16
        %v7956 = vrot.slane %v7954, 3
        %v7957 = vshll.u32 %v7921, 16
        %v7959 = vrot.slane %v7957, 4
        %v7960 = vor.u32 %v7956, %v7959
        %v7961 = vsel %vm1921, %v7951, %v7960
        %v7963 = vshrl.u32 %v7922, 16
        %v7965 = vrot.slane %v7963, 3
        %v7966 = vshll.u32 %v7922, 16
        %v7968 = vrot.slane %v7966, 4
        %v7969 = vor.u32 %v7965, %v7968
        %v7970 = vsel %vm1921, %v7960, %v7969
        %v7972 = vshrl.u32 %v7923, 16
        %v7974 = vrot.slane %v7972, 3
        %v7975 = vshll.u32 %v7923, 16
        %v7977 = vrot.slane %v7975, 4
        %v7978 = vor.u32 %v7974, %v7977
        %v7979 = vsel %vm1921, %v7969, %v7978
        %v7981 = vshrl.u32 %v7924, 16
        %v7983 = vrot.slane %v7981, 3
        %v7984 = vshll.u32 %v7924, 16
        %v7986 = vrot.slane %v7984, 4
        %v7987 = vor.u32 %v7983, %v7986
        %v7988 = vsel %vm1921, %v7978, %v7987
        %v7990 = vshrl.u32 %v7925, 16
        %v7992 = vrot.slane %v7990, 3
        %v7993 = vshll.u32 %v7925, 16
        %v7995 = vrot.slane %v7993, 4
        %v7996 = vor.u32 %v7992, %v7995
        %v7997 = vsel %vm1921, %v7987, %v7996
        %v7999 = vshrl.u32 %v7926, 16
        %v8001 = vrot.slane %v7999, 3
        %v8002 = vshll.u32 %v7926, 16
        %v8004 = vrot.slane %v8002, 4
        %v8005 = vor.u32 %v8001, %v8004
        %v8006 = vsel %vm1921, %v7996, %v8005
        %v8008 = vshrl.u32 %v7927, 16
        %v8010 = vrot.slane %v8008, 3
        %v8011 = vshll.u32 %v7927, 16
        %v8013 = vrot.slane %v8011, 4
        %v8014 = vor.u32 %v8010, %v8013
        %v8015 = vsel %vm1921, %v8005, %v8014
        %v8017 = vshrl.u32 %v7928, 16
        %v8019 = vrot.slane %v8017, 3
        %v8020 = vshll.u32 %v7928, 16
        %v8022 = vrot.slane %v8020, 4
        %v8023 = vor.u32 %v8019, %v8022
        %v8024 = vsel %vm1921, %v8014, %v8023
        %v8026 = vshrl.u32 %v7929, 16
        %v8028 = vrot.slane %v8026, 3
        %v8029 = vshll.u32 %v7929, 16
        %v8031 = vrot.slane %v8029, 4
        %v8032 = vor.u32 %v8028, %v8031
        %v8033 = vsel %vm1921, %v8023, %v8032
        %v8035 = vshrl.u32 %v7930, 16
        %v8037 = vrot.slane %v8035, 3
        %v8038 = vshll.u32 %v7930, 16
        %v8040 = vrot.slane %v8038, 4
        %v8041 = vor.u32 %v8037, %v8040
        %v8042 = vsel %vm1921, %v8032, %v8041
        %v8044 = vshrl.u32 %v7931, 16
        %v8046 = vrot.slane %v8044, 3
        %v8047 = vshll.u32 %v7931, 16
        %v8049 = vrot.slane %v8047, 4
        %v8050 = vor.u32 %v8046, %v8049
        %v8051 = vsel %vm1921, %v8041, %v8050
        %v8053 = vshrl.u32 %v7932, 16
        %v8055 = vrot.slane %v8053, 3
        %v8056 = vshll.u32 %v7932, 16
        %v8058 = vrot.slane %v8056, 4
        %v8059 = vor.u32 %v8055, %v8058
        %v8060 = vsel %vm1921, %v8050, %v8059
        %v8062 = vshrl.u32 %v7933, 16
        %v8064 = vrot.slane %v8062, 3
        %v8065 = vshll.u32 %v7933, 16
        %v8067 = vrot.slane %v8065, 4
        %v8068 = vor.u32 %v8064, %v8067
        %v8069 = vsel %vm1921, %v8059, %v8068
        %v8071 = vshrl.u32 %v7934, 16
        %v8073 = vrot.slane %v8071, 3
        %v8074 = vshll.u32 %v7934, 16
        %v8076 = vrot.slane %v8074, 4
        %v8077 = vor.u32 %v8073, %v8076
        %v8078 = vsel %vm1921, %v8068, %v8077
        %v8080 = vshrl.u32 %v7935, 16
        %v8082 = vrot.slane %v8080, 3
        %v8083 = vshll.u32 %v7935, 16
        %v8085 = vrot.slane %v8083, 4
        %v8086 = vor.u32 %v8082, %v8085
        %v8087 = vsel %vm1921, %v8077, %v8086
        %v8096 = vunpack.c.l.b16 %v7845
        %v8097 = vunpack.c.l.b16 %v7846
        %v8098 = vunpack.c.l.b16 %v7847
        %v8099 = vunpack.c.l.b16 %v7848
        %v8100 = vunpack.c.l.b16 %v7849
        %v8101 = vunpack.c.l.b16 %v7850
        %v8102 = vunpack.c.l.b16 %v7851
        %v8103 = vunpack.c.l.b16 %v7852
        %v8104 = vpack.c.b16 %v8097, %v8096
        %v8105 = vpack.c.b16 %v8099, %v8098
        %v8106 = vpack.c.b16 %v8101, %v8100
        %v8107 = vpack.c.b16 %v8103, %v8102
        %v8113 = vsel %vm1700, %v7952, 0
        %v8116 = vsel %vm1700, %v7961, 0
        %v8119 = vsel %vm1700, %v7970, 0
        %v8122 = vsel %vm1700, %v7979, 0
        %v8125 = vsel %vm1700, %v7988, 0
        %v8128 = vsel %vm1700, %v7997, 0
        %v8131 = vsel %vm1700, %v8006, 0
        %v8134 = vsel %vm1700, %v8015, 0
        %v8137 = vsel %vm1700, %v8024, 0
        %v8140 = vsel %vm1700, %v8033, 0
        %v8143 = vsel %vm1700, %v8042, 0
        %v8146 = vsel %vm1700, %v8051, 0
        %v8149 = vsel %vm1700, %v8060, 0
        %v8152 = vsel %vm1700, %v8069, 0
        %v8155 = vsel %vm1700, %v8078, 0
        %v8158 = vsel %vm1700, %v8087, 0
        %8160 = vmatpush.bf16.msra.mxu0 0
        %8161 = vmatpush.bf16.msra.mxu0 0
        %8162 = vmatpush.bf16.msra.mxu0 0
        %8163 = vmatpush.bf16.msra.mxu0 0
        %8164 = vmatpush.bf16.msra.mxu0 %v8107
        %8165 = vmatpush.bf16.msra.mxu0 %v8106
        %8166 = vmatpush.bf16.msra.mxu0 %v8105
        %8167 = vmatpush.bf16.msra.mxu0 %v8104
        %8168 = vmatmul.bf16.gmra.mxu0 %v8113
        %v8169 = vpop.f32.mrf.mxu0
        %v8170 = vadd.f32 0.0, %v8169
        %v8171 = vpop.f32.mrf.mxu0
        %v8172 = vadd.f32 0.0, %v8171
        %8173 = vmatmul.bf16.gmra.mxu0 %v8116
        %v8174 = vpop.f32.mrf.mxu0
        %v8175 = vadd.f32 0.0, %v8174
        %v8176 = vpop.f32.mrf.mxu0
        %v8177 = vadd.f32 0.0, %v8176
        %8178 = vmatmul.bf16.gmra.mxu0 %v8119
        %v8179 = vpop.f32.mrf.mxu0
        %v8180 = vadd.f32 0.0, %v8179
        %v8181 = vpop.f32.mrf.mxu0
        %v8182 = vadd.f32 0.0, %v8181
        %8183 = vmatmul.bf16.gmra.mxu0 %v8122
        %v8184 = vpop.f32.mrf.mxu0
        %v8185 = vadd.f32 0.0, %v8184
        %v8186 = vpop.f32.mrf.mxu0
        %v8187 = vadd.f32 0.0, %v8186
        %8188 = vmatmul.bf16.gmra.mxu0 %v8125
        %v8189 = vpop.f32.mrf.mxu0
        %v8190 = vadd.f32 0.0, %v8189
        %v8191 = vpop.f32.mrf.mxu0
        %v8192 = vadd.f32 0.0, %v8191
        %8193 = vmatmul.bf16.gmra.mxu0 %v8128
        %v8194 = vpop.f32.mrf.mxu0
        %v8195 = vadd.f32 0.0, %v8194
        %v8196 = vpop.f32.mrf.mxu0
        %v8197 = vadd.f32 0.0, %v8196
        %8198 = vmatmul.bf16.gmra.mxu0 %v8131
        %v8199 = vpop.f32.mrf.mxu0
        %v8200 = vadd.f32 0.0, %v8199
        %v8201 = vpop.f32.mrf.mxu0
        %v8202 = vadd.f32 0.0, %v8201
        %8203 = vmatmul.bf16.gmra.mxu0 %v8134
        %v8204 = vpop.f32.mrf.mxu0
        %v8205 = vadd.f32 0.0, %v8204
        %v8206 = vpop.f32.mrf.mxu0
        %v8207 = vadd.f32 0.0, %v8206
        %8208 = vmatmul.bf16.gmra.mxu0 %v8137
        %v8209 = vpop.f32.mrf.mxu0
        %v8210 = vadd.f32 0.0, %v8209
        %v8211 = vpop.f32.mrf.mxu0
        %v8212 = vadd.f32 0.0, %v8211
        %8213 = vmatmul.bf16.gmra.mxu0 %v8140
        %v8214 = vpop.f32.mrf.mxu0
        %v8215 = vadd.f32 0.0, %v8214
        %v8216 = vpop.f32.mrf.mxu0
        %v8217 = vadd.f32 0.0, %v8216
        %8218 = vmatmul.bf16.gmra.mxu0 %v8143
        %v8219 = vpop.f32.mrf.mxu0
        %v8220 = vadd.f32 0.0, %v8219
        %v8221 = vpop.f32.mrf.mxu0
        %v8222 = vadd.f32 0.0, %v8221
        %8223 = vmatmul.bf16.gmra.mxu0 %v8146
        %v8224 = vpop.f32.mrf.mxu0
        %v8225 = vadd.f32 0.0, %v8224
        %v8226 = vpop.f32.mrf.mxu0
        %v8227 = vadd.f32 0.0, %v8226
        %8228 = vmatmul.bf16.gmra.mxu0 %v8149
        %v8229 = vpop.f32.mrf.mxu0
        %v8230 = vadd.f32 0.0, %v8229
        %v8231 = vpop.f32.mrf.mxu0
        %v8232 = vadd.f32 0.0, %v8231
        %8233 = vmatmul.bf16.gmra.mxu0 %v8152
        %v8234 = vpop.f32.mrf.mxu0
        %v8235 = vadd.f32 0.0, %v8234
        %v8236 = vpop.f32.mrf.mxu0
        %v8237 = vadd.f32 0.0, %v8236
        %8238 = vmatmul.bf16.gmra.mxu0 %v8155
        %v8239 = vpop.f32.mrf.mxu0
        %v8240 = vadd.f32 0.0, %v8239
        %v8241 = vpop.f32.mrf.mxu0
        %v8242 = vadd.f32 0.0, %v8241
        %8243 = vmatmul.bf16.gmra.mxu0 %v8158
        %v8244 = vpop.f32.mrf.mxu0
        %v8245 = vadd.f32 0.0, %v8244
        %v8246 = vpop.f32.mrf.mxu0
        %v8247 = vadd.f32 0.0, %v8246
        %8248 = vdwg.mxu0
        %v8249 = vadd.f32 %v7780, %v8170
        %v8250 = vadd.f32 %v7781, %v8172
        %v8251 = vadd.f32 %v7782, %v8175
        %v8252 = vadd.f32 %v7783, %v8177
        %v8253 = vadd.f32 %v7784, %v8180
        %v8254 = vadd.f32 %v7785, %v8182
        %v8255 = vadd.f32 %v7786, %v8185
        %v8256 = vadd.f32 %v7787, %v8187
        %v8257 = vadd.f32 %v7788, %v8190
        %v8258 = vadd.f32 %v7789, %v8192
        %v8259 = vadd.f32 %v7790, %v8195
        %v8260 = vadd.f32 %v7791, %v8197
        %v8261 = vadd.f32 %v7792, %v8200
        %v8262 = vadd.f32 %v7793, %v8202
        %v8263 = vadd.f32 %v7794, %v8205
        %v8264 = vadd.f32 %v7795, %v8207
        %v8265 = vadd.f32 %v7796, %v8210
        %v8266 = vadd.f32 %v7797, %v8212
        %v8267 = vadd.f32 %v7798, %v8215
        %v8268 = vadd.f32 %v7799, %v8217
        %v8269 = vadd.f32 %v7800, %v8220
        %v8270 = vadd.f32 %v7801, %v8222
        %v8271 = vadd.f32 %v7802, %v8225
        %v8272 = vadd.f32 %v7803, %v8227
        %v8273 = vadd.f32 %v7804, %v8230
        %v8274 = vadd.f32 %v7805, %v8232
        %v8275 = vadd.f32 %v7806, %v8235
        %v8276 = vadd.f32 %v7807, %v8237
        %v8277 = vadd.f32 %v7808, %v8240
        %v8278 = vadd.f32 %v7809, %v8242
        %v8279 = vadd.f32 %v7810, %v8245
        %v8280 = vadd.f32 %v7811, %v8247
        %v8281 = vld [vmem:[%s3 + $0xe0] sm:$0xf]
        %v8282 = vld [vmem:[%s3 + $0xe4] sm:$0xf]
        %v8283 = vld [vmem:[%s3 + $0xe8] sm:$0xf]
        %v8284 = vld [vmem:[%s3 + $0xec] sm:$0xf]
        %v8285 = vld [vmem:[%s3 + $0xf0] sm:$0xf]
        %v8286 = vld [vmem:[%s3 + $0xf4] sm:$0xf]
        %v8287 = vld [vmem:[%s3 + $0xf8] sm:$0xf]
        %v8288 = vld [vmem:[%s3 + $0xfc] sm:$0xf]
        %v8291 = vunpack.c.l.b16 %v5595
        %v8292 = vunpack.c.l.b16 %v5596
        %v8293 = vpack.c.b16 %v8292, %v8291
        %v8302 = vunpack.c.l.b16 %v8281
        %v8303 = vunpack.c.l.b16 %v8282
        %v8304 = vunpack.c.l.b16 %v8283
        %v8305 = vunpack.c.l.b16 %v8284
        %v8306 = vunpack.c.l.b16 %v8285
        %v8307 = vunpack.c.l.b16 %v8286
        %v8308 = vunpack.c.l.b16 %v8287
        %v8309 = vunpack.c.l.b16 %v8288
        %v8310 = vpack.c.b16 %v8303, %v8302
        %v8311 = vpack.c.b16 %v8305, %v8304
        %v8312 = vpack.c.b16 %v8307, %v8306
        %v8313 = vpack.c.b16 %v8309, %v8308
        %v8319 = vsel %vm1700, %v8293, 0
        %8321 = vmatpush.bf16.msra.mxu0 0
        %8322 = vmatpush.bf16.msra.mxu0 0
        %8323 = vmatpush.bf16.msra.mxu0 0
        %8324 = vmatpush.bf16.msra.mxu0 0
        %8325 = vmatpush.bf16.msra.mxu0 %v8313
        %8326 = vmatpush.bf16.msra.mxu0 %v8312
        %8327 = vmatpush.bf16.msra.mxu0 %v8311
        %8328 = vmatpush.bf16.msra.mxu0 %v8310
        %8329 = vmatmul.bf16.gmra.mxu0 %v5758
        %v8330 = vpop.f32.mrf.mxu0
        %v8331 = vadd.f32 0.0, %v8330
        %v8332 = vpop.f32.mrf.mxu0
        %v8333 = vadd.f32 0.0, %v8332
        %8334 = vmatmul.bf16.gmra.mxu0 %v5761
        %v8335 = vpop.f32.mrf.mxu0
        %v8336 = vadd.f32 0.0, %v8335
        %v8337 = vpop.f32.mrf.mxu0
        %v8338 = vadd.f32 0.0, %v8337
        %8339 = vmatmul.bf16.gmra.mxu0 %v5764
        %v8340 = vpop.f32.mrf.mxu0
        %v8341 = vadd.f32 0.0, %v8340
        %v8342 = vpop.f32.mrf.mxu0
        %v8343 = vadd.f32 0.0, %v8342
        %8344 = vmatmul.bf16.gmra.mxu0 %v5767
        %v8345 = vpop.f32.mrf.mxu0
        %v8346 = vadd.f32 0.0, %v8345
        %v8347 = vpop.f32.mrf.mxu0
        %v8348 = vadd.f32 0.0, %v8347
        %8349 = vmatmul.bf16.gmra.mxu0 %v5770
        %v8350 = vpop.f32.mrf.mxu0
        %v8351 = vadd.f32 0.0, %v8350
        %v8352 = vpop.f32.mrf.mxu0
        %v8353 = vadd.f32 0.0, %v8352
        %8354 = vmatmul.bf16.gmra.mxu0 %v5773
        %v8355 = vpop.f32.mrf.mxu0
        %v8356 = vadd.f32 0.0, %v8355
        %v8357 = vpop.f32.mrf.mxu0
        %v8358 = vadd.f32 0.0, %v8357
        %8359 = vmatmul.bf16.gmra.mxu0 %v5776
        %v8360 = vpop.f32.mrf.mxu0
        %v8361 = vadd.f32 0.0, %v8360
        %v8362 = vpop.f32.mrf.mxu0
        %v8363 = vadd.f32 0.0, %v8362
        %8364 = vmatmul.bf16.gmra.mxu0 %v5779
        %v8365 = vpop.f32.mrf.mxu0
        %v8366 = vadd.f32 0.0, %v8365
        %v8367 = vpop.f32.mrf.mxu0
        %v8368 = vadd.f32 0.0, %v8367
        %8369 = vmatmul.bf16.gmra.mxu0 %v5782
        %v8370 = vpop.f32.mrf.mxu0
        %v8371 = vadd.f32 0.0, %v8370
        %v8372 = vpop.f32.mrf.mxu0
        %v8373 = vadd.f32 0.0, %v8372
        %8374 = vmatmul.bf16.gmra.mxu0 %v5785
        %v8375 = vpop.f32.mrf.mxu0
        %v8376 = vadd.f32 0.0, %v8375
        %v8377 = vpop.f32.mrf.mxu0
        %v8378 = vadd.f32 0.0, %v8377
        %8379 = vmatmul.bf16.gmra.mxu0 %v5788
        %v8380 = vpop.f32.mrf.mxu0
        %v8381 = vadd.f32 0.0, %v8380
        %v8382 = vpop.f32.mrf.mxu0
        %v8383 = vadd.f32 0.0, %v8382
        %8384 = vmatmul.bf16.gmra.mxu0 %v5791
        %v8385 = vpop.f32.mrf.mxu0
        %v8386 = vadd.f32 0.0, %v8385
        %v8387 = vpop.f32.mrf.mxu0
        %v8388 = vadd.f32 0.0, %v8387
        %8389 = vmatmul.bf16.gmra.mxu0 %v5794
        %v8390 = vpop.f32.mrf.mxu0
        %v8391 = vadd.f32 0.0, %v8390
        %v8392 = vpop.f32.mrf.mxu0
        %v8393 = vadd.f32 0.0, %v8392
        %8394 = vmatmul.bf16.gmra.mxu0 %v5797
        %v8395 = vpop.f32.mrf.mxu0
        %v8396 = vadd.f32 0.0, %v8395
        %v8397 = vpop.f32.mrf.mxu0
        %v8398 = vadd.f32 0.0, %v8397
        %8399 = vmatmul.bf16.gmra.mxu0 %v7240
        %v8400 = vpop.f32.mrf.mxu0
        %v8401 = vadd.f32 0.0, %v8400
        %v8402 = vpop.f32.mrf.mxu0
        %v8403 = vadd.f32 0.0, %v8402
        %8404 = vmatmul.bf16.gmra.mxu0 %v8319
        %v8405 = vpop.f32.mrf.mxu0
        %v8406 = vadd.f32 0.0, %v8405
        %v8407 = vpop.f32.mrf.mxu0
        %v8408 = vadd.f32 0.0, %v8407
        %8409 = vdwg.mxu0
        %v8410 = vadd.f32 %v8249, %v8331
        %v8411 = vadd.f32 %v8250, %v8333
        %v8412 = vadd.f32 %v8251, %v8336
        %v8413 = vadd.f32 %v8252, %v8338
        %v8414 = vadd.f32 %v8253, %v8341
        %v8415 = vadd.f32 %v8254, %v8343
        %v8416 = vadd.f32 %v8255, %v8346
        %v8417 = vadd.f32 %v8256, %v8348
        %v8418 = vadd.f32 %v8257, %v8351
        %v8419 = vadd.f32 %v8258, %v8353
        %v8420 = vadd.f32 %v8259, %v8356
        %v8421 = vadd.f32 %v8260, %v8358
        %v8422 = vadd.f32 %v8261, %v8361
        %v8423 = vadd.f32 %v8262, %v8363
        %v8424 = vadd.f32 %v8263, %v8366
        %v8425 = vadd.f32 %v8264, %v8368
        %v8426 = vadd.f32 %v8265, %v8371
        %v8427 = vadd.f32 %v8266, %v8373
        %v8428 = vadd.f32 %v8267, %v8376
        %v8429 = vadd.f32 %v8268, %v8378
        %v8430 = vadd.f32 %v8269, %v8381
        %v8431 = vadd.f32 %v8270, %v8383
        %v8432 = vadd.f32 %v8271, %v8386
        %v8433 = vadd.f32 %v8272, %v8388
        %v8434 = vadd.f32 %v8273, %v8391
        %v8435 = vadd.f32 %v8274, %v8393
        %v8436 = vadd.f32 %v8275, %v8396
        %v8437 = vadd.f32 %v8276, %v8398
        %v8438 = vadd.f32 %v8277, %v8401
        %v8439 = vadd.f32 %v8278, %v8403
        %v8440 = vadd.f32 %v8279, %v8406
        %v8441 = vadd.f32 %v8280, %v8408
        %v8442 = vsel %vm2595, %v5565, 0
        %v8443 = vsel %vm2602, %v5566, 0
        %v8444 = vsel %vm2609, %v5567, 0
        %v8445 = vsel %vm2616, %v5568, 0
        %v8446 = vsel %vm2623, %v5569, 0
        %v8447 = vsel %vm2630, %v5570, 0
        %v8448 = vsel %vm2637, %v5571, 0
        %v8449 = vsel %vm2644, %v5572, 0
        %v8450 = vsel %vm2651, %v5573, 0
        %v8451 = vsel %vm2658, %v5574, 0
        %v8452 = vsel %vm2665, %v5575, 0
        %v8453 = vsel %vm2672, %v5576, 0
        %v8454 = vsel %vm2679, %v5577, 0
        %v8455 = vsel %vm2686, %v5578, 0
        %v8456 = vsel %vm2693, %v5579, 0
        %v8457 = vsel %vm2700, %v5580, 0
        %v8458 = vsel %vm2707, %v5581, 0
        %v8459 = vsel %vm2714, %v5582, 0
        %v8460 = vsel %vm2721, %v5583, 0
        %v8461 = vsel %vm2728, %v5584, 0
        %v8462 = vsel %vm2735, %v5585, 0
        %v8463 = vsel %vm2742, %v5586, 0
        %v8464 = vsel %vm2749, %v5587, 0
        %v8465 = vsel %vm2756, %v5588, 0
        %v8466 = vsel %vm2763, %v5589, 0
        %v8467 = vsel %vm2770, %v5590, 0
        %v8468 = vsel %vm2777, %v5591, 0
        %v8469 = vsel %vm2784, %v5592, 0
        %v8470 = vsel %vm2791, %v5593, 0
        %v8471 = vsel %vm2798, %v5594, 0
        %v8472 = vsel %vm2805, %v5595, 0
        %v8473 = vsel %vm2812, %v5596, 0
        %v8474 = vsel %vm2819, %v5597, 0
        %v8475 = vld [vmem:[%s3 + $0x100] sm:$0xf]
        %v8476 = vld [vmem:[%s3 + $0x104] sm:$0xf]
        %v8477 = vld [vmem:[%s3 + $0x108] sm:$0xf]
        %v8478 = vld [vmem:[%s3 + $0x10c] sm:$0xf]
        %v8479 = vld [vmem:[%s3 + $0x110] sm:$0xf]
        %v8480 = vld [vmem:[%s3 + $0x114] sm:$0xf]
        %v8481 = vld [vmem:[%s3 + $0x118] sm:$0xf]
        %v8482 = vld [vmem:[%s3 + $0x11c] sm:$0xf]
        %v8516 = vunpack.c.l.b16 %v8442
        %v8517 = vunpack.c.l.b16 %v8443
        %v8518 = vunpack.c.l.b16 %v8444
        %v8519 = vunpack.c.l.b16 %v8445
        %v8520 = vunpack.c.l.b16 %v8446
        %v8521 = vunpack.c.l.b16 %v8447
        %v8522 = vunpack.c.l.b16 %v8448
        %v8523 = vunpack.c.l.b16 %v8449
        %v8524 = vunpack.c.l.b16 %v8450
        %v8525 = vunpack.c.l.b16 %v8451
        %v8526 = vunpack.c.l.b16 %v8452
        %v8527 = vunpack.c.l.b16 %v8453
        %v8528 = vunpack.c.l.b16 %v8454
        %v8529 = vunpack.c.l.b16 %v8455
        %v8530 = vunpack.c.l.b16 %v8456
        %v8531 = vunpack.c.l.b16 %v8457
        %v8532 = vunpack.c.l.b16 %v8458
        %v8533 = vunpack.c.l.b16 %v8459
        %v8534 = vunpack.c.l.b16 %v8460
        %v8535 = vunpack.c.l.b16 %v8461
        %v8536 = vunpack.c.l.b16 %v8462
        %v8537 = vunpack.c.l.b16 %v8463
        %v8538 = vunpack.c.l.b16 %v8464
        %v8539 = vunpack.c.l.b16 %v8465
        %v8540 = vunpack.c.l.b16 %v8466
        %v8541 = vunpack.c.l.b16 %v8467
        %v8542 = vunpack.c.l.b16 %v8468
        %v8543 = vunpack.c.l.b16 %v8469
        %v8544 = vunpack.c.l.b16 %v8470
        %v8545 = vunpack.c.l.b16 %v8471
        %v8546 = vunpack.c.l.b16 %v8472
        %v8547 = vunpack.c.l.b16 %v8473
        %v8548 = vunpack.c.l.b16 %v8474
        %v8549 = vpack.c.b16 %v8517, %v8516
        %v8550 = vpack.c.b16 %v8519, %v8518
        %v8551 = vpack.c.b16 %v8521, %v8520
        %v8552 = vpack.c.b16 %v8523, %v8522
        %v8553 = vpack.c.b16 %v8525, %v8524
        %v8554 = vpack.c.b16 %v8527, %v8526
        %v8555 = vpack.c.b16 %v8529, %v8528
        %v8556 = vpack.c.b16 %v8531, %v8530
        %v8557 = vpack.c.b16 %v8533, %v8532
        %v8558 = vpack.c.b16 %v8535, %v8534
        %v8559 = vpack.c.b16 %v8537, %v8536
        %v8560 = vpack.c.b16 %v8539, %v8538
        %v8561 = vpack.c.b16 %v8541, %v8540
        %v8562 = vpack.c.b16 %v8543, %v8542
        %v8563 = vpack.c.b16 %v8545, %v8544
        %v8564 = vpack.c.b16 %v8547, %v8546
        %v8565 = vpack.c.b16 %v8548, %v8548
        %v8567 = vshrl.u32 %v8549, 16
        %v8569 = vshll.u32 %v8549, 16
        %v8571 = vrot.slane %v8569, 1
        %v8572 = vor.u32 %v8567, %v8571
        %v8574 = vshll.u32 %v8550, 16
        %v8576 = vrot.slane %v8574, 1
        %v8577 = vsel %vm2944, %v8572, %v8576
        %v8578 = vshrl.u32 %v8550, 16
        %v8580 = vor.u32 %v8578, %v8576
        %v8582 = vshll.u32 %v8551, 16
        %v8584 = vrot.slane %v8582, 1
        %v8585 = vsel %vm2944, %v8580, %v8584
        %v8586 = vshrl.u32 %v8551, 16
        %v8588 = vor.u32 %v8586, %v8584
        %v8590 = vshll.u32 %v8552, 16
        %v8592 = vrot.slane %v8590, 1
        %v8593 = vsel %vm2944, %v8588, %v8592
        %v8594 = vshrl.u32 %v8552, 16
        %v8596 = vor.u32 %v8594, %v8592
        %v8598 = vshll.u32 %v8553, 16
        %v8600 = vrot.slane %v8598, 1
        %v8601 = vsel %vm2944, %v8596, %v8600
        %v8602 = vshrl.u32 %v8553, 16
        %v8604 = vor.u32 %v8602, %v8600
        %v8606 = vshll.u32 %v8554, 16
        %v8608 = vrot.slane %v8606, 1
        %v8609 = vsel %vm2944, %v8604, %v8608
        %v8610 = vshrl.u32 %v8554, 16
        %v8612 = vor.u32 %v8610, %v8608
        %v8614 = vshll.u32 %v8555, 16
        %v8616 = vrot.slane %v8614, 1
        %v8617 = vsel %vm2944, %v8612, %v8616
        %v8618 = vshrl.u32 %v8555, 16
        %v8620 = vor.u32 %v8618, %v8616
        %v8622 = vshll.u32 %v8556, 16
        %v8624 = vrot.slane %v8622, 1
        %v8625 = vsel %vm2944, %v8620, %v8624
        %v8626 = vshrl.u32 %v8556, 16
        %v8628 = vor.u32 %v8626, %v8624
        %v8630 = vshll.u32 %v8557, 16
        %v8632 = vrot.slane %v8630, 1
        %v8633 = vsel %vm2944, %v8628, %v8632
        %v8634 = vshrl.u32 %v8557, 16
        %v8636 = vor.u32 %v8634, %v8632
        %v8638 = vshll.u32 %v8558, 16
        %v8640 = vrot.slane %v8638, 1
        %v8641 = vsel %vm2944, %v8636, %v8640
        %v8642 = vshrl.u32 %v8558, 16
        %v8644 = vor.u32 %v8642, %v8640
        %v8646 = vshll.u32 %v8559, 16
        %v8648 = vrot.slane %v8646, 1
        %v8649 = vsel %vm2944, %v8644, %v8648
        %v8650 = vshrl.u32 %v8559, 16
        %v8652 = vor.u32 %v8650, %v8648
        %v8654 = vshll.u32 %v8560, 16
        %v8656 = vrot.slane %v8654, 1
        %v8657 = vsel %vm2944, %v8652, %v8656
        %v8658 = vshrl.u32 %v8560, 16
        %v8660 = vor.u32 %v8658, %v8656
        %v8662 = vshll.u32 %v8561, 16
        %v8664 = vrot.slane %v8662, 1
        %v8665 = vsel %vm2944, %v8660, %v8664
        %v8666 = vshrl.u32 %v8561, 16
        %v8668 = vor.u32 %v8666, %v8664
        %v8670 = vshll.u32 %v8562, 16
        %v8672 = vrot.slane %v8670, 1
        %v8673 = vsel %vm2944, %v8668, %v8672
        %v8674 = vshrl.u32 %v8562, 16
        %v8676 = vor.u32 %v8674, %v8672
        %v8678 = vshll.u32 %v8563, 16
        %v8680 = vrot.slane %v8678, 1
        %v8681 = vsel %vm2944, %v8676, %v8680
        %v8682 = vshrl.u32 %v8563, 16
        %v8684 = vor.u32 %v8682, %v8680
        %v8686 = vshll.u32 %v8564, 16
        %v8688 = vrot.slane %v8686, 1
        %v8689 = vsel %vm2944, %v8684, %v8688
        %v8690 = vshrl.u32 %v8564, 16
        %v8692 = vor.u32 %v8690, %v8688
        %v8694 = vshll.u32 %v8565, 16
        %v8696 = vrot.slane %v8694, 1
        %v8697 = vsel %vm2944, %v8692, %v8696
        %v8706 = vunpack.c.l.b16 %v8475
        %v8707 = vunpack.c.l.b16 %v8476
        %v8708 = vunpack.c.l.b16 %v8477
        %v8709 = vunpack.c.l.b16 %v8478
        %v8710 = vunpack.c.l.b16 %v8479
        %v8711 = vunpack.c.l.b16 %v8480
        %v8712 = vunpack.c.l.b16 %v8481
        %v8713 = vunpack.c.l.b16 %v8482
        %v8714 = vpack.c.b16 %v8707, %v8706
        %v8715 = vpack.c.b16 %v8709, %v8708
        %v8716 = vpack.c.b16 %v8711, %v8710
        %v8717 = vpack.c.b16 %v8713, %v8712
        %v8723 = vsel %vm1700, %v8577, 0
        %v8726 = vsel %vm1700, %v8585, 0
        %v8729 = vsel %vm1700, %v8593, 0
        %v8732 = vsel %vm1700, %v8601, 0
        %v8735 = vsel %vm1700, %v8609, 0
        %v8738 = vsel %vm1700, %v8617, 0
        %v8741 = vsel %vm1700, %v8625, 0
        %v8744 = vsel %vm1700, %v8633, 0
        %v8747 = vsel %vm1700, %v8641, 0
        %v8750 = vsel %vm1700, %v8649, 0
        %v8753 = vsel %vm1700, %v8657, 0
        %v8756 = vsel %vm1700, %v8665, 0
        %v8759 = vsel %vm1700, %v8673, 0
        %v8762 = vsel %vm1700, %v8681, 0
        %v8765 = vsel %vm1700, %v8689, 0
        %v8768 = vsel %vm1700, %v8697, 0
        %8770 = vmatpush.bf16.msra.mxu0 0
        %8771 = vmatpush.bf16.msra.mxu0 0
        %8772 = vmatpush.bf16.msra.mxu0 0
        %8773 = vmatpush.bf16.msra.mxu0 0
        %8774 = vmatpush.bf16.msra.mxu0 %v8717
        %8775 = vmatpush.bf16.msra.mxu0 %v8716
        %8776 = vmatpush.bf16.msra.mxu0 %v8715
        %8777 = vmatpush.bf16.msra.mxu0 %v8714
        %8778 = vmatmul.bf16.gmra.mxu0 %v8723
        %v8779 = vpop.f32.mrf.mxu0
        %v8780 = vadd.f32 0.0, %v8779
        %v8781 = vpop.f32.mrf.mxu0
        %v8782 = vadd.f32 0.0, %v8781
        %8783 = vmatmul.bf16.gmra.mxu0 %v8726
        %v8784 = vpop.f32.mrf.mxu0
        %v8785 = vadd.f32 0.0, %v8784
        %v8786 = vpop.f32.mrf.mxu0
        %v8787 = vadd.f32 0.0, %v8786
        %8788 = vmatmul.bf16.gmra.mxu0 %v8729
        %v8789 = vpop.f32.mrf.mxu0
        %v8790 = vadd.f32 0.0, %v8789
        %v8791 = vpop.f32.mrf.mxu0
        %v8792 = vadd.f32 0.0, %v8791
        %8793 = vmatmul.bf16.gmra.mxu0 %v8732
        %v8794 = vpop.f32.mrf.mxu0
        %v8795 = vadd.f32 0.0, %v8794
        %v8796 = vpop.f32.mrf.mxu0
        %v8797 = vadd.f32 0.0, %v8796
        %8798 = vmatmul.bf16.gmra.mxu0 %v8735
        %v8799 = vpop.f32.mrf.mxu0
        %v8800 = vadd.f32 0.0, %v8799
        %v8801 = vpop.f32.mrf.mxu0
        %v8802 = vadd.f32 0.0, %v8801
        %8803 = vmatmul.bf16.gmra.mxu0 %v8738
        %v8804 = vpop.f32.mrf.mxu0
        %v8805 = vadd.f32 0.0, %v8804
        %v8806 = vpop.f32.mrf.mxu0
        %v8807 = vadd.f32 0.0, %v8806
        %8808 = vmatmul.bf16.gmra.mxu0 %v8741
        %v8809 = vpop.f32.mrf.mxu0
        %v8810 = vadd.f32 0.0, %v8809
        %v8811 = vpop.f32.mrf.mxu0
        %v8812 = vadd.f32 0.0, %v8811
        %8813 = vmatmul.bf16.gmra.mxu0 %v8744
        %v8814 = vpop.f32.mrf.mxu0
        %v8815 = vadd.f32 0.0, %v8814
        %v8816 = vpop.f32.mrf.mxu0
        %v8817 = vadd.f32 0.0, %v8816
        %8818 = vmatmul.bf16.gmra.mxu0 %v8747
        %v8819 = vpop.f32.mrf.mxu0
        %v8820 = vadd.f32 0.0, %v8819
        %v8821 = vpop.f32.mrf.mxu0
        %v8822 = vadd.f32 0.0, %v8821
        %8823 = vmatmul.bf16.gmra.mxu0 %v8750
        %v8824 = vpop.f32.mrf.mxu0
        %v8825 = vadd.f32 0.0, %v8824
        %v8826 = vpop.f32.mrf.mxu0
        %v8827 = vadd.f32 0.0, %v8826
        %8828 = vmatmul.bf16.gmra.mxu0 %v8753
        %v8829 = vpop.f32.mrf.mxu0
        %v8830 = vadd.f32 0.0, %v8829
        %v8831 = vpop.f32.mrf.mxu0
        %v8832 = vadd.f32 0.0, %v8831
        %8833 = vmatmul.bf16.gmra.mxu0 %v8756
        %v8834 = vpop.f32.mrf.mxu0
        %v8835 = vadd.f32 0.0, %v8834
        %v8836 = vpop.f32.mrf.mxu0
        %v8837 = vadd.f32 0.0, %v8836
        %8838 = vmatmul.bf16.gmra.mxu0 %v8759
        %v8839 = vpop.f32.mrf.mxu0
        %v8840 = vadd.f32 0.0, %v8839
        %v8841 = vpop.f32.mrf.mxu0
        %v8842 = vadd.f32 0.0, %v8841
        %8843 = vmatmul.bf16.gmra.mxu0 %v8762
        %v8844 = vpop.f32.mrf.mxu0
        %v8845 = vadd.f32 0.0, %v8844
        %v8846 = vpop.f32.mrf.mxu0
        %v8847 = vadd.f32 0.0, %v8846
        %8848 = vmatmul.bf16.gmra.mxu0 %v8765
        %v8849 = vpop.f32.mrf.mxu0
        %v8850 = vadd.f32 0.0, %v8849
        %v8851 = vpop.f32.mrf.mxu0
        %v8852 = vadd.f32 0.0, %v8851
        %8853 = vmatmul.bf16.gmra.mxu0 %v8768
        %v8854 = vpop.f32.mrf.mxu0
        %v8855 = vadd.f32 0.0, %v8854
        %v8856 = vpop.f32.mrf.mxu0
        %v8857 = vadd.f32 0.0, %v8856
        %8858 = vdwg.mxu0
        %v8859 = vadd.f32 %v8410, %v8780
        %v8860 = vadd.f32 %v8411, %v8782
        %v8861 = vadd.f32 %v8412, %v8785
        %v8862 = vadd.f32 %v8413, %v8787
        %v8863 = vadd.f32 %v8414, %v8790
        %v8864 = vadd.f32 %v8415, %v8792
        %v8865 = vadd.f32 %v8416, %v8795
        %v8866 = vadd.f32 %v8417, %v8797
        %v8867 = vadd.f32 %v8418, %v8800
        %v8868 = vadd.f32 %v8419, %v8802
        %v8869 = vadd.f32 %v8420, %v8805
        %v8870 = vadd.f32 %v8421, %v8807
        %v8871 = vadd.f32 %v8422, %v8810
        %v8872 = vadd.f32 %v8423, %v8812
        %v8873 = vadd.f32 %v8424, %v8815
        %v8874 = vadd.f32 %v8425, %v8817
        %v8875 = vadd.f32 %v8426, %v8820
        %v8876 = vadd.f32 %v8427, %v8822
        %v8877 = vadd.f32 %v8428, %v8825
        %v8878 = vadd.f32 %v8429, %v8827
        %v8879 = vadd.f32 %v8430, %v8830
        %v8880 = vadd.f32 %v8431, %v8832
        %v8881 = vadd.f32 %v8432, %v8835
        %v8882 = vadd.f32 %v8433, %v8837
        %v8883 = vadd.f32 %v8434, %v8840
        %v8884 = vadd.f32 %v8435, %v8842
        %v8885 = vadd.f32 %v8436, %v8845
        %v8886 = vadd.f32 %v8437, %v8847
        %v8887 = vadd.f32 %v8438, %v8850
        %v8888 = vadd.f32 %v8439, %v8852
        %v8889 = vadd.f32 %v8440, %v8855
        %v8890 = vadd.f32 %v8441, %v8857
        %v8891 = vld [vmem:[%s4] sm:$0x1]
        %v8893 = vperm.slane %v8891, 0
        %v8895 = vadd.f32 %v8859, %v8893
        %v8896 = vadd.f32 %v8860, %v8893
        %v8897 = vadd.f32 %v8861, %v8893
        %v8898 = vadd.f32 %v8862, %v8893
        %v8899 = vadd.f32 %v8863, %v8893
        %v8900 = vadd.f32 %v8864, %v8893
        %v8901 = vadd.f32 %v8865, %v8893
        %v8902 = vadd.f32 %v8866, %v8893
        %v8903 = vadd.f32 %v8867, %v8893
        %v8904 = vadd.f32 %v8868, %v8893
        %v8905 = vadd.f32 %v8869, %v8893
        %v8906 = vadd.f32 %v8870, %v8893
        %v8907 = vadd.f32 %v8871, %v8893
        %v8908 = vadd.f32 %v8872, %v8893
        %v8909 = vadd.f32 %v8873, %v8893
        %v8910 = vadd.f32 %v8874, %v8893
        %v8911 = vadd.f32 %v8875, %v8893
        %v8912 = vadd.f32 %v8876, %v8893
        %v8913 = vadd.f32 %v8877, %v8893
        %v8914 = vadd.f32 %v8878, %v8893
        %v8915 = vadd.f32 %v8879, %v8893
        %v8916 = vadd.f32 %v8880, %v8893
        %v8917 = vadd.f32 %v8881, %v8893
        %v8918 = vadd.f32 %v8882, %v8893
        %v8919 = vadd.f32 %v8883, %v8893
        %v8920 = vadd.f32 %v8884, %v8893
        %v8921 = vadd.f32 %v8885, %v8893
        %v8922 = vadd.f32 %v8886, %v8893
        %v8923 = vadd.f32 %v8887, %v8893
        %v8924 = vadd.f32 %v8888, %v8893
        %v8925 = vadd.f32 %v8889, %v8893
        %v8926 = vadd.f32 %v8890, %v8893
        %v8927 = vld [vmem:[%s301] sm:$0x1]
        %v8929 = vperm.slane %v8927, 0
        %v8931 = vmul.f32 %v8929, %v8895
        %v8932 = vmul.f32 %v8929, %v8896
        %v8933 = vmul.f32 %v8929, %v8897
        %v8934 = vmul.f32 %v8929, %v8898
        %v8935 = vmul.f32 %v8929, %v8899
        %v8936 = vmul.f32 %v8929, %v8900
        %v8937 = vmul.f32 %v8929, %v8901
        %v8938 = vmul.f32 %v8929, %v8902
        %v8939 = vmul.f32 %v8929, %v8903
        %v8940 = vmul.f32 %v8929, %v8904
        %v8941 = vmul.f32 %v8929, %v8905
        %v8942 = vmul.f32 %v8929, %v8906
        %v8943 = vmul.f32 %v8929, %v8907
        %v8944 = vmul.f32 %v8929, %v8908
        %v8945 = vmul.f32 %v8929, %v8909
        %v8946 = vmul.f32 %v8929, %v8910
        %v8947 = vmul.f32 %v8929, %v8911
        %v8948 = vmul.f32 %v8929, %v8912
        %v8949 = vmul.f32 %v8929, %v8913
        %v8950 = vmul.f32 %v8929, %v8914
        %v8951 = vmul.f32 %v8929, %v8915
        %v8952 = vmul.f32 %v8929, %v8916
        %v8953 = vmul.f32 %v8929, %v8917
        %v8954 = vmul.f32 %v8929, %v8918
        %v8955 = vmul.f32 %v8929, %v8919
        %v8956 = vmul.f32 %v8929, %v8920
        %v8957 = vmul.f32 %v8929, %v8921
        %v8958 = vmul.f32 %v8929, %v8922
        %v8959 = vmul.f32 %v8929, %v8923
        %v8960 = vmul.f32 %v8929, %v8924
        %v8961 = vmul.f32 %v8929, %v8925
        %v8962 = vmul.f32 %v8929, %v8926
        %v8963 = vadd.f32 %v796, %v8931
        %v8964 = vadd.f32 %v797, %v8932
        %v8965 = vadd.f32 %v798, %v8933
        %v8966 = vadd.f32 %v799, %v8934
        %v8967 = vadd.f32 %v800, %v8935
        %v8968 = vadd.f32 %v801, %v8936
        %v8969 = vadd.f32 %v802, %v8937
        %v8970 = vadd.f32 %v803, %v8938
        %v8971 = vadd.f32 %v804, %v8939
        %v8972 = vadd.f32 %v805, %v8940
        %v8973 = vadd.f32 %v806, %v8941
        %v8974 = vadd.f32 %v807, %v8942
        %v8975 = vadd.f32 %v808, %v8943
        %v8976 = vadd.f32 %v809, %v8944
        %v8977 = vadd.f32 %v810, %v8945
        %v8978 = vadd.f32 %v811, %v8946
        %v8979 = vadd.f32 %v812, %v8947
        %v8980 = vadd.f32 %v813, %v8948
        %v8981 = vadd.f32 %v814, %v8949
        %v8982 = vadd.f32 %v815, %v8950
        %v8983 = vadd.f32 %v816, %v8951
        %v8984 = vadd.f32 %v817, %v8952
        %v8985 = vadd.f32 %v818, %v8953
        %v8986 = vadd.f32 %v819, %v8954
        %v8987 = vadd.f32 %v820, %v8955
        %v8988 = vadd.f32 %v821, %v8956
        %v8989 = vadd.f32 %v822, %v8957
        %v8990 = vadd.f32 %v823, %v8958
        %v8991 = vadd.f32 %v824, %v8959
        %v8992 = vadd.f32 %v825, %v8960
        %v8993 = vadd.f32 %v826, %v8961
        %v8994 = vadd.f32 %v827, %v8962
        %v8995 = vld [vmem:[%s304] sm:$0x1]
        %v8997 = vperm.slane %v8995, 0
        %v8999 = vadd.f32 %v8963, %v8997
        %v9000 = vadd.f32 %v8964, %v8997
        %v9001 = vadd.f32 %v8965, %v8997
        %v9002 = vadd.f32 %v8966, %v8997
        %v9003 = vadd.f32 %v8967, %v8997
        %v9004 = vadd.f32 %v8968, %v8997
        %v9005 = vadd.f32 %v8969, %v8997
        %v9006 = vadd.f32 %v8970, %v8997
        %v9007 = vadd.f32 %v8971, %v8997
        %v9008 = vadd.f32 %v8972, %v8997
        %v9009 = vadd.f32 %v8973, %v8997
        %v9010 = vadd.f32 %v8974, %v8997
        %v9011 = vadd.f32 %v8975, %v8997
        %v9012 = vadd.f32 %v8976, %v8997
        %v9013 = vadd.f32 %v8977, %v8997
        %v9014 = vadd.f32 %v8978, %v8997
        %v9015 = vadd.f32 %v8979, %v8997
        %v9016 = vadd.f32 %v8980, %v8997
        %v9017 = vadd.f32 %v8981, %v8997
        %v9018 = vadd.f32 %v8982, %v8997
        %v9019 = vadd.f32 %v8983, %v8997
        %v9020 = vadd.f32 %v8984, %v8997
        %v9021 = vadd.f32 %v8985, %v8997
        %v9022 = vadd.f32 %v8986, %v8997
        %v9023 = vadd.f32 %v8987, %v8997
        %v9024 = vadd.f32 %v8988, %v8997
        %v9025 = vadd.f32 %v8989, %v8997
        %v9026 = vadd.f32 %v8990, %v8997
        %v9027 = vadd.f32 %v8991, %v8997
        %v9028 = vadd.f32 %v8992, %v8997
        %v9029 = vadd.f32 %v8993, %v8997
        %v9030 = vadd.f32 %v8994, %v8997
        %9031 = vst.msk [vmem:[%s293] sm:$0xff] %vm1700, %v8999
        %9032 = vst.msk [vmem:[%s293 + $0x8] sm:$0xff] %vm1700, %v9000
        %9033 = vst.msk [vmem:[%s293 + $0x10] sm:$0xff] %vm1700, %v9001
        %9034 = vst.msk [vmem:[%s293 + $0x18] sm:$0xff] %vm1700, %v9002
        %9035 = vst.msk [vmem:[%s293 + $0x20] sm:$0xff] %vm1700, %v9003
        %9036 = vst.msk [vmem:[%s293 + $0x28] sm:$0xff] %vm1700, %v9004
        %9037 = vst.msk [vmem:[%s293 + $0x30] sm:$0xff] %vm1700, %v9005
        %9038 = vst.msk [vmem:[%s293 + $0x38] sm:$0xff] %vm1700, %v9006
        %9039 = vst.msk [vmem:[%s293 + $0x40] sm:$0xff] %vm1700, %v9007
        %9040 = vst.msk [vmem:[%s293 + $0x48] sm:$0xff] %vm1700, %v9008
        %9041 = vst.msk [vmem:[%s293 + $0x50] sm:$0xff] %vm1700, %v9009
        %9042 = vst.msk [vmem:[%s293 + $0x58] sm:$0xff] %vm1700, %v9010
        %9043 = vst.msk [vmem:[%s293 + $0x60] sm:$0xff] %vm1700, %v9011
        %9044 = vst.msk [vmem:[%s293 + $0x68] sm:$0xff] %vm1700, %v9012
        %9045 = vst.msk [vmem:[%s293 + $0x70] sm:$0xff] %vm1700, %v9013
        %9046 = vst.msk [vmem:[%s293 + $0x78] sm:$0xff] %vm1700, %v9014
        %9047 = vst.msk [vmem:[%s293 + $0x80] sm:$0xff] %vm1700, %v9015
        %9048 = vst.msk [vmem:[%s293 + $0x88] sm:$0xff] %vm1700, %v9016
        %9049 = vst.msk [vmem:[%s293 + $0x90] sm:$0xff] %vm1700, %v9017
        %9050 = vst.msk [vmem:[%s293 + $0x98] sm:$0xff] %vm1700, %v9018
        %9051 = vst.msk [vmem:[%s293 + $0xa0] sm:$0xff] %vm1700, %v9019
        %9052 = vst.msk [vmem:[%s293 + $0xa8] sm:$0xff] %vm1700, %v9020
        %9053 = vst.msk [vmem:[%s293 + $0xb0] sm:$0xff] %vm1700, %v9021
        %9054 = vst.msk [vmem:[%s293 + $0xb8] sm:$0xff] %vm1700, %v9022
        %9055 = vst.msk [vmem:[%s293 + $0xc0] sm:$0xff] %vm1700, %v9023
        %9056 = vst.msk [vmem:[%s293 + $0xc8] sm:$0xff] %vm1700, %v9024
        %9057 = vst.msk [vmem:[%s293 + $0xd0] sm:$0xff] %vm1700, %v9025
        %9058 = vst.msk [vmem:[%s293 + $0xd8] sm:$0xff] %vm1700, %v9026
        %9059 = vst.msk [vmem:[%s293 + $0xe0] sm:$0xff] %vm1700, %v9027
        %9060 = vst.msk [vmem:[%s293 + $0xe8] sm:$0xff] %vm1700, %v9028
        %9061 = vst.msk [vmem:[%s293 + $0xf0] sm:$0xff] %vm1700, %v9029
        %9062 = vst.msk [vmem:[%s293 + $0xf8] sm:$0xff] %vm1700, %v9030
        %s9063 = sand.u32 %s191, 1
        %s9064 = scalar_lea.sflag [#allocation4], %s9063
        %s9065 = sand.u32 %s191, 1
        %s9066 = smul.addr %s9065, 256
        %s9067 = scalar_lea.vmem [#allocation3], %s9066
        // Predicated region
        $region49: #{tpu_custom_call.1} parent=47 // pred_check
          %p9068 = pneg %p201
        $region50: #{tpu_custom_call.1} parent=47 // pred_check_branch
          %9070 = sbr.rel (%p9068) target = $region52
        $region51: #{tpu_custom_call.1} parent=47 // pred_region
          %9072 = vsyncadd %s9064, 0
          %s9073 = smul.addr %s21, 32
          %s9074 = smul.addr %s9073, 8
          %s9075 = scalar_lea.hbm %s7, %s9074
          %s9076 = sshll.u32 %s9067, 4
          %s9077 = int_to_ptr.vmem [resolvable:$true] %s9076
          %s9078 = sshll.u32 %s9075, 4
          %s9079 = int_to_ptr.hbm [resolvable:$true] %s9078
          %9084 = dma.vmem_to_hbm [thread:$0]  %s9077, 4096, %s9079, %s9064, 128, 128, 8
        $region52: #{tpu_custom_call.1} parent=47 // pred_fallthru
          _
      $region48: #{tpu_custom_call.1} parent=5 // pred_fallthru
        _
      %p9085 = scmp.le.s32.totalorder 2, %s16
      // Predicated region
      $region53: #{tpu_custom_call.1} parent=5 // pred_check
        %p9086 = pneg %p9085
      $region54: #{tpu_custom_call.1} parent=5 // pred_check_branch
        %9088 = sbr.rel (%p9086) target = $region56
      $region55: #{tpu_custom_call.1} parent=5 // pred_region
        %s9089 = ssub.s32 %s16, 2
        // Predicated region
        $region57: #{tpu_custom_call.1} parent=55 // pred_check
          %p9090 = pneg %p207
        $region58: #{tpu_custom_call.1} parent=55 // pred_check_branch
          %9092 = sbr.rel (%p9090) target = $region60
        $region59: #{tpu_custom_call.1} parent=55 // pred_region
          %s9093 = sand.u32 %s192, 1
          %s9094 = scalar_lea.sflag [#allocation4], %s9093
          %s9095 = sand.u32 %s192, 1
          %s9096 = smul.addr %s9095, 256
          %s9097 = scalar_lea.vmem [#allocation3], %s9096
          %9099 = dma.done %s9094, 4096
        $region60: #{tpu_custom_call.1} parent=55 // pred_fallthru
          _
      $region56: #{tpu_custom_call.1} parent=5 // pred_fallthru
        _
    $region6: #{tpu_custom_call.1} parent=1 // loop_footer
      %s20 = sadd.s32 1, %s16
    $region7: #{tpu_custom_call.1} parent=1 // loop_footer_branch
      %15 = sbr.rel target = $region3
    $region8: #{tpu_custom_call.1} parent=1 // loop_exit
      _
    %9100 = vsyncpa [#allocation4], 1
    %s9101 = scalar_lea.sflag [#allocation4], 1
    %9102 = vsyncpa %s9101, 1

</llo_original>
